<compile_context>
chip_gen: v6e
topology: v6e:2x2x1
jax: 0.10.0
libtpu: 0.0.40
codegen_flags: <defaults>
</compile_context>

<pallas_src>
import math
import functools

import jax
import jax.numpy as jnp
from jax.experimental import pallas as pl
from jax.experimental.pallas import tpu as pltpu

EPS = 1e-5       # nn.LayerNorm default eps
OUT_PAD = 128    # lane-dense padded classifier width (real classes = 3)


def encoder_kernel(x_ref, pos_ref,
                   ew1_ref, eb1_ref, ew2_ref, eb2_ref,
                   wq_ref, bq_ref, wk_ref, bk_ref, wv_ref, bv_ref, wo_ref, bo_ref,
                   g1_ref, be1_ref, g2_ref, be2_ref,
                   fw1_ref, fb1_ref, fw2_ref, fb2_ref,
                   cw1_ref, cb1_ref, cw2_ref, cb2_ref,
                   o_ref, *, n_heads, embed_dim, seq_len, batch_tile):
    TB, S, E, H = batch_tile, seq_len, embed_dim, n_heads
    dk = E // H
    M = TB * S
    mm = wq_ref.dtype                     # matmul operand dtype (f32 or bf16)

    def lin(a, w_ref, b_ref):
        # weights are stored pre-transposed as [in, out]; accumulate in f32.
        return jnp.dot(a.astype(w_ref.dtype), w_ref[...],
                       preferred_element_type=jnp.float32) + b_ref[...]

    def layernorm(t, g_ref, b_ref):
        mu = jnp.mean(t, axis=-1, keepdims=True)
        var = jnp.mean((t - mu) ** 2, axis=-1, keepdims=True)
        return (t - mu) * jax.lax.rsqrt(var + EPS) * g_ref[...] + b_ref[...]

    def softmax_lastdim(t):
        t = t - jnp.max(t, axis=-1, keepdims=True)
        e = jnp.exp(t)
        return e * pl.reciprocal(jnp.sum(e, axis=-1, keepdims=True), approx=True)

    # ---- embedding FeedForward: Linear(V,32) -> ReLU -> Linear(32,E) ----
    x = x_ref[...].reshape(M, -1)                               # [TB*S, V]
    h = jnp.maximum(lin(x, ew1_ref, eb1_ref), 0.0)
    emb = lin(h, ew2_ref, eb2_ref)                              # [TB*S, E]

    # ---- positional embedding: x * sqrt(E) + sin/cos table ----
    emb = emb * math.sqrt(E)
    emb = (emb.reshape(TB, S, E) + pos_ref[...][None]).reshape(M, E)
    # TODO(synk): dropout layers are identity here (eval-mode semantics).

    # ---- multi-head attention (reference's K/Q swap preserved) ----
    q = lin(emb, wq_ref, bq_ref)
    k = lin(emb, wk_ref, bk_ref)
    v = lin(emb, wv_ref, bv_ref)

    def split_heads(t):                                         # [M,E] -> [H*TB, S, dk]
        t3 = t.reshape(TB, S, E)
        return jnp.stack([t3[:, :, hh * dk:(hh + 1) * dk] for hh in range(H)],
                         axis=0).reshape(H * TB, S, dk)

    qh = split_heads(q.astype(mm))
    kh = split_heads(k.astype(mm))
    vh = split_heads(v.astype(mm))

    # NOTE: the reference calls scaled_dot_product_attention(Q, K, V) on a
    # method whose signature is (K, Q, V), so scores = K_proj @ Q_proj^T.
    scores = jnp.einsum('bsd,btd->bst', kh, qh,
                        preferred_element_type=jnp.float32) * (1.0 / math.sqrt(dk))
    probs = softmax_lastdim(scores)                             # [H*TB, S, S] f32
    ctx = jnp.einsum('bst,btd->bsd', probs.astype(mm), vh,
                     preferred_element_type=jnp.float32)        # [H*TB, S, dk]

    ctx = ctx.reshape(H, TB, S, dk)
    attn = jnp.concatenate([ctx[hh] for hh in range(H)], axis=-1).reshape(M, E)
    attn_out = lin(attn, wo_ref, bo_ref)

    norm1 = layernorm(attn_out + emb, g1_ref, be1_ref)

    ff = jnp.maximum(lin(norm1, fw1_ref, fb1_ref), 0.0)
    ff = lin(ff, fw2_ref, fb2_ref)
    norm2 = layernorm(ff + norm1, g2_ref, be2_ref)

    # ---- torch.max(out, dim=1)[0] pooling, classifier, softmax ----
    pooled = jnp.max(norm2.reshape(TB, S, E), axis=1)           # [TB, E]
    c = jnp.maximum(lin(pooled, cw1_ref, cb1_ref), 0.0)
    logits = lin(c, cw2_ref, cb2_ref)                           # [TB, OUT_PAD]; pad bias=-1e30
    o_ref[...] = softmax_lastdim(logits).astype(o_ref.dtype)


def transformer_encoder(x, pos, params, *, n_heads, embed_dim, block_batch=8,
                        matmul_dtype=jnp.float32):
    B, S, V = x.shape
    E = embed_dim
    TB = min(block_batch, B)
    assert B % TB == 0, "batch must be divisible by the batch tile"

    mm, f32 = matmul_dtype, jnp.float32

    def w_t(name):                      # nn.Linear [out,in] -> [in,out], matmul dtype
        return jnp.asarray(params[name].T, dtype=mm)

    def p_f32(name):                    # biases / LayerNorm params stay f32
        return jnp.asarray(params[name], dtype=f32)

    cls_hidden = params["cw1"].shape[0]
    n_cls = params["cw2"].shape[0]
    # Pad the classifier output to a lane-dense width; -1e30 bias on the padded
    # logits makes them vanish under softmax.
    cw2p = jnp.zeros((cls_hidden, OUT_PAD), mm).at[:, :n_cls].set(
        params["cw2"].T.astype(mm))
    cb2p = jnp.full((1, OUT_PAD), -1e30, f32).at[:, :n_cls].set(
        params["cb2"].astype(f32))

    weights = [
        w_t("ew1"), p_f32("eb1"), w_t("ew2"), p_f32("eb2"),
        w_t("wq"), p_f32("bq"), w_t("wk"), p_f32("bk"),
        w_t("wv"), p_f32("bv"), w_t("wo"), p_f32("bo"),
        p_f32("g1"), p_f32("be1"), p_f32("g2"), p_f32("be2"),
        w_t("fw1"), p_f32("fb1"), w_t("fw2"), p_f32("fb2"),
        w_t("cw1"), p_f32("cb1"), cw2p, cb2p,
    ]

    def full_spec(w):
        nd = w.ndim
        return pl.BlockSpec(w.shape, lambda b, _nd=nd: (0,) * _nd)

    in_specs = ([pl.BlockSpec((TB, S, V), lambda b: (b, 0, 0)),
                 pl.BlockSpec((S, E), lambda b: (0, 0))]
                + [full_spec(w) for w in weights])
    out_spec = pl.BlockSpec((TB, OUT_PAD), lambda b: (b, 0))

    kernel = functools.partial(encoder_kernel, n_heads=n_heads, embed_dim=E,
                               seq_len=S, batch_tile=TB)
    out_padded = pl.pallas_call(
        kernel,
        out_shape=jax.ShapeDtypeStruct((B, OUT_PAD), jnp.float32),
        grid_spec=pltpu.PrefetchScalarGridSpec(
            num_scalar_prefetch=0,
            grid=(B // TB,),
            in_specs=in_specs,
            out_specs=out_spec,
        ),
        compiler_params=pltpu.CompilerParams(
            dimension_semantics=("parallel",),
            vmem_limit_bytes=32 * 1024 * 1024,
        ),
    )(x, pos, *weights)
    return out_padded[:, :n_cls]


def positional_table(seq_len, embed_dim):
    """Matches PositionalEmbedding.forward's angle table (before slicing/repeat)."""
    ed = embed_dim if embed_dim % 2 == 0 else embed_dim + 1
    pos = jnp.arange(seq_len, dtype=jnp.float32)[:, None]
    i = jnp.arange(ed, dtype=jnp.float32)
    angle_rates = 1.0 / jnp.power(10000.0, 2.0 * jnp.floor(i / 2.0) / ed)
    angles = pos * angle_rates
    angles = jnp.where(jnp.arange(ed) % 2 == 0, jnp.sin(angles), jnp.cos(angles))
    return angles[:, :embed_dim].astype(jnp.float32)


def init_params(key, *, vocab_size, embed_dim, expansion_factor, n_heads, cls_hidden=1024):
    E = embed_dim
    keys = jax.random.split(key, 20)

    def unif(k, shape, bound):
        return jax.random.uniform(k, shape, jnp.float32, -bound, bound)

    def lin_w(k, out_f, in_f):
        return unif(k, (out_f, in_f), 1.0 / math.sqrt(in_f))

    def xavier(k, out_f, in_f):
        return unif(k, (out_f, in_f), math.sqrt(6.0 / (in_f + out_f)))

    p = {}
    # embedding FeedForward(vocab_size, 32, E)
    p["ew1"] = lin_w(keys[0], 32, vocab_size)
    p["eb1"] = unif(keys[1], (1, 32), 1.0 / math.sqrt(vocab_size))
    p["ew2"] = lin_w(keys[2], E, 32)
    p["eb2"] = unif(keys[3], (1, E), 1.0 / math.sqrt(32))
    # MultiHeadAttention: xavier_uniform weights, zero biases (per module __init__)
    p["wq"], p["wk"], p["wv"], p["wo"] = (xavier(keys[4 + j], E, E) for j in range(4))
    p["bq"] = p["bk"] = p["bv"] = p["bo"] = jnp.zeros((1, E), jnp.float32)
    # LayerNorms
    p["g1"] = jnp.ones((1, E), jnp.float32)
    p["be1"] = jnp.zeros((1, E), jnp.float32)
    p["g2"] = jnp.ones((1, E), jnp.float32)
    p["be2"] = jnp.zeros((1, E), jnp.float32)
    # TransformerBlock feed forward
    H = expansion_factor * E
    p["fw1"] = lin_w(keys[8], H, E)
    p["fb1"] = unif(keys[9], (1, H), 1.0 / math.sqrt(E))
    p["fw2"] = lin_w(keys[10], E, H)
    p["fb2"] = unif(keys[11], (1, E), 1.0 / math.sqrt(H))
    # classifier: Linear(E, 1024) -> ReLU -> Linear(1024, 3) -> Softmax
    p["cw1"] = lin_w(keys[12], cls_hidden, E)
    p["cb1"] = unif(keys[13], (1, cls_hidden), 1.0 / math.sqrt(E))
    p["cw2"] = lin_w(keys[14], 3, cls_hidden)
    p["cb2"] = unif(keys[15], (1, 3), 1.0 / math.sqrt(cls_hidden))
    return p


def reference_forward(x, pos, p, *, n_heads, embed_dim):
    """Pure-JAX mirror of the PyTorch forward (eval mode), for verification."""
    B, S, _ = x.shape
    lin = lambda a, w, b: a @ w.T + b
    out = jnp.maximum(lin(x, p["ew1"], p["eb1"]), 0.0)
    out = lin(out, p["ew2"], p["eb2"])
    out = out * math.sqrt(embed_dim) + pos[None]
    q = lin(out, p["wq"], p["bq"])
    k = lin(out, p["wk"], p["bk"])
    v = lin(out, p["wv"], p["bv"])
    d_k = embed_dim // n_heads
    split = lambda t: t.reshape(B, S, n_heads, d_k).transpose(0, 2, 1, 3)
    qh, kh, vh = split(q), split(k), split(v)
    scores = jnp.einsum("bhsd,bhtd->bhst", kh, qh) / math.sqrt(d_k)  # K @ Q^T (ref swap)
    probs = jax.nn.softmax(scores, axis=-1)
    ao = jnp.einsum("bhst,bhtd->bhsd", probs, vh)
    ao = ao.transpose(0, 2, 1, 3).reshape(B, S, embed_dim)
    ao = lin(ao, p["wo"], p["bo"])

    def ln(t, g, b):
        mu = t.mean(-1, keepdims=True)
        var = ((t - mu) ** 2).mean(-1, keepdims=True)
        return (t - mu) / jnp.sqrt(var + EPS) * g + b

    n1 = ln(ao + out, p["g1"], p["be1"])
    ff = jnp.maximum(lin(n1, p["fw1"], p["fb1"]), 0.0)
    ff = lin(ff, p["fw2"], p["fb2"])
    n2 = ln(ff + n1, p["g2"], p["be2"])
    pooled = n2.max(axis=1)
    c = jnp.maximum(pooled @ p["cw1"].T + p["cb1"], 0.0)
    logits = c @ p["cw2"].T + p["cb2"]
    return jax.nn.softmax(logits, axis=1)


if __name__ == "__main__":
    B, S, V = 16, 16, 8         # batch, seq_len, vocab_size (small test shapes)
    E, NH, EXP = 64, 4, 2       # embed_dim, n_heads, expansion_factor (num_layers = 1)

    key = jax.random.PRNGKey(0)
    kx, kp = jax.random.split(key)
    x = jax.random.normal(kx, (B, S, V), jnp.float32)
    params = init_params(kp, vocab_size=V, embed_dim=E, expansion_factor=EXP, n_heads=NH)
    pos = positional_table(S, E)

    ref = reference_forward(x, pos, params, n_heads=NH, embed_dim=E)

    # f32 matmul operands (v5e default path). TB=8 -> TB*S=128 MXU rows, 2 grid steps.
    out = transformer_encoder(x, pos, params, n_heads=NH, embed_dim=E, block_batch=8)
    jax.block_until_ready(out)
    assert out.shape == (B, 3)
    assert jnp.allclose(out, ref, atol=5e-3, rtol=5e-3), (out, ref)

    # bf16 matmul operands (v6e/v7x MXU path), f32 accumulation; looser tolerance.
    out_bf16 = transformer_encoder(x, pos, params, n_heads=NH, embed_dim=E,
                                   block_batch=8, matmul_dtype=jnp.bfloat16)
    jax.block_until_ready(out_bf16)
    assert out_bf16.shape == (B, 3)
    assert jnp.allclose(out_bf16, ref, atol=5e-2, rtol=5e-2), (out_bf16, ref)

    print("KERNEL_OK")
</pallas_src>

<mosaic_0001>
module attributes {stable_mosaic.version = 11 : i64} {
  func.func @encoder_kernel(%arg0: i32, %arg1: memref<8x16x8xf32, #tpu.memory_space<vmem>>, %arg2: memref<16x64xf32, #tpu.memory_space<vmem>>, %arg3: memref<8x32xf32, #tpu.memory_space<vmem>>, %arg4: memref<1x32xf32, #tpu.memory_space<vmem>>, %arg5: memref<32x64xf32, #tpu.memory_space<vmem>>, %arg6: memref<1x64xf32, #tpu.memory_space<vmem>>, %arg7: memref<64x64xf32, #tpu.memory_space<vmem>>, %arg8: memref<1x64xf32, #tpu.memory_space<vmem>>, %arg9: memref<64x64xf32, #tpu.memory_space<vmem>>, %arg10: memref<1x64xf32, #tpu.memory_space<vmem>>, %arg11: memref<64x64xf32, #tpu.memory_space<vmem>>, %arg12: memref<1x64xf32, #tpu.memory_space<vmem>>, %arg13: memref<64x64xf32, #tpu.memory_space<vmem>>, %arg14: memref<1x64xf32, #tpu.memory_space<vmem>>, %arg15: memref<1x64xf32, #tpu.memory_space<vmem>>, %arg16: memref<1x64xf32, #tpu.memory_space<vmem>>, %arg17: memref<1x64xf32, #tpu.memory_space<vmem>>, %arg18: memref<1x64xf32, #tpu.memory_space<vmem>>, %arg19: memref<64x128xf32, #tpu.memory_space<vmem>>, %arg20: memref<1x128xf32, #tpu.memory_space<vmem>>, %arg21: memref<128x64xf32, #tpu.memory_space<vmem>>, %arg22: memref<1x64xf32, #tpu.memory_space<vmem>>, %arg23: memref<64x1024xf32, #tpu.memory_space<vmem>>, %arg24: memref<1x1024xf32, #tpu.memory_space<vmem>>, %arg25: memref<1024x128xf32, #tpu.memory_space<vmem>>, %arg26: memref<1x128xf32, #tpu.memory_space<vmem>>, %arg27: memref<8x128xf32, #tpu.memory_space<vmem>>) attributes {dimension_semantics = [#tpu.dimension_semantics<parallel>], iteration_bounds = array<i64: 2>, scalar_prefetch = 0 : i64, scratch_operands = 0 : i64, tpu.core_type = #tpu.core_type<tc>, window_params = [{transform_indices = @transform_0, window_bounds = array<i64: 8, 16, 8>}, {pipeline_mode = #tpu.pipeline_mode<synchronous>, transform_indices = @transform_1, window_bounds = array<i64: 16, 64>}, {pipeline_mode = #tpu.pipeline_mode<synchronous>, transform_indices = @transform_2, window_bounds = array<i64: 8, 32>}, {pipeline_mode = #tpu.pipeline_mode<synchronous>, transform_indices = @transform_3, window_bounds = array<i64: 1, 32>}, {pipeline_mode = #tpu.pipeline_mode<synchronous>, transform_indices = @transform_4, window_bounds = array<i64: 32, 64>}, {pipeline_mode = #tpu.pipeline_mode<synchronous>, transform_indices = @transform_5, window_bounds = array<i64: 1, 64>}, {pipeline_mode = #tpu.pipeline_mode<synchronous>, transform_indices = @transform_6, window_bounds = array<i64: 64, 64>}, {pipeline_mode = #tpu.pipeline_mode<synchronous>, transform_indices = @transform_7, window_bounds = array<i64: 1, 64>}, {pipeline_mode = #tpu.pipeline_mode<synchronous>, transform_indices = @transform_8, window_bounds = array<i64: 64, 64>}, {pipeline_mode = #tpu.pipeline_mode<synchronous>, transform_indices = @transform_9, window_bounds = array<i64: 1, 64>}, {pipeline_mode = #tpu.pipeline_mode<synchronous>, transform_indices = @transform_10, window_bounds = array<i64: 64, 64>}, {pipeline_mode = #tpu.pipeline_mode<synchronous>, transform_indices = @transform_11, window_bounds = array<i64: 1, 64>}, {pipeline_mode = #tpu.pipeline_mode<synchronous>, transform_indices = @transform_12, window_bounds = array<i64: 64, 64>}, {pipeline_mode = #tpu.pipeline_mode<synchronous>, transform_indices = @transform_13, window_bounds = array<i64: 1, 64>}, {pipeline_mode = #tpu.pipeline_mode<synchronous>, transform_indices = @transform_14, window_bounds = array<i64: 1, 64>}, {pipeline_mode = #tpu.pipeline_mode<synchronous>, transform_indices = @transform_15, window_bounds = array<i64: 1, 64>}, {pipeline_mode = #tpu.pipeline_mode<synchronous>, transform_indices = @transform_16, window_bounds = array<i64: 1, 64>}, {pipeline_mode = #tpu.pipeline_mode<synchronous>, transform_indices = @transform_17, window_bounds = array<i64: 1, 64>}, {pipeline_mode = #tpu.pipeline_mode<synchronous>, transform_indices = @transform_18, window_bounds = array<i64: 64, 128>}, {pipeline_mode = #tpu.pipeline_mode<synchronous>, transform_indices = @transform_19, window_bounds = array<i64: 1, 128>}, {pipeline_mode = #tpu.pipeline_mode<synchronous>, transform_indices = @transform_20, window_bounds = array<i64: 128, 64>}, {pipeline_mode = #tpu.pipeline_mode<synchronous>, transform_indices = @transform_21, window_bounds = array<i64: 1, 64>}, {pipeline_mode = #tpu.pipeline_mode<synchronous>, transform_indices = @transform_22, window_bounds = array<i64: 64, 1024>}, {pipeline_mode = #tpu.pipeline_mode<synchronous>, transform_indices = @transform_23, window_bounds = array<i64: 1, 1024>}, {pipeline_mode = #tpu.pipeline_mode<synchronous>, transform_indices = @transform_24, window_bounds = array<i64: 1024, 128>}, {pipeline_mode = #tpu.pipeline_mode<synchronous>, transform_indices = @transform_25, window_bounds = array<i64: 1, 128>}, {transform_indices = @transform_26, window_bounds = array<i64: 8, 128>}]} {
    %c0 = arith.constant 0 : index
    %c0_0 = arith.constant 0 : index
    %c0_1 = arith.constant 0 : index
    %0 = vector.load %arg1[%c0, %c0_0, %c0_1] : memref<8x16x8xf32, #tpu.memory_space<vmem>>, vector<8x16x8xf32>
    %1 = vector.shape_cast %0 : vector<8x16x8xf32> to vector<128x8xf32>
    %c0_2 = arith.constant 0 : index
    %c0_3 = arith.constant 0 : index
    %2 = vector.load %arg3[%c0_2, %c0_3] : memref<8x32xf32, #tpu.memory_space<vmem>>, vector<8x32xf32>
    %cst = arith.constant dense<0.000000e+00> : vector<128x32xf32>
    %3 = tpu.matmul %1, %2, %cst {dimension_numbers = #tpu.dot_dimension_numbers<[1], [0], [0], [1], [0, 0, 1, 1], [], []>} : vector<128x8xf32>, vector<8x32xf32>, vector<128x32xf32> -> vector<128x32xf32>
    %c0_4 = arith.constant 0 : index
    %c0_5 = arith.constant 0 : index
    %4 = vector.load %arg4[%c0_4, %c0_5] : memref<1x32xf32, #tpu.memory_space<vmem>>, vector<1x32xf32>
    %5 = vector.broadcast %4 : vector<1x32xf32> to vector<128x32xf32>
    %6 = arith.addf %3, %5 : vector<128x32xf32>
    %cst_6 = arith.constant 0.000000e+00 : f32
    %7 = vector.broadcast %cst_6 : f32 to vector<128x32xf32>
    %8 = arith.maximumf %6, %7 : vector<128x32xf32>
    %c0_7 = arith.constant 0 : index
    %c0_8 = arith.constant 0 : index
    %9 = vector.load %arg5[%c0_7, %c0_8] : memref<32x64xf32, #tpu.memory_space<vmem>>, vector<32x64xf32>
    %cst_9 = arith.constant dense<0.000000e+00> : vector<128x64xf32>
    %10 = tpu.matmul %8, %9, %cst_9 {dimension_numbers = #tpu.dot_dimension_numbers<[1], [0], [0], [1], [0, 0, 1, 1], [], []>} : vector<128x32xf32>, vector<32x64xf32>, vector<128x64xf32> -> vector<128x64xf32>
    %c0_10 = arith.constant 0 : index
    %c0_11 = arith.constant 0 : index
    %11 = vector.load %arg6[%c0_10, %c0_11] : memref<1x64xf32, #tpu.memory_space<vmem>>, vector<1x64xf32>
    %12 = vector.broadcast %11 : vector<1x64xf32> to vector<128x64xf32>
    %13 = arith.addf %10, %12 : vector<128x64xf32>
    %cst_12 = arith.constant 8.000000e+00 : f32
    %14 = vector.broadcast %cst_12 : f32 to vector<128x64xf32>
    %15 = arith.mulf %13, %14 : vector<128x64xf32>
    %16 = vector.shape_cast %15 : vector<128x64xf32> to vector<8x16x64xf32>
    %c0_13 = arith.constant 0 : index
    %c0_14 = arith.constant 0 : index
    %17 = vector.load %arg2[%c0_13, %c0_14] : memref<16x64xf32, #tpu.memory_space<vmem>>, vector<16x64xf32>
    %18 = vector.shape_cast %17 : vector<16x64xf32> to vector<1x16x64xf32>
    %19 = vector.broadcast %18 : vector<1x16x64xf32> to vector<8x16x64xf32>
    %20 = arith.addf %16, %19 : vector<8x16x64xf32>
    %21 = vector.shape_cast %20 : vector<8x16x64xf32> to vector<128x64xf32>
    %c0_15 = arith.constant 0 : index
    %c0_16 = arith.constant 0 : index
    %22 = vector.load %arg7[%c0_15, %c0_16] : memref<64x64xf32, #tpu.memory_space<vmem>>, vector<64x64xf32>
    %cst_17 = arith.constant dense<0.000000e+00> : vector<128x64xf32>
    %23 = tpu.matmul %21, %22, %cst_17 {dimension_numbers = #tpu.dot_dimension_numbers<[1], [0], [0], [1], [0, 0, 1, 1], [], []>} : vector<128x64xf32>, vector<64x64xf32>, vector<128x64xf32> -> vector<128x64xf32>
    %c0_18 = arith.constant 0 : index
    %c0_19 = arith.constant 0 : index
    %24 = vector.load %arg8[%c0_18, %c0_19] : memref<1x64xf32, #tpu.memory_space<vmem>>, vector<1x64xf32>
    %25 = vector.broadcast %24 : vector<1x64xf32> to vector<128x64xf32>
    %26 = arith.addf %23, %25 : vector<128x64xf32>
    %c0_20 = arith.constant 0 : index
    %c0_21 = arith.constant 0 : index
    %27 = vector.load %arg9[%c0_20, %c0_21] : memref<64x64xf32, #tpu.memory_space<vmem>>, vector<64x64xf32>
    %cst_22 = arith.constant dense<0.000000e+00> : vector<128x64xf32>
    %28 = tpu.matmul %21, %27, %cst_22 {dimension_numbers = #tpu.dot_dimension_numbers<[1], [0], [0], [1], [0, 0, 1, 1], [], []>} : vector<128x64xf32>, vector<64x64xf32>, vector<128x64xf32> -> vector<128x64xf32>
    %c0_23 = arith.constant 0 : index
    %c0_24 = arith.constant 0 : index
    %29 = vector.load %arg10[%c0_23, %c0_24] : memref<1x64xf32, #tpu.memory_space<vmem>>, vector<1x64xf32>
    %30 = vector.broadcast %29 : vector<1x64xf32> to vector<128x64xf32>
    %31 = arith.addf %28, %30 : vector<128x64xf32>
    %c0_25 = arith.constant 0 : index
    %c0_26 = arith.constant 0 : index
    %32 = vector.load %arg11[%c0_25, %c0_26] : memref<64x64xf32, #tpu.memory_space<vmem>>, vector<64x64xf32>
    %cst_27 = arith.constant dense<0.000000e+00> : vector<128x64xf32>
    %33 = tpu.matmul %21, %32, %cst_27 {dimension_numbers = #tpu.dot_dimension_numbers<[1], [0], [0], [1], [0, 0, 1, 1], [], []>} : vector<128x64xf32>, vector<64x64xf32>, vector<128x64xf32> -> vector<128x64xf32>
    %c0_28 = arith.constant 0 : index
    %c0_29 = arith.constant 0 : index
    %34 = vector.load %arg12[%c0_28, %c0_29] : memref<1x64xf32, #tpu.memory_space<vmem>>, vector<1x64xf32>
    %35 = vector.broadcast %34 : vector<1x64xf32> to vector<128x64xf32>
    %36 = arith.addf %33, %35 : vector<128x64xf32>
    %37 = vector.shape_cast %26 : vector<128x64xf32> to vector<8x16x64xf32>
    %38 = vector.extract_strided_slice %37 {offsets = [0, 0, 0], sizes = [8, 16, 16], strides = [1, 1, 1]} : vector<8x16x64xf32> to vector<8x16x16xf32>
    %39 = vector.extract_strided_slice %37 {offsets = [0, 0, 16], sizes = [8, 16, 16], strides = [1, 1, 1]} : vector<8x16x64xf32> to vector<8x16x16xf32>
    %40 = vector.extract_strided_slice %37 {offsets = [0, 0, 32], sizes = [8, 16, 16], strides = [1, 1, 1]} : vector<8x16x64xf32> to vector<8x16x16xf32>
    %41 = vector.extract_strided_slice %37 {offsets = [0, 0, 48], sizes = [8, 16, 16], strides = [1, 1, 1]} : vector<8x16x64xf32> to vector<8x16x16xf32>
    %42 = vector.shape_cast %38 : vector<8x16x16xf32> to vector<1x8x16x16xf32>
    %43 = vector.shape_cast %39 : vector<8x16x16xf32> to vector<1x8x16x16xf32>
    %44 = vector.shape_cast %40 : vector<8x16x16xf32> to vector<1x8x16x16xf32>
    %45 = vector.shape_cast %41 : vector<8x16x16xf32> to vector<1x8x16x16xf32>
    %46 = tpu.concatenate %42, %43, %44, %45 in 0 : vector<1x8x16x16xf32>, vector<1x8x16x16xf32>, vector<1x8x16x16xf32>, vector<1x8x16x16xf32> -> vector<4x8x16x16xf32>
    %47 = vector.shape_cast %46 : vector<4x8x16x16xf32> to vector<32x16x16xf32>
    %48 = vector.shape_cast %31 : vector<128x64xf32> to vector<8x16x64xf32>
    %49 = vector.extract_strided_slice %48 {offsets = [0, 0, 0], sizes = [8, 16, 16], strides = [1, 1, 1]} : vector<8x16x64xf32> to vector<8x16x16xf32>
    %50 = vector.extract_strided_slice %48 {offsets = [0, 0, 16], sizes = [8, 16, 16], strides = [1, 1, 1]} : vector<8x16x64xf32> to vector<8x16x16xf32>
    %51 = vector.extract_strided_slice %48 {offsets = [0, 0, 32], sizes = [8, 16, 16], strides = [1, 1, 1]} : vector<8x16x64xf32> to vector<8x16x16xf32>
    %52 = vector.extract_strided_slice %48 {offsets = [0, 0, 48], sizes = [8, 16, 16], strides = [1, 1, 1]} : vector<8x16x64xf32> to vector<8x16x16xf32>
    %53 = vector.shape_cast %49 : vector<8x16x16xf32> to vector<1x8x16x16xf32>
    %54 = vector.shape_cast %50 : vector<8x16x16xf32> to vector<1x8x16x16xf32>
    %55 = vector.shape_cast %51 : vector<8x16x16xf32> to vector<1x8x16x16xf32>
    %56 = vector.shape_cast %52 : vector<8x16x16xf32> to vector<1x8x16x16xf32>
    %57 = tpu.concatenate %53, %54, %55, %56 in 0 : vector<1x8x16x16xf32>, vector<1x8x16x16xf32>, vector<1x8x16x16xf32>, vector<1x8x16x16xf32> -> vector<4x8x16x16xf32>
    %58 = vector.shape_cast %57 : vector<4x8x16x16xf32> to vector<32x16x16xf32>
    %59 = vector.shape_cast %36 : vector<128x64xf32> to vector<8x16x64xf32>
    %60 = vector.extract_strided_slice %59 {offsets = [0, 0, 0], sizes = [8, 16, 16], strides = [1, 1, 1]} : vector<8x16x64xf32> to vector<8x16x16xf32>
    %61 = vector.extract_strided_slice %59 {offsets = [0, 0, 16], sizes = [8, 16, 16], strides = [1, 1, 1]} : vector<8x16x64xf32> to vector<8x16x16xf32>
    %62 = vector.extract_strided_slice %59 {offsets = [0, 0, 32], sizes = [8, 16, 16], strides = [1, 1, 1]} : vector<8x16x64xf32> to vector<8x16x16xf32>
    %63 = vector.extract_strided_slice %59 {offsets = [0, 0, 48], sizes = [8, 16, 16], strides = [1, 1, 1]} : vector<8x16x64xf32> to vector<8x16x16xf32>
    %64 = vector.shape_cast %60 : vector<8x16x16xf32> to vector<1x8x16x16xf32>
    %65 = vector.shape_cast %61 : vector<8x16x16xf32> to vector<1x8x16x16xf32>
    %66 = vector.shape_cast %62 : vector<8x16x16xf32> to vector<1x8x16x16xf32>
    %67 = vector.shape_cast %63 : vector<8x16x16xf32> to vector<1x8x16x16xf32>
    %68 = tpu.concatenate %64, %65, %66, %67 in 0 : vector<1x8x16x16xf32>, vector<1x8x16x16xf32>, vector<1x8x16x16xf32>, vector<1x8x16x16xf32> -> vector<4x8x16x16xf32>
    %69 = vector.shape_cast %68 : vector<4x8x16x16xf32> to vector<32x16x16xf32>
    "tpu.trace_start"() <{level = 10 : i32, message = "bsd,btd->bst"}> : () -> ()
    %cst_30 = arith.constant dense<0.000000e+00> : vector<32x16x16xf32>
    %70 = tpu.matmul %58, %47, %cst_30 {dimension_numbers = #tpu.dot_dimension_numbers<[2], [2], [1], [1], [0, 0, 0, 1, 1, 1], [0], [0]>} : vector<32x16x16xf32>, vector<32x16x16xf32>, vector<32x16x16xf32> -> vector<32x16x16xf32>
    "tpu.trace_stop"() : () -> ()
    %cst_31 = arith.constant 2.500000e-01 : f32
    %71 = vector.broadcast %cst_31 : f32 to vector<32x16x16xf32>
    %72 = arith.mulf %70, %71 : vector<32x16x16xf32>
    %cst_32 = arith.constant dense<0xFF800000> : vector<32x16xf32>
    %73 = vector.multi_reduction <maximumf>, %72, %cst_32 [2] : vector<32x16x16xf32> to vector<32x16xf32>
    %74 = vector.shape_cast %73 : vector<32x16xf32> to vector<32x16x1xf32>
    %75 = vector.broadcast %74 : vector<32x16x1xf32> to vector<32x16x16xf32>
    %76 = arith.subf %72, %75 : vector<32x16x16xf32>
    %77 = math.exp %76 : vector<32x16x16xf32>
    %cst_33 = arith.constant dense<0.000000e+00> : vector<32x16xf32>
    %78 = vector.multi_reduction <add>, %77, %cst_33 [2] : vector<32x16x16xf32> to vector<32x16xf32>
    %79 = vector.shape_cast %78 : vector<32x16xf32> to vector<32x16x1xf32>
    %80 = tpu.reciprocal %79 {approx = true} : vector<32x16x1xf32> -> vector<32x16x1xf32>
    %81 = vector.broadcast %80 : vector<32x16x1xf32> to vector<32x16x16xf32>
    %82 = arith.mulf %77, %81 : vector<32x16x16xf32>
    "tpu.trace_start"() <{level = 10 : i32, message = "bst,btd->bsd"}> : () -> ()
    %cst_34 = arith.constant dense<0.000000e+00> : vector<32x16x16xf32>
    %83 = tpu.matmul %82, %69, %cst_34 {dimension_numbers = #tpu.dot_dimension_numbers<[2], [1], [1], [2], [0, 0, 0, 1, 1, 2], [0], [0]>} : vector<32x16x16xf32>, vector<32x16x16xf32>, vector<32x16x16xf32> -> vector<32x16x16xf32>
    "tpu.trace_stop"() : () -> ()
    %84 = vector.shape_cast %83 : vector<32x16x16xf32> to vector<4x8x16x16xf32>
    %85 = vector.extract_strided_slice %84 {offsets = [0, 0, 0, 0], sizes = [1, 8, 16, 16], strides = [1, 1, 1, 1]} : vector<4x8x16x16xf32> to vector<1x8x16x16xf32>
    %86 = vector.shape_cast %85 : vector<1x8x16x16xf32> to vector<8x16x16xf32>
    %87 = vector.extract_strided_slice %84 {offsets = [1, 0, 0, 0], sizes = [1, 8, 16, 16], strides = [1, 1, 1, 1]} : vector<4x8x16x16xf32> to vector<1x8x16x16xf32>
    %88 = vector.shape_cast %87 : vector<1x8x16x16xf32> to vector<8x16x16xf32>
    %89 = vector.extract_strided_slice %84 {offsets = [2, 0, 0, 0], sizes = [1, 8, 16, 16], strides = [1, 1, 1, 1]} : vector<4x8x16x16xf32> to vector<1x8x16x16xf32>
    %90 = vector.shape_cast %89 : vector<1x8x16x16xf32> to vector<8x16x16xf32>
    %91 = vector.extract_strided_slice %84 {offsets = [3, 0, 0, 0], sizes = [1, 8, 16, 16], strides = [1, 1, 1, 1]} : vector<4x8x16x16xf32> to vector<1x8x16x16xf32>
    %92 = vector.shape_cast %91 : vector<1x8x16x16xf32> to vector<8x16x16xf32>
    %93 = tpu.concatenate %86, %88, %90, %92 in 2 : vector<8x16x16xf32>, vector<8x16x16xf32>, vector<8x16x16xf32>, vector<8x16x16xf32> -> vector<8x16x64xf32>
    %94 = vector.shape_cast %93 : vector<8x16x64xf32> to vector<128x64xf32>
    %c0_35 = arith.constant 0 : index
    %c0_36 = arith.constant 0 : index
    %95 = vector.load %arg13[%c0_35, %c0_36] : memref<64x64xf32, #tpu.memory_space<vmem>>, vector<64x64xf32>
    %cst_37 = arith.constant dense<0.000000e+00> : vector<128x64xf32>
    %96 = tpu.matmul %94, %95, %cst_37 {dimension_numbers = #tpu.dot_dimension_numbers<[1], [0], [0], [1], [0, 0, 1, 1], [], []>} : vector<128x64xf32>, vector<64x64xf32>, vector<128x64xf32> -> vector<128x64xf32>
    %c0_38 = arith.constant 0 : index
    %c0_39 = arith.constant 0 : index
    %97 = vector.load %arg14[%c0_38, %c0_39] : memref<1x64xf32, #tpu.memory_space<vmem>>, vector<1x64xf32>
    %98 = vector.broadcast %97 : vector<1x64xf32> to vector<128x64xf32>
    %99 = arith.addf %96, %98 : vector<128x64xf32>
    %100 = arith.addf %99, %21 : vector<128x64xf32>
    %cst_40 = arith.constant dense<0.000000e+00> : vector<128xf32>
    %101 = vector.multi_reduction <add>, %100, %cst_40 [1] : vector<128x64xf32> to vector<128xf32>
    %102 = vector.shape_cast %101 : vector<128xf32> to vector<128x1xf32>
    %cst_41 = arith.constant 6.400000e+01 : f32
    %103 = vector.broadcast %cst_41 : f32 to vector<128x1xf32>
    %104 = arith.divf %102, %103 : vector<128x1xf32>
    %105 = vector.broadcast %104 : vector<128x1xf32> to vector<128x64xf32>
    %106 = arith.subf %100, %105 : vector<128x64xf32>
    %107 = arith.mulf %106, %106 : vector<128x64xf32>
    %cst_42 = arith.constant dense<0.000000e+00> : vector<128xf32>
    %108 = vector.multi_reduction <add>, %107, %cst_42 [1] : vector<128x64xf32> to vector<128xf32>
    %109 = vector.shape_cast %108 : vector<128xf32> to vector<128x1xf32>
    %cst_43 = arith.constant 6.400000e+01 : f32
    %110 = vector.broadcast %cst_43 : f32 to vector<128x1xf32>
    %111 = arith.divf %109, %110 : vector<128x1xf32>
    %112 = vector.broadcast %104 : vector<128x1xf32> to vector<128x64xf32>
    %113 = arith.subf %100, %112 : vector<128x64xf32>
    %cst_44 = arith.constant 9.99999974E-6 : f32
    %114 = vector.broadcast %cst_44 : f32 to vector<128x1xf32>
    %115 = arith.addf %111, %114 : vector<128x1xf32>
    %116 = math.rsqrt %115 : vector<128x1xf32>
    %117 = vector.broadcast %116 : vector<128x1xf32> to vector<128x64xf32>
    %118 = arith.mulf %113, %117 : vector<128x64xf32>
    %c0_45 = arith.constant 0 : index
    %c0_46 = arith.constant 0 : index
    %119 = vector.load %arg15[%c0_45, %c0_46] : memref<1x64xf32, #tpu.memory_space<vmem>>, vector<1x64xf32>
    %120 = vector.broadcast %119 : vector<1x64xf32> to vector<128x64xf32>
    %121 = arith.mulf %118, %120 : vector<128x64xf32>
    %c0_47 = arith.constant 0 : index
    %c0_48 = arith.constant 0 : index
    %122 = vector.load %arg16[%c0_47, %c0_48] : memref<1x64xf32, #tpu.memory_space<vmem>>, vector<1x64xf32>
    %123 = vector.broadcast %122 : vector<1x64xf32> to vector<128x64xf32>
    %124 = arith.addf %121, %123 : vector<128x64xf32>
    %c0_49 = arith.constant 0 : index
    %c0_50 = arith.constant 0 : index
    %125 = vector.load %arg19[%c0_49, %c0_50] : memref<64x128xf32, #tpu.memory_space<vmem>>, vector<64x128xf32>
    %cst_51 = arith.constant dense<0.000000e+00> : vector<128x128xf32>
    %126 = tpu.matmul %124, %125, %cst_51 {dimension_numbers = #tpu.dot_dimension_numbers<[1], [0], [0], [1], [0, 0, 1, 1], [], []>} : vector<128x64xf32>, vector<64x128xf32>, vector<128x128xf32> -> vector<128x128xf32>
    %c0_52 = arith.constant 0 : index
    %c0_53 = arith.constant 0 : index
    %127 = vector.load %arg20[%c0_52, %c0_53] : memref<1x128xf32, #tpu.memory_space<vmem>>, vector<1x128xf32>
    %128 = vector.broadcast %127 : vector<1x128xf32> to vector<128x128xf32>
    %129 = arith.addf %126, %128 : vector<128x128xf32>
    %cst_54 = arith.constant 0.000000e+00 : f32
    %130 = vector.broadcast %cst_54 : f32 to vector<128x128xf32>
    %131 = arith.maximumf %129, %130 : vector<128x128xf32>
    %c0_55 = arith.constant 0 : index
    %c0_56 = arith.constant 0 : index
    %132 = vector.load %arg21[%c0_55, %c0_56] : memref<128x64xf32, #tpu.memory_space<vmem>>, vector<128x64xf32>
    %cst_57 = arith.constant dense<0.000000e+00> : vector<128x64xf32>
    %133 = tpu.matmul %131, %132, %cst_57 {dimension_numbers = #tpu.dot_dimension_numbers<[1], [0], [0], [1], [0, 0, 1, 1], [], []>} : vector<128x128xf32>, vector<128x64xf32>, vector<128x64xf32> -> vector<128x64xf32>
    %c0_58 = arith.constant 0 : index
    %c0_59 = arith.constant 0 : index
    %134 = vector.load %arg22[%c0_58, %c0_59] : memref<1x64xf32, #tpu.memory_space<vmem>>, vector<1x64xf32>
    %135 = vector.broadcast %134 : vector<1x64xf32> to vector<128x64xf32>
    %136 = arith.addf %133, %135 : vector<128x64xf32>
    %137 = arith.addf %136, %124 : vector<128x64xf32>
    %cst_60 = arith.constant dense<0.000000e+00> : vector<128xf32>
    %138 = vector.multi_reduction <add>, %137, %cst_60 [1] : vector<128x64xf32> to vector<128xf32>
    %139 = vector.shape_cast %138 : vector<128xf32> to vector<128x1xf32>
    %cst_61 = arith.constant 6.400000e+01 : f32
    %140 = vector.broadcast %cst_61 : f32 to vector<128x1xf32>
    %141 = arith.divf %139, %140 : vector<128x1xf32>
    %142 = vector.broadcast %141 : vector<128x1xf32> to vector<128x64xf32>
    %143 = arith.subf %137, %142 : vector<128x64xf32>
    %144 = arith.mulf %143, %143 : vector<128x64xf32>
    %cst_62 = arith.constant dense<0.000000e+00> : vector<128xf32>
    %145 = vector.multi_reduction <add>, %144, %cst_62 [1] : vector<128x64xf32> to vector<128xf32>
    %146 = vector.shape_cast %145 : vector<128xf32> to vector<128x1xf32>
    %cst_63 = arith.constant 6.400000e+01 : f32
    %147 = vector.broadcast %cst_63 : f32 to vector<128x1xf32>
    %148 = arith.divf %146, %147 : vector<128x1xf32>
    %149 = vector.broadcast %141 : vector<128x1xf32> to vector<128x64xf32>
    %150 = arith.subf %137, %149 : vector<128x64xf32>
    %cst_64 = arith.constant 9.99999974E-6 : f32
    %151 = vector.broadcast %cst_64 : f32 to vector<128x1xf32>
    %152 = arith.addf %148, %151 : vector<128x1xf32>
    %153 = math.rsqrt %152 : vector<128x1xf32>
    %154 = vector.broadcast %153 : vector<128x1xf32> to vector<128x64xf32>
    %155 = arith.mulf %150, %154 : vector<128x64xf32>
    %c0_65 = arith.constant 0 : index
    %c0_66 = arith.constant 0 : index
    %156 = vector.load %arg17[%c0_65, %c0_66] : memref<1x64xf32, #tpu.memory_space<vmem>>, vector<1x64xf32>
    %157 = vector.broadcast %156 : vector<1x64xf32> to vector<128x64xf32>
    %158 = arith.mulf %155, %157 : vector<128x64xf32>
    %c0_67 = arith.constant 0 : index
    %c0_68 = arith.constant 0 : index
    %159 = vector.load %arg18[%c0_67, %c0_68] : memref<1x64xf32, #tpu.memory_space<vmem>>, vector<1x64xf32>
    %160 = vector.broadcast %159 : vector<1x64xf32> to vector<128x64xf32>
    %161 = arith.addf %158, %160 : vector<128x64xf32>
    %162 = vector.shape_cast %161 : vector<128x64xf32> to vector<8x16x64xf32>
    %cst_69 = arith.constant dense<0xFF800000> : vector<8x64xf32>
    %163 = vector.multi_reduction <maximumf>, %162, %cst_69 [1] : vector<8x16x64xf32> to vector<8x64xf32>
    %c0_70 = arith.constant 0 : index
    %c0_71 = arith.constant 0 : index
    %164 = vector.load %arg23[%c0_70, %c0_71] : memref<64x1024xf32, #tpu.memory_space<vmem>>, vector<64x1024xf32>
    %cst_72 = arith.constant dense<0.000000e+00> : vector<8x1024xf32>
    %165 = tpu.matmul %163, %164, %cst_72 {dimension_numbers = #tpu.dot_dimension_numbers<[1], [0], [0], [1], [0, 0, 1, 1], [], []>} : vector<8x64xf32>, vector<64x1024xf32>, vector<8x1024xf32> -> vector<8x1024xf32>
    %c0_73 = arith.constant 0 : index
    %c0_74 = arith.constant 0 : index
    %166 = vector.load %arg24[%c0_73, %c0_74] : memref<1x1024xf32, #tpu.memory_space<vmem>>, vector<1x1024xf32>
    %167 = vector.broadcast %166 : vector<1x1024xf32> to vector<8x1024xf32>
    %168 = arith.addf %165, %167 : vector<8x1024xf32>
    %cst_75 = arith.constant 0.000000e+00 : f32
    %169 = vector.broadcast %cst_75 : f32 to vector<8x1024xf32>
    %170 = arith.maximumf %168, %169 : vector<8x1024xf32>
    %c0_76 = arith.constant 0 : index
    %c0_77 = arith.constant 0 : index
    %171 = vector.load %arg25[%c0_76, %c0_77] : memref<1024x128xf32, #tpu.memory_space<vmem>>, vector<1024x128xf32>
    %cst_78 = arith.constant dense<0.000000e+00> : vector<8x128xf32>
    %172 = tpu.matmul %170, %171, %cst_78 {dimension_numbers = #tpu.dot_dimension_numbers<[1], [0], [0], [1], [0, 0, 1, 1], [], []>} : vector<8x1024xf32>, vector<1024x128xf32>, vector<8x128xf32> -> vector<8x128xf32>
    %c0_79 = arith.constant 0 : index
    %c0_80 = arith.constant 0 : index
    %173 = vector.load %arg26[%c0_79, %c0_80] : memref<1x128xf32, #tpu.memory_space<vmem>>, vector<1x128xf32>
    %174 = vector.broadcast %173 : vector<1x128xf32> to vector<8x128xf32>
    %175 = arith.addf %172, %174 : vector<8x128xf32>
    %cst_81 = arith.constant dense<0xFF800000> : vector<8xf32>
    %176 = vector.multi_reduction <maximumf>, %175, %cst_81 [1] : vector<8x128xf32> to vector<8xf32>
    %177 = vector.shape_cast %176 : vector<8xf32> to vector<8x1xf32>
    %178 = vector.broadcast %177 : vector<8x1xf32> to vector<8x128xf32>
    %179 = arith.subf %175, %178 : vector<8x128xf32>
    %180 = math.exp %179 : vector<8x128xf32>
    %cst_82 = arith.constant dense<0.000000e+00> : vector<8xf32>
    %181 = vector.multi_reduction <add>, %180, %cst_82 [1] : vector<8x128xf32> to vector<8xf32>
    %182 = vector.shape_cast %181 : vector<8xf32> to vector<8x1xf32>
    %183 = tpu.reciprocal %182 {approx = true} : vector<8x1xf32> -> vector<8x1xf32>
    %184 = vector.broadcast %183 : vector<8x1xf32> to vector<8x128xf32>
    %185 = arith.mulf %180, %184 : vector<8x128xf32>
    %c0_83 = arith.constant 0 : index
    %c0_84 = arith.constant 0 : index
    %186 = vector.load %arg27[%c0_83, %c0_84] : memref<8x128xf32, #tpu.memory_space<vmem>>, vector<8x128xf32>
    tpu.vector_store %arg27[%c0_83, %c0_84], %185 {strides = array<i32>} : memref<8x128xf32, #tpu.memory_space<vmem>>, vector<8x128xf32>,
    return
  }
  func.func @transform_0(%arg0: i32) -> (i32, i32, i32) {
    %c0_i32 = arith.constant 0 : i32
    %c0_i32_0 = arith.constant 0 : i32
    %c0_i32_1 = arith.constant 0 : i32
    return %arg0, %c0_i32, %c0_i32_0 : i32, i32, i32
  }
  func.func @transform_1(%arg0: i32) -> (i32, i32) {
    %c0_i32 = arith.constant 0 : i32
    %c0_i32_0 = arith.constant 0 : i32
    %c0_i32_1 = arith.constant 0 : i32
    return %c0_i32, %c0_i32_0 : i32, i32
  }
  func.func @transform_2(%arg0: i32) -> (i32, i32) {
    %c0_i32 = arith.constant 0 : i32
    %c0_i32_0 = arith.constant 0 : i32
    %c0_i32_1 = arith.constant 0 : i32
    return %c0_i32, %c0_i32_0 : i32, i32
  }
  func.func @transform_3(%arg0: i32) -> (i32, i32) {
    %c0_i32 = arith.constant 0 : i32
    %c0_i32_0 = arith.constant 0 : i32
    %c0_i32_1 = arith.constant 0 : i32
    return %c0_i32, %c0_i32_0 : i32, i32
  }
  func.func @transform_4(%arg0: i32) -> (i32, i32) {
    %c0_i32 = arith.constant 0 : i32
    %c0_i32_0 = arith.constant 0 : i32
    %c0_i32_1 = arith.constant 0 : i32
    return %c0_i32, %c0_i32_0 : i32, i32
  }
  func.func @transform_5(%arg0: i32) -> (i32, i32) {
    %c0_i32 = arith.constant 0 : i32
    %c0_i32_0 = arith.constant 0 : i32
    %c0_i32_1 = arith.constant 0 : i32
    return %c0_i32, %c0_i32_0 : i32, i32
  }
  func.func @transform_6(%arg0: i32) -> (i32, i32) {
    %c0_i32 = arith.constant 0 : i32
    %c0_i32_0 = arith.constant 0 : i32
    %c0_i32_1 = arith.constant 0 : i32
    return %c0_i32, %c0_i32_0 : i32, i32
  }
  func.func @transform_7(%arg0: i32) -> (i32, i32) {
    %c0_i32 = arith.constant 0 : i32
    %c0_i32_0 = arith.constant 0 : i32
    %c0_i32_1 = arith.constant 0 : i32
    return %c0_i32, %c0_i32_0 : i32, i32
  }
  func.func @transform_8(%arg0: i32) -> (i32, i32) {
    %c0_i32 = arith.constant 0 : i32
    %c0_i32_0 = arith.constant 0 : i32
    %c0_i32_1 = arith.constant 0 : i32
    return %c0_i32, %c0_i32_0 : i32, i32
  }
  func.func @transform_9(%arg0: i32) -> (i32, i32) {
    %c0_i32 = arith.constant 0 : i32
    %c0_i32_0 = arith.constant 0 : i32
    %c0_i32_1 = arith.constant 0 : i32
    return %c0_i32, %c0_i32_0 : i32, i32
  }
  func.func @transform_10(%arg0: i32) -> (i32, i32) {
    %c0_i32 = arith.constant 0 : i32
    %c0_i32_0 = arith.constant 0 : i32
    %c0_i32_1 = arith.constant 0 : i32
    return %c0_i32, %c0_i32_0 : i32, i32
  }
  func.func @transform_11(%arg0: i32) -> (i32, i32) {
    %c0_i32 = arith.constant 0 : i32
    %c0_i32_0 = arith.constant 0 : i32
    %c0_i32_1 = arith.constant 0 : i32
    return %c0_i32, %c0_i32_0 : i32, i32
  }
  func.func @transform_12(%arg0: i32) -> (i32, i32) {
    %c0_i32 = arith.constant 0 : i32
    %c0_i32_0 = arith.constant 0 : i32
    %c0_i32_1 = arith.constant 0 : i32
    return %c0_i32, %c0_i32_0 : i32, i32
  }
  func.func @transform_13(%arg0: i32) -> (i32, i32) {
    %c0_i32 = arith.constant 0 : i32
    %c0_i32_0 = arith.constant 0 : i32
    %c0_i32_1 = arith.constant 0 : i32
    return %c0_i32, %c0_i32_0 : i32, i32
  }
  func.func @transform_14(%arg0: i32) -> (i32, i32) {
    %c0_i32 = arith.constant 0 : i32
    %c0_i32_0 = arith.constant 0 : i32
    %c0_i32_1 = arith.constant 0 : i32
    return %c0_i32, %c0_i32_0 : i32, i32
  }
  func.func @transform_15(%arg0: i32) -> (i32, i32) {
    %c0_i32 = arith.constant 0 : i32
    %c0_i32_0 = arith.constant 0 : i32
    %c0_i32_1 = arith.constant 0 : i32
    return %c0_i32, %c0_i32_0 : i32, i32
  }
  func.func @transform_16(%arg0: i32) -> (i32, i32) {
    %c0_i32 = arith.constant 0 : i32
    %c0_i32_0 = arith.constant 0 : i32
    %c0_i32_1 = arith.constant 0 : i32
    return %c0_i32, %c0_i32_0 : i32, i32
  }
  func.func @transform_17(%arg0: i32) -> (i32, i32) {
    %c0_i32 = arith.constant 0 : i32
    %c0_i32_0 = arith.constant 0 : i32
    %c0_i32_1 = arith.constant 0 : i32
    return %c0_i32, %c0_i32_0 : i32, i32
  }
  func.func @transform_18(%arg0: i32) -> (i32, i32) {
    %c0_i32 = arith.constant 0 : i32
    %c0_i32_0 = arith.constant 0 : i32
    %c0_i32_1 = arith.constant 0 : i32
    return %c0_i32, %c0_i32_0 : i32, i32
  }
  func.func @transform_19(%arg0: i32) -> (i32, i32) {
    %c0_i32 = arith.constant 0 : i32
    %c0_i32_0 = arith.constant 0 : i32
    %c0_i32_1 = arith.constant 0 : i32
    return %c0_i32, %c0_i32_0 : i32, i32
  }
  func.func @transform_20(%arg0: i32) -> (i32, i32) {
    %c0_i32 = arith.constant 0 : i32
    %c0_i32_0 = arith.constant 0 : i32
    %c0_i32_1 = arith.constant 0 : i32
    return %c0_i32, %c0_i32_0 : i32, i32
  }
  func.func @transform_21(%arg0: i32) -> (i32, i32) {
    %c0_i32 = arith.constant 0 : i32
    %c0_i32_0 = arith.constant 0 : i32
    %c0_i32_1 = arith.constant 0 : i32
    return %c0_i32, %c0_i32_0 : i32, i32
  }
  func.func @transform_22(%arg0: i32) -> (i32, i32) {
    %c0_i32 = arith.constant 0 : i32
    %c0_i32_0 = arith.constant 0 : i32
    %c0_i32_1 = arith.constant 0 : i32
    return %c0_i32, %c0_i32_0 : i32, i32
  }
  func.func @transform_23(%arg0: i32) -> (i32, i32) {
    %c0_i32 = arith.constant 0 : i32
    %c0_i32_0 = arith.constant 0 : i32
    %c0_i32_1 = arith.constant 0 : i32
    return %c0_i32, %c0_i32_0 : i32, i32
  }
  func.func @transform_24(%arg0: i32) -> (i32, i32) {
    %c0_i32 = arith.constant 0 : i32
    %c0_i32_0 = arith.constant 0 : i32
    %c0_i32_1 = arith.constant 0 : i32
    return %c0_i32, %c0_i32_0 : i32, i32
  }
  func.func @transform_25(%arg0: i32) -> (i32, i32) {
    %c0_i32 = arith.constant 0 : i32
    %c0_i32_0 = arith.constant 0 : i32
    %c0_i32_1 = arith.constant 0 : i32
    return %c0_i32, %c0_i32_0 : i32, i32
  }
  func.func @transform_26(%arg0: i32) -> (i32, i32) {
    %c0_i32 = arith.constant 0 : i32
    %c0_i32_0 = arith.constant 0 : i32
    return %arg0, %c0_i32 : i32, i32
  }
}

</mosaic_0001>

<llo_original>
// kernel: tpu_custom_call.1
$region0: #{tpu_custom_call.1}
  #allocation0 [shape = 'u32[]', space=smem, size = 0x4, offset = 0x4, fixed_abs, tag = 'smem constant byte address 0x4 - core index']
  #allocation1 [shape = 'u32[144,128]{1,0:T(1,128)}', space=vmem, size = 0x12000, scoped, tag = 'internal scratch']
  %s0 = inlined_call_operand.vmem [shape: f32[16,16,8], index: 0, kind: input, shape index: {}]
  %s1 = inlined_call_operand.hbm [shape: f32[16,64], index: 1, kind: input, shape index: {}]
  %s2 = inlined_call_operand.vmem [shape: f32[8,32], index: 2, kind: input, shape index: {}]
  %s3 = inlined_call_operand.hbm [shape: f32[1,32], index: 3, kind: input, shape index: {}]
  %s4 = inlined_call_operand.vmem [shape: f32[32,64], index: 4, kind: input, shape index: {}]
  %s5 = inlined_call_operand.hbm [shape: f32[1,64], index: 5, kind: input, shape index: {}]
  %s6 = inlined_call_operand.vmem [shape: f32[64,64], index: 6, kind: input, shape index: {}]
  %s7 = inlined_call_operand.hbm [shape: f32[1,64], index: 7, kind: input, shape index: {}]
  %s8 = inlined_call_operand.hbm [shape: f32[64,64], index: 8, kind: input, shape index: {}]
  %s9 = inlined_call_operand.hbm [shape: f32[1,64], index: 9, kind: input, shape index: {}]
  %s10 = inlined_call_operand.hbm [shape: f32[64,64], index: 10, kind: input, shape index: {}]
  %s11 = inlined_call_operand.hbm [shape: f32[1,64], index: 11, kind: input, shape index: {}]
  %s12 = inlined_call_operand.hbm [shape: f32[64,64], index: 12, kind: input, shape index: {}]
  %s13 = inlined_call_operand.hbm [shape: f32[1,64], index: 13, kind: input, shape index: {}]
  %s14 = inlined_call_operand.hbm [shape: f32[1,64], index: 14, kind: input, shape index: {}]
  %s15 = inlined_call_operand.hbm [shape: f32[1,64], index: 15, kind: input, shape index: {}]
  %s16 = inlined_call_operand.hbm [shape: f32[1,64], index: 16, kind: input, shape index: {}]
  %s17 = inlined_call_operand.hbm [shape: f32[1,64], index: 17, kind: input, shape index: {}]
  %s18 = inlined_call_operand.hbm [shape: f32[64,128], index: 18, kind: input, shape index: {}]
  %s19 = inlined_call_operand.hbm [shape: f32[1,128], index: 19, kind: input, shape index: {}]
  %s20 = inlined_call_operand.vmem [shape: f32[128,64], index: 20, kind: input, shape index: {}]
  %s21 = inlined_call_operand.hbm [shape: f32[1,64], index: 21, kind: input, shape index: {}]
  %s22 = inlined_call_operand.vmem [shape: f32[64,1024], index: 22, kind: input, shape index: {}]
  %s23 = inlined_call_operand.hbm [shape: f32[1,1024], index: 23, kind: input, shape index: {}]
  %s24 = inlined_call_operand.hbm [shape: f32[1024,128], index: 24, kind: input, shape index: {}]
  %s25 = inlined_call_operand.vmem [shape: f32[1,128], index: 25, kind: input, shape index: {}]
  %s26 = inlined_call_operand.hbm [shape: f32[16,128], index: 26, kind: output, shape index: {}]
  %s27 = sld [smem:[#allocation0]]
  $region213: #{tpu_custom_call.1} parent=0
    _
  %s29 = ssub.s32 1, %s27
  %s30 = scalar_select 0, %s29, %s27
  $region1: #{tpu_custom_call.1} parent=0
    #allocation2 [shape = 'u8[8192]{0}', space=vmem, size = 0x2000, scoped, tag = 'input window, operand 1, single buffered']
    #allocation3 [shape = 's32[2]{0}', space=sflag, size = 0x8, scoped, tag = 'scoped memory for tpu_custom_call.1']
    #allocation4 [shape = 's32[2]{0}', space=sflag, size = 0x8, scoped, tag = 'scoped memory for tpu_custom_call.1']
    #allocation5 [shape = 'u8[512]{0}', space=vmem, size = 0x400, scoped, tag = 'input window, operand 3, single buffered']
    #allocation6 [shape = 's32[1]{0}', space=sflag, size = 0x4, scoped, tag = 'scoped memory for tpu_custom_call.1']
    #allocation7 [shape = 'u8[512]{0}', space=vmem, size = 0x400, scoped, tag = 'input window, operand 5, single buffered']
    #allocation8 [shape = 'u8[512]{0}', space=vmem, size = 0x400, scoped, tag = 'input window, operand 7, single buffered']
    #allocation9 [shape = 's32[1]{0}', space=sflag, size = 0x4, scoped, tag = 'scoped memory for tpu_custom_call.1']
    #allocation10 [shape = 'u8[32768]{0}', space=vmem, size = 0x8000, scoped, tag = 'input window, operand 8, single buffered']
    #allocation11 [shape = 'u8[512]{0}', space=vmem, size = 0x400, scoped, tag = 'input window, operand 9, single buffered']
    #allocation12 [shape = 's32[1]{0}', space=sflag, size = 0x4, scoped, tag = 'scoped memory for tpu_custom_call.1']
    #allocation13 [shape = 'u8[32768]{0}', space=vmem, size = 0x8000, scoped, tag = 'input window, operand 10, single buffered']
    #allocation14 [shape = 'u8[512]{0}', space=vmem, size = 0x400, scoped, tag = 'input window, operand 11, single buffered']
    #allocation15 [shape = 's32[1]{0}', space=sflag, size = 0x4, scoped, tag = 'scoped memory for tpu_custom_call.1']
    #allocation16 [shape = 'u8[32768]{0}', space=vmem, size = 0x8000, scoped, tag = 'input window, operand 12, single buffered']
    #allocation17 [shape = 'u8[512]{0}', space=vmem, size = 0x400, scoped, tag = 'input window, operand 13, single buffered']
    #allocation18 [shape = 's32[1]{0}', space=sflag, size = 0x4, scoped, tag = 'scoped memory for tpu_custom_call.1']
    #allocation19 [shape = 'u8[512]{0}', space=vmem, size = 0x400, scoped, tag = 'input window, operand 14, single buffered']
    #allocation20 [shape = 'u8[512]{0}', space=vmem, size = 0x400, scoped, tag = 'input window, operand 15, single buffered']
    #allocation21 [shape = 's32[1]{0}', space=sflag, size = 0x4, scoped, tag = 'scoped memory for tpu_custom_call.1']
    #allocation22 [shape = 'u8[512]{0}', space=vmem, size = 0x400, scoped, tag = 'input window, operand 16, single buffered']
    #allocation23 [shape = 'u8[512]{0}', space=vmem, size = 0x400, scoped, tag = 'input window, operand 17, single buffered']
    #allocation24 [shape = 's32[1]{0}', space=sflag, size = 0x4, scoped, tag = 'scoped memory for tpu_custom_call.1']
    #allocation25 [shape = 'u8[32768]{0}', space=vmem, size = 0x8000, scoped, tag = 'input window, operand 18, single buffered']
    #allocation26 [shape = 'u8[512]{0}', space=vmem, size = 0x400, scoped, tag = 'input window, operand 19, single buffered']
    #allocation27 [shape = 's32[1]{0}', space=sflag, size = 0x4, scoped, tag = 'scoped memory for tpu_custom_call.1']
    #allocation28 [shape = 'u8[512]{0}', space=vmem, size = 0x400, scoped, tag = 'input window, operand 21, single buffered']
    #allocation29 [shape = 'u8[4096]{0}', space=vmem, size = 0x1000, scoped, tag = 'input window, operand 23, single buffered']
    #allocation30 [shape = 's32[1]{0}', space=sflag, size = 0x4, scoped, tag = 'scoped memory for tpu_custom_call.1']
    #allocation31 [shape = 'u8[524288]{0}', space=vmem, size = 0x80000, scoped, tag = 'input window, operand 24, single buffered']
    #allocation32 [shape = 'u8[8192]{0}', space=vmem, size = 0x2000, scoped, tag = 'output window, operand 0']
    %31 = vsyncpa [#allocation3], 0
    %32 = vsyncpa [#allocation6], 0
    %33 = vsyncpa [#allocation9], 0
    %34 = vsyncpa [#allocation12], 0
    %35 = vsyncpa [#allocation15], 0
    %36 = vsyncpa [#allocation18], 0
    %37 = vsyncpa [#allocation21], 0
    %38 = vsyncpa [#allocation24], 0
    %39 = vsyncpa [#allocation27], 0
    %40 = vsyncpa [#allocation30], 0
    %41 = vsyncpa [#allocation4], 0
    %s42 = scalar_lea.sflag [#allocation4], 1
    %43 = vsyncpa %s42, 0
    loop: start=0, step=1, limit=4
    $region2: #{tpu_custom_call.1} parent=1 // loop_pre_header
      _
    $region3: #{tpu_custom_call.1} parent=1 // loop_header
      %s45 = sphi 0, %s49
      %p46 = scmp.ge.s32.totalorder %s45, 4
      %s55 = sphi 0, %s57
      %s58 = sphi 0, %s55
      %s59 = sphi 0, %s58
      %s75 = sphi 0, %s59
      %s79 = sphi 0, %s79
      %s81 = sphi 0, %s79
      %s82 = sphi 0, %s81
      %s96 = sphi 0, %s82
      %s100 = sphi 0, %s100
      %s102 = sphi 0, %s100
      %s103 = sphi 0, %s102
      %s117 = sphi 0, %s103
      %s121 = sphi 0, %s121
      %s123 = sphi 0, %s121
      %s124 = sphi 0, %s123
      %s138 = sphi 0, %s124
      %s142 = sphi 0, %s142
      %s144 = sphi 0, %s142
      %s145 = sphi 0, %s144
      %s159 = sphi 0, %s145
      %s163 = sphi 0, %s163
      %s165 = sphi 0, %s163
      %s166 = sphi 0, %s165
      %s180 = sphi 0, %s166
      %s184 = sphi 0, %s184
      %s186 = sphi 0, %s184
      %s187 = sphi 0, %s186
      %s201 = sphi 0, %s187
      %s205 = sphi 0, %s205
      %s207 = sphi 0, %s205
      %s208 = sphi 0, %s207
      %s222 = sphi 0, %s208
      %s226 = sphi 0, %s226
      %s228 = sphi 0, %s226
      %s229 = sphi 0, %s228
      %s243 = sphi 0, %s229
      %s247 = sphi 0, %s247
      %s249 = sphi 0, %s247
      %s250 = sphi 0, %s249
      %s264 = sphi 0, %s250
      %s268 = sphi 0, %s268
      %s270 = sphi 0, %s268
      %s271 = sphi 0, %s270
      %s285 = sphi 0, %s271
      %s289 = sphi 0, %s289
      %s291 = sphi 0, %s289
      %s292 = sphi 0, %s291
      %s306 = sphi 0, %s292
      %s310 = sphi 0, %s310
      %s312 = sphi 0, %s310
      %s313 = sphi 0, %s312
      %s327 = sphi 0, %s313
      %s331 = sphi 0, %s331
      %s333 = sphi 0, %s331
      %s334 = sphi 0, %s333
      %s348 = sphi 0, %s334
      %s352 = sphi 0, %s352
      %s354 = sphi 0, %s352
      %s355 = sphi 0, %s354
      %s369 = sphi 0, %s355
      %s373 = sphi 0, %s373
      %s375 = sphi 0, %s373
      %s376 = sphi 0, %s375
      %s390 = sphi 0, %s376
      %s394 = sphi 0, %s394
      %s396 = sphi 0, %s394
      %s397 = sphi 0, %s396
      %s411 = sphi 0, %s397
      %s415 = sphi 0, %s415
      %s417 = sphi 0, %s415
      %s418 = sphi 0, %s417
      %s432 = sphi 0, %s418
      %s436 = sphi 0, %s436
      %s438 = sphi 0, %s436
      %s439 = sphi 0, %s438
      %s453 = sphi 0, %s439
      %s457 = sphi 0, %s457
      %s459 = sphi 0, %s457
      %s460 = sphi 0, %s459
      %s474 = sphi 0, %s460
      %s478 = sphi 0, %s478
      %s480 = sphi 0, %s478
      %s481 = sphi 0, %s480
      %s495 = sphi 0, %s481
      %s499 = sphi 0, %s499
      %s501 = sphi 0, %s499
      %s502 = sphi 0, %s501
      %s516 = sphi 0, %s502
      %s520 = sphi 0, %s520
      %s522 = sphi 0, %s520
      %s523 = sphi 0, %s522
      %s537 = sphi 0, %s523
      %s541 = sphi 0, %s541
      %s543 = sphi 0, %s541
      %s544 = sphi 0, %s543
      %s558 = sphi 0, %s544
      %s562 = sphi 0, %s562
      %s564 = sphi 0, %s562
      %s565 = sphi 0, %s564
      %s579 = sphi 0, %s565
      %s583 = sphi 0, %s583
      %s585 = sphi 0, %s583
      %s586 = sphi 0, %s585
      %s600 = sphi 0, %s586
      %s606 = sphi 0, %s608
      %s609 = sphi 0, %s606
      %s610 = sphi 0, %s609
      %s626 = sphi 0, %s610
    $region4: #{tpu_custom_call.1} parent=1 // loop_header_branch
      %48 = sbr.rel (%p46) target = $region8
    $region5: #{tpu_custom_call.1} parent=1 // loop_body
      %s50 = ssub.s32 %s45, 1
      %s51 = ssub.s32 %s45, 2
      %s52 = sadd.s32 %s45, 1
      %s53 = ssub.s32 %s45, %s52
      %p54 = scmp.eq.s32.totalorder %s53, 0
      %s56 = sadd.s32 %s55, 1
      %s57 = scalar_select %p54, %s55, %s56
      %p60 = pneg %p54
      %p61 = scmp.eq.s32.totalorder %s45, 1
      %p62 = por %p60, %p61
      %p63 = scmp.ne.s32.totalorder %s55, %s58
      %p64 = scmp.eq.s32.totalorder %s45, 0
      %p65 = por %p63, %p64
      %p66 = scmp.ne.s32.totalorder %s55, %s58
      %p67 = scmp.eq.s32.totalorder %s50, 1
      %p68 = por %p66, %p67
      %p69 = scmp.ne.s32.totalorder %s58, %s59
      %p70 = scmp.eq.s32.totalorder %s50, 0
      %p71 = por %p69, %p70
      %p72 = scmp.ne.s32.totalorder %s58, %s59
      %p73 = scmp.eq.s32.totalorder %s51, 1
      %p74 = por %p72, %p73
      %p76 = scmp.ne.s32.totalorder %s59, %s75
      %p77 = scmp.eq.s32.totalorder %s51, 0
      %p78 = por %p76, %p77
      %s80 = sadd.s32 %s79, 1
      %p83 = scmp.eq.s32.totalorder %s45, 1
      %p84 = scmp.ne.s32.totalorder %s79, %s81
      %p85 = scmp.eq.s32.totalorder %s45, 0
      %p86 = por %p84, %p85
      %p87 = scmp.ne.s32.totalorder %s79, %s81
      %p88 = scmp.eq.s32.totalorder %s50, 1
      %p89 = por %p87, %p88
      %p90 = scmp.ne.s32.totalorder %s81, %s82
      %p91 = scmp.eq.s32.totalorder %s50, 0
      %p92 = por %p90, %p91
      %p93 = scmp.ne.s32.totalorder %s81, %s82
      %p94 = scmp.eq.s32.totalorder %s51, 1
      %p95 = por %p93, %p94
      %p97 = scmp.ne.s32.totalorder %s82, %s96
      %p98 = scmp.eq.s32.totalorder %s51, 0
      %p99 = por %p97, %p98
      %s101 = sadd.s32 %s100, 1
      %p104 = scmp.eq.s32.totalorder %s45, 1
      %p105 = scmp.ne.s32.totalorder %s100, %s102
      %p106 = scmp.eq.s32.totalorder %s45, 0
      %p107 = por %p105, %p106
      %p108 = scmp.ne.s32.totalorder %s100, %s102
      %p109 = scmp.eq.s32.totalorder %s50, 1
      %p110 = por %p108, %p109
      %p111 = scmp.ne.s32.totalorder %s102, %s103
      %p112 = scmp.eq.s32.totalorder %s50, 0
      %p113 = por %p111, %p112
      %p114 = scmp.ne.s32.totalorder %s102, %s103
      %p115 = scmp.eq.s32.totalorder %s51, 1
      %p116 = por %p114, %p115
      %p118 = scmp.ne.s32.totalorder %s103, %s117
      %p119 = scmp.eq.s32.totalorder %s51, 0
      %p120 = por %p118, %p119
      %s122 = sadd.s32 %s121, 1
      %p125 = scmp.eq.s32.totalorder %s45, 1
      %p126 = scmp.ne.s32.totalorder %s121, %s123
      %p127 = scmp.eq.s32.totalorder %s45, 0
      %p128 = por %p126, %p127
      %p129 = scmp.ne.s32.totalorder %s121, %s123
      %p130 = scmp.eq.s32.totalorder %s50, 1
      %p131 = por %p129, %p130
      %p132 = scmp.ne.s32.totalorder %s123, %s124
      %p133 = scmp.eq.s32.totalorder %s50, 0
      %p134 = por %p132, %p133
      %p135 = scmp.ne.s32.totalorder %s123, %s124
      %p136 = scmp.eq.s32.totalorder %s51, 1
      %p137 = por %p135, %p136
      %p139 = scmp.ne.s32.totalorder %s124, %s138
      %p140 = scmp.eq.s32.totalorder %s51, 0
      %p141 = por %p139, %p140
      %s143 = sadd.s32 %s142, 1
      %p146 = scmp.eq.s32.totalorder %s45, 1
      %p147 = scmp.ne.s32.totalorder %s142, %s144
      %p148 = scmp.eq.s32.totalorder %s45, 0
      %p149 = por %p147, %p148
      %p150 = scmp.ne.s32.totalorder %s142, %s144
      %p151 = scmp.eq.s32.totalorder %s50, 1
      %p152 = por %p150, %p151
      %p153 = scmp.ne.s32.totalorder %s144, %s145
      %p154 = scmp.eq.s32.totalorder %s50, 0
      %p155 = por %p153, %p154
      %p156 = scmp.ne.s32.totalorder %s144, %s145
      %p157 = scmp.eq.s32.totalorder %s51, 1
      %p158 = por %p156, %p157
      %p160 = scmp.ne.s32.totalorder %s145, %s159
      %p161 = scmp.eq.s32.totalorder %s51, 0
      %p162 = por %p160, %p161
      %s164 = sadd.s32 %s163, 1
      %p167 = scmp.eq.s32.totalorder %s45, 1
      %p168 = scmp.ne.s32.totalorder %s163, %s165
      %p169 = scmp.eq.s32.totalorder %s45, 0
      %p170 = por %p168, %p169
      %p171 = scmp.ne.s32.totalorder %s163, %s165
      %p172 = scmp.eq.s32.totalorder %s50, 1
      %p173 = por %p171, %p172
      %p174 = scmp.ne.s32.totalorder %s165, %s166
      %p175 = scmp.eq.s32.totalorder %s50, 0
      %p176 = por %p174, %p175
      %p177 = scmp.ne.s32.totalorder %s165, %s166
      %p178 = scmp.eq.s32.totalorder %s51, 1
      %p179 = por %p177, %p178
      %p181 = scmp.ne.s32.totalorder %s166, %s180
      %p182 = scmp.eq.s32.totalorder %s51, 0
      %p183 = por %p181, %p182
      %s185 = sadd.s32 %s184, 1
      %p188 = scmp.eq.s32.totalorder %s45, 1
      %p189 = scmp.ne.s32.totalorder %s184, %s186
      %p190 = scmp.eq.s32.totalorder %s45, 0
      %p191 = por %p189, %p190
      %p192 = scmp.ne.s32.totalorder %s184, %s186
      %p193 = scmp.eq.s32.totalorder %s50, 1
      %p194 = por %p192, %p193
      %p195 = scmp.ne.s32.totalorder %s186, %s187
      %p196 = scmp.eq.s32.totalorder %s50, 0
      %p197 = por %p195, %p196
      %p198 = scmp.ne.s32.totalorder %s186, %s187
      %p199 = scmp.eq.s32.totalorder %s51, 1
      %p200 = por %p198, %p199
      %p202 = scmp.ne.s32.totalorder %s187, %s201
      %p203 = scmp.eq.s32.totalorder %s51, 0
      %p204 = por %p202, %p203
      %s206 = sadd.s32 %s205, 1
      %p209 = scmp.eq.s32.totalorder %s45, 1
      %p210 = scmp.ne.s32.totalorder %s205, %s207
      %p211 = scmp.eq.s32.totalorder %s45, 0
      %p212 = por %p210, %p211
      %p213 = scmp.ne.s32.totalorder %s205, %s207
      %p214 = scmp.eq.s32.totalorder %s50, 1
      %p215 = por %p213, %p214
      %p216 = scmp.ne.s32.totalorder %s207, %s208
      %p217 = scmp.eq.s32.totalorder %s50, 0
      %p218 = por %p216, %p217
      %p219 = scmp.ne.s32.totalorder %s207, %s208
      %p220 = scmp.eq.s32.totalorder %s51, 1
      %p221 = por %p219, %p220
      %p223 = scmp.ne.s32.totalorder %s208, %s222
      %p224 = scmp.eq.s32.totalorder %s51, 0
      %p225 = por %p223, %p224
      %s227 = sadd.s32 %s226, 1
      %p230 = scmp.eq.s32.totalorder %s45, 1
      %p231 = scmp.ne.s32.totalorder %s226, %s228
      %p232 = scmp.eq.s32.totalorder %s45, 0
      %p233 = por %p231, %p232
      %p234 = scmp.ne.s32.totalorder %s226, %s228
      %p235 = scmp.eq.s32.totalorder %s50, 1
      %p236 = por %p234, %p235
      %p237 = scmp.ne.s32.totalorder %s228, %s229
      %p238 = scmp.eq.s32.totalorder %s50, 0
      %p239 = por %p237, %p238
      %p240 = scmp.ne.s32.totalorder %s228, %s229
      %p241 = scmp.eq.s32.totalorder %s51, 1
      %p242 = por %p240, %p241
      %p244 = scmp.ne.s32.totalorder %s229, %s243
      %p245 = scmp.eq.s32.totalorder %s51, 0
      %p246 = por %p244, %p245
      %s248 = sadd.s32 %s247, 1
      %p251 = scmp.eq.s32.totalorder %s45, 1
      %p252 = scmp.ne.s32.totalorder %s247, %s249
      %p253 = scmp.eq.s32.totalorder %s45, 0
      %p254 = por %p252, %p253
      %p255 = scmp.ne.s32.totalorder %s247, %s249
      %p256 = scmp.eq.s32.totalorder %s50, 1
      %p257 = por %p255, %p256
      %p258 = scmp.ne.s32.totalorder %s249, %s250
      %p259 = scmp.eq.s32.totalorder %s50, 0
      %p260 = por %p258, %p259
      %p261 = scmp.ne.s32.totalorder %s249, %s250
      %p262 = scmp.eq.s32.totalorder %s51, 1
      %p263 = por %p261, %p262
      %p265 = scmp.ne.s32.totalorder %s250, %s264
      %p266 = scmp.eq.s32.totalorder %s51, 0
      %p267 = por %p265, %p266
      %s269 = sadd.s32 %s268, 1
      %p272 = scmp.eq.s32.totalorder %s45, 1
      %p273 = scmp.ne.s32.totalorder %s268, %s270
      %p274 = scmp.eq.s32.totalorder %s45, 0
      %p275 = por %p273, %p274
      %p276 = scmp.ne.s32.totalorder %s268, %s270
      %p277 = scmp.eq.s32.totalorder %s50, 1
      %p278 = por %p276, %p277
      %p279 = scmp.ne.s32.totalorder %s270, %s271
      %p280 = scmp.eq.s32.totalorder %s50, 0
      %p281 = por %p279, %p280
      %p282 = scmp.ne.s32.totalorder %s270, %s271
      %p283 = scmp.eq.s32.totalorder %s51, 1
      %p284 = por %p282, %p283
      %p286 = scmp.ne.s32.totalorder %s271, %s285
      %p287 = scmp.eq.s32.totalorder %s51, 0
      %p288 = por %p286, %p287
      %s290 = sadd.s32 %s289, 1
      %p293 = scmp.eq.s32.totalorder %s45, 1
      %p294 = scmp.ne.s32.totalorder %s289, %s291
      %p295 = scmp.eq.s32.totalorder %s45, 0
      %p296 = por %p294, %p295
      %p297 = scmp.ne.s32.totalorder %s289, %s291
      %p298 = scmp.eq.s32.totalorder %s50, 1
      %p299 = por %p297, %p298
      %p300 = scmp.ne.s32.totalorder %s291, %s292
      %p301 = scmp.eq.s32.totalorder %s50, 0
      %p302 = por %p300, %p301
      %p303 = scmp.ne.s32.totalorder %s291, %s292
      %p304 = scmp.eq.s32.totalorder %s51, 1
      %p305 = por %p303, %p304
      %p307 = scmp.ne.s32.totalorder %s292, %s306
      %p308 = scmp.eq.s32.totalorder %s51, 0
      %p309 = por %p307, %p308
      %s311 = sadd.s32 %s310, 1
      %p314 = scmp.eq.s32.totalorder %s45, 1
      %p315 = scmp.ne.s32.totalorder %s310, %s312
      %p316 = scmp.eq.s32.totalorder %s45, 0
      %p317 = por %p315, %p316
      %p318 = scmp.ne.s32.totalorder %s310, %s312
      %p319 = scmp.eq.s32.totalorder %s50, 1
      %p320 = por %p318, %p319
      %p321 = scmp.ne.s32.totalorder %s312, %s313
      %p322 = scmp.eq.s32.totalorder %s50, 0
      %p323 = por %p321, %p322
      %p324 = scmp.ne.s32.totalorder %s312, %s313
      %p325 = scmp.eq.s32.totalorder %s51, 1
      %p326 = por %p324, %p325
      %p328 = scmp.ne.s32.totalorder %s313, %s327
      %p329 = scmp.eq.s32.totalorder %s51, 0
      %p330 = por %p328, %p329
      %s332 = sadd.s32 %s331, 1
      %p335 = scmp.eq.s32.totalorder %s45, 1
      %p336 = scmp.ne.s32.totalorder %s331, %s333
      %p337 = scmp.eq.s32.totalorder %s45, 0
      %p338 = por %p336, %p337
      %p339 = scmp.ne.s32.totalorder %s331, %s333
      %p340 = scmp.eq.s32.totalorder %s50, 1
      %p341 = por %p339, %p340
      %p342 = scmp.ne.s32.totalorder %s333, %s334
      %p343 = scmp.eq.s32.totalorder %s50, 0
      %p344 = por %p342, %p343
      %p345 = scmp.ne.s32.totalorder %s333, %s334
      %p346 = scmp.eq.s32.totalorder %s51, 1
      %p347 = por %p345, %p346
      %p349 = scmp.ne.s32.totalorder %s334, %s348
      %p350 = scmp.eq.s32.totalorder %s51, 0
      %p351 = por %p349, %p350
      %s353 = sadd.s32 %s352, 1
      %p356 = scmp.eq.s32.totalorder %s45, 1
      %p357 = scmp.ne.s32.totalorder %s352, %s354
      %p358 = scmp.eq.s32.totalorder %s45, 0
      %p359 = por %p357, %p358
      %p360 = scmp.ne.s32.totalorder %s352, %s354
      %p361 = scmp.eq.s32.totalorder %s50, 1
      %p362 = por %p360, %p361
      %p363 = scmp.ne.s32.totalorder %s354, %s355
      %p364 = scmp.eq.s32.totalorder %s50, 0
      %p365 = por %p363, %p364
      %p366 = scmp.ne.s32.totalorder %s354, %s355
      %p367 = scmp.eq.s32.totalorder %s51, 1
      %p368 = por %p366, %p367
      %p370 = scmp.ne.s32.totalorder %s355, %s369
      %p371 = scmp.eq.s32.totalorder %s51, 0
      %p372 = por %p370, %p371
      %s374 = sadd.s32 %s373, 1
      %p377 = scmp.eq.s32.totalorder %s45, 1
      %p378 = scmp.ne.s32.totalorder %s373, %s375
      %p379 = scmp.eq.s32.totalorder %s45, 0
      %p380 = por %p378, %p379
      %p381 = scmp.ne.s32.totalorder %s373, %s375
      %p382 = scmp.eq.s32.totalorder %s50, 1
      %p383 = por %p381, %p382
      %p384 = scmp.ne.s32.totalorder %s375, %s376
      %p385 = scmp.eq.s32.totalorder %s50, 0
      %p386 = por %p384, %p385
      %p387 = scmp.ne.s32.totalorder %s375, %s376
      %p388 = scmp.eq.s32.totalorder %s51, 1
      %p389 = por %p387, %p388
      %p391 = scmp.ne.s32.totalorder %s376, %s390
      %p392 = scmp.eq.s32.totalorder %s51, 0
      %p393 = por %p391, %p392
      %s395 = sadd.s32 %s394, 1
      %p398 = scmp.eq.s32.totalorder %s45, 1
      %p399 = scmp.ne.s32.totalorder %s394, %s396
      %p400 = scmp.eq.s32.totalorder %s45, 0
      %p401 = por %p399, %p400
      %p402 = scmp.ne.s32.totalorder %s394, %s396
      %p403 = scmp.eq.s32.totalorder %s50, 1
      %p404 = por %p402, %p403
      %p405 = scmp.ne.s32.totalorder %s396, %s397
      %p406 = scmp.eq.s32.totalorder %s50, 0
      %p407 = por %p405, %p406
      %p408 = scmp.ne.s32.totalorder %s396, %s397
      %p409 = scmp.eq.s32.totalorder %s51, 1
      %p410 = por %p408, %p409
      %p412 = scmp.ne.s32.totalorder %s397, %s411
      %p413 = scmp.eq.s32.totalorder %s51, 0
      %p414 = por %p412, %p413
      %s416 = sadd.s32 %s415, 1
      %p419 = scmp.eq.s32.totalorder %s45, 1
      %p420 = scmp.ne.s32.totalorder %s415, %s417
      %p421 = scmp.eq.s32.totalorder %s45, 0
      %p422 = por %p420, %p421
      %p423 = scmp.ne.s32.totalorder %s415, %s417
      %p424 = scmp.eq.s32.totalorder %s50, 1
      %p425 = por %p423, %p424
      %p426 = scmp.ne.s32.totalorder %s417, %s418
      %p427 = scmp.eq.s32.totalorder %s50, 0
      %p428 = por %p426, %p427
      %p429 = scmp.ne.s32.totalorder %s417, %s418
      %p430 = scmp.eq.s32.totalorder %s51, 1
      %p431 = por %p429, %p430
      %p433 = scmp.ne.s32.totalorder %s418, %s432
      %p434 = scmp.eq.s32.totalorder %s51, 0
      %p435 = por %p433, %p434
      %s437 = sadd.s32 %s436, 1
      %p440 = scmp.eq.s32.totalorder %s45, 1
      %p441 = scmp.ne.s32.totalorder %s436, %s438
      %p442 = scmp.eq.s32.totalorder %s45, 0
      %p443 = por %p441, %p442
      %p444 = scmp.ne.s32.totalorder %s436, %s438
      %p445 = scmp.eq.s32.totalorder %s50, 1
      %p446 = por %p444, %p445
      %p447 = scmp.ne.s32.totalorder %s438, %s439
      %p448 = scmp.eq.s32.totalorder %s50, 0
      %p449 = por %p447, %p448
      %p450 = scmp.ne.s32.totalorder %s438, %s439
      %p451 = scmp.eq.s32.totalorder %s51, 1
      %p452 = por %p450, %p451
      %p454 = scmp.ne.s32.totalorder %s439, %s453
      %p455 = scmp.eq.s32.totalorder %s51, 0
      %p456 = por %p454, %p455
      %s458 = sadd.s32 %s457, 1
      %p461 = scmp.eq.s32.totalorder %s45, 1
      %p462 = scmp.ne.s32.totalorder %s457, %s459
      %p463 = scmp.eq.s32.totalorder %s45, 0
      %p464 = por %p462, %p463
      %p465 = scmp.ne.s32.totalorder %s457, %s459
      %p466 = scmp.eq.s32.totalorder %s50, 1
      %p467 = por %p465, %p466
      %p468 = scmp.ne.s32.totalorder %s459, %s460
      %p469 = scmp.eq.s32.totalorder %s50, 0
      %p470 = por %p468, %p469
      %p471 = scmp.ne.s32.totalorder %s459, %s460
      %p472 = scmp.eq.s32.totalorder %s51, 1
      %p473 = por %p471, %p472
      %p475 = scmp.ne.s32.totalorder %s460, %s474
      %p476 = scmp.eq.s32.totalorder %s51, 0
      %p477 = por %p475, %p476
      %s479 = sadd.s32 %s478, 1
      %p482 = scmp.eq.s32.totalorder %s45, 1
      %p483 = scmp.ne.s32.totalorder %s478, %s480
      %p484 = scmp.eq.s32.totalorder %s45, 0
      %p485 = por %p483, %p484
      %p486 = scmp.ne.s32.totalorder %s478, %s480
      %p487 = scmp.eq.s32.totalorder %s50, 1
      %p488 = por %p486, %p487
      %p489 = scmp.ne.s32.totalorder %s480, %s481
      %p490 = scmp.eq.s32.totalorder %s50, 0
      %p491 = por %p489, %p490
      %p492 = scmp.ne.s32.totalorder %s480, %s481
      %p493 = scmp.eq.s32.totalorder %s51, 1
      %p494 = por %p492, %p493
      %p496 = scmp.ne.s32.totalorder %s481, %s495
      %p497 = scmp.eq.s32.totalorder %s51, 0
      %p498 = por %p496, %p497
      %s500 = sadd.s32 %s499, 1
      %p503 = scmp.eq.s32.totalorder %s45, 1
      %p504 = scmp.ne.s32.totalorder %s499, %s501
      %p505 = scmp.eq.s32.totalorder %s45, 0
      %p506 = por %p504, %p505
      %p507 = scmp.ne.s32.totalorder %s499, %s501
      %p508 = scmp.eq.s32.totalorder %s50, 1
      %p509 = por %p507, %p508
      %p510 = scmp.ne.s32.totalorder %s501, %s502
      %p511 = scmp.eq.s32.totalorder %s50, 0
      %p512 = por %p510, %p511
      %p513 = scmp.ne.s32.totalorder %s501, %s502
      %p514 = scmp.eq.s32.totalorder %s51, 1
      %p515 = por %p513, %p514
      %p517 = scmp.ne.s32.totalorder %s502, %s516
      %p518 = scmp.eq.s32.totalorder %s51, 0
      %p519 = por %p517, %p518
      %s521 = sadd.s32 %s520, 1
      %p524 = scmp.eq.s32.totalorder %s45, 1
      %p525 = scmp.ne.s32.totalorder %s520, %s522
      %p526 = scmp.eq.s32.totalorder %s45, 0
      %p527 = por %p525, %p526
      %p528 = scmp.ne.s32.totalorder %s520, %s522
      %p529 = scmp.eq.s32.totalorder %s50, 1
      %p530 = por %p528, %p529
      %p531 = scmp.ne.s32.totalorder %s522, %s523
      %p532 = scmp.eq.s32.totalorder %s50, 0
      %p533 = por %p531, %p532
      %p534 = scmp.ne.s32.totalorder %s522, %s523
      %p535 = scmp.eq.s32.totalorder %s51, 1
      %p536 = por %p534, %p535
      %p538 = scmp.ne.s32.totalorder %s523, %s537
      %p539 = scmp.eq.s32.totalorder %s51, 0
      %p540 = por %p538, %p539
      %s542 = sadd.s32 %s541, 1
      %p545 = scmp.eq.s32.totalorder %s45, 1
      %p546 = scmp.ne.s32.totalorder %s541, %s543
      %p547 = scmp.eq.s32.totalorder %s45, 0
      %p548 = por %p546, %p547
      %p549 = scmp.ne.s32.totalorder %s541, %s543
      %p550 = scmp.eq.s32.totalorder %s50, 1
      %p551 = por %p549, %p550
      %p552 = scmp.ne.s32.totalorder %s543, %s544
      %p553 = scmp.eq.s32.totalorder %s50, 0
      %p554 = por %p552, %p553
      %p555 = scmp.ne.s32.totalorder %s543, %s544
      %p556 = scmp.eq.s32.totalorder %s51, 1
      %p557 = por %p555, %p556
      %p559 = scmp.ne.s32.totalorder %s544, %s558
      %p560 = scmp.eq.s32.totalorder %s51, 0
      %p561 = por %p559, %p560
      %s563 = sadd.s32 %s562, 1
      %p566 = scmp.eq.s32.totalorder %s45, 1
      %p567 = scmp.ne.s32.totalorder %s562, %s564
      %p568 = scmp.eq.s32.totalorder %s45, 0
      %p569 = por %p567, %p568
      %p570 = scmp.ne.s32.totalorder %s562, %s564
      %p571 = scmp.eq.s32.totalorder %s50, 1
      %p572 = por %p570, %p571
      %p573 = scmp.ne.s32.totalorder %s564, %s565
      %p574 = scmp.eq.s32.totalorder %s50, 0
      %p575 = por %p573, %p574
      %p576 = scmp.ne.s32.totalorder %s564, %s565
      %p577 = scmp.eq.s32.totalorder %s51, 1
      %p578 = por %p576, %p577
      %p580 = scmp.ne.s32.totalorder %s565, %s579
      %p581 = scmp.eq.s32.totalorder %s51, 0
      %p582 = por %p580, %p581
      %s584 = sadd.s32 %s583, 1
      %p587 = scmp.eq.s32.totalorder %s45, 1
      %p588 = scmp.ne.s32.totalorder %s583, %s585
      %p589 = scmp.eq.s32.totalorder %s45, 0
      %p590 = por %p588, %p589
      %p591 = scmp.ne.s32.totalorder %s583, %s585
      %p592 = scmp.eq.s32.totalorder %s50, 1
      %p593 = por %p591, %p592
      %p594 = scmp.ne.s32.totalorder %s585, %s586
      %p595 = scmp.eq.s32.totalorder %s50, 0
      %p596 = por %p594, %p595
      %p597 = scmp.ne.s32.totalorder %s585, %s586
      %p598 = scmp.eq.s32.totalorder %s51, 1
      %p599 = por %p597, %p598
      %p601 = scmp.ne.s32.totalorder %s586, %s600
      %p602 = scmp.eq.s32.totalorder %s51, 0
      %p603 = por %p601, %p602
      %s604 = ssub.s32 %s45, %s52
      %p605 = scmp.eq.s32.totalorder %s604, 0
      %s607 = sadd.s32 %s606, 1
      %s608 = scalar_select %p605, %s606, %s607
      %p611 = pneg %p605
      %p612 = scmp.eq.s32.totalorder %s45, 1
      %p613 = por %p611, %p612
      %p614 = scmp.ne.s32.totalorder %s606, %s609
      %p615 = scmp.eq.s32.totalorder %s45, 0
      %p616 = por %p614, %p615
      %p617 = scmp.ne.s32.totalorder %s606, %s609
      %p618 = scmp.eq.s32.totalorder %s50, 1
      %p619 = por %p617, %p618
      %p620 = scmp.ne.s32.totalorder %s609, %s610
      %p621 = scmp.eq.s32.totalorder %s50, 0
      %p622 = por %p620, %p621
      %p623 = scmp.ne.s32.totalorder %s609, %s610
      %p624 = scmp.eq.s32.totalorder %s51, 1
      %p625 = por %p623, %p624
      %p627 = scmp.ne.s32.totalorder %s610, %s626
      %p628 = scmp.eq.s32.totalorder %s51, 0
      %p629 = por %p627, %p628
      %p630 = scmp.le.s32.totalorder 1, %s45
      %p631 = scmp.lt.s32.totalorder %s45, 3
      %p632 = pnand %p630, %p631
      %p633 = pneg %p632
      // Predicated region
      $region9: #{tpu_custom_call.1} parent=5 // pred_check
        _
      $region10: #{tpu_custom_call.1} parent=5 // pred_check_branch
        %635 = sbr.rel (%p632) target = $region12
      $region11: #{tpu_custom_call.1} parent=5 // pred_region
        %s636 = ssub.s32 %s45, 1
        // Predicated region
        $region13: #{tpu_custom_call.1} parent=11 // pred_check
          %p637 = pneg %p92
        $region14: #{tpu_custom_call.1} parent=11 // pred_check_branch
          %639 = sbr.rel (%p637) target = $region16
        $region15: #{tpu_custom_call.1} parent=11 // pred_region
          %s641 = ssub.s32 256, 256
          %642 = vsyncadd [#allocation3], %s641
          %s643 = sshll.u32 [#allocation2], 4
          %s644 = int_to_ptr.vmem [resolvable:$true] %s643
          %649 = dma.hbm_to_vmem [thread:$0]  %s1, 256, %s644, [#allocation3], 128, 128, 8
        $region16: #{tpu_custom_call.1} parent=11 // pred_fallthru
          _
        // Predicated region
        $region17: #{tpu_custom_call.1} parent=11 // pred_check
          %p650 = pneg %p113
        $region18: #{tpu_custom_call.1} parent=11 // pred_check_branch
          %652 = sbr.rel (%p650) target = $region20
        $region19: #{tpu_custom_call.1} parent=11 // pred_region
          _
        $region20: #{tpu_custom_call.1} parent=11 // pred_fallthru
          _
        // Predicated region
        $region21: #{tpu_custom_call.1} parent=11 // pred_check
          %p653 = pneg %p134
        $region22: #{tpu_custom_call.1} parent=11 // pred_check_branch
          %655 = sbr.rel (%p653) target = $region24
        $region23: #{tpu_custom_call.1} parent=11 // pred_region
          %s657 = ssub.s32 16, 16
          %658 = vsyncadd [#allocation6], %s657
          %s660 = sshll.u32 [#allocation5], 4
          %s661 = int_to_ptr.vmem [resolvable:$true] %s660
          %663 = dma.hbm_to_vmem [thread:$0]  %s3, 16, %s661, [#allocation6]
        $region24: #{tpu_custom_call.1} parent=11 // pred_fallthru
          _
        // Predicated region
        $region25: #{tpu_custom_call.1} parent=11 // pred_check
          %p664 = pneg %p155
        $region26: #{tpu_custom_call.1} parent=11 // pred_check_branch
          %666 = sbr.rel (%p664) target = $region28
        $region27: #{tpu_custom_call.1} parent=11 // pred_region
          _
        $region28: #{tpu_custom_call.1} parent=11 // pred_fallthru
          _
        // Predicated region
        $region29: #{tpu_custom_call.1} parent=11 // pred_check
          %p667 = pneg %p176
        $region30: #{tpu_custom_call.1} parent=11 // pred_check_branch
          %669 = sbr.rel (%p667) target = $region32
        $region31: #{tpu_custom_call.1} parent=11 // pred_region
          %s671 = ssub.s32 16, 16
          %672 = vsyncadd [#allocation6], %s671
          %s674 = sshll.u32 [#allocation7], 4
          %s675 = int_to_ptr.vmem [resolvable:$true] %s674
          %677 = dma.hbm_to_vmem [thread:$0]  %s5, 16, %s675, [#allocation6]
        $region32: #{tpu_custom_call.1} parent=11 // pred_fallthru
          _
        // Predicated region
        $region33: #{tpu_custom_call.1} parent=11 // pred_check
          %p678 = pneg %p197
        $region34: #{tpu_custom_call.1} parent=11 // pred_check_branch
          %680 = sbr.rel (%p678) target = $region36
        $region35: #{tpu_custom_call.1} parent=11 // pred_region
          _
        $region36: #{tpu_custom_call.1} parent=11 // pred_fallthru
          _
        // Predicated region
        $region37: #{tpu_custom_call.1} parent=11 // pred_check
          %p681 = pneg %p218
        $region38: #{tpu_custom_call.1} parent=11 // pred_check_branch
          %683 = sbr.rel (%p681) target = $region40
        $region39: #{tpu_custom_call.1} parent=11 // pred_region
          %s685 = ssub.s32 16, 16
          %686 = vsyncadd [#allocation9], %s685
          %s688 = sshll.u32 [#allocation8], 4
          %s689 = int_to_ptr.vmem [resolvable:$true] %s688
          %691 = dma.hbm_to_vmem [thread:$0]  %s7, 16, %s689, [#allocation9]
        $region40: #{tpu_custom_call.1} parent=11 // pred_fallthru
          _
        // Predicated region
        $region41: #{tpu_custom_call.1} parent=11 // pred_check
          %p692 = pneg %p239
        $region42: #{tpu_custom_call.1} parent=11 // pred_check_branch
          %694 = sbr.rel (%p692) target = $region44
        $region43: #{tpu_custom_call.1} parent=11 // pred_region
          %s696 = ssub.s32 1024, 1024
          %697 = vsyncadd [#allocation9], %s696
          %s698 = sshll.u32 [#allocation10], 4
          %s699 = int_to_ptr.vmem [resolvable:$true] %s698
          %704 = dma.hbm_to_vmem [thread:$0]  %s8, 1024, %s699, [#allocation9], 128, 128, 8
        $region44: #{tpu_custom_call.1} parent=11 // pred_fallthru
          _
        // Predicated region
        $region45: #{tpu_custom_call.1} parent=11 // pred_check
          %p705 = pneg %p260
        $region46: #{tpu_custom_call.1} parent=11 // pred_check_branch
          %707 = sbr.rel (%p705) target = $region48
        $region47: #{tpu_custom_call.1} parent=11 // pred_region
          %s709 = ssub.s32 16, 16
          %710 = vsyncadd [#allocation12], %s709
          %s712 = sshll.u32 [#allocation11], 4
          %s713 = int_to_ptr.vmem [resolvable:$true] %s712
          %715 = dma.hbm_to_vmem [thread:$0]  %s9, 16, %s713, [#allocation12]
        $region48: #{tpu_custom_call.1} parent=11 // pred_fallthru
          _
        // Predicated region
        $region49: #{tpu_custom_call.1} parent=11 // pred_check
          %p716 = pneg %p281
        $region50: #{tpu_custom_call.1} parent=11 // pred_check_branch
          %718 = sbr.rel (%p716) target = $region52
        $region51: #{tpu_custom_call.1} parent=11 // pred_region
          %s720 = ssub.s32 1024, 1024
          %721 = vsyncadd [#allocation12], %s720
          %s722 = sshll.u32 [#allocation13], 4
          %s723 = int_to_ptr.vmem [resolvable:$true] %s722
          %728 = dma.hbm_to_vmem [thread:$0]  %s10, 1024, %s723, [#allocation12], 128, 128, 8
        $region52: #{tpu_custom_call.1} parent=11 // pred_fallthru
          _
        // Predicated region
        $region53: #{tpu_custom_call.1} parent=11 // pred_check
          %p729 = pneg %p302
        $region54: #{tpu_custom_call.1} parent=11 // pred_check_branch
          %731 = sbr.rel (%p729) target = $region56
        $region55: #{tpu_custom_call.1} parent=11 // pred_region
          %s733 = ssub.s32 16, 16
          %734 = vsyncadd [#allocation15], %s733
          %s736 = sshll.u32 [#allocation14], 4
          %s737 = int_to_ptr.vmem [resolvable:$true] %s736
          %739 = dma.hbm_to_vmem [thread:$0]  %s11, 16, %s737, [#allocation15]
        $region56: #{tpu_custom_call.1} parent=11 // pred_fallthru
          _
        // Predicated region
        $region57: #{tpu_custom_call.1} parent=11 // pred_check
          %p740 = pneg %p323
        $region58: #{tpu_custom_call.1} parent=11 // pred_check_branch
          %742 = sbr.rel (%p740) target = $region60
        $region59: #{tpu_custom_call.1} parent=11 // pred_region
          %s744 = ssub.s32 1024, 1024
          %745 = vsyncadd [#allocation15], %s744
          %s746 = sshll.u32 [#allocation16], 4
          %s747 = int_to_ptr.vmem [resolvable:$true] %s746
          %752 = dma.hbm_to_vmem [thread:$0]  %s12, 1024, %s747, [#allocation15], 128, 128, 8
        $region60: #{tpu_custom_call.1} parent=11 // pred_fallthru
          _
        // Predicated region
        $region61: #{tpu_custom_call.1} parent=11 // pred_check
          %p753 = pneg %p344
        $region62: #{tpu_custom_call.1} parent=11 // pred_check_branch
          %755 = sbr.rel (%p753) target = $region64
        $region63: #{tpu_custom_call.1} parent=11 // pred_region
          %s757 = ssub.s32 16, 16
          %758 = vsyncadd [#allocation18], %s757
          %s760 = sshll.u32 [#allocation17], 4
          %s761 = int_to_ptr.vmem [resolvable:$true] %s760
          %763 = dma.hbm_to_vmem [thread:$0]  %s13, 16, %s761, [#allocation18]
        $region64: #{tpu_custom_call.1} parent=11 // pred_fallthru
          _
        // Predicated region
        $region65: #{tpu_custom_call.1} parent=11 // pred_check
          %p764 = pneg %p365
        $region66: #{tpu_custom_call.1} parent=11 // pred_check_branch
          %766 = sbr.rel (%p764) target = $region68
        $region67: #{tpu_custom_call.1} parent=11 // pred_region
          %s768 = ssub.s32 16, 16
          %769 = vsyncadd [#allocation18], %s768
          %s771 = sshll.u32 [#allocation19], 4
          %s772 = int_to_ptr.vmem [resolvable:$true] %s771
          %774 = dma.hbm_to_vmem [thread:$0]  %s14, 16, %s772, [#allocation18]
        $region68: #{tpu_custom_call.1} parent=11 // pred_fallthru
          _
        // Predicated region
        $region69: #{tpu_custom_call.1} parent=11 // pred_check
          %p775 = pneg %p386
        $region70: #{tpu_custom_call.1} parent=11 // pred_check_branch
          %777 = sbr.rel (%p775) target = $region72
        $region71: #{tpu_custom_call.1} parent=11 // pred_region
          %s779 = ssub.s32 16, 16
          %780 = vsyncadd [#allocation21], %s779
          %s782 = sshll.u32 [#allocation20], 4
          %s783 = int_to_ptr.vmem [resolvable:$true] %s782
          %785 = dma.hbm_to_vmem [thread:$0]  %s15, 16, %s783, [#allocation21]
        $region72: #{tpu_custom_call.1} parent=11 // pred_fallthru
          _
        // Predicated region
        $region73: #{tpu_custom_call.1} parent=11 // pred_check
          %p786 = pneg %p407
        $region74: #{tpu_custom_call.1} parent=11 // pred_check_branch
          %788 = sbr.rel (%p786) target = $region76
        $region75: #{tpu_custom_call.1} parent=11 // pred_region
          %s790 = ssub.s32 16, 16
          %791 = vsyncadd [#allocation21], %s790
          %s793 = sshll.u32 [#allocation22], 4
          %s794 = int_to_ptr.vmem [resolvable:$true] %s793
          %796 = dma.hbm_to_vmem [thread:$0]  %s16, 16, %s794, [#allocation21]
        $region76: #{tpu_custom_call.1} parent=11 // pred_fallthru
          _
        // Predicated region
        $region77: #{tpu_custom_call.1} parent=11 // pred_check
          %p797 = pneg %p428
        $region78: #{tpu_custom_call.1} parent=11 // pred_check_branch
          %799 = sbr.rel (%p797) target = $region80
        $region79: #{tpu_custom_call.1} parent=11 // pred_region
          %s801 = ssub.s32 16, 16
          %802 = vsyncadd [#allocation24], %s801
          %s804 = sshll.u32 [#allocation23], 4
          %s805 = int_to_ptr.vmem [resolvable:$true] %s804
          %807 = dma.hbm_to_vmem [thread:$0]  %s17, 16, %s805, [#allocation24]
        $region80: #{tpu_custom_call.1} parent=11 // pred_fallthru
          _
        // Predicated region
        $region81: #{tpu_custom_call.1} parent=11 // pred_check
          %p808 = pneg %p449
        $region82: #{tpu_custom_call.1} parent=11 // pred_check_branch
          %810 = sbr.rel (%p808) target = $region84
        $region83: #{tpu_custom_call.1} parent=11 // pred_region
          %s812 = ssub.s32 1024, 1024
          %813 = vsyncadd [#allocation24], %s812
          %s814 = sshll.u32 [#allocation25], 4
          %s815 = int_to_ptr.vmem [resolvable:$true] %s814
          %820 = dma.hbm_to_vmem [thread:$0]  %s18, 1024, %s815, [#allocation24], 128, 128, 8
        $region84: #{tpu_custom_call.1} parent=11 // pred_fallthru
          _
        // Predicated region
        $region85: #{tpu_custom_call.1} parent=11 // pred_check
          %p821 = pneg %p470
        $region86: #{tpu_custom_call.1} parent=11 // pred_check_branch
          %823 = sbr.rel (%p821) target = $region88
        $region87: #{tpu_custom_call.1} parent=11 // pred_region
          %s825 = ssub.s32 16, 16
          %826 = vsyncadd [#allocation27], %s825
          %s828 = sshll.u32 [#allocation26], 4
          %s829 = int_to_ptr.vmem [resolvable:$true] %s828
          %831 = dma.hbm_to_vmem [thread:$0]  %s19, 16, %s829, [#allocation27]
        $region88: #{tpu_custom_call.1} parent=11 // pred_fallthru
          _
        // Predicated region
        $region89: #{tpu_custom_call.1} parent=11 // pred_check
          %p832 = pneg %p491
        $region90: #{tpu_custom_call.1} parent=11 // pred_check_branch
          %834 = sbr.rel (%p832) target = $region92
        $region91: #{tpu_custom_call.1} parent=11 // pred_region
          _
        $region92: #{tpu_custom_call.1} parent=11 // pred_fallthru
          _
        // Predicated region
        $region93: #{tpu_custom_call.1} parent=11 // pred_check
          %p835 = pneg %p512
        $region94: #{tpu_custom_call.1} parent=11 // pred_check_branch
          %837 = sbr.rel (%p835) target = $region96
        $region95: #{tpu_custom_call.1} parent=11 // pred_region
          %s839 = ssub.s32 16, 16
          %840 = vsyncadd [#allocation27], %s839
          %s842 = sshll.u32 [#allocation28], 4
          %s843 = int_to_ptr.vmem [resolvable:$true] %s842
          %845 = dma.hbm_to_vmem [thread:$0]  %s21, 16, %s843, [#allocation27]
        $region96: #{tpu_custom_call.1} parent=11 // pred_fallthru
          _
        // Predicated region
        $region97: #{tpu_custom_call.1} parent=11 // pred_check
          %p846 = pneg %p533
        $region98: #{tpu_custom_call.1} parent=11 // pred_check_branch
          %848 = sbr.rel (%p846) target = $region100
        $region99: #{tpu_custom_call.1} parent=11 // pred_region
          _
        $region100: #{tpu_custom_call.1} parent=11 // pred_fallthru
          _
        // Predicated region
        $region101: #{tpu_custom_call.1} parent=11 // pred_check
          %p849 = pneg %p554
        $region102: #{tpu_custom_call.1} parent=11 // pred_check_branch
          %851 = sbr.rel (%p849) target = $region104
        $region103: #{tpu_custom_call.1} parent=11 // pred_region
          %s853 = ssub.s32 128, 128
          %854 = vsyncadd [#allocation30], %s853
          %s856 = sshll.u32 [#allocation29], 4
          %s857 = int_to_ptr.vmem [resolvable:$true] %s856
          %859 = dma.hbm_to_vmem [thread:$0]  %s23, 128, %s857, [#allocation30]
        $region104: #{tpu_custom_call.1} parent=11 // pred_fallthru
          _
        // Predicated region
        $region105: #{tpu_custom_call.1} parent=11 // pred_check
          %p860 = pneg %p575
        $region106: #{tpu_custom_call.1} parent=11 // pred_check_branch
          %862 = sbr.rel (%p860) target = $region108
        $region107: #{tpu_custom_call.1} parent=11 // pred_region
          %s864 = ssub.s32 16384, 16384
          %865 = vsyncadd [#allocation30], %s864
          %s866 = sshll.u32 [#allocation31], 4
          %s867 = int_to_ptr.vmem [resolvable:$true] %s866
          %872 = dma.hbm_to_vmem [thread:$0]  %s24, 16384, %s867, [#allocation30], 128, 128, 8
        $region108: #{tpu_custom_call.1} parent=11 // pred_fallthru
          _
        // Predicated region
        $region109: #{tpu_custom_call.1} parent=11 // pred_check
          %p873 = pneg %p596
        $region110: #{tpu_custom_call.1} parent=11 // pred_check_branch
          %875 = sbr.rel (%p873) target = $region112
        $region111: #{tpu_custom_call.1} parent=11 // pred_region
          _
        $region112: #{tpu_custom_call.1} parent=11 // pred_fallthru
          _
      $region12: #{tpu_custom_call.1} parent=5 // pred_fallthru
        _
      %p876 = scmp.lt.s32.totalorder %s45, 2
      // Predicated region
      $region113: #{tpu_custom_call.1} parent=5 // pred_check
        %p877 = pneg %p876
      $region114: #{tpu_custom_call.1} parent=5 // pred_check_branch
        %879 = sbr.rel (%p877) target = $region116
      $region115: #{tpu_custom_call.1} parent=5 // pred_region
        // Predicated region
        $region117: #{tpu_custom_call.1} parent=115 // pred_check
          %p880 = pneg %p65
        $region118: #{tpu_custom_call.1} parent=115 // pred_check_branch
          %882 = sbr.rel (%p880) target = $region120
        $region119: #{tpu_custom_call.1} parent=115 // pred_region
          %s883 = smul.u32 8, %s45
          %p884 = scmp.lt.s32.totalorder %s883, 15
          %s885 = scalar_select %p884, %s883, 15
          %s886 = smul.addr %s885, 2
          %s887 = smul.addr %s886, 8
          %s888 = scalar_lea.vmem %s0, %s887
          %s889 = smul.u32 8, %s45
        $region120: #{tpu_custom_call.1} parent=115 // pred_fallthru
          _
      $region116: #{tpu_custom_call.1} parent=5 // pred_fallthru
        _
      %p890 = scmp.le.s32.totalorder 1, %s45
      %p891 = scmp.lt.s32.totalorder %s45, 3
      %p892 = pnand %p890, %p891
      %p893 = pneg %p892
      // Predicated region
      $region121: #{tpu_custom_call.1} parent=5 // pred_check
        _
      $region122: #{tpu_custom_call.1} parent=5 // pred_check_branch
        %895 = sbr.rel (%p892) target = $region124
      $region123: #{tpu_custom_call.1} parent=5 // pred_region
        %s896 = ssub.s32 %s45, 1
        // Predicated region
        $region125: #{tpu_custom_call.1} parent=123 // pred_check
          %p897 = pneg %p92
        $region126: #{tpu_custom_call.1} parent=123 // pred_check_branch
          %899 = sbr.rel (%p897) target = $region128
        $region127: #{tpu_custom_call.1} parent=123 // pred_region
          %900 = dma.done [#allocation3], 256
        $region128: #{tpu_custom_call.1} parent=123 // pred_fallthru
          _
        // Predicated region
        $region129: #{tpu_custom_call.1} parent=123 // pred_check
          %p901 = pneg %p134
        $region130: #{tpu_custom_call.1} parent=123 // pred_check_branch
          %903 = sbr.rel (%p901) target = $region132
        $region131: #{tpu_custom_call.1} parent=123 // pred_region
          %904 = dma.done [#allocation6], 16
        $region132: #{tpu_custom_call.1} parent=123 // pred_fallthru
          _
        // Predicated region
        $region133: #{tpu_custom_call.1} parent=123 // pred_check
          %p905 = pneg %p176
        $region134: #{tpu_custom_call.1} parent=123 // pred_check_branch
          %907 = sbr.rel (%p905) target = $region136
        $region135: #{tpu_custom_call.1} parent=123 // pred_region
          %908 = dma.done [#allocation6], 16
        $region136: #{tpu_custom_call.1} parent=123 // pred_fallthru
          _
        // Predicated region
        $region137: #{tpu_custom_call.1} parent=123 // pred_check
          %p909 = pneg %p218
        $region138: #{tpu_custom_call.1} parent=123 // pred_check_branch
          %911 = sbr.rel (%p909) target = $region140
        $region139: #{tpu_custom_call.1} parent=123 // pred_region
          %912 = dma.done [#allocation9], 16
        $region140: #{tpu_custom_call.1} parent=123 // pred_fallthru
          _
        // Predicated region
        $region141: #{tpu_custom_call.1} parent=123 // pred_check
          %p913 = pneg %p239
        $region142: #{tpu_custom_call.1} parent=123 // pred_check_branch
          %915 = sbr.rel (%p913) target = $region144
        $region143: #{tpu_custom_call.1} parent=123 // pred_region
          %916 = dma.done [#allocation9], 1024
        $region144: #{tpu_custom_call.1} parent=123 // pred_fallthru
          _
        // Predicated region
        $region145: #{tpu_custom_call.1} parent=123 // pred_check
          %p917 = pneg %p260
        $region146: #{tpu_custom_call.1} parent=123 // pred_check_branch
          %919 = sbr.rel (%p917) target = $region148
        $region147: #{tpu_custom_call.1} parent=123 // pred_region
          %920 = dma.done [#allocation12], 16
        $region148: #{tpu_custom_call.1} parent=123 // pred_fallthru
          _
        // Predicated region
        $region149: #{tpu_custom_call.1} parent=123 // pred_check
          %p921 = pneg %p281
        $region150: #{tpu_custom_call.1} parent=123 // pred_check_branch
          %923 = sbr.rel (%p921) target = $region152
        $region151: #{tpu_custom_call.1} parent=123 // pred_region
          %924 = dma.done [#allocation12], 1024
        $region152: #{tpu_custom_call.1} parent=123 // pred_fallthru
          _
        // Predicated region
        $region153: #{tpu_custom_call.1} parent=123 // pred_check
          %p925 = pneg %p302
        $region154: #{tpu_custom_call.1} parent=123 // pred_check_branch
          %927 = sbr.rel (%p925) target = $region156
        $region155: #{tpu_custom_call.1} parent=123 // pred_region
          %928 = dma.done [#allocation15], 16
        $region156: #{tpu_custom_call.1} parent=123 // pred_fallthru
          _
        // Predicated region
        $region157: #{tpu_custom_call.1} parent=123 // pred_check
          %p929 = pneg %p323
        $region158: #{tpu_custom_call.1} parent=123 // pred_check_branch
          %931 = sbr.rel (%p929) target = $region160
        $region159: #{tpu_custom_call.1} parent=123 // pred_region
          %932 = dma.done [#allocation15], 1024
        $region160: #{tpu_custom_call.1} parent=123 // pred_fallthru
          _
        // Predicated region
        $region161: #{tpu_custom_call.1} parent=123 // pred_check
          %p933 = pneg %p344
        $region162: #{tpu_custom_call.1} parent=123 // pred_check_branch
          %935 = sbr.rel (%p933) target = $region164
        $region163: #{tpu_custom_call.1} parent=123 // pred_region
          %936 = dma.done [#allocation18], 16
        $region164: #{tpu_custom_call.1} parent=123 // pred_fallthru
          _
        // Predicated region
        $region165: #{tpu_custom_call.1} parent=123 // pred_check
          %p937 = pneg %p365
        $region166: #{tpu_custom_call.1} parent=123 // pred_check_branch
          %939 = sbr.rel (%p937) target = $region168
        $region167: #{tpu_custom_call.1} parent=123 // pred_region
          %940 = dma.done [#allocation18], 16
        $region168: #{tpu_custom_call.1} parent=123 // pred_fallthru
          _
        // Predicated region
        $region169: #{tpu_custom_call.1} parent=123 // pred_check
          %p941 = pneg %p386
        $region170: #{tpu_custom_call.1} parent=123 // pred_check_branch
          %943 = sbr.rel (%p941) target = $region172
        $region171: #{tpu_custom_call.1} parent=123 // pred_region
          %944 = dma.done [#allocation21], 16
        $region172: #{tpu_custom_call.1} parent=123 // pred_fallthru
          _
        // Predicated region
        $region173: #{tpu_custom_call.1} parent=123 // pred_check
          %p945 = pneg %p407
        $region174: #{tpu_custom_call.1} parent=123 // pred_check_branch
          %947 = sbr.rel (%p945) target = $region176
        $region175: #{tpu_custom_call.1} parent=123 // pred_region
          %948 = dma.done [#allocation21], 16
        $region176: #{tpu_custom_call.1} parent=123 // pred_fallthru
          _
        // Predicated region
        $region177: #{tpu_custom_call.1} parent=123 // pred_check
          %p949 = pneg %p428
        $region178: #{tpu_custom_call.1} parent=123 // pred_check_branch
          %951 = sbr.rel (%p949) target = $region180
        $region179: #{tpu_custom_call.1} parent=123 // pred_region
          %952 = dma.done [#allocation24], 16
        $region180: #{tpu_custom_call.1} parent=123 // pred_fallthru
          _
        // Predicated region
        $region181: #{tpu_custom_call.1} parent=123 // pred_check
          %p953 = pneg %p449
        $region182: #{tpu_custom_call.1} parent=123 // pred_check_branch
          %955 = sbr.rel (%p953) target = $region184
        $region183: #{tpu_custom_call.1} parent=123 // pred_region
          %956 = dma.done [#allocation24], 1024
        $region184: #{tpu_custom_call.1} parent=123 // pred_fallthru
          _
        // Predicated region
        $region185: #{tpu_custom_call.1} parent=123 // pred_check
          %p957 = pneg %p470
        $region186: #{tpu_custom_call.1} parent=123 // pred_check_branch
          %959 = sbr.rel (%p957) target = $region188
        $region187: #{tpu_custom_call.1} parent=123 // pred_region
          %960 = dma.done [#allocation27], 16
        $region188: #{tpu_custom_call.1} parent=123 // pred_fallthru
          _
        // Predicated region
        $region189: #{tpu_custom_call.1} parent=123 // pred_check
          %p961 = pneg %p512
        $region190: #{tpu_custom_call.1} parent=123 // pred_check_branch
          %963 = sbr.rel (%p961) target = $region192
        $region191: #{tpu_custom_call.1} parent=123 // pred_region
          %964 = dma.done [#allocation27], 16
        $region192: #{tpu_custom_call.1} parent=123 // pred_fallthru
          _
        // Predicated region
        $region193: #{tpu_custom_call.1} parent=123 // pred_check
          %p965 = pneg %p554
        $region194: #{tpu_custom_call.1} parent=123 // pred_check_branch
          %967 = sbr.rel (%p965) target = $region196
        $region195: #{tpu_custom_call.1} parent=123 // pred_region
          %968 = dma.done [#allocation30], 128
        $region196: #{tpu_custom_call.1} parent=123 // pred_fallthru
          _
        // Predicated region
        $region197: #{tpu_custom_call.1} parent=123 // pred_check
          %p969 = pneg %p575
        $region198: #{tpu_custom_call.1} parent=123 // pred_check_branch
          %971 = sbr.rel (%p969) target = $region200
        $region199: #{tpu_custom_call.1} parent=123 // pred_region
          %972 = dma.done [#allocation30], 16384
        $region200: #{tpu_custom_call.1} parent=123 // pred_fallthru
          _
        %s973 = smul.u32 8, %s50
        %p974 = scmp.lt.s32.totalorder %s973, 15
        %s975 = scalar_select %p974, %s973, 15
        %s976 = smul.addr %s975, 2
        %s977 = smul.addr %s976, 8
        %s978 = scalar_lea.vmem %s0, %s977
        %p979 = pneg %p71
        %p980 = pneg %p68
        %p981 = pneg %p92
        %p982 = pneg %p89
        %p983 = pneg %p113
        %p984 = pneg %p110
        %p985 = pneg %p134
        %p986 = pneg %p131
        %p987 = pneg %p155
        %p988 = pneg %p152
        %p989 = pneg %p176
        %p990 = pneg %p173
        %p991 = pneg %p197
        %p992 = pneg %p194
        %p993 = pneg %p218
        %p994 = pneg %p215
        %p995 = pneg %p239
        %p996 = pneg %p236
        %p997 = pneg %p260
        %p998 = pneg %p257
        %p999 = pneg %p281
        %p1000 = pneg %p278
        %p1001 = pneg %p302
        %p1002 = pneg %p299
        %p1003 = pneg %p323
        %p1004 = pneg %p320
        %p1005 = pneg %p344
        %p1006 = pneg %p341
        %p1007 = pneg %p365
        %p1008 = pneg %p362
        %p1009 = pneg %p386
        %p1010 = pneg %p383
        %p1011 = pneg %p407
        %p1012 = pneg %p404
        %p1013 = pneg %p428
        %p1014 = pneg %p425
        %p1015 = pneg %p449
        %p1016 = pneg %p446
        %p1017 = pneg %p470
        %p1018 = pneg %p467
        %p1019 = pneg %p491
        %p1020 = pneg %p488
        %p1021 = pneg %p512
        %p1022 = pneg %p509
        %p1023 = pneg %p533
        %p1024 = pneg %p530
        %p1025 = pneg %p554
        %p1026 = pneg %p551
        %p1027 = pneg %p575
        %p1028 = pneg %p572
        %p1029 = pneg %p596
        %p1030 = pneg %p593
        %p1031 = pneg %p622
        %p1032 = pneg %p619
        %s1033 = sand.u32 %s609, 1
        %s1034 = scalar_lea.sflag [#allocation4], %s1033
        %s1035 = sand.u32 %s609, 1
        %s1036 = smul.addr %s1035, 8
        %s1037 = scalar_lea.vmem [#allocation32], %s1036
        %s1038 = smul.u32 8, %s50
        %p1039 = scmp.lt.s32.totalorder %s1038, 15
        %s1040 = scalar_select %p1039, %s1038, 15
        %s1041 = smul.addr %s1040, 2
        %s1042 = smul.addr %s1041, 8
        %s1043 = scalar_lea.vmem %s0, %s1042
        %s1044 = smul.u32 8, %s50
        %v1045 = vld [vmem:[%s1043] sm:$0xff]
        %v1046 = vld [vmem:[%s1043 + $0x8] sm:$0xff]
        %v1047 = vld [vmem:[%s1043 + $0x10] sm:$0xff]
        %v1048 = vld [vmem:[%s1043 + $0x18] sm:$0xff]
        %v1049 = vld [vmem:[%s1043 + $0x20] sm:$0xff]
        %v1050 = vld [vmem:[%s1043 + $0x28] sm:$0xff]
        %v1051 = vld [vmem:[%s1043 + $0x30] sm:$0xff]
        %v1052 = vld [vmem:[%s1043 + $0x38] sm:$0xff]
        %v1053 = vld [vmem:[%s1043 + $0x40] sm:$0xff]
        %v1054 = vld [vmem:[%s1043 + $0x48] sm:$0xff]
        %v1055 = vld [vmem:[%s1043 + $0x50] sm:$0xff]
        %v1056 = vld [vmem:[%s1043 + $0x58] sm:$0xff]
        %v1057 = vld [vmem:[%s1043 + $0x60] sm:$0xff]
        %v1058 = vld [vmem:[%s1043 + $0x68] sm:$0xff]
        %v1059 = vld [vmem:[%s1043 + $0x70] sm:$0xff]
        %v1060 = vld [vmem:[%s1043 + $0x78] sm:$0xff]
        %v1061 = vld [vmem:[%s2] sm:$0xff]
        %v1062 = vld [vmem:[#allocation5] sm:$0x1]
        %v1064 = vlaneseq
        %v1065 = vshrl.u32 %v1064, 7
        %v1066 = vsub.s32 0, %v1065
        %v1067 = vrot.slane %v1062, %v1066
        %vm1069 = vcmask 64512
        %v1071 = vsel %vm1069, %v1045, 0
        %v1074 = vsel %vm1069, %v1046, 0
        %v1077 = vsel %vm1069, %v1047, 0
        %v1080 = vsel %vm1069, %v1048, 0
        %v1083 = vsel %vm1069, %v1049, 0
        %v1086 = vsel %vm1069, %v1050, 0
        %v1089 = vsel %vm1069, %v1051, 0
        %v1092 = vsel %vm1069, %v1052, 0
        %v1095 = vsel %vm1069, %v1053, 0
        %v1098 = vsel %vm1069, %v1054, 0
        %v1101 = vsel %vm1069, %v1055, 0
        %v1104 = vsel %vm1069, %v1056, 0
        %v1107 = vsel %vm1069, %v1057, 0
        %v1110 = vsel %vm1069, %v1058, 0
        %v1113 = vsel %vm1069, %v1059, 0
        %v1116 = vsel %vm1069, %v1060, 0
        %1118 = vmatprep.subr.mxu0 0.0
        %1119 = vmatpush1.msra.mxu0 0.0
        %1120 = vmatprep.subr.mxu0 0.0
        %1121 = vmatpush1.msra.mxu0 0.0
        %1122 = vmatprep.subr.mxu0 0.0
        %1123 = vmatpush1.msra.mxu0 0.0
        %1124 = vmatprep.subr.mxu0 0.0
        %1125 = vmatpush1.msra.mxu0 0.0
        %1126 = vmatprep.subr.mxu0 0.0
        %1127 = vmatpush1.msra.mxu0 0.0
        %1128 = vmatprep.subr.mxu0 0.0
        %1129 = vmatpush1.msra.mxu0 0.0
        %1130 = vmatprep.subr.mxu0 0.0
        %1131 = vmatpush1.msra.mxu0 0.0
        %1132 = vmatprep.subr.mxu0 0.0
        %1133 = vmatpush1.msra.mxu0 0.0
        %1134 = vmatprep.subr.mxu0 0.0
        %1135 = vmatpush1.msra.mxu0 0.0
        %1136 = vmatprep.subr.mxu0 0.0
        %1137 = vmatpush1.msra.mxu0 0.0
        %1138 = vmatprep.subr.mxu0 0.0
        %1139 = vmatpush1.msra.mxu0 0.0
        %1140 = vmatprep.subr.mxu0 0.0
        %1141 = vmatpush1.msra.mxu0 0.0
        %1142 = vmatprep.subr.mxu0 0.0
        %1143 = vmatpush1.msra.mxu0 0.0
        %1144 = vmatprep.subr.mxu0 0.0
        %1145 = vmatpush1.msra.mxu0 0.0
        %1146 = vmatprep.subr.mxu0 0.0
        %1147 = vmatpush1.msra.mxu0 0.0
        %1148 = vmatprep.subr.mxu0 0.0
        %1149 = vmatpush1.msra.mxu0 %v1061
        %1150 = vmatprep.subr.mxu0 0.0
        %1151 = vmatpush2.msra.mxu0 0.0
        %1152 = vmatprep.subr.mxu0 0.0
        %1153 = vmatpush2.msra.mxu0 0.0
        %1154 = vmatprep.subr.mxu0 0.0
        %1155 = vmatpush2.msra.mxu0 0.0
        %1156 = vmatprep.subr.mxu0 0.0
        %1157 = vmatpush2.msra.mxu0 0.0
        %1158 = vmatprep.subr.mxu0 0.0
        %1159 = vmatpush2.msra.mxu0 0.0
        %1160 = vmatprep.subr.mxu0 0.0
        %1161 = vmatpush2.msra.mxu0 0.0
        %1162 = vmatprep.subr.mxu0 0.0
        %1163 = vmatpush2.msra.mxu0 0.0
        %1164 = vmatprep.subr.mxu0 0.0
        %1165 = vmatpush2.msra.mxu0 0.0
        %1166 = vmatprep.subr.mxu0 0.0
        %1167 = vmatpush2.msra.mxu0 0.0
        %1168 = vmatprep.subr.mxu0 0.0
        %1169 = vmatpush2.msra.mxu0 0.0
        %1170 = vmatprep.subr.mxu0 0.0
        %1171 = vmatpush2.msra.mxu0 0.0
        %1172 = vmatprep.subr.mxu0 0.0
        %1173 = vmatpush2.msra.mxu0 0.0
        %1174 = vmatprep.subr.mxu0 0.0
        %1175 = vmatpush2.msra.mxu0 0.0
        %1176 = vmatprep.subr.mxu0 0.0
        %1177 = vmatpush2.msra.mxu0 0.0
        %1178 = vmatprep.subr.mxu0 0.0
        %1179 = vmatpush2.msra.mxu0 0.0
        %1180 = vmatprep.subr.mxu0 0.0
        %1181 = vmatpush2.msra.mxu0 0.0
        %1182 = vmatprep.mubr.f32.mxu0 0.0
        %1183 = vmatmul.mubr.f32.gmra.mxu0 %v1071
        %v1184 = vpop.f32.mrf.mxu0
        %v1185 = vadd.f32 %v1067, %v1184
        %v1186 = vpop.f32.mrf.mxu0
        %1187 = vmatprep.mubr.f32.mxu0 0.0
        %1188 = vmatmul.mubr.f32.gmra.mxu0 %v1074
        %v1189 = vpop.f32.mrf.mxu0
        %v1190 = vadd.f32 %v1067, %v1189
        %v1191 = vpop.f32.mrf.mxu0
        %1192 = vmatprep.mubr.f32.mxu0 0.0
        %1193 = vmatmul.mubr.f32.gmra.mxu0 %v1077
        %v1194 = vpop.f32.mrf.mxu0
        %v1195 = vadd.f32 %v1067, %v1194
        %v1196 = vpop.f32.mrf.mxu0
        %1197 = vmatprep.mubr.f32.mxu0 0.0
        %1198 = vmatmul.mubr.f32.gmra.mxu0 %v1080
        %v1199 = vpop.f32.mrf.mxu0
        %v1200 = vadd.f32 %v1067, %v1199
        %v1201 = vpop.f32.mrf.mxu0
        %1202 = vmatprep.mubr.f32.mxu0 0.0
        %1203 = vmatmul.mubr.f32.gmra.mxu0 %v1083
        %v1204 = vpop.f32.mrf.mxu0
        %v1205 = vadd.f32 %v1067, %v1204
        %v1206 = vpop.f32.mrf.mxu0
        %1207 = vmatprep.mubr.f32.mxu0 0.0
        %1208 = vmatmul.mubr.f32.gmra.mxu0 %v1086
        %v1209 = vpop.f32.mrf.mxu0
        %v1210 = vadd.f32 %v1067, %v1209
        %v1211 = vpop.f32.mrf.mxu0
        %1212 = vmatprep.mubr.f32.mxu0 0.0
        %1213 = vmatmul.mubr.f32.gmra.mxu0 %v1089
        %v1214 = vpop.f32.mrf.mxu0
        %v1215 = vadd.f32 %v1067, %v1214
        %v1216 = vpop.f32.mrf.mxu0
        %1217 = vmatprep.mubr.f32.mxu0 0.0
        %1218 = vmatmul.mubr.f32.gmra.mxu0 %v1092
        %v1219 = vpop.f32.mrf.mxu0
        %v1220 = vadd.f32 %v1067, %v1219
        %v1221 = vpop.f32.mrf.mxu0
        %1222 = vmatprep.mubr.f32.mxu0 0.0
        %1223 = vmatmul.mubr.f32.gmra.mxu0 %v1095
        %v1224 = vpop.f32.mrf.mxu0
        %v1225 = vadd.f32 %v1067, %v1224
        %v1226 = vpop.f32.mrf.mxu0
        %1227 = vmatprep.mubr.f32.mxu0 0.0
        %1228 = vmatmul.mubr.f32.gmra.mxu0 %v1098
        %v1229 = vpop.f32.mrf.mxu0
        %v1230 = vadd.f32 %v1067, %v1229
        %v1231 = vpop.f32.mrf.mxu0
        %1232 = vmatprep.mubr.f32.mxu0 0.0
        %1233 = vmatmul.mubr.f32.gmra.mxu0 %v1101
        %v1234 = vpop.f32.mrf.mxu0
        %v1235 = vadd.f32 %v1067, %v1234
        %v1236 = vpop.f32.mrf.mxu0
        %1237 = vmatprep.mubr.f32.mxu0 0.0
        %1238 = vmatmul.mubr.f32.gmra.mxu0 %v1104
        %v1239 = vpop.f32.mrf.mxu0
        %v1240 = vadd.f32 %v1067, %v1239
        %v1241 = vpop.f32.mrf.mxu0
        %1242 = vmatprep.mubr.f32.mxu0 0.0
        %1243 = vmatmul.mubr.f32.gmra.mxu0 %v1107
        %v1244 = vpop.f32.mrf.mxu0
        %v1245 = vadd.f32 %v1067, %v1244
        %v1246 = vpop.f32.mrf.mxu0
        %1247 = vmatprep.mubr.f32.mxu0 0.0
        %1248 = vmatmul.mubr.f32.gmra.mxu0 %v1110
        %v1249 = vpop.f32.mrf.mxu0
        %v1250 = vadd.f32 %v1067, %v1249
        %v1251 = vpop.f32.mrf.mxu0
        %1252 = vmatprep.mubr.f32.mxu0 0.0
        %1253 = vmatmul.mubr.f32.gmra.mxu0 %v1113
        %v1254 = vpop.f32.mrf.mxu0
        %v1255 = vadd.f32 %v1067, %v1254
        %v1256 = vpop.f32.mrf.mxu0
        %1257 = vmatprep.mubr.f32.mxu0 0.0
        %1258 = vmatmul.mubr.f32.gmra.mxu0 %v1116
        %v1259 = vpop.f32.mrf.mxu0
        %v1260 = vadd.f32 %v1067, %v1259
        %v1261 = vpop.f32.mrf.mxu0
        %1262 = vdwg.mxu0
        %v1263 = vmax.f32 %v1185, 0.0
        %v1264 = vmax.f32 %v1190, 0.0
        %v1265 = vmax.f32 %v1195, 0.0
        %v1266 = vmax.f32 %v1200, 0.0
        %v1267 = vmax.f32 %v1205, 0.0
        %v1268 = vmax.f32 %v1210, 0.0
        %v1269 = vmax.f32 %v1215, 0.0
        %v1270 = vmax.f32 %v1220, 0.0
        %v1271 = vmax.f32 %v1225, 0.0
        %v1272 = vmax.f32 %v1230, 0.0
        %v1273 = vmax.f32 %v1235, 0.0
        %v1274 = vmax.f32 %v1240, 0.0
        %v1275 = vmax.f32 %v1245, 0.0
        %v1276 = vmax.f32 %v1250, 0.0
        %v1277 = vmax.f32 %v1255, 0.0
        %v1278 = vmax.f32 %v1260, 0.0
        %v1279 = vld [vmem:[%s4] sm:$0xff]
        %v1280 = vld [vmem:[%s4 + $0x8] sm:$0xff]
        %v1281 = vld [vmem:[%s4 + $0x10] sm:$0xff]
        %v1282 = vld [vmem:[%s4 + $0x18] sm:$0xff]
        %v1283 = vld [vmem:[#allocation7] sm:$0x1]
        %v1285 = vlaneseq
        %v1286 = vshrl.u32 %v1285, 7
        %v1287 = vsub.s32 0, %v1286
        %v1288 = vrot.slane %v1283, %v1287
        %vm1290 = vcmask 261120
        %v1292 = vsel %vm1290, %v1263, 0
        %v1295 = vsel %vm1290, %v1264, 0
        %v1298 = vsel %vm1290, %v1265, 0
        %v1301 = vsel %vm1290, %v1266, 0
        %v1304 = vsel %vm1290, %v1267, 0
        %v1307 = vsel %vm1290, %v1268, 0
        %v1310 = vsel %vm1290, %v1269, 0
        %v1313 = vsel %vm1290, %v1270, 0
        %v1316 = vsel %vm1290, %v1271, 0
        %v1319 = vsel %vm1290, %v1272, 0
        %v1322 = vsel %vm1290, %v1273, 0
        %v1325 = vsel %vm1290, %v1274, 0
        %v1328 = vsel %vm1290, %v1275, 0
        %v1331 = vsel %vm1290, %v1276, 0
        %v1334 = vsel %vm1290, %v1277, 0
        %v1337 = vsel %vm1290, %v1278, 0
        %1339 = vmatprep.subr.mxu0 0.0
        %1340 = vmatpush1.msra.mxu0 0.0
        %1341 = vmatprep.subr.mxu0 0.0
        %1342 = vmatpush1.msra.mxu0 0.0
        %1343 = vmatprep.subr.mxu0 0.0
        %1344 = vmatpush1.msra.mxu0 0.0
        %1345 = vmatprep.subr.mxu0 0.0
        %1346 = vmatpush1.msra.mxu0 0.0
        %1347 = vmatprep.subr.mxu0 0.0
        %1348 = vmatpush1.msra.mxu0 0.0
        %1349 = vmatprep.subr.mxu0 0.0
        %1350 = vmatpush1.msra.mxu0 0.0
        %1351 = vmatprep.subr.mxu0 0.0
        %1352 = vmatpush1.msra.mxu0 0.0
        %1353 = vmatprep.subr.mxu0 0.0
        %1354 = vmatpush1.msra.mxu0 0.0
        %1355 = vmatprep.subr.mxu0 0.0
        %1356 = vmatpush1.msra.mxu0 0.0
        %1357 = vmatprep.subr.mxu0 0.0
        %1358 = vmatpush1.msra.mxu0 0.0
        %1359 = vmatprep.subr.mxu0 0.0
        %1360 = vmatpush1.msra.mxu0 0.0
        %1361 = vmatprep.subr.mxu0 0.0
        %1362 = vmatpush1.msra.mxu0 0.0
        %1363 = vmatprep.subr.mxu0 0.0
        %1364 = vmatpush1.msra.mxu0 %v1282
        %1365 = vmatprep.subr.mxu0 0.0
        %1366 = vmatpush1.msra.mxu0 %v1281
        %1367 = vmatprep.subr.mxu0 0.0
        %1368 = vmatpush1.msra.mxu0 %v1280
        %1369 = vmatprep.subr.mxu0 0.0
        %1370 = vmatpush1.msra.mxu0 %v1279
        %1371 = vmatprep.subr.mxu0 0.0
        %1372 = vmatpush2.msra.mxu0 0.0
        %1373 = vmatprep.subr.mxu0 0.0
        %1374 = vmatpush2.msra.mxu0 0.0
        %1375 = vmatprep.subr.mxu0 0.0
        %1376 = vmatpush2.msra.mxu0 0.0
        %1377 = vmatprep.subr.mxu0 0.0
        %1378 = vmatpush2.msra.mxu0 0.0
        %1379 = vmatprep.subr.mxu0 0.0
        %1380 = vmatpush2.msra.mxu0 0.0
        %1381 = vmatprep.subr.mxu0 0.0
        %1382 = vmatpush2.msra.mxu0 0.0
        %1383 = vmatprep.subr.mxu0 0.0
        %1384 = vmatpush2.msra.mxu0 0.0
        %1385 = vmatprep.subr.mxu0 0.0
        %1386 = vmatpush2.msra.mxu0 0.0
        %1387 = vmatprep.subr.mxu0 0.0
        %1388 = vmatpush2.msra.mxu0 0.0
        %1389 = vmatprep.subr.mxu0 0.0
        %1390 = vmatpush2.msra.mxu0 0.0
        %1391 = vmatprep.subr.mxu0 0.0
        %1392 = vmatpush2.msra.mxu0 0.0
        %1393 = vmatprep.subr.mxu0 0.0
        %1394 = vmatpush2.msra.mxu0 0.0
        %1395 = vmatprep.subr.mxu0 0.0
        %1396 = vmatpush2.msra.mxu0 0.0
        %1397 = vmatprep.subr.mxu0 0.0
        %1398 = vmatpush2.msra.mxu0 0.0
        %1399 = vmatprep.subr.mxu0 0.0
        %1400 = vmatpush2.msra.mxu0 0.0
        %1401 = vmatprep.subr.mxu0 0.0
        %1402 = vmatpush2.msra.mxu0 0.0
        %1403 = vmatprep.mubr.f32.mxu0 0.0
        %1404 = vmatmul.mubr.f32.gmra.mxu0 %v1292
        %v1405 = vpop.f32.mrf.mxu0
        %v1406 = vadd.f32 %v1288, %v1405
        %v1407 = vpop.f32.mrf.mxu0
        %1408 = vmatprep.mubr.f32.mxu0 0.0
        %1409 = vmatmul.mubr.f32.gmra.mxu0 %v1295
        %v1410 = vpop.f32.mrf.mxu0
        %v1411 = vadd.f32 %v1288, %v1410
        %v1412 = vpop.f32.mrf.mxu0
        %1413 = vmatprep.mubr.f32.mxu0 0.0
        %1414 = vmatmul.mubr.f32.gmra.mxu0 %v1298
        %v1415 = vpop.f32.mrf.mxu0
        %v1416 = vadd.f32 %v1288, %v1415
        %v1417 = vpop.f32.mrf.mxu0
        %1418 = vmatprep.mubr.f32.mxu0 0.0
        %1419 = vmatmul.mubr.f32.gmra.mxu0 %v1301
        %v1420 = vpop.f32.mrf.mxu0
        %v1421 = vadd.f32 %v1288, %v1420
        %v1422 = vpop.f32.mrf.mxu0
        %1423 = vmatprep.mubr.f32.mxu0 0.0
        %1424 = vmatmul.mubr.f32.gmra.mxu0 %v1304
        %v1425 = vpop.f32.mrf.mxu0
        %v1426 = vadd.f32 %v1288, %v1425
        %v1427 = vpop.f32.mrf.mxu0
        %1428 = vmatprep.mubr.f32.mxu0 0.0
        %1429 = vmatmul.mubr.f32.gmra.mxu0 %v1307
        %v1430 = vpop.f32.mrf.mxu0
        %v1431 = vadd.f32 %v1288, %v1430
        %v1432 = vpop.f32.mrf.mxu0
        %1433 = vmatprep.mubr.f32.mxu0 0.0
        %1434 = vmatmul.mubr.f32.gmra.mxu0 %v1310
        %v1435 = vpop.f32.mrf.mxu0
        %v1436 = vadd.f32 %v1288, %v1435
        %v1437 = vpop.f32.mrf.mxu0
        %1438 = vmatprep.mubr.f32.mxu0 0.0
        %1439 = vmatmul.mubr.f32.gmra.mxu0 %v1313
        %v1440 = vpop.f32.mrf.mxu0
        %v1441 = vadd.f32 %v1288, %v1440
        %v1442 = vpop.f32.mrf.mxu0
        %1443 = vmatprep.mubr.f32.mxu0 0.0
        %1444 = vmatmul.mubr.f32.gmra.mxu0 %v1316
        %v1445 = vpop.f32.mrf.mxu0
        %v1446 = vadd.f32 %v1288, %v1445
        %v1447 = vpop.f32.mrf.mxu0
        %1448 = vmatprep.mubr.f32.mxu0 0.0
        %1449 = vmatmul.mubr.f32.gmra.mxu0 %v1319
        %v1450 = vpop.f32.mrf.mxu0
        %v1451 = vadd.f32 %v1288, %v1450
        %v1452 = vpop.f32.mrf.mxu0
        %1453 = vmatprep.mubr.f32.mxu0 0.0
        %1454 = vmatmul.mubr.f32.gmra.mxu0 %v1322
        %v1455 = vpop.f32.mrf.mxu0
        %v1456 = vadd.f32 %v1288, %v1455
        %v1457 = vpop.f32.mrf.mxu0
        %1458 = vmatprep.mubr.f32.mxu0 0.0
        %1459 = vmatmul.mubr.f32.gmra.mxu0 %v1325
        %v1460 = vpop.f32.mrf.mxu0
        %v1461 = vadd.f32 %v1288, %v1460
        %v1462 = vpop.f32.mrf.mxu0
        %1463 = vmatprep.mubr.f32.mxu0 0.0
        %1464 = vmatmul.mubr.f32.gmra.mxu0 %v1328
        %v1465 = vpop.f32.mrf.mxu0
        %v1466 = vadd.f32 %v1288, %v1465
        %v1467 = vpop.f32.mrf.mxu0
        %1468 = vmatprep.mubr.f32.mxu0 0.0
        %1469 = vmatmul.mubr.f32.gmra.mxu0 %v1331
        %v1470 = vpop.f32.mrf.mxu0
        %v1471 = vadd.f32 %v1288, %v1470
        %v1472 = vpop.f32.mrf.mxu0
        %1473 = vmatprep.mubr.f32.mxu0 0.0
        %1474 = vmatmul.mubr.f32.gmra.mxu0 %v1334
        %v1475 = vpop.f32.mrf.mxu0
        %v1476 = vadd.f32 %v1288, %v1475
        %v1477 = vpop.f32.mrf.mxu0
        %1478 = vmatprep.mubr.f32.mxu0 0.0
        %1479 = vmatmul.mubr.f32.gmra.mxu0 %v1337
        %v1480 = vpop.f32.mrf.mxu0
        %v1481 = vadd.f32 %v1288, %v1480
        %v1482 = vpop.f32.mrf.mxu0
        %1483 = vdwg.mxu0
        %v1484 = vmul.f32 %v1406, 8.0
        %v1485 = vmul.f32 %v1411, 8.0
        %v1486 = vmul.f32 %v1416, 8.0
        %v1487 = vmul.f32 %v1421, 8.0
        %v1488 = vmul.f32 %v1426, 8.0
        %v1489 = vmul.f32 %v1431, 8.0
        %v1490 = vmul.f32 %v1436, 8.0
        %v1491 = vmul.f32 %v1441, 8.0
        %v1492 = vmul.f32 %v1446, 8.0
        %v1493 = vmul.f32 %v1451, 8.0
        %v1494 = vmul.f32 %v1456, 8.0
        %v1495 = vmul.f32 %v1461, 8.0
        %v1496 = vmul.f32 %v1466, 8.0
        %v1497 = vmul.f32 %v1471, 8.0
        %v1498 = vmul.f32 %v1476, 8.0
        %v1499 = vmul.f32 %v1481, 8.0
        %v1500 = vld [vmem:[#allocation2] sm:$0xff]
        %v1501 = vld [vmem:[#allocation2 + $0x8] sm:$0xff]
        %v1502 = vadd.f32 %v1484, %v1500
        %v1503 = vadd.f32 %v1485, %v1501
        %v1504 = vadd.f32 %v1486, %v1500
        %v1505 = vadd.f32 %v1487, %v1501
        %v1506 = vadd.f32 %v1488, %v1500
        %v1507 = vadd.f32 %v1489, %v1501
        %v1508 = vadd.f32 %v1490, %v1500
        %v1509 = vadd.f32 %v1491, %v1501
        %v1510 = vadd.f32 %v1492, %v1500
        %v1511 = vadd.f32 %v1493, %v1501
        %v1512 = vadd.f32 %v1494, %v1500
        %v1513 = vadd.f32 %v1495, %v1501
        %v1514 = vadd.f32 %v1496, %v1500
        %v1515 = vadd.f32 %v1497, %v1501
        %v1516 = vadd.f32 %v1498, %v1500
        %v1517 = vadd.f32 %v1499, %v1501
        %v1518 = vld [vmem:[%s6] sm:$0xff]
        %v1519 = vld [vmem:[%s6 + $0x8] sm:$0xff]
        %v1520 = vld [vmem:[%s6 + $0x10] sm:$0xff]
        %v1521 = vld [vmem:[%s6 + $0x18] sm:$0xff]
        %v1522 = vld [vmem:[%s6 + $0x20] sm:$0xff]
        %v1523 = vld [vmem:[%s6 + $0x28] sm:$0xff]
        %v1524 = vld [vmem:[%s6 + $0x30] sm:$0xff]
        %v1525 = vld [vmem:[%s6 + $0x38] sm:$0xff]
        %v1526 = vld [vmem:[#allocation8] sm:$0x1]
        %v1528 = vlaneseq
        %v1529 = vshrl.u32 %v1528, 7
        %v1530 = vsub.s32 0, %v1529
        %v1531 = vrot.slane %v1526, %v1530
        %vm1533 = vcmask 523264
        %v1535 = vsel %vm1533, %v1502, 0
        %v1538 = vsel %vm1533, %v1503, 0
        %v1541 = vsel %vm1533, %v1504, 0
        %v1544 = vsel %vm1533, %v1505, 0
        %v1547 = vsel %vm1533, %v1506, 0
        %v1550 = vsel %vm1533, %v1507, 0
        %v1553 = vsel %vm1533, %v1508, 0
        %v1556 = vsel %vm1533, %v1509, 0
        %v1559 = vsel %vm1533, %v1510, 0
        %v1562 = vsel %vm1533, %v1511, 0
        %v1565 = vsel %vm1533, %v1512, 0
        %v1568 = vsel %vm1533, %v1513, 0
        %v1571 = vsel %vm1533, %v1514, 0
        %v1574 = vsel %vm1533, %v1515, 0
        %v1577 = vsel %vm1533, %v1516, 0
        %v1580 = vsel %vm1533, %v1517, 0
        %1582 = vmatprep.subr.mxu0 0.0
        %1583 = vmatpush1.msra.mxu0 0.0
        %1584 = vmatprep.subr.mxu0 0.0
        %1585 = vmatpush1.msra.mxu0 0.0
        %1586 = vmatprep.subr.mxu0 0.0
        %1587 = vmatpush1.msra.mxu0 0.0
        %1588 = vmatprep.subr.mxu0 0.0
        %1589 = vmatpush1.msra.mxu0 0.0
        %1590 = vmatprep.subr.mxu0 0.0
        %1591 = vmatpush1.msra.mxu0 0.0
        %1592 = vmatprep.subr.mxu0 0.0
        %1593 = vmatpush1.msra.mxu0 0.0
        %1594 = vmatprep.subr.mxu0 0.0
        %1595 = vmatpush1.msra.mxu0 0.0
        %1596 = vmatprep.subr.mxu0 0.0
        %1597 = vmatpush1.msra.mxu0 0.0
        %1598 = vmatprep.subr.mxu0 0.0
        %1599 = vmatpush1.msra.mxu0 %v1525
        %1600 = vmatprep.subr.mxu0 0.0
        %1601 = vmatpush1.msra.mxu0 %v1524
        %1602 = vmatprep.subr.mxu0 0.0
        %1603 = vmatpush1.msra.mxu0 %v1523
        %1604 = vmatprep.subr.mxu0 0.0
        %1605 = vmatpush1.msra.mxu0 %v1522
        %1606 = vmatprep.subr.mxu0 0.0
        %1607 = vmatpush1.msra.mxu0 %v1521
        %1608 = vmatprep.subr.mxu0 0.0
        %1609 = vmatpush1.msra.mxu0 %v1520
        %1610 = vmatprep.subr.mxu0 0.0
        %1611 = vmatpush1.msra.mxu0 %v1519
        %1612 = vmatprep.subr.mxu0 0.0
        %1613 = vmatpush1.msra.mxu0 %v1518
        %1614 = vmatprep.subr.mxu0 0.0
        %1615 = vmatpush2.msra.mxu0 0.0
        %1616 = vmatprep.subr.mxu0 0.0
        %1617 = vmatpush2.msra.mxu0 0.0
        %1618 = vmatprep.subr.mxu0 0.0
        %1619 = vmatpush2.msra.mxu0 0.0
        %1620 = vmatprep.subr.mxu0 0.0
        %1621 = vmatpush2.msra.mxu0 0.0
        %1622 = vmatprep.subr.mxu0 0.0
        %1623 = vmatpush2.msra.mxu0 0.0
        %1624 = vmatprep.subr.mxu0 0.0
        %1625 = vmatpush2.msra.mxu0 0.0
        %1626 = vmatprep.subr.mxu0 0.0
        %1627 = vmatpush2.msra.mxu0 0.0
        %1628 = vmatprep.subr.mxu0 0.0
        %1629 = vmatpush2.msra.mxu0 0.0
        %1630 = vmatprep.subr.mxu0 0.0
        %1631 = vmatpush2.msra.mxu0 0.0
        %1632 = vmatprep.subr.mxu0 0.0
        %1633 = vmatpush2.msra.mxu0 0.0
        %1634 = vmatprep.subr.mxu0 0.0
        %1635 = vmatpush2.msra.mxu0 0.0
        %1636 = vmatprep.subr.mxu0 0.0
        %1637 = vmatpush2.msra.mxu0 0.0
        %1638 = vmatprep.subr.mxu0 0.0
        %1639 = vmatpush2.msra.mxu0 0.0
        %1640 = vmatprep.subr.mxu0 0.0
        %1641 = vmatpush2.msra.mxu0 0.0
        %1642 = vmatprep.subr.mxu0 0.0
        %1643 = vmatpush2.msra.mxu0 0.0
        %1644 = vmatprep.subr.mxu0 0.0
        %1645 = vmatpush2.msra.mxu0 0.0
        %1646 = vmatprep.mubr.f32.mxu0 0.0
        %1647 = vmatmul.mubr.f32.gmra.mxu0 %v1535
        %v1648 = vpop.f32.mrf.mxu0
        %v1649 = vadd.f32 %v1531, %v1648
        %v1650 = vpop.f32.mrf.mxu0
        %1651 = vmatprep.mubr.f32.mxu0 0.0
        %1652 = vmatmul.mubr.f32.gmra.mxu0 %v1538
        %v1653 = vpop.f32.mrf.mxu0
        %v1654 = vadd.f32 %v1531, %v1653
        %v1655 = vpop.f32.mrf.mxu0
        %1656 = vmatprep.mubr.f32.mxu0 0.0
        %1657 = vmatmul.mubr.f32.gmra.mxu0 %v1541
        %v1658 = vpop.f32.mrf.mxu0
        %v1659 = vadd.f32 %v1531, %v1658
        %v1660 = vpop.f32.mrf.mxu0
        %1661 = vmatprep.mubr.f32.mxu0 0.0
        %1662 = vmatmul.mubr.f32.gmra.mxu0 %v1544
        %v1663 = vpop.f32.mrf.mxu0
        %v1664 = vadd.f32 %v1531, %v1663
        %v1665 = vpop.f32.mrf.mxu0
        %1666 = vmatprep.mubr.f32.mxu0 0.0
        %1667 = vmatmul.mubr.f32.gmra.mxu0 %v1547
        %v1668 = vpop.f32.mrf.mxu0
        %v1669 = vadd.f32 %v1531, %v1668
        %v1670 = vpop.f32.mrf.mxu0
        %1671 = vmatprep.mubr.f32.mxu0 0.0
        %1672 = vmatmul.mubr.f32.gmra.mxu0 %v1550
        %v1673 = vpop.f32.mrf.mxu0
        %v1674 = vadd.f32 %v1531, %v1673
        %v1675 = vpop.f32.mrf.mxu0
        %1676 = vmatprep.mubr.f32.mxu0 0.0
        %1677 = vmatmul.mubr.f32.gmra.mxu0 %v1553
        %v1678 = vpop.f32.mrf.mxu0
        %v1679 = vadd.f32 %v1531, %v1678
        %v1680 = vpop.f32.mrf.mxu0
        %1681 = vmatprep.mubr.f32.mxu0 0.0
        %1682 = vmatmul.mubr.f32.gmra.mxu0 %v1556
        %v1683 = vpop.f32.mrf.mxu0
        %v1684 = vadd.f32 %v1531, %v1683
        %v1685 = vpop.f32.mrf.mxu0
        %1686 = vmatprep.mubr.f32.mxu0 0.0
        %1687 = vmatmul.mubr.f32.gmra.mxu0 %v1559
        %v1688 = vpop.f32.mrf.mxu0
        %v1689 = vadd.f32 %v1531, %v1688
        %v1690 = vpop.f32.mrf.mxu0
        %1691 = vmatprep.mubr.f32.mxu0 0.0
        %1692 = vmatmul.mubr.f32.gmra.mxu0 %v1562
        %v1693 = vpop.f32.mrf.mxu0
        %v1694 = vadd.f32 %v1531, %v1693
        %v1695 = vpop.f32.mrf.mxu0
        %1696 = vmatprep.mubr.f32.mxu0 0.0
        %1697 = vmatmul.mubr.f32.gmra.mxu0 %v1565
        %v1698 = vpop.f32.mrf.mxu0
        %v1699 = vadd.f32 %v1531, %v1698
        %v1700 = vpop.f32.mrf.mxu0
        %1701 = vmatprep.mubr.f32.mxu0 0.0
        %1702 = vmatmul.mubr.f32.gmra.mxu0 %v1568
        %v1703 = vpop.f32.mrf.mxu0
        %v1704 = vadd.f32 %v1531, %v1703
        %v1705 = vpop.f32.mrf.mxu0
        %1706 = vmatprep.mubr.f32.mxu0 0.0
        %1707 = vmatmul.mubr.f32.gmra.mxu0 %v1571
        %v1708 = vpop.f32.mrf.mxu0
        %v1709 = vadd.f32 %v1531, %v1708
        %v1710 = vpop.f32.mrf.mxu0
        %1711 = vmatprep.mubr.f32.mxu0 0.0
        %1712 = vmatmul.mubr.f32.gmra.mxu0 %v1574
        %v1713 = vpop.f32.mrf.mxu0
        %v1714 = vadd.f32 %v1531, %v1713
        %v1715 = vpop.f32.mrf.mxu0
        %1716 = vmatprep.mubr.f32.mxu0 0.0
        %1717 = vmatmul.mubr.f32.gmra.mxu0 %v1577
        %v1718 = vpop.f32.mrf.mxu0
        %v1719 = vadd.f32 %v1531, %v1718
        %v1720 = vpop.f32.mrf.mxu0
        %1721 = vmatprep.mubr.f32.mxu0 0.0
        %1722 = vmatmul.mubr.f32.gmra.mxu0 %v1580
        %v1723 = vpop.f32.mrf.mxu0
        %v1724 = vadd.f32 %v1531, %v1723
        %v1725 = vpop.f32.mrf.mxu0
        %1726 = vdwg.mxu0
        %v1727 = vld [vmem:[#allocation10] sm:$0xff]
        %v1728 = vld [vmem:[#allocation10 + $0x8] sm:$0xff]
        %v1729 = vld [vmem:[#allocation10 + $0x10] sm:$0xff]
        %v1730 = vld [vmem:[#allocation10 + $0x18] sm:$0xff]
        %v1731 = vld [vmem:[#allocation10 + $0x20] sm:$0xff]
        %v1732 = vld [vmem:[#allocation10 + $0x28] sm:$0xff]
        %v1733 = vld [vmem:[#allocation10 + $0x30] sm:$0xff]
        %v1734 = vld [vmem:[#allocation10 + $0x38] sm:$0xff]
        %v1735 = vld [vmem:[#allocation11] sm:$0x1]
        %v1737 = vlaneseq
        %v1738 = vshrl.u32 %v1737, 7
        %v1739 = vsub.s32 0, %v1738
        %v1740 = vrot.slane %v1735, %v1739
        %1742 = vmatprep.subr.mxu0 0.0
        %1743 = vmatpush1.msra.mxu0 0.0
        %1744 = vmatprep.subr.mxu0 0.0
        %1745 = vmatpush1.msra.mxu0 0.0
        %1746 = vmatprep.subr.mxu0 0.0
        %1747 = vmatpush1.msra.mxu0 0.0
        %1748 = vmatprep.subr.mxu0 0.0
        %1749 = vmatpush1.msra.mxu0 0.0
        %1750 = vmatprep.subr.mxu0 0.0
        %1751 = vmatpush1.msra.mxu0 0.0
        %1752 = vmatprep.subr.mxu0 0.0
        %1753 = vmatpush1.msra.mxu0 0.0
        %1754 = vmatprep.subr.mxu0 0.0
        %1755 = vmatpush1.msra.mxu0 0.0
        %1756 = vmatprep.subr.mxu0 0.0
        %1757 = vmatpush1.msra.mxu0 0.0
        %1758 = vmatprep.subr.mxu0 0.0
        %1759 = vmatpush1.msra.mxu0 %v1734
        %1760 = vmatprep.subr.mxu0 0.0
        %1761 = vmatpush1.msra.mxu0 %v1733
        %1762 = vmatprep.subr.mxu0 0.0
        %1763 = vmatpush1.msra.mxu0 %v1732
        %1764 = vmatprep.subr.mxu0 0.0
        %1765 = vmatpush1.msra.mxu0 %v1731
        %1766 = vmatprep.subr.mxu0 0.0
        %1767 = vmatpush1.msra.mxu0 %v1730
        %1768 = vmatprep.subr.mxu0 0.0
        %1769 = vmatpush1.msra.mxu0 %v1729
        %1770 = vmatprep.subr.mxu0 0.0
        %1771 = vmatpush1.msra.mxu0 %v1728
        %1772 = vmatprep.subr.mxu0 0.0
        %1773 = vmatpush1.msra.mxu0 %v1727
        %1774 = vmatprep.subr.mxu0 0.0
        %1775 = vmatpush2.msra.mxu0 0.0
        %1776 = vmatprep.subr.mxu0 0.0
        %1777 = vmatpush2.msra.mxu0 0.0
        %1778 = vmatprep.subr.mxu0 0.0
        %1779 = vmatpush2.msra.mxu0 0.0
        %1780 = vmatprep.subr.mxu0 0.0
        %1781 = vmatpush2.msra.mxu0 0.0
        %1782 = vmatprep.subr.mxu0 0.0
        %1783 = vmatpush2.msra.mxu0 0.0
        %1784 = vmatprep.subr.mxu0 0.0
        %1785 = vmatpush2.msra.mxu0 0.0
        %1786 = vmatprep.subr.mxu0 0.0
        %1787 = vmatpush2.msra.mxu0 0.0
        %1788 = vmatprep.subr.mxu0 0.0
        %1789 = vmatpush2.msra.mxu0 0.0
        %1790 = vmatprep.subr.mxu0 0.0
        %1791 = vmatpush2.msra.mxu0 0.0
        %1792 = vmatprep.subr.mxu0 0.0
        %1793 = vmatpush2.msra.mxu0 0.0
        %1794 = vmatprep.subr.mxu0 0.0
        %1795 = vmatpush2.msra.mxu0 0.0
        %1796 = vmatprep.subr.mxu0 0.0
        %1797 = vmatpush2.msra.mxu0 0.0
        %1798 = vmatprep.subr.mxu0 0.0
        %1799 = vmatpush2.msra.mxu0 0.0
        %1800 = vmatprep.subr.mxu0 0.0
        %1801 = vmatpush2.msra.mxu0 0.0
        %1802 = vmatprep.subr.mxu0 0.0
        %1803 = vmatpush2.msra.mxu0 0.0
        %1804 = vmatprep.subr.mxu0 0.0
        %1805 = vmatpush2.msra.mxu0 0.0
        %1806 = vmatprep.mubr.f32.mxu0 0.0
        %1807 = vmatmul.mubr.f32.gmra.mxu0 %v1535
        %v1808 = vpop.f32.mrf.mxu0
        %v1809 = vadd.f32 %v1740, %v1808
        %v1810 = vpop.f32.mrf.mxu0
        %1811 = vmatprep.mubr.f32.mxu0 0.0
        %1812 = vmatmul.mubr.f32.gmra.mxu0 %v1538
        %v1813 = vpop.f32.mrf.mxu0
        %v1814 = vadd.f32 %v1740, %v1813
        %v1815 = vpop.f32.mrf.mxu0
        %1816 = vmatprep.mubr.f32.mxu0 0.0
        %1817 = vmatmul.mubr.f32.gmra.mxu0 %v1541
        %v1818 = vpop.f32.mrf.mxu0
        %v1819 = vadd.f32 %v1740, %v1818
        %v1820 = vpop.f32.mrf.mxu0
        %1821 = vmatprep.mubr.f32.mxu0 0.0
        %1822 = vmatmul.mubr.f32.gmra.mxu0 %v1544
        %v1823 = vpop.f32.mrf.mxu0
        %v1824 = vadd.f32 %v1740, %v1823
        %v1825 = vpop.f32.mrf.mxu0
        %1826 = vmatprep.mubr.f32.mxu0 0.0
        %1827 = vmatmul.mubr.f32.gmra.mxu0 %v1547
        %v1828 = vpop.f32.mrf.mxu0
        %v1829 = vadd.f32 %v1740, %v1828
        %v1830 = vpop.f32.mrf.mxu0
        %1831 = vmatprep.mubr.f32.mxu0 0.0
        %1832 = vmatmul.mubr.f32.gmra.mxu0 %v1550
        %v1833 = vpop.f32.mrf.mxu0
        %v1834 = vadd.f32 %v1740, %v1833
        %v1835 = vpop.f32.mrf.mxu0
        %1836 = vmatprep.mubr.f32.mxu0 0.0
        %1837 = vmatmul.mubr.f32.gmra.mxu0 %v1553
        %v1838 = vpop.f32.mrf.mxu0
        %v1839 = vadd.f32 %v1740, %v1838
        %v1840 = vpop.f32.mrf.mxu0
        %1841 = vmatprep.mubr.f32.mxu0 0.0
        %1842 = vmatmul.mubr.f32.gmra.mxu0 %v1556
        %v1843 = vpop.f32.mrf.mxu0
        %v1844 = vadd.f32 %v1740, %v1843
        %v1845 = vpop.f32.mrf.mxu0
        %1846 = vmatprep.mubr.f32.mxu0 0.0
        %1847 = vmatmul.mubr.f32.gmra.mxu0 %v1559
        %v1848 = vpop.f32.mrf.mxu0
        %v1849 = vadd.f32 %v1740, %v1848
        %v1850 = vpop.f32.mrf.mxu0
        %1851 = vmatprep.mubr.f32.mxu0 0.0
        %1852 = vmatmul.mubr.f32.gmra.mxu0 %v1562
        %v1853 = vpop.f32.mrf.mxu0
        %v1854 = vadd.f32 %v1740, %v1853
        %v1855 = vpop.f32.mrf.mxu0
        %1856 = vmatprep.mubr.f32.mxu0 0.0
        %1857 = vmatmul.mubr.f32.gmra.mxu0 %v1565
        %v1858 = vpop.f32.mrf.mxu0
        %v1859 = vadd.f32 %v1740, %v1858
        %v1860 = vpop.f32.mrf.mxu0
        %1861 = vmatprep.mubr.f32.mxu0 0.0
        %1862 = vmatmul.mubr.f32.gmra.mxu0 %v1568
        %v1863 = vpop.f32.mrf.mxu0
        %v1864 = vadd.f32 %v1740, %v1863
        %v1865 = vpop.f32.mrf.mxu0
        %1866 = vmatprep.mubr.f32.mxu0 0.0
        %1867 = vmatmul.mubr.f32.gmra.mxu0 %v1571
        %v1868 = vpop.f32.mrf.mxu0
        %v1869 = vadd.f32 %v1740, %v1868
        %v1870 = vpop.f32.mrf.mxu0
        %1871 = vmatprep.mubr.f32.mxu0 0.0
        %1872 = vmatmul.mubr.f32.gmra.mxu0 %v1574
        %v1873 = vpop.f32.mrf.mxu0
        %v1874 = vadd.f32 %v1740, %v1873
        %v1875 = vpop.f32.mrf.mxu0
        %1876 = vmatprep.mubr.f32.mxu0 0.0
        %1877 = vmatmul.mubr.f32.gmra.mxu0 %v1577
        %v1878 = vpop.f32.mrf.mxu0
        %v1879 = vadd.f32 %v1740, %v1878
        %v1880 = vpop.f32.mrf.mxu0
        %1881 = vmatprep.mubr.f32.mxu0 0.0
        %1882 = vmatmul.mubr.f32.gmra.mxu0 %v1580
        %v1883 = vpop.f32.mrf.mxu0
        %v1884 = vadd.f32 %v1740, %v1883
        %v1885 = vpop.f32.mrf.mxu0
        %1886 = vdwg.mxu0
        %v1887 = vld [vmem:[#allocation13] sm:$0xff]
        %v1888 = vld [vmem:[#allocation13 + $0x8] sm:$0xff]
        %v1889 = vld [vmem:[#allocation13 + $0x10] sm:$0xff]
        %v1890 = vld [vmem:[#allocation13 + $0x18] sm:$0xff]
        %v1891 = vld [vmem:[#allocation13 + $0x20] sm:$0xff]
        %v1892 = vld [vmem:[#allocation13 + $0x28] sm:$0xff]
        %v1893 = vld [vmem:[#allocation13 + $0x30] sm:$0xff]
        %v1894 = vld [vmem:[#allocation13 + $0x38] sm:$0xff]
        %v1895 = vld [vmem:[#allocation14] sm:$0x1]
        %v1897 = vlaneseq
        %v1898 = vshrl.u32 %v1897, 7
        %v1899 = vsub.s32 0, %v1898
        %v1900 = vrot.slane %v1895, %v1899
        %1902 = vmatprep.subr.mxu0 0.0
        %1903 = vmatpush1.msra.mxu0 0.0
        %1904 = vmatprep.subr.mxu0 0.0
        %1905 = vmatpush1.msra.mxu0 0.0
        %1906 = vmatprep.subr.mxu0 0.0
        %1907 = vmatpush1.msra.mxu0 0.0
        %1908 = vmatprep.subr.mxu0 0.0
        %1909 = vmatpush1.msra.mxu0 0.0
        %1910 = vmatprep.subr.mxu0 0.0
        %1911 = vmatpush1.msra.mxu0 0.0
        %1912 = vmatprep.subr.mxu0 0.0
        %1913 = vmatpush1.msra.mxu0 0.0
        %1914 = vmatprep.subr.mxu0 0.0
        %1915 = vmatpush1.msra.mxu0 0.0
        %1916 = vmatprep.subr.mxu0 0.0
        %1917 = vmatpush1.msra.mxu0 0.0
        %1918 = vmatprep.subr.mxu0 0.0
        %1919 = vmatpush1.msra.mxu0 %v1894
        %1920 = vmatprep.subr.mxu0 0.0
        %1921 = vmatpush1.msra.mxu0 %v1893
        %1922 = vmatprep.subr.mxu0 0.0
        %1923 = vmatpush1.msra.mxu0 %v1892
        %1924 = vmatprep.subr.mxu0 0.0
        %1925 = vmatpush1.msra.mxu0 %v1891
        %1926 = vmatprep.subr.mxu0 0.0
        %1927 = vmatpush1.msra.mxu0 %v1890
        %1928 = vmatprep.subr.mxu0 0.0
        %1929 = vmatpush1.msra.mxu0 %v1889
        %1930 = vmatprep.subr.mxu0 0.0
        %1931 = vmatpush1.msra.mxu0 %v1888
        %1932 = vmatprep.subr.mxu0 0.0
        %1933 = vmatpush1.msra.mxu0 %v1887
        %1934 = vmatprep.subr.mxu0 0.0
        %1935 = vmatpush2.msra.mxu0 0.0
        %1936 = vmatprep.subr.mxu0 0.0
        %1937 = vmatpush2.msra.mxu0 0.0
        %1938 = vmatprep.subr.mxu0 0.0
        %1939 = vmatpush2.msra.mxu0 0.0
        %1940 = vmatprep.subr.mxu0 0.0
        %1941 = vmatpush2.msra.mxu0 0.0
        %1942 = vmatprep.subr.mxu0 0.0
        %1943 = vmatpush2.msra.mxu0 0.0
        %1944 = vmatprep.subr.mxu0 0.0
        %1945 = vmatpush2.msra.mxu0 0.0
        %1946 = vmatprep.subr.mxu0 0.0
        %1947 = vmatpush2.msra.mxu0 0.0
        %1948 = vmatprep.subr.mxu0 0.0
        %1949 = vmatpush2.msra.mxu0 0.0
        %1950 = vmatprep.subr.mxu0 0.0
        %1951 = vmatpush2.msra.mxu0 0.0
        %1952 = vmatprep.subr.mxu0 0.0
        %1953 = vmatpush2.msra.mxu0 0.0
        %1954 = vmatprep.subr.mxu0 0.0
        %1955 = vmatpush2.msra.mxu0 0.0
        %1956 = vmatprep.subr.mxu0 0.0
        %1957 = vmatpush2.msra.mxu0 0.0
        %1958 = vmatprep.subr.mxu0 0.0
        %1959 = vmatpush2.msra.mxu0 0.0
        %1960 = vmatprep.subr.mxu0 0.0
        %1961 = vmatpush2.msra.mxu0 0.0
        %1962 = vmatprep.subr.mxu0 0.0
        %1963 = vmatpush2.msra.mxu0 0.0
        %1964 = vmatprep.subr.mxu0 0.0
        %1965 = vmatpush2.msra.mxu0 0.0
        %1966 = vmatprep.mubr.f32.mxu0 0.0
        %1967 = vmatmul.mubr.f32.gmra.mxu0 %v1535
        %v1968 = vpop.f32.mrf.mxu0
        %v1969 = vadd.f32 %v1900, %v1968
        %v1970 = vpop.f32.mrf.mxu0
        %1971 = vmatprep.mubr.f32.mxu0 0.0
        %1972 = vmatmul.mubr.f32.gmra.mxu0 %v1538
        %v1973 = vpop.f32.mrf.mxu0
        %v1974 = vadd.f32 %v1900, %v1973
        %v1975 = vpop.f32.mrf.mxu0
        %1976 = vmatprep.mubr.f32.mxu0 0.0
        %1977 = vmatmul.mubr.f32.gmra.mxu0 %v1541
        %v1978 = vpop.f32.mrf.mxu0
        %v1979 = vadd.f32 %v1900, %v1978
        %v1980 = vpop.f32.mrf.mxu0
        %1981 = vmatprep.mubr.f32.mxu0 0.0
        %1982 = vmatmul.mubr.f32.gmra.mxu0 %v1544
        %v1983 = vpop.f32.mrf.mxu0
        %v1984 = vadd.f32 %v1900, %v1983
        %v1985 = vpop.f32.mrf.mxu0
        %1986 = vmatprep.mubr.f32.mxu0 0.0
        %1987 = vmatmul.mubr.f32.gmra.mxu0 %v1547
        %v1988 = vpop.f32.mrf.mxu0
        %v1989 = vadd.f32 %v1900, %v1988
        %v1990 = vpop.f32.mrf.mxu0
        %1991 = vmatprep.mubr.f32.mxu0 0.0
        %1992 = vmatmul.mubr.f32.gmra.mxu0 %v1550
        %v1993 = vpop.f32.mrf.mxu0
        %v1994 = vadd.f32 %v1900, %v1993
        %v1995 = vpop.f32.mrf.mxu0
        %1996 = vmatprep.mubr.f32.mxu0 0.0
        %1997 = vmatmul.mubr.f32.gmra.mxu0 %v1553
        %v1998 = vpop.f32.mrf.mxu0
        %v1999 = vadd.f32 %v1900, %v1998
        %v2000 = vpop.f32.mrf.mxu0
        %2001 = vmatprep.mubr.f32.mxu0 0.0
        %2002 = vmatmul.mubr.f32.gmra.mxu0 %v1556
        %v2003 = vpop.f32.mrf.mxu0
        %v2004 = vadd.f32 %v1900, %v2003
        %v2005 = vpop.f32.mrf.mxu0
        %2006 = vmatprep.mubr.f32.mxu0 0.0
        %2007 = vmatmul.mubr.f32.gmra.mxu0 %v1559
        %v2008 = vpop.f32.mrf.mxu0
        %v2009 = vadd.f32 %v1900, %v2008
        %v2010 = vpop.f32.mrf.mxu0
        %2011 = vmatprep.mubr.f32.mxu0 0.0
        %2012 = vmatmul.mubr.f32.gmra.mxu0 %v1562
        %v2013 = vpop.f32.mrf.mxu0
        %v2014 = vadd.f32 %v1900, %v2013
        %v2015 = vpop.f32.mrf.mxu0
        %2016 = vmatprep.mubr.f32.mxu0 0.0
        %2017 = vmatmul.mubr.f32.gmra.mxu0 %v1565
        %v2018 = vpop.f32.mrf.mxu0
        %v2019 = vadd.f32 %v1900, %v2018
        %v2020 = vpop.f32.mrf.mxu0
        %2021 = vmatprep.mubr.f32.mxu0 0.0
        %2022 = vmatmul.mubr.f32.gmra.mxu0 %v1568
        %v2023 = vpop.f32.mrf.mxu0
        %v2024 = vadd.f32 %v1900, %v2023
        %v2025 = vpop.f32.mrf.mxu0
        %2026 = vmatprep.mubr.f32.mxu0 0.0
        %2027 = vmatmul.mubr.f32.gmra.mxu0 %v1571
        %v2028 = vpop.f32.mrf.mxu0
        %v2029 = vadd.f32 %v1900, %v2028
        %v2030 = vpop.f32.mrf.mxu0
        %2031 = vmatprep.mubr.f32.mxu0 0.0
        %2032 = vmatmul.mubr.f32.gmra.mxu0 %v1574
        %v2033 = vpop.f32.mrf.mxu0
        %v2034 = vadd.f32 %v1900, %v2033
        %v2035 = vpop.f32.mrf.mxu0
        %2036 = vmatprep.mubr.f32.mxu0 0.0
        %2037 = vmatmul.mubr.f32.gmra.mxu0 %v1577
        %v2038 = vpop.f32.mrf.mxu0
        %v2039 = vadd.f32 %v1900, %v2038
        %v2040 = vpop.f32.mrf.mxu0
        %2041 = vmatprep.mubr.f32.mxu0 0.0
        %2042 = vmatmul.mubr.f32.gmra.mxu0 %v1580
        %v2043 = vpop.f32.mrf.mxu0
        %v2044 = vadd.f32 %v1900, %v2043
        %v2045 = vpop.f32.mrf.mxu0
        %2046 = vdwg.mxu0
        %2063 = vrot.lane.b32.xlu0 %v1649, 112
        %v2064 = vpop.permute.xlu0 %2063
        %2065 = vrot.lane.b32.xlu0 %v1654, 112
        %v2066 = vpop.permute.xlu0 %2065
        %2067 = vrot.lane.b32.xlu0 %v1659, 112
        %v2068 = vpop.permute.xlu0 %2067
        %2069 = vrot.lane.b32.xlu0 %v1664, 112
        %v2070 = vpop.permute.xlu0 %2069
        %2071 = vrot.lane.b32.xlu0 %v1669, 112
        %v2072 = vpop.permute.xlu0 %2071
        %2073 = vrot.lane.b32.xlu0 %v1674, 112
        %v2074 = vpop.permute.xlu0 %2073
        %2075 = vrot.lane.b32.xlu0 %v1679, 112
        %v2076 = vpop.permute.xlu0 %2075
        %2077 = vrot.lane.b32.xlu0 %v1684, 112
        %v2078 = vpop.permute.xlu0 %2077
        %2079 = vrot.lane.b32.xlu0 %v1689, 112
        %v2080 = vpop.permute.xlu0 %2079
        %2081 = vrot.lane.b32.xlu0 %v1694, 112
        %v2082 = vpop.permute.xlu0 %2081
        %2083 = vrot.lane.b32.xlu0 %v1699, 112
        %v2084 = vpop.permute.xlu0 %2083
        %2085 = vrot.lane.b32.xlu0 %v1704, 112
        %v2086 = vpop.permute.xlu0 %2085
        %2087 = vrot.lane.b32.xlu0 %v1709, 112
        %v2088 = vpop.permute.xlu0 %2087
        %2089 = vrot.lane.b32.xlu0 %v1714, 112
        %v2090 = vpop.permute.xlu0 %2089
        %2091 = vrot.lane.b32.xlu0 %v1719, 112
        %v2092 = vpop.permute.xlu0 %2091
        %2093 = vrot.lane.b32.xlu0 %v1724, 112
        %v2094 = vpop.permute.xlu0 %2093
        %2095 = vrot.lane.b32.xlu0 %v1649, 96
        %v2096 = vpop.permute.xlu0 %2095
        %2097 = vrot.lane.b32.xlu0 %v1654, 96
        %v2098 = vpop.permute.xlu0 %2097
        %2099 = vrot.lane.b32.xlu0 %v1659, 96
        %v2100 = vpop.permute.xlu0 %2099
        %2101 = vrot.lane.b32.xlu0 %v1664, 96
        %v2102 = vpop.permute.xlu0 %2101
        %2103 = vrot.lane.b32.xlu0 %v1669, 96
        %v2104 = vpop.permute.xlu0 %2103
        %2105 = vrot.lane.b32.xlu0 %v1674, 96
        %v2106 = vpop.permute.xlu0 %2105
        %2107 = vrot.lane.b32.xlu0 %v1679, 96
        %v2108 = vpop.permute.xlu0 %2107
        %2109 = vrot.lane.b32.xlu0 %v1684, 96
        %v2110 = vpop.permute.xlu0 %2109
        %2111 = vrot.lane.b32.xlu0 %v1689, 96
        %v2112 = vpop.permute.xlu0 %2111
        %2113 = vrot.lane.b32.xlu0 %v1694, 96
        %v2114 = vpop.permute.xlu0 %2113
        %2115 = vrot.lane.b32.xlu0 %v1699, 96
        %v2116 = vpop.permute.xlu0 %2115
        %2117 = vrot.lane.b32.xlu0 %v1704, 96
        %v2118 = vpop.permute.xlu0 %2117
        %2119 = vrot.lane.b32.xlu0 %v1709, 96
        %v2120 = vpop.permute.xlu0 %2119
        %2121 = vrot.lane.b32.xlu0 %v1714, 96
        %v2122 = vpop.permute.xlu0 %2121
        %2123 = vrot.lane.b32.xlu0 %v1719, 96
        %v2124 = vpop.permute.xlu0 %2123
        %2125 = vrot.lane.b32.xlu0 %v1724, 96
        %v2126 = vpop.permute.xlu0 %2125
        %2127 = vrot.lane.b32.xlu0 %v1649, 80
        %v2128 = vpop.permute.xlu0 %2127
        %2129 = vrot.lane.b32.xlu0 %v1654, 80
        %v2130 = vpop.permute.xlu0 %2129
        %2131 = vrot.lane.b32.xlu0 %v1659, 80
        %v2132 = vpop.permute.xlu0 %2131
        %2133 = vrot.lane.b32.xlu0 %v1664, 80
        %v2134 = vpop.permute.xlu0 %2133
        %2135 = vrot.lane.b32.xlu0 %v1669, 80
        %v2136 = vpop.permute.xlu0 %2135
        %2137 = vrot.lane.b32.xlu0 %v1674, 80
        %v2138 = vpop.permute.xlu0 %2137
        %2139 = vrot.lane.b32.xlu0 %v1679, 80
        %v2140 = vpop.permute.xlu0 %2139
        %2141 = vrot.lane.b32.xlu0 %v1684, 80
        %v2142 = vpop.permute.xlu0 %2141
        %2143 = vrot.lane.b32.xlu0 %v1689, 80
        %v2144 = vpop.permute.xlu0 %2143
        %2145 = vrot.lane.b32.xlu0 %v1694, 80
        %v2146 = vpop.permute.xlu0 %2145
        %2147 = vrot.lane.b32.xlu0 %v1699, 80
        %v2148 = vpop.permute.xlu0 %2147
        %2149 = vrot.lane.b32.xlu0 %v1704, 80
        %v2150 = vpop.permute.xlu0 %2149
        %2151 = vrot.lane.b32.xlu0 %v1709, 80
        %v2152 = vpop.permute.xlu0 %2151
        %2153 = vrot.lane.b32.xlu0 %v1714, 80
        %v2154 = vpop.permute.xlu0 %2153
        %2155 = vrot.lane.b32.xlu0 %v1719, 80
        %v2156 = vpop.permute.xlu0 %2155
        %2157 = vrot.lane.b32.xlu0 %v1724, 80
        %v2158 = vpop.permute.xlu0 %2157
        %2175 = vrot.lane.b32.xlu0 %v1809, 112
        %v2176 = vpop.permute.xlu0 %2175
        %2177 = vrot.lane.b32.xlu0 %v1814, 112
        %v2178 = vpop.permute.xlu0 %2177
        %2179 = vrot.lane.b32.xlu0 %v1819, 112
        %v2180 = vpop.permute.xlu0 %2179
        %2181 = vrot.lane.b32.xlu0 %v1824, 112
        %v2182 = vpop.permute.xlu0 %2181
        %2183 = vrot.lane.b32.xlu0 %v1829, 112
        %v2184 = vpop.permute.xlu0 %2183
        %2185 = vrot.lane.b32.xlu0 %v1834, 112
        %v2186 = vpop.permute.xlu0 %2185
        %2187 = vrot.lane.b32.xlu0 %v1839, 112
        %v2188 = vpop.permute.xlu0 %2187
        %2189 = vrot.lane.b32.xlu0 %v1844, 112
        %v2190 = vpop.permute.xlu0 %2189
        %2191 = vrot.lane.b32.xlu0 %v1849, 112
        %v2192 = vpop.permute.xlu0 %2191
        %2193 = vrot.lane.b32.xlu0 %v1854, 112
        %v2194 = vpop.permute.xlu0 %2193
        %2195 = vrot.lane.b32.xlu0 %v1859, 112
        %v2196 = vpop.permute.xlu0 %2195
        %2197 = vrot.lane.b32.xlu0 %v1864, 112
        %v2198 = vpop.permute.xlu0 %2197
        %2199 = vrot.lane.b32.xlu0 %v1869, 112
        %v2200 = vpop.permute.xlu0 %2199
        %2201 = vrot.lane.b32.xlu0 %v1874, 112
        %v2202 = vpop.permute.xlu0 %2201
        %2203 = vrot.lane.b32.xlu0 %v1879, 112
        %v2204 = vpop.permute.xlu0 %2203
        %2205 = vrot.lane.b32.xlu0 %v1884, 112
        %v2206 = vpop.permute.xlu0 %2205
        %2207 = vrot.lane.b32.xlu0 %v1809, 96
        %v2208 = vpop.permute.xlu0 %2207
        %2209 = vrot.lane.b32.xlu0 %v1814, 96
        %v2210 = vpop.permute.xlu0 %2209
        %2211 = vrot.lane.b32.xlu0 %v1819, 96
        %v2212 = vpop.permute.xlu0 %2211
        %2213 = vrot.lane.b32.xlu0 %v1824, 96
        %v2214 = vpop.permute.xlu0 %2213
        %2215 = vrot.lane.b32.xlu0 %v1829, 96
        %v2216 = vpop.permute.xlu0 %2215
        %2217 = vrot.lane.b32.xlu0 %v1834, 96
        %v2218 = vpop.permute.xlu0 %2217
        %2219 = vrot.lane.b32.xlu0 %v1839, 96
        %v2220 = vpop.permute.xlu0 %2219
        %2221 = vrot.lane.b32.xlu0 %v1844, 96
        %v2222 = vpop.permute.xlu0 %2221
        %2223 = vrot.lane.b32.xlu0 %v1849, 96
        %v2224 = vpop.permute.xlu0 %2223
        %2225 = vrot.lane.b32.xlu0 %v1854, 96
        %v2226 = vpop.permute.xlu0 %2225
        %2227 = vrot.lane.b32.xlu0 %v1859, 96
        %v2228 = vpop.permute.xlu0 %2227
        %2229 = vrot.lane.b32.xlu0 %v1864, 96
        %v2230 = vpop.permute.xlu0 %2229
        %2231 = vrot.lane.b32.xlu0 %v1869, 96
        %v2232 = vpop.permute.xlu0 %2231
        %2233 = vrot.lane.b32.xlu0 %v1874, 96
        %v2234 = vpop.permute.xlu0 %2233
        %2235 = vrot.lane.b32.xlu0 %v1879, 96
        %v2236 = vpop.permute.xlu0 %2235
        %2237 = vrot.lane.b32.xlu0 %v1884, 96
        %v2238 = vpop.permute.xlu0 %2237
        %2239 = vrot.lane.b32.xlu0 %v1809, 80
        %v2240 = vpop.permute.xlu0 %2239
        %2241 = vrot.lane.b32.xlu0 %v1814, 80
        %v2242 = vpop.permute.xlu0 %2241
        %2243 = vrot.lane.b32.xlu0 %v1819, 80
        %v2244 = vpop.permute.xlu0 %2243
        %2245 = vrot.lane.b32.xlu0 %v1824, 80
        %v2246 = vpop.permute.xlu0 %2245
        %2247 = vrot.lane.b32.xlu0 %v1829, 80
        %v2248 = vpop.permute.xlu0 %2247
        %2249 = vrot.lane.b32.xlu0 %v1834, 80
        %v2250 = vpop.permute.xlu0 %2249
        %2251 = vrot.lane.b32.xlu0 %v1839, 80
        %v2252 = vpop.permute.xlu0 %2251
        %2253 = vrot.lane.b32.xlu0 %v1844, 80
        %v2254 = vpop.permute.xlu0 %2253
        %2255 = vrot.lane.b32.xlu0 %v1849, 80
        %v2256 = vpop.permute.xlu0 %2255
        %2257 = vrot.lane.b32.xlu0 %v1854, 80
        %v2258 = vpop.permute.xlu0 %2257
        %2259 = vrot.lane.b32.xlu0 %v1859, 80
        %v2260 = vpop.permute.xlu0 %2259
        %2261 = vrot.lane.b32.xlu0 %v1864, 80
        %v2262 = vpop.permute.xlu0 %2261
        %2263 = vrot.lane.b32.xlu0 %v1869, 80
        %v2264 = vpop.permute.xlu0 %2263
        %2265 = vrot.lane.b32.xlu0 %v1874, 80
        %v2266 = vpop.permute.xlu0 %2265
        %2267 = vrot.lane.b32.xlu0 %v1879, 80
        %v2268 = vpop.permute.xlu0 %2267
        %2269 = vrot.lane.b32.xlu0 %v1884, 80
        %v2270 = vpop.permute.xlu0 %2269
        %2287 = vrot.lane.b32.xlu0 %v1969, 112
        %v2288 = vpop.permute.xlu0 %2287
        %2289 = vrot.lane.b32.xlu0 %v1974, 112
        %v2290 = vpop.permute.xlu0 %2289
        %2291 = vrot.lane.b32.xlu0 %v1979, 112
        %v2292 = vpop.permute.xlu0 %2291
        %2293 = vrot.lane.b32.xlu0 %v1984, 112
        %v2294 = vpop.permute.xlu0 %2293
        %2295 = vrot.lane.b32.xlu0 %v1989, 112
        %v2296 = vpop.permute.xlu0 %2295
        %2297 = vrot.lane.b32.xlu0 %v1994, 112
        %v2298 = vpop.permute.xlu0 %2297
        %2299 = vrot.lane.b32.xlu0 %v1999, 112
        %v2300 = vpop.permute.xlu0 %2299
        %2301 = vrot.lane.b32.xlu0 %v2004, 112
        %v2302 = vpop.permute.xlu0 %2301
        %2303 = vrot.lane.b32.xlu0 %v2009, 112
        %v2304 = vpop.permute.xlu0 %2303
        %2305 = vrot.lane.b32.xlu0 %v2014, 112
        %v2306 = vpop.permute.xlu0 %2305
        %2307 = vrot.lane.b32.xlu0 %v2019, 112
        %v2308 = vpop.permute.xlu0 %2307
        %2309 = vrot.lane.b32.xlu0 %v2024, 112
        %v2310 = vpop.permute.xlu0 %2309
        %2311 = vrot.lane.b32.xlu0 %v2029, 112
        %v2312 = vpop.permute.xlu0 %2311
        %2313 = vrot.lane.b32.xlu0 %v2034, 112
        %v2314 = vpop.permute.xlu0 %2313
        %2315 = vrot.lane.b32.xlu0 %v2039, 112
        %v2316 = vpop.permute.xlu0 %2315
        %2317 = vrot.lane.b32.xlu0 %v2044, 112
        %v2318 = vpop.permute.xlu0 %2317
        %2335 = vrot.lane.b32.xlu0 %v1969, 96
        %v2336 = vpop.permute.xlu0 %2335
        %2337 = vrot.lane.b32.xlu0 %v1974, 96
        %v2338 = vpop.permute.xlu0 %2337
        %2339 = vrot.lane.b32.xlu0 %v1979, 96
        %v2340 = vpop.permute.xlu0 %2339
        %2341 = vrot.lane.b32.xlu0 %v1984, 96
        %v2342 = vpop.permute.xlu0 %2341
        %2343 = vrot.lane.b32.xlu0 %v1989, 96
        %v2344 = vpop.permute.xlu0 %2343
        %2345 = vrot.lane.b32.xlu0 %v1994, 96
        %v2346 = vpop.permute.xlu0 %2345
        %2347 = vrot.lane.b32.xlu0 %v1999, 96
        %v2348 = vpop.permute.xlu0 %2347
        %2349 = vrot.lane.b32.xlu0 %v2004, 96
        %v2350 = vpop.permute.xlu0 %2349
        %2351 = vrot.lane.b32.xlu0 %v2009, 96
        %v2352 = vpop.permute.xlu0 %2351
        %2353 = vrot.lane.b32.xlu0 %v2014, 96
        %v2354 = vpop.permute.xlu0 %2353
        %2355 = vrot.lane.b32.xlu0 %v2019, 96
        %v2356 = vpop.permute.xlu0 %2355
        %2357 = vrot.lane.b32.xlu0 %v2024, 96
        %v2358 = vpop.permute.xlu0 %2357
        %2359 = vrot.lane.b32.xlu0 %v2029, 96
        %v2360 = vpop.permute.xlu0 %2359
        %2361 = vrot.lane.b32.xlu0 %v2034, 96
        %v2362 = vpop.permute.xlu0 %2361
        %2363 = vrot.lane.b32.xlu0 %v2039, 96
        %v2364 = vpop.permute.xlu0 %2363
        %2365 = vrot.lane.b32.xlu0 %v2044, 96
        %v2366 = vpop.permute.xlu0 %2365
        %2383 = vrot.lane.b32.xlu0 %v1969, 80
        %v2384 = vpop.permute.xlu0 %2383
        %2385 = vrot.lane.b32.xlu0 %v1974, 80
        %v2386 = vpop.permute.xlu0 %2385
        %2387 = vrot.lane.b32.xlu0 %v1979, 80
        %v2388 = vpop.permute.xlu0 %2387
        %2389 = vrot.lane.b32.xlu0 %v1984, 80
        %v2390 = vpop.permute.xlu0 %2389
        %2391 = vrot.lane.b32.xlu0 %v1989, 80
        %v2392 = vpop.permute.xlu0 %2391
        %2393 = vrot.lane.b32.xlu0 %v1994, 80
        %v2394 = vpop.permute.xlu0 %2393
        %2395 = vrot.lane.b32.xlu0 %v1999, 80
        %v2396 = vpop.permute.xlu0 %2395
        %2397 = vrot.lane.b32.xlu0 %v2004, 80
        %v2398 = vpop.permute.xlu0 %2397
        %2399 = vrot.lane.b32.xlu0 %v2009, 80
        %v2400 = vpop.permute.xlu0 %2399
        %2401 = vrot.lane.b32.xlu0 %v2014, 80
        %v2402 = vpop.permute.xlu0 %2401
        %2403 = vrot.lane.b32.xlu0 %v2019, 80
        %v2404 = vpop.permute.xlu0 %2403
        %2405 = vrot.lane.b32.xlu0 %v2024, 80
        %v2406 = vpop.permute.xlu0 %2405
        %2407 = vrot.lane.b32.xlu0 %v2029, 80
        %v2408 = vpop.permute.xlu0 %2407
        %2409 = vrot.lane.b32.xlu0 %v2034, 80
        %v2410 = vpop.permute.xlu0 %2409
        %2411 = vrot.lane.b32.xlu0 %v2039, 80
        %v2412 = vpop.permute.xlu0 %2411
        %2413 = vrot.lane.b32.xlu0 %v2044, 80
        %v2414 = vpop.permute.xlu0 %2413
        %vm2431 = vcmask 130048
        %v2432 = vsel %vm2431, %v1809, 0
        %v2434 = vsel %vm2431, %v1814, 0
        %v2436 = vsel %vm2431, %v1649, 0
        %v2438 = vsel %vm2431, %v1654, 0
        %2440 = vmatprep.subr.mxu0 0.0
        %2441 = vmatpush1.xpose.msra.mxu0 0.0
        %2442 = vmatprep.subr.mxu0 0.0
        %2443 = vmatpush1.xpose.msra.mxu0 0.0
        %2444 = vmatprep.subr.mxu0 0.0
        %2445 = vmatpush1.xpose.msra.mxu0 0.0
        %2446 = vmatprep.subr.mxu0 0.0
        %2447 = vmatpush1.xpose.msra.mxu0 0.0
        %2448 = vmatprep.subr.mxu0 0.0
        %2449 = vmatpush1.xpose.msra.mxu0 0.0
        %2450 = vmatprep.subr.mxu0 0.0
        %2451 = vmatpush1.xpose.msra.mxu0 0.0
        %2452 = vmatprep.subr.mxu0 0.0
        %2453 = vmatpush1.xpose.msra.mxu0 0.0
        %2454 = vmatprep.subr.mxu0 0.0
        %2455 = vmatpush1.xpose.msra.mxu0 0.0
        %2456 = vmatprep.subr.mxu0 0.0
        %2457 = vmatpush1.xpose.msra.mxu0 0.0
        %2458 = vmatprep.subr.mxu0 0.0
        %2459 = vmatpush1.xpose.msra.mxu0 0.0
        %2460 = vmatprep.subr.mxu0 0.0
        %2461 = vmatpush1.xpose.msra.mxu0 0.0
        %2462 = vmatprep.subr.mxu0 0.0
        %2463 = vmatpush1.xpose.msra.mxu0 0.0
        %2464 = vmatprep.subr.mxu0 0.0
        %2465 = vmatpush1.xpose.msra.mxu0 0.0
        %2466 = vmatprep.subr.mxu0 0.0
        %2467 = vmatpush1.xpose.msra.mxu0 0.0
        %2468 = vmatprep.subr.mxu0 0.0
        %2469 = vmatpush1.xpose.msra.mxu0 %v2438
        %2470 = vmatprep.subr.mxu0 0.0
        %2471 = vmatpush1.xpose.msra.mxu0 %v2436
        %2472 = vmatprep.subr.mxu0 0.0
        %2473 = vmatpush2.xpose.msra.mxu0 0.0
        %2474 = vmatprep.subr.mxu0 0.0
        %2475 = vmatpush2.xpose.msra.mxu0 0.0
        %2476 = vmatprep.subr.mxu0 0.0
        %2477 = vmatpush2.xpose.msra.mxu0 0.0
        %2478 = vmatprep.subr.mxu0 0.0
        %2479 = vmatpush2.xpose.msra.mxu0 0.0
        %2480 = vmatprep.subr.mxu0 0.0
        %2481 = vmatpush2.xpose.msra.mxu0 0.0
        %2482 = vmatprep.subr.mxu0 0.0
        %2483 = vmatpush2.xpose.msra.mxu0 0.0
        %2484 = vmatprep.subr.mxu0 0.0
        %2485 = vmatpush2.xpose.msra.mxu0 0.0
        %2486 = vmatprep.subr.mxu0 0.0
        %2487 = vmatpush2.xpose.msra.mxu0 0.0
        %2488 = vmatprep.subr.mxu0 0.0
        %2489 = vmatpush2.xpose.msra.mxu0 0.0
        %2490 = vmatprep.subr.mxu0 0.0
        %2491 = vmatpush2.xpose.msra.mxu0 0.0
        %2492 = vmatprep.subr.mxu0 0.0
        %2493 = vmatpush2.xpose.msra.mxu0 0.0
        %2494 = vmatprep.subr.mxu0 0.0
        %2495 = vmatpush2.xpose.msra.mxu0 0.0
        %2496 = vmatprep.subr.mxu0 0.0
        %2497 = vmatpush2.xpose.msra.mxu0 0.0
        %2498 = vmatprep.subr.mxu0 0.0
        %2499 = vmatpush2.xpose.msra.mxu0 0.0
        %2500 = vmatprep.subr.mxu0 0.0
        %2501 = vmatpush2.xpose.msra.mxu0 0.0
        %2502 = vmatprep.subr.mxu0 0.0
        %2503 = vmatpush2.xpose.msra.mxu0 0.0
        %2504 = vmatprep.mubr.f32.mxu0 0.0
        %2505 = vmatmul.mubr.f32.gmra.mxu0 %v2432
        %v2506 = vpop.f32.mrf.mxu0
        %v2507 = vadd.f32 0.0, %v2506
        %v2508 = vpop.f32.mrf.mxu0
        %2509 = vmatprep.mubr.f32.mxu0 0.0
        %2510 = vmatmul.mubr.f32.gmra.mxu0 %v2434
        %v2511 = vpop.f32.mrf.mxu0
        %v2512 = vadd.f32 0.0, %v2511
        %v2513 = vpop.f32.mrf.mxu0
        %2514 = vdwg.mxu0
        %v2515 = vsel %vm2431, %v1819, 0
        %v2517 = vsel %vm2431, %v1824, 0
        %v2519 = vsel %vm2431, %v1659, 0
        %v2521 = vsel %vm2431, %v1664, 0
        %2523 = vmatprep.subr.mxu0 0.0
        %2524 = vmatpush1.xpose.msra.mxu0 0.0
        %2525 = vmatprep.subr.mxu0 0.0
        %2526 = vmatpush1.xpose.msra.mxu0 0.0
        %2527 = vmatprep.subr.mxu0 0.0
        %2528 = vmatpush1.xpose.msra.mxu0 0.0
        %2529 = vmatprep.subr.mxu0 0.0
        %2530 = vmatpush1.xpose.msra.mxu0 0.0
        %2531 = vmatprep.subr.mxu0 0.0
        %2532 = vmatpush1.xpose.msra.mxu0 0.0
        %2533 = vmatprep.subr.mxu0 0.0
        %2534 = vmatpush1.xpose.msra.mxu0 0.0
        %2535 = vmatprep.subr.mxu0 0.0
        %2536 = vmatpush1.xpose.msra.mxu0 0.0
        %2537 = vmatprep.subr.mxu0 0.0
        %2538 = vmatpush1.xpose.msra.mxu0 0.0
        %2539 = vmatprep.subr.mxu0 0.0
        %2540 = vmatpush1.xpose.msra.mxu0 0.0
        %2541 = vmatprep.subr.mxu0 0.0
        %2542 = vmatpush1.xpose.msra.mxu0 0.0
        %2543 = vmatprep.subr.mxu0 0.0
        %2544 = vmatpush1.xpose.msra.mxu0 0.0
        %2545 = vmatprep.subr.mxu0 0.0
        %2546 = vmatpush1.xpose.msra.mxu0 0.0
        %2547 = vmatprep.subr.mxu0 0.0
        %2548 = vmatpush1.xpose.msra.mxu0 0.0
        %2549 = vmatprep.subr.mxu0 0.0
        %2550 = vmatpush1.xpose.msra.mxu0 0.0
        %2551 = vmatprep.subr.mxu0 0.0
        %2552 = vmatpush1.xpose.msra.mxu0 %v2521
        %2553 = vmatprep.subr.mxu0 0.0
        %2554 = vmatpush1.xpose.msra.mxu0 %v2519
        %2555 = vmatprep.subr.mxu0 0.0
        %2556 = vmatpush2.xpose.msra.mxu0 0.0
        %2557 = vmatprep.subr.mxu0 0.0
        %2558 = vmatpush2.xpose.msra.mxu0 0.0
        %2559 = vmatprep.subr.mxu0 0.0
        %2560 = vmatpush2.xpose.msra.mxu0 0.0
        %2561 = vmatprep.subr.mxu0 0.0
        %2562 = vmatpush2.xpose.msra.mxu0 0.0
        %2563 = vmatprep.subr.mxu0 0.0
        %2564 = vmatpush2.xpose.msra.mxu0 0.0
        %2565 = vmatprep.subr.mxu0 0.0
        %2566 = vmatpush2.xpose.msra.mxu0 0.0
        %2567 = vmatprep.subr.mxu0 0.0
        %2568 = vmatpush2.xpose.msra.mxu0 0.0
        %2569 = vmatprep.subr.mxu0 0.0
        %2570 = vmatpush2.xpose.msra.mxu0 0.0
        %2571 = vmatprep.subr.mxu0 0.0
        %2572 = vmatpush2.xpose.msra.mxu0 0.0
        %2573 = vmatprep.subr.mxu0 0.0
        %2574 = vmatpush2.xpose.msra.mxu0 0.0
        %2575 = vmatprep.subr.mxu0 0.0
        %2576 = vmatpush2.xpose.msra.mxu0 0.0
        %2577 = vmatprep.subr.mxu0 0.0
        %2578 = vmatpush2.xpose.msra.mxu0 0.0
        %2579 = vmatprep.subr.mxu0 0.0
        %2580 = vmatpush2.xpose.msra.mxu0 0.0
        %2581 = vmatprep.subr.mxu0 0.0
        %2582 = vmatpush2.xpose.msra.mxu0 0.0
        %2583 = vmatprep.subr.mxu0 0.0
        %2584 = vmatpush2.xpose.msra.mxu0 0.0
        %2585 = vmatprep.subr.mxu0 0.0
        %2586 = vmatpush2.xpose.msra.mxu0 0.0
        %2587 = vmatprep.mubr.f32.mxu0 0.0
        %2588 = vmatmul.mubr.f32.gmra.mxu0 %v2515
        %v2589 = vpop.f32.mrf.mxu0
        %v2590 = vadd.f32 0.0, %v2589
        %v2591 = vpop.f32.mrf.mxu0
        %2592 = vmatprep.mubr.f32.mxu0 0.0
        %2593 = vmatmul.mubr.f32.gmra.mxu0 %v2517
        %v2594 = vpop.f32.mrf.mxu0
        %v2595 = vadd.f32 0.0, %v2594
        %v2596 = vpop.f32.mrf.mxu0
        %2597 = vdwg.mxu0
        %v2598 = vsel %vm2431, %v1829, 0
        %v2600 = vsel %vm2431, %v1834, 0
        %v2602 = vsel %vm2431, %v1669, 0
        %v2604 = vsel %vm2431, %v1674, 0
        %2606 = vmatprep.subr.mxu0 0.0
        %2607 = vmatpush1.xpose.msra.mxu0 0.0
        %2608 = vmatprep.subr.mxu0 0.0
        %2609 = vmatpush1.xpose.msra.mxu0 0.0
        %2610 = vmatprep.subr.mxu0 0.0
        %2611 = vmatpush1.xpose.msra.mxu0 0.0
        %2612 = vmatprep.subr.mxu0 0.0
        %2613 = vmatpush1.xpose.msra.mxu0 0.0
        %2614 = vmatprep.subr.mxu0 0.0
        %2615 = vmatpush1.xpose.msra.mxu0 0.0
        %2616 = vmatprep.subr.mxu0 0.0
        %2617 = vmatpush1.xpose.msra.mxu0 0.0
        %2618 = vmatprep.subr.mxu0 0.0
        %2619 = vmatpush1.xpose.msra.mxu0 0.0
        %2620 = vmatprep.subr.mxu0 0.0
        %2621 = vmatpush1.xpose.msra.mxu0 0.0
        %2622 = vmatprep.subr.mxu0 0.0
        %2623 = vmatpush1.xpose.msra.mxu0 0.0
        %2624 = vmatprep.subr.mxu0 0.0
        %2625 = vmatpush1.xpose.msra.mxu0 0.0
        %2626 = vmatprep.subr.mxu0 0.0
        %2627 = vmatpush1.xpose.msra.mxu0 0.0
        %2628 = vmatprep.subr.mxu0 0.0
        %2629 = vmatpush1.xpose.msra.mxu0 0.0
        %2630 = vmatprep.subr.mxu0 0.0
        %2631 = vmatpush1.xpose.msra.mxu0 0.0
        %2632 = vmatprep.subr.mxu0 0.0
        %2633 = vmatpush1.xpose.msra.mxu0 0.0
        %2634 = vmatprep.subr.mxu0 0.0
        %2635 = vmatpush1.xpose.msra.mxu0 %v2604
        %2636 = vmatprep.subr.mxu0 0.0
        %2637 = vmatpush1.xpose.msra.mxu0 %v2602
        %2638 = vmatprep.subr.mxu0 0.0
        %2639 = vmatpush2.xpose.msra.mxu0 0.0
        %2640 = vmatprep.subr.mxu0 0.0
        %2641 = vmatpush2.xpose.msra.mxu0 0.0
        %2642 = vmatprep.subr.mxu0 0.0
        %2643 = vmatpush2.xpose.msra.mxu0 0.0
        %2644 = vmatprep.subr.mxu0 0.0
        %2645 = vmatpush2.xpose.msra.mxu0 0.0
        %2646 = vmatprep.subr.mxu0 0.0
        %2647 = vmatpush2.xpose.msra.mxu0 0.0
        %2648 = vmatprep.subr.mxu0 0.0
        %2649 = vmatpush2.xpose.msra.mxu0 0.0
        %2650 = vmatprep.subr.mxu0 0.0
        %2651 = vmatpush2.xpose.msra.mxu0 0.0
        %2652 = vmatprep.subr.mxu0 0.0
        %2653 = vmatpush2.xpose.msra.mxu0 0.0
        %2654 = vmatprep.subr.mxu0 0.0
        %2655 = vmatpush2.xpose.msra.mxu0 0.0
        %2656 = vmatprep.subr.mxu0 0.0
        %2657 = vmatpush2.xpose.msra.mxu0 0.0
        %2658 = vmatprep.subr.mxu0 0.0
        %2659 = vmatpush2.xpose.msra.mxu0 0.0
        %2660 = vmatprep.subr.mxu0 0.0
        %2661 = vmatpush2.xpose.msra.mxu0 0.0
        %2662 = vmatprep.subr.mxu0 0.0
        %2663 = vmatpush2.xpose.msra.mxu0 0.0
        %2664 = vmatprep.subr.mxu0 0.0
        %2665 = vmatpush2.xpose.msra.mxu0 0.0
        %2666 = vmatprep.subr.mxu0 0.0
        %2667 = vmatpush2.xpose.msra.mxu0 0.0
        %2668 = vmatprep.subr.mxu0 0.0
        %2669 = vmatpush2.xpose.msra.mxu0 0.0
        %2670 = vmatprep.mubr.f32.mxu0 0.0
        %2671 = vmatmul.mubr.f32.gmra.mxu0 %v2598
        %v2672 = vpop.f32.mrf.mxu0
        %v2673 = vadd.f32 0.0, %v2672
        %v2674 = vpop.f32.mrf.mxu0
        %2675 = vmatprep.mubr.f32.mxu0 0.0
        %2676 = vmatmul.mubr.f32.gmra.mxu0 %v2600
        %v2677 = vpop.f32.mrf.mxu0
        %v2678 = vadd.f32 0.0, %v2677
        %v2679 = vpop.f32.mrf.mxu0
        %2680 = vdwg.mxu0
        %v2681 = vsel %vm2431, %v1839, 0
        %v2683 = vsel %vm2431, %v1844, 0
        %v2685 = vsel %vm2431, %v1679, 0
        %v2687 = vsel %vm2431, %v1684, 0
        %2689 = vmatprep.subr.mxu0 0.0
        %2690 = vmatpush1.xpose.msra.mxu0 0.0
        %2691 = vmatprep.subr.mxu0 0.0
        %2692 = vmatpush1.xpose.msra.mxu0 0.0
        %2693 = vmatprep.subr.mxu0 0.0
        %2694 = vmatpush1.xpose.msra.mxu0 0.0
        %2695 = vmatprep.subr.mxu0 0.0
        %2696 = vmatpush1.xpose.msra.mxu0 0.0
        %2697 = vmatprep.subr.mxu0 0.0
        %2698 = vmatpush1.xpose.msra.mxu0 0.0
        %2699 = vmatprep.subr.mxu0 0.0
        %2700 = vmatpush1.xpose.msra.mxu0 0.0
        %2701 = vmatprep.subr.mxu0 0.0
        %2702 = vmatpush1.xpose.msra.mxu0 0.0
        %2703 = vmatprep.subr.mxu0 0.0
        %2704 = vmatpush1.xpose.msra.mxu0 0.0
        %2705 = vmatprep.subr.mxu0 0.0
        %2706 = vmatpush1.xpose.msra.mxu0 0.0
        %2707 = vmatprep.subr.mxu0 0.0
        %2708 = vmatpush1.xpose.msra.mxu0 0.0
        %2709 = vmatprep.subr.mxu0 0.0
        %2710 = vmatpush1.xpose.msra.mxu0 0.0
        %2711 = vmatprep.subr.mxu0 0.0
        %2712 = vmatpush1.xpose.msra.mxu0 0.0
        %2713 = vmatprep.subr.mxu0 0.0
        %2714 = vmatpush1.xpose.msra.mxu0 0.0
        %2715 = vmatprep.subr.mxu0 0.0
        %2716 = vmatpush1.xpose.msra.mxu0 0.0
        %2717 = vmatprep.subr.mxu0 0.0
        %2718 = vmatpush1.xpose.msra.mxu0 %v2687
        %2719 = vmatprep.subr.mxu0 0.0
        %2720 = vmatpush1.xpose.msra.mxu0 %v2685
        %2721 = vmatprep.subr.mxu0 0.0
        %2722 = vmatpush2.xpose.msra.mxu0 0.0
        %2723 = vmatprep.subr.mxu0 0.0
        %2724 = vmatpush2.xpose.msra.mxu0 0.0
        %2725 = vmatprep.subr.mxu0 0.0
        %2726 = vmatpush2.xpose.msra.mxu0 0.0
        %2727 = vmatprep.subr.mxu0 0.0
        %2728 = vmatpush2.xpose.msra.mxu0 0.0
        %2729 = vmatprep.subr.mxu0 0.0
        %2730 = vmatpush2.xpose.msra.mxu0 0.0
        %2731 = vmatprep.subr.mxu0 0.0
        %2732 = vmatpush2.xpose.msra.mxu0 0.0
        %2733 = vmatprep.subr.mxu0 0.0
        %2734 = vmatpush2.xpose.msra.mxu0 0.0
        %2735 = vmatprep.subr.mxu0 0.0
        %2736 = vmatpush2.xpose.msra.mxu0 0.0
        %2737 = vmatprep.subr.mxu0 0.0
        %2738 = vmatpush2.xpose.msra.mxu0 0.0
        %2739 = vmatprep.subr.mxu0 0.0
        %2740 = vmatpush2.xpose.msra.mxu0 0.0
        %2741 = vmatprep.subr.mxu0 0.0
        %2742 = vmatpush2.xpose.msra.mxu0 0.0
        %2743 = vmatprep.subr.mxu0 0.0
        %2744 = vmatpush2.xpose.msra.mxu0 0.0
        %2745 = vmatprep.subr.mxu0 0.0
        %2746 = vmatpush2.xpose.msra.mxu0 0.0
        %2747 = vmatprep.subr.mxu0 0.0
        %2748 = vmatpush2.xpose.msra.mxu0 0.0
        %2749 = vmatprep.subr.mxu0 0.0
        %2750 = vmatpush2.xpose.msra.mxu0 0.0
        %2751 = vmatprep.subr.mxu0 0.0
        %2752 = vmatpush2.xpose.msra.mxu0 0.0
        %2753 = vmatprep.mubr.f32.mxu0 0.0
        %2754 = vmatmul.mubr.f32.gmra.mxu0 %v2681
        %v2755 = vpop.f32.mrf.mxu0
        %v2756 = vadd.f32 0.0, %v2755
        %v2757 = vpop.f32.mrf.mxu0
        %2758 = vmatprep.mubr.f32.mxu0 0.0
        %2759 = vmatmul.mubr.f32.gmra.mxu0 %v2683
        %v2760 = vpop.f32.mrf.mxu0
        %v2761 = vadd.f32 0.0, %v2760
        %v2762 = vpop.f32.mrf.mxu0
        %2763 = vdwg.mxu0
        %v2764 = vsel %vm2431, %v1849, 0
        %v2766 = vsel %vm2431, %v1854, 0
        %v2768 = vsel %vm2431, %v1689, 0
        %v2770 = vsel %vm2431, %v1694, 0
        %2772 = vmatprep.subr.mxu0 0.0
        %2773 = vmatpush1.xpose.msra.mxu0 0.0
        %2774 = vmatprep.subr.mxu0 0.0
        %2775 = vmatpush1.xpose.msra.mxu0 0.0
        %2776 = vmatprep.subr.mxu0 0.0
        %2777 = vmatpush1.xpose.msra.mxu0 0.0
        %2778 = vmatprep.subr.mxu0 0.0
        %2779 = vmatpush1.xpose.msra.mxu0 0.0
        %2780 = vmatprep.subr.mxu0 0.0
        %2781 = vmatpush1.xpose.msra.mxu0 0.0
        %2782 = vmatprep.subr.mxu0 0.0
        %2783 = vmatpush1.xpose.msra.mxu0 0.0
        %2784 = vmatprep.subr.mxu0 0.0
        %2785 = vmatpush1.xpose.msra.mxu0 0.0
        %2786 = vmatprep.subr.mxu0 0.0
        %2787 = vmatpush1.xpose.msra.mxu0 0.0
        %2788 = vmatprep.subr.mxu0 0.0
        %2789 = vmatpush1.xpose.msra.mxu0 0.0
        %2790 = vmatprep.subr.mxu0 0.0
        %2791 = vmatpush1.xpose.msra.mxu0 0.0
        %2792 = vmatprep.subr.mxu0 0.0
        %2793 = vmatpush1.xpose.msra.mxu0 0.0
        %2794 = vmatprep.subr.mxu0 0.0
        %2795 = vmatpush1.xpose.msra.mxu0 0.0
        %2796 = vmatprep.subr.mxu0 0.0
        %2797 = vmatpush1.xpose.msra.mxu0 0.0
        %2798 = vmatprep.subr.mxu0 0.0
        %2799 = vmatpush1.xpose.msra.mxu0 0.0
        %2800 = vmatprep.subr.mxu0 0.0
        %2801 = vmatpush1.xpose.msra.mxu0 %v2770
        %2802 = vmatprep.subr.mxu0 0.0
        %2803 = vmatpush1.xpose.msra.mxu0 %v2768
        %2804 = vmatprep.subr.mxu0 0.0
        %2805 = vmatpush2.xpose.msra.mxu0 0.0
        %2806 = vmatprep.subr.mxu0 0.0
        %2807 = vmatpush2.xpose.msra.mxu0 0.0
        %2808 = vmatprep.subr.mxu0 0.0
        %2809 = vmatpush2.xpose.msra.mxu0 0.0
        %2810 = vmatprep.subr.mxu0 0.0
        %2811 = vmatpush2.xpose.msra.mxu0 0.0
        %2812 = vmatprep.subr.mxu0 0.0
        %2813 = vmatpush2.xpose.msra.mxu0 0.0
        %2814 = vmatprep.subr.mxu0 0.0
        %2815 = vmatpush2.xpose.msra.mxu0 0.0
        %2816 = vmatprep.subr.mxu0 0.0
        %2817 = vmatpush2.xpose.msra.mxu0 0.0
        %2818 = vmatprep.subr.mxu0 0.0
        %2819 = vmatpush2.xpose.msra.mxu0 0.0
        %2820 = vmatprep.subr.mxu0 0.0
        %2821 = vmatpush2.xpose.msra.mxu0 0.0
        %2822 = vmatprep.subr.mxu0 0.0
        %2823 = vmatpush2.xpose.msra.mxu0 0.0
        %2824 = vmatprep.subr.mxu0 0.0
        %2825 = vmatpush2.xpose.msra.mxu0 0.0
        %2826 = vmatprep.subr.mxu0 0.0
        %2827 = vmatpush2.xpose.msra.mxu0 0.0
        %2828 = vmatprep.subr.mxu0 0.0
        %2829 = vmatpush2.xpose.msra.mxu0 0.0
        %2830 = vmatprep.subr.mxu0 0.0
        %2831 = vmatpush2.xpose.msra.mxu0 0.0
        %2832 = vmatprep.subr.mxu0 0.0
        %2833 = vmatpush2.xpose.msra.mxu0 0.0
        %2834 = vmatprep.subr.mxu0 0.0
        %2835 = vmatpush2.xpose.msra.mxu0 0.0
        %2836 = vmatprep.mubr.f32.mxu0 0.0
        %2837 = vmatmul.mubr.f32.gmra.mxu0 %v2764
        %v2838 = vpop.f32.mrf.mxu0
        %v2839 = vadd.f32 0.0, %v2838
        %v2840 = vpop.f32.mrf.mxu0
        %2841 = vmatprep.mubr.f32.mxu0 0.0
        %2842 = vmatmul.mubr.f32.gmra.mxu0 %v2766
        %v2843 = vpop.f32.mrf.mxu0
        %v2844 = vadd.f32 0.0, %v2843
        %v2845 = vpop.f32.mrf.mxu0
        %2846 = vdwg.mxu0
        %v2847 = vsel %vm2431, %v1859, 0
        %v2849 = vsel %vm2431, %v1864, 0
        %v2851 = vsel %vm2431, %v1699, 0
        %v2853 = vsel %vm2431, %v1704, 0
        %2855 = vmatprep.subr.mxu0 0.0
        %2856 = vmatpush1.xpose.msra.mxu0 0.0
        %2857 = vmatprep.subr.mxu0 0.0
        %2858 = vmatpush1.xpose.msra.mxu0 0.0
        %2859 = vmatprep.subr.mxu0 0.0
        %2860 = vmatpush1.xpose.msra.mxu0 0.0
        %2861 = vmatprep.subr.mxu0 0.0
        %2862 = vmatpush1.xpose.msra.mxu0 0.0
        %2863 = vmatprep.subr.mxu0 0.0
        %2864 = vmatpush1.xpose.msra.mxu0 0.0
        %2865 = vmatprep.subr.mxu0 0.0
        %2866 = vmatpush1.xpose.msra.mxu0 0.0
        %2867 = vmatprep.subr.mxu0 0.0
        %2868 = vmatpush1.xpose.msra.mxu0 0.0
        %2869 = vmatprep.subr.mxu0 0.0
        %2870 = vmatpush1.xpose.msra.mxu0 0.0
        %2871 = vmatprep.subr.mxu0 0.0
        %2872 = vmatpush1.xpose.msra.mxu0 0.0
        %2873 = vmatprep.subr.mxu0 0.0
        %2874 = vmatpush1.xpose.msra.mxu0 0.0
        %2875 = vmatprep.subr.mxu0 0.0
        %2876 = vmatpush1.xpose.msra.mxu0 0.0
        %2877 = vmatprep.subr.mxu0 0.0
        %2878 = vmatpush1.xpose.msra.mxu0 0.0
        %2879 = vmatprep.subr.mxu0 0.0
        %2880 = vmatpush1.xpose.msra.mxu0 0.0
        %2881 = vmatprep.subr.mxu0 0.0
        %2882 = vmatpush1.xpose.msra.mxu0 0.0
        %2883 = vmatprep.subr.mxu0 0.0
        %2884 = vmatpush1.xpose.msra.mxu0 %v2853
        %2885 = vmatprep.subr.mxu0 0.0
        %2886 = vmatpush1.xpose.msra.mxu0 %v2851
        %2887 = vmatprep.subr.mxu0 0.0
        %2888 = vmatpush2.xpose.msra.mxu0 0.0
        %2889 = vmatprep.subr.mxu0 0.0
        %2890 = vmatpush2.xpose.msra.mxu0 0.0
        %2891 = vmatprep.subr.mxu0 0.0
        %2892 = vmatpush2.xpose.msra.mxu0 0.0
        %2893 = vmatprep.subr.mxu0 0.0
        %2894 = vmatpush2.xpose.msra.mxu0 0.0
        %2895 = vmatprep.subr.mxu0 0.0
        %2896 = vmatpush2.xpose.msra.mxu0 0.0
        %2897 = vmatprep.subr.mxu0 0.0
        %2898 = vmatpush2.xpose.msra.mxu0 0.0
        %2899 = vmatprep.subr.mxu0 0.0
        %2900 = vmatpush2.xpose.msra.mxu0 0.0
        %2901 = vmatprep.subr.mxu0 0.0
        %2902 = vmatpush2.xpose.msra.mxu0 0.0
        %2903 = vmatprep.subr.mxu0 0.0
        %2904 = vmatpush2.xpose.msra.mxu0 0.0
        %2905 = vmatprep.subr.mxu0 0.0
        %2906 = vmatpush2.xpose.msra.mxu0 0.0
        %2907 = vmatprep.subr.mxu0 0.0
        %2908 = vmatpush2.xpose.msra.mxu0 0.0
        %2909 = vmatprep.subr.mxu0 0.0
        %2910 = vmatpush2.xpose.msra.mxu0 0.0
        %2911 = vmatprep.subr.mxu0 0.0
        %2912 = vmatpush2.xpose.msra.mxu0 0.0
        %2913 = vmatprep.subr.mxu0 0.0
        %2914 = vmatpush2.xpose.msra.mxu0 0.0
        %2915 = vmatprep.subr.mxu0 0.0
        %2916 = vmatpush2.xpose.msra.mxu0 0.0
        %2917 = vmatprep.subr.mxu0 0.0
        %2918 = vmatpush2.xpose.msra.mxu0 0.0
        %2919 = vmatprep.mubr.f32.mxu0 0.0
        %2920 = vmatmul.mubr.f32.gmra.mxu0 %v2847
        %v2921 = vpop.f32.mrf.mxu0
        %v2922 = vadd.f32 0.0, %v2921
        %v2923 = vpop.f32.mrf.mxu0
        %2924 = vmatprep.mubr.f32.mxu0 0.0
        %2925 = vmatmul.mubr.f32.gmra.mxu0 %v2849
        %v2926 = vpop.f32.mrf.mxu0
        %v2927 = vadd.f32 0.0, %v2926
        %v2928 = vpop.f32.mrf.mxu0
        %2929 = vdwg.mxu0
        %v2930 = vsel %vm2431, %v1869, 0
        %v2932 = vsel %vm2431, %v1874, 0
        %v2934 = vsel %vm2431, %v1709, 0
        %v2936 = vsel %vm2431, %v1714, 0
        %2938 = vmatprep.subr.mxu0 0.0
        %2939 = vmatpush1.xpose.msra.mxu0 0.0
        %2940 = vmatprep.subr.mxu0 0.0
        %2941 = vmatpush1.xpose.msra.mxu0 0.0
        %2942 = vmatprep.subr.mxu0 0.0
        %2943 = vmatpush1.xpose.msra.mxu0 0.0
        %2944 = vmatprep.subr.mxu0 0.0
        %2945 = vmatpush1.xpose.msra.mxu0 0.0
        %2946 = vmatprep.subr.mxu0 0.0
        %2947 = vmatpush1.xpose.msra.mxu0 0.0
        %2948 = vmatprep.subr.mxu0 0.0
        %2949 = vmatpush1.xpose.msra.mxu0 0.0
        %2950 = vmatprep.subr.mxu0 0.0
        %2951 = vmatpush1.xpose.msra.mxu0 0.0
        %2952 = vmatprep.subr.mxu0 0.0
        %2953 = vmatpush1.xpose.msra.mxu0 0.0
        %2954 = vmatprep.subr.mxu0 0.0
        %2955 = vmatpush1.xpose.msra.mxu0 0.0
        %2956 = vmatprep.subr.mxu0 0.0
        %2957 = vmatpush1.xpose.msra.mxu0 0.0
        %2958 = vmatprep.subr.mxu0 0.0
        %2959 = vmatpush1.xpose.msra.mxu0 0.0
        %2960 = vmatprep.subr.mxu0 0.0
        %2961 = vmatpush1.xpose.msra.mxu0 0.0
        %2962 = vmatprep.subr.mxu0 0.0
        %2963 = vmatpush1.xpose.msra.mxu0 0.0
        %2964 = vmatprep.subr.mxu0 0.0
        %2965 = vmatpush1.xpose.msra.mxu0 0.0
        %2966 = vmatprep.subr.mxu0 0.0
        %2967 = vmatpush1.xpose.msra.mxu0 %v2936
        %2968 = vmatprep.subr.mxu0 0.0
        %2969 = vmatpush1.xpose.msra.mxu0 %v2934
        %2970 = vmatprep.subr.mxu0 0.0
        %2971 = vmatpush2.xpose.msra.mxu0 0.0
        %2972 = vmatprep.subr.mxu0 0.0
        %2973 = vmatpush2.xpose.msra.mxu0 0.0
        %2974 = vmatprep.subr.mxu0 0.0
        %2975 = vmatpush2.xpose.msra.mxu0 0.0
        %2976 = vmatprep.subr.mxu0 0.0
        %2977 = vmatpush2.xpose.msra.mxu0 0.0
        %2978 = vmatprep.subr.mxu0 0.0
        %2979 = vmatpush2.xpose.msra.mxu0 0.0
        %2980 = vmatprep.subr.mxu0 0.0
        %2981 = vmatpush2.xpose.msra.mxu0 0.0
        %2982 = vmatprep.subr.mxu0 0.0
        %2983 = vmatpush2.xpose.msra.mxu0 0.0
        %2984 = vmatprep.subr.mxu0 0.0
        %2985 = vmatpush2.xpose.msra.mxu0 0.0
        %2986 = vmatprep.subr.mxu0 0.0
        %2987 = vmatpush2.xpose.msra.mxu0 0.0
        %2988 = vmatprep.subr.mxu0 0.0
        %2989 = vmatpush2.xpose.msra.mxu0 0.0
        %2990 = vmatprep.subr.mxu0 0.0
        %2991 = vmatpush2.xpose.msra.mxu0 0.0
        %2992 = vmatprep.subr.mxu0 0.0
        %2993 = vmatpush2.xpose.msra.mxu0 0.0
        %2994 = vmatprep.subr.mxu0 0.0
        %2995 = vmatpush2.xpose.msra.mxu0 0.0
        %2996 = vmatprep.subr.mxu0 0.0
        %2997 = vmatpush2.xpose.msra.mxu0 0.0
        %2998 = vmatprep.subr.mxu0 0.0
        %2999 = vmatpush2.xpose.msra.mxu0 0.0
        %3000 = vmatprep.subr.mxu0 0.0
        %3001 = vmatpush2.xpose.msra.mxu0 0.0
        %3002 = vmatprep.mubr.f32.mxu0 0.0
        %3003 = vmatmul.mubr.f32.gmra.mxu0 %v2930
        %v3004 = vpop.f32.mrf.mxu0
        %v3005 = vadd.f32 0.0, %v3004
        %v3006 = vpop.f32.mrf.mxu0
        %3007 = vmatprep.mubr.f32.mxu0 0.0
        %3008 = vmatmul.mubr.f32.gmra.mxu0 %v2932
        %v3009 = vpop.f32.mrf.mxu0
        %v3010 = vadd.f32 0.0, %v3009
        %v3011 = vpop.f32.mrf.mxu0
        %3012 = vdwg.mxu0
        %v3013 = vsel %vm2431, %v1879, 0
        %v3015 = vsel %vm2431, %v1884, 0
        %v3017 = vsel %vm2431, %v1719, 0
        %v3019 = vsel %vm2431, %v1724, 0
        %3021 = vmatprep.subr.mxu0 0.0
        %3022 = vmatpush1.xpose.msra.mxu0 0.0
        %3023 = vmatprep.subr.mxu0 0.0
        %3024 = vmatpush1.xpose.msra.mxu0 0.0
        %3025 = vmatprep.subr.mxu0 0.0
        %3026 = vmatpush1.xpose.msra.mxu0 0.0
        %3027 = vmatprep.subr.mxu0 0.0
        %3028 = vmatpush1.xpose.msra.mxu0 0.0
        %3029 = vmatprep.subr.mxu0 0.0
        %3030 = vmatpush1.xpose.msra.mxu0 0.0
        %3031 = vmatprep.subr.mxu0 0.0
        %3032 = vmatpush1.xpose.msra.mxu0 0.0
        %3033 = vmatprep.subr.mxu0 0.0
        %3034 = vmatpush1.xpose.msra.mxu0 0.0
        %3035 = vmatprep.subr.mxu0 0.0
        %3036 = vmatpush1.xpose.msra.mxu0 0.0
        %3037 = vmatprep.subr.mxu0 0.0
        %3038 = vmatpush1.xpose.msra.mxu0 0.0
        %3039 = vmatprep.subr.mxu0 0.0
        %3040 = vmatpush1.xpose.msra.mxu0 0.0
        %3041 = vmatprep.subr.mxu0 0.0
        %3042 = vmatpush1.xpose.msra.mxu0 0.0
        %3043 = vmatprep.subr.mxu0 0.0
        %3044 = vmatpush1.xpose.msra.mxu0 0.0
        %3045 = vmatprep.subr.mxu0 0.0
        %3046 = vmatpush1.xpose.msra.mxu0 0.0
        %3047 = vmatprep.subr.mxu0 0.0
        %3048 = vmatpush1.xpose.msra.mxu0 0.0
        %3049 = vmatprep.subr.mxu0 0.0
        %3050 = vmatpush1.xpose.msra.mxu0 %v3019
        %3051 = vmatprep.subr.mxu0 0.0
        %3052 = vmatpush1.xpose.msra.mxu0 %v3017
        %3053 = vmatprep.subr.mxu0 0.0
        %3054 = vmatpush2.xpose.msra.mxu0 0.0
        %3055 = vmatprep.subr.mxu0 0.0
        %3056 = vmatpush2.xpose.msra.mxu0 0.0
        %3057 = vmatprep.subr.mxu0 0.0
        %3058 = vmatpush2.xpose.msra.mxu0 0.0
        %3059 = vmatprep.subr.mxu0 0.0
        %3060 = vmatpush2.xpose.msra.mxu0 0.0
        %3061 = vmatprep.subr.mxu0 0.0
        %3062 = vmatpush2.xpose.msra.mxu0 0.0
        %3063 = vmatprep.subr.mxu0 0.0
        %3064 = vmatpush2.xpose.msra.mxu0 0.0
        %3065 = vmatprep.subr.mxu0 0.0
        %3066 = vmatpush2.xpose.msra.mxu0 0.0
        %3067 = vmatprep.subr.mxu0 0.0
        %3068 = vmatpush2.xpose.msra.mxu0 0.0
        %3069 = vmatprep.subr.mxu0 0.0
        %3070 = vmatpush2.xpose.msra.mxu0 0.0
        %3071 = vmatprep.subr.mxu0 0.0
        %3072 = vmatpush2.xpose.msra.mxu0 0.0
        %3073 = vmatprep.subr.mxu0 0.0
        %3074 = vmatpush2.xpose.msra.mxu0 0.0
        %3075 = vmatprep.subr.mxu0 0.0
        %3076 = vmatpush2.xpose.msra.mxu0 0.0
        %3077 = vmatprep.subr.mxu0 0.0
        %3078 = vmatpush2.xpose.msra.mxu0 0.0
        %3079 = vmatprep.subr.mxu0 0.0
        %3080 = vmatpush2.xpose.msra.mxu0 0.0
        %3081 = vmatprep.subr.mxu0 0.0
        %3082 = vmatpush2.xpose.msra.mxu0 0.0
        %3083 = vmatprep.subr.mxu0 0.0
        %3084 = vmatpush2.xpose.msra.mxu0 0.0
        %3085 = vmatprep.mubr.f32.mxu0 0.0
        %3086 = vmatmul.mubr.f32.gmra.mxu0 %v3013
        %v3087 = vpop.f32.mrf.mxu0
        %v3088 = vadd.f32 0.0, %v3087
        %v3089 = vpop.f32.mrf.mxu0
        %3090 = vmatprep.mubr.f32.mxu0 0.0
        %3091 = vmatmul.mubr.f32.gmra.mxu0 %v3015
        %v3092 = vpop.f32.mrf.mxu0
        %v3093 = vadd.f32 0.0, %v3092
        %v3094 = vpop.f32.mrf.mxu0
        %3095 = vdwg.mxu0
        %v3096 = vsel %vm2431, %v2176, 0
        %v3098 = vsel %vm2431, %v2178, 0
        %v3100 = vsel %vm2431, %v2064, 0
        %v3102 = vsel %vm2431, %v2066, 0
        %3104 = vmatprep.subr.mxu0 0.0
        %3105 = vmatpush1.xpose.msra.mxu0 0.0
        %3106 = vmatprep.subr.mxu0 0.0
        %3107 = vmatpush1.xpose.msra.mxu0 0.0
        %3108 = vmatprep.subr.mxu0 0.0
        %3109 = vmatpush1.xpose.msra.mxu0 0.0
        %3110 = vmatprep.subr.mxu0 0.0
        %3111 = vmatpush1.xpose.msra.mxu0 0.0
        %3112 = vmatprep.subr.mxu0 0.0
        %3113 = vmatpush1.xpose.msra.mxu0 0.0
        %3114 = vmatprep.subr.mxu0 0.0
        %3115 = vmatpush1.xpose.msra.mxu0 0.0
        %3116 = vmatprep.subr.mxu0 0.0
        %3117 = vmatpush1.xpose.msra.mxu0 0.0
        %3118 = vmatprep.subr.mxu0 0.0
        %3119 = vmatpush1.xpose.msra.mxu0 0.0
        %3120 = vmatprep.subr.mxu0 0.0
        %3121 = vmatpush1.xpose.msra.mxu0 0.0
        %3122 = vmatprep.subr.mxu0 0.0
        %3123 = vmatpush1.xpose.msra.mxu0 0.0
        %3124 = vmatprep.subr.mxu0 0.0
        %3125 = vmatpush1.xpose.msra.mxu0 0.0
        %3126 = vmatprep.subr.mxu0 0.0
        %3127 = vmatpush1.xpose.msra.mxu0 0.0
        %3128 = vmatprep.subr.mxu0 0.0
        %3129 = vmatpush1.xpose.msra.mxu0 0.0
        %3130 = vmatprep.subr.mxu0 0.0
        %3131 = vmatpush1.xpose.msra.mxu0 0.0
        %3132 = vmatprep.subr.mxu0 0.0
        %3133 = vmatpush1.xpose.msra.mxu0 %v3102
        %3134 = vmatprep.subr.mxu0 0.0
        %3135 = vmatpush1.xpose.msra.mxu0 %v3100
        %3136 = vmatprep.subr.mxu0 0.0
        %3137 = vmatpush2.xpose.msra.mxu0 0.0
        %3138 = vmatprep.subr.mxu0 0.0
        %3139 = vmatpush2.xpose.msra.mxu0 0.0
        %3140 = vmatprep.subr.mxu0 0.0
        %3141 = vmatpush2.xpose.msra.mxu0 0.0
        %3142 = vmatprep.subr.mxu0 0.0
        %3143 = vmatpush2.xpose.msra.mxu0 0.0
        %3144 = vmatprep.subr.mxu0 0.0
        %3145 = vmatpush2.xpose.msra.mxu0 0.0
        %3146 = vmatprep.subr.mxu0 0.0
        %3147 = vmatpush2.xpose.msra.mxu0 0.0
        %3148 = vmatprep.subr.mxu0 0.0
        %3149 = vmatpush2.xpose.msra.mxu0 0.0
        %3150 = vmatprep.subr.mxu0 0.0
        %3151 = vmatpush2.xpose.msra.mxu0 0.0
        %3152 = vmatprep.subr.mxu0 0.0
        %3153 = vmatpush2.xpose.msra.mxu0 0.0
        %3154 = vmatprep.subr.mxu0 0.0
        %3155 = vmatpush2.xpose.msra.mxu0 0.0
        %3156 = vmatprep.subr.mxu0 0.0
        %3157 = vmatpush2.xpose.msra.mxu0 0.0
        %3158 = vmatprep.subr.mxu0 0.0
        %3159 = vmatpush2.xpose.msra.mxu0 0.0
        %3160 = vmatprep.subr.mxu0 0.0
        %3161 = vmatpush2.xpose.msra.mxu0 0.0
        %3162 = vmatprep.subr.mxu0 0.0
        %3163 = vmatpush2.xpose.msra.mxu0 0.0
        %3164 = vmatprep.subr.mxu0 0.0
        %3165 = vmatpush2.xpose.msra.mxu0 0.0
        %3166 = vmatprep.subr.mxu0 0.0
        %3167 = vmatpush2.xpose.msra.mxu0 0.0
        %3168 = vmatprep.mubr.f32.mxu0 0.0
        %3169 = vmatmul.mubr.f32.gmra.mxu0 %v3096
        %v3170 = vpop.f32.mrf.mxu0
        %v3171 = vadd.f32 0.0, %v3170
        %v3172 = vpop.f32.mrf.mxu0
        %3173 = vmatprep.mubr.f32.mxu0 0.0
        %3174 = vmatmul.mubr.f32.gmra.mxu0 %v3098
        %v3175 = vpop.f32.mrf.mxu0
        %v3176 = vadd.f32 0.0, %v3175
        %v3177 = vpop.f32.mrf.mxu0
        %3178 = vdwg.mxu0
        %v3179 = vsel %vm2431, %v2180, 0
        %v3181 = vsel %vm2431, %v2182, 0
        %v3183 = vsel %vm2431, %v2068, 0
        %v3185 = vsel %vm2431, %v2070, 0
        %3187 = vmatprep.subr.mxu0 0.0
        %3188 = vmatpush1.xpose.msra.mxu0 0.0
        %3189 = vmatprep.subr.mxu0 0.0
        %3190 = vmatpush1.xpose.msra.mxu0 0.0
        %3191 = vmatprep.subr.mxu0 0.0
        %3192 = vmatpush1.xpose.msra.mxu0 0.0
        %3193 = vmatprep.subr.mxu0 0.0
        %3194 = vmatpush1.xpose.msra.mxu0 0.0
        %3195 = vmatprep.subr.mxu0 0.0
        %3196 = vmatpush1.xpose.msra.mxu0 0.0
        %3197 = vmatprep.subr.mxu0 0.0
        %3198 = vmatpush1.xpose.msra.mxu0 0.0
        %3199 = vmatprep.subr.mxu0 0.0
        %3200 = vmatpush1.xpose.msra.mxu0 0.0
        %3201 = vmatprep.subr.mxu0 0.0
        %3202 = vmatpush1.xpose.msra.mxu0 0.0
        %3203 = vmatprep.subr.mxu0 0.0
        %3204 = vmatpush1.xpose.msra.mxu0 0.0
        %3205 = vmatprep.subr.mxu0 0.0
        %3206 = vmatpush1.xpose.msra.mxu0 0.0
        %3207 = vmatprep.subr.mxu0 0.0
        %3208 = vmatpush1.xpose.msra.mxu0 0.0
        %3209 = vmatprep.subr.mxu0 0.0
        %3210 = vmatpush1.xpose.msra.mxu0 0.0
        %3211 = vmatprep.subr.mxu0 0.0
        %3212 = vmatpush1.xpose.msra.mxu0 0.0
        %3213 = vmatprep.subr.mxu0 0.0
        %3214 = vmatpush1.xpose.msra.mxu0 0.0
        %3215 = vmatprep.subr.mxu0 0.0
        %3216 = vmatpush1.xpose.msra.mxu0 %v3185
        %3217 = vmatprep.subr.mxu0 0.0
        %3218 = vmatpush1.xpose.msra.mxu0 %v3183
        %3219 = vmatprep.subr.mxu0 0.0
        %3220 = vmatpush2.xpose.msra.mxu0 0.0
        %3221 = vmatprep.subr.mxu0 0.0
        %3222 = vmatpush2.xpose.msra.mxu0 0.0
        %3223 = vmatprep.subr.mxu0 0.0
        %3224 = vmatpush2.xpose.msra.mxu0 0.0
        %3225 = vmatprep.subr.mxu0 0.0
        %3226 = vmatpush2.xpose.msra.mxu0 0.0
        %3227 = vmatprep.subr.mxu0 0.0
        %3228 = vmatpush2.xpose.msra.mxu0 0.0
        %3229 = vmatprep.subr.mxu0 0.0
        %3230 = vmatpush2.xpose.msra.mxu0 0.0
        %3231 = vmatprep.subr.mxu0 0.0
        %3232 = vmatpush2.xpose.msra.mxu0 0.0
        %3233 = vmatprep.subr.mxu0 0.0
        %3234 = vmatpush2.xpose.msra.mxu0 0.0
        %3235 = vmatprep.subr.mxu0 0.0
        %3236 = vmatpush2.xpose.msra.mxu0 0.0
        %3237 = vmatprep.subr.mxu0 0.0
        %3238 = vmatpush2.xpose.msra.mxu0 0.0
        %3239 = vmatprep.subr.mxu0 0.0
        %3240 = vmatpush2.xpose.msra.mxu0 0.0
        %3241 = vmatprep.subr.mxu0 0.0
        %3242 = vmatpush2.xpose.msra.mxu0 0.0
        %3243 = vmatprep.subr.mxu0 0.0
        %3244 = vmatpush2.xpose.msra.mxu0 0.0
        %3245 = vmatprep.subr.mxu0 0.0
        %3246 = vmatpush2.xpose.msra.mxu0 0.0
        %3247 = vmatprep.subr.mxu0 0.0
        %3248 = vmatpush2.xpose.msra.mxu0 0.0
        %3249 = vmatprep.subr.mxu0 0.0
        %3250 = vmatpush2.xpose.msra.mxu0 0.0
        %3251 = vmatprep.mubr.f32.mxu0 0.0
        %3252 = vmatmul.mubr.f32.gmra.mxu0 %v3179
        %v3253 = vpop.f32.mrf.mxu0
        %v3254 = vadd.f32 0.0, %v3253
        %v3255 = vpop.f32.mrf.mxu0
        %3256 = vmatprep.mubr.f32.mxu0 0.0
        %3257 = vmatmul.mubr.f32.gmra.mxu0 %v3181
        %v3258 = vpop.f32.mrf.mxu0
        %v3259 = vadd.f32 0.0, %v3258
        %v3260 = vpop.f32.mrf.mxu0
        %3261 = vdwg.mxu0
        %v3262 = vsel %vm2431, %v2184, 0
        %v3264 = vsel %vm2431, %v2186, 0
        %v3266 = vsel %vm2431, %v2072, 0
        %v3268 = vsel %vm2431, %v2074, 0
        %3270 = vmatprep.subr.mxu0 0.0
        %3271 = vmatpush1.xpose.msra.mxu0 0.0
        %3272 = vmatprep.subr.mxu0 0.0
        %3273 = vmatpush1.xpose.msra.mxu0 0.0
        %3274 = vmatprep.subr.mxu0 0.0
        %3275 = vmatpush1.xpose.msra.mxu0 0.0
        %3276 = vmatprep.subr.mxu0 0.0
        %3277 = vmatpush1.xpose.msra.mxu0 0.0
        %3278 = vmatprep.subr.mxu0 0.0
        %3279 = vmatpush1.xpose.msra.mxu0 0.0
        %3280 = vmatprep.subr.mxu0 0.0
        %3281 = vmatpush1.xpose.msra.mxu0 0.0
        %3282 = vmatprep.subr.mxu0 0.0
        %3283 = vmatpush1.xpose.msra.mxu0 0.0
        %3284 = vmatprep.subr.mxu0 0.0
        %3285 = vmatpush1.xpose.msra.mxu0 0.0
        %3286 = vmatprep.subr.mxu0 0.0
        %3287 = vmatpush1.xpose.msra.mxu0 0.0
        %3288 = vmatprep.subr.mxu0 0.0
        %3289 = vmatpush1.xpose.msra.mxu0 0.0
        %3290 = vmatprep.subr.mxu0 0.0
        %3291 = vmatpush1.xpose.msra.mxu0 0.0
        %3292 = vmatprep.subr.mxu0 0.0
        %3293 = vmatpush1.xpose.msra.mxu0 0.0
        %3294 = vmatprep.subr.mxu0 0.0
        %3295 = vmatpush1.xpose.msra.mxu0 0.0
        %3296 = vmatprep.subr.mxu0 0.0
        %3297 = vmatpush1.xpose.msra.mxu0 0.0
        %3298 = vmatprep.subr.mxu0 0.0
        %3299 = vmatpush1.xpose.msra.mxu0 %v3268
        %3300 = vmatprep.subr.mxu0 0.0
        %3301 = vmatpush1.xpose.msra.mxu0 %v3266
        %3302 = vmatprep.subr.mxu0 0.0
        %3303 = vmatpush2.xpose.msra.mxu0 0.0
        %3304 = vmatprep.subr.mxu0 0.0
        %3305 = vmatpush2.xpose.msra.mxu0 0.0
        %3306 = vmatprep.subr.mxu0 0.0
        %3307 = vmatpush2.xpose.msra.mxu0 0.0
        %3308 = vmatprep.subr.mxu0 0.0
        %3309 = vmatpush2.xpose.msra.mxu0 0.0
        %3310 = vmatprep.subr.mxu0 0.0
        %3311 = vmatpush2.xpose.msra.mxu0 0.0
        %3312 = vmatprep.subr.mxu0 0.0
        %3313 = vmatpush2.xpose.msra.mxu0 0.0
        %3314 = vmatprep.subr.mxu0 0.0
        %3315 = vmatpush2.xpose.msra.mxu0 0.0
        %3316 = vmatprep.subr.mxu0 0.0
        %3317 = vmatpush2.xpose.msra.mxu0 0.0
        %3318 = vmatprep.subr.mxu0 0.0
        %3319 = vmatpush2.xpose.msra.mxu0 0.0
        %3320 = vmatprep.subr.mxu0 0.0
        %3321 = vmatpush2.xpose.msra.mxu0 0.0
        %3322 = vmatprep.subr.mxu0 0.0
        %3323 = vmatpush2.xpose.msra.mxu0 0.0
        %3324 = vmatprep.subr.mxu0 0.0
        %3325 = vmatpush2.xpose.msra.mxu0 0.0
        %3326 = vmatprep.subr.mxu0 0.0
        %3327 = vmatpush2.xpose.msra.mxu0 0.0
        %3328 = vmatprep.subr.mxu0 0.0
        %3329 = vmatpush2.xpose.msra.mxu0 0.0
        %3330 = vmatprep.subr.mxu0 0.0
        %3331 = vmatpush2.xpose.msra.mxu0 0.0
        %3332 = vmatprep.subr.mxu0 0.0
        %3333 = vmatpush2.xpose.msra.mxu0 0.0
        %3334 = vmatprep.mubr.f32.mxu0 0.0
        %3335 = vmatmul.mubr.f32.gmra.mxu0 %v3262
        %v3336 = vpop.f32.mrf.mxu0
        %v3337 = vadd.f32 0.0, %v3336
        %v3338 = vpop.f32.mrf.mxu0
        %3339 = vmatprep.mubr.f32.mxu0 0.0
        %3340 = vmatmul.mubr.f32.gmra.mxu0 %v3264
        %v3341 = vpop.f32.mrf.mxu0
        %v3342 = vadd.f32 0.0, %v3341
        %v3343 = vpop.f32.mrf.mxu0
        %3344 = vdwg.mxu0
        %v3345 = vsel %vm2431, %v2188, 0
        %v3347 = vsel %vm2431, %v2190, 0
        %v3349 = vsel %vm2431, %v2076, 0
        %v3351 = vsel %vm2431, %v2078, 0
        %3353 = vmatprep.subr.mxu0 0.0
        %3354 = vmatpush1.xpose.msra.mxu0 0.0
        %3355 = vmatprep.subr.mxu0 0.0
        %3356 = vmatpush1.xpose.msra.mxu0 0.0
        %3357 = vmatprep.subr.mxu0 0.0
        %3358 = vmatpush1.xpose.msra.mxu0 0.0
        %3359 = vmatprep.subr.mxu0 0.0
        %3360 = vmatpush1.xpose.msra.mxu0 0.0
        %3361 = vmatprep.subr.mxu0 0.0
        %3362 = vmatpush1.xpose.msra.mxu0 0.0
        %3363 = vmatprep.subr.mxu0 0.0
        %3364 = vmatpush1.xpose.msra.mxu0 0.0
        %3365 = vmatprep.subr.mxu0 0.0
        %3366 = vmatpush1.xpose.msra.mxu0 0.0
        %3367 = vmatprep.subr.mxu0 0.0
        %3368 = vmatpush1.xpose.msra.mxu0 0.0
        %3369 = vmatprep.subr.mxu0 0.0
        %3370 = vmatpush1.xpose.msra.mxu0 0.0
        %3371 = vmatprep.subr.mxu0 0.0
        %3372 = vmatpush1.xpose.msra.mxu0 0.0
        %3373 = vmatprep.subr.mxu0 0.0
        %3374 = vmatpush1.xpose.msra.mxu0 0.0
        %3375 = vmatprep.subr.mxu0 0.0
        %3376 = vmatpush1.xpose.msra.mxu0 0.0
        %3377 = vmatprep.subr.mxu0 0.0
        %3378 = vmatpush1.xpose.msra.mxu0 0.0
        %3379 = vmatprep.subr.mxu0 0.0
        %3380 = vmatpush1.xpose.msra.mxu0 0.0
        %3381 = vmatprep.subr.mxu0 0.0
        %3382 = vmatpush1.xpose.msra.mxu0 %v3351
        %3383 = vmatprep.subr.mxu0 0.0
        %3384 = vmatpush1.xpose.msra.mxu0 %v3349
        %3385 = vmatprep.subr.mxu0 0.0
        %3386 = vmatpush2.xpose.msra.mxu0 0.0
        %3387 = vmatprep.subr.mxu0 0.0
        %3388 = vmatpush2.xpose.msra.mxu0 0.0
        %3389 = vmatprep.subr.mxu0 0.0
        %3390 = vmatpush2.xpose.msra.mxu0 0.0
        %3391 = vmatprep.subr.mxu0 0.0
        %3392 = vmatpush2.xpose.msra.mxu0 0.0
        %3393 = vmatprep.subr.mxu0 0.0
        %3394 = vmatpush2.xpose.msra.mxu0 0.0
        %3395 = vmatprep.subr.mxu0 0.0
        %3396 = vmatpush2.xpose.msra.mxu0 0.0
        %3397 = vmatprep.subr.mxu0 0.0
        %3398 = vmatpush2.xpose.msra.mxu0 0.0
        %3399 = vmatprep.subr.mxu0 0.0
        %3400 = vmatpush2.xpose.msra.mxu0 0.0
        %3401 = vmatprep.subr.mxu0 0.0
        %3402 = vmatpush2.xpose.msra.mxu0 0.0
        %3403 = vmatprep.subr.mxu0 0.0
        %3404 = vmatpush2.xpose.msra.mxu0 0.0
        %3405 = vmatprep.subr.mxu0 0.0
        %3406 = vmatpush2.xpose.msra.mxu0 0.0
        %3407 = vmatprep.subr.mxu0 0.0
        %3408 = vmatpush2.xpose.msra.mxu0 0.0
        %3409 = vmatprep.subr.mxu0 0.0
        %3410 = vmatpush2.xpose.msra.mxu0 0.0
        %3411 = vmatprep.subr.mxu0 0.0
        %3412 = vmatpush2.xpose.msra.mxu0 0.0
        %3413 = vmatprep.subr.mxu0 0.0
        %3414 = vmatpush2.xpose.msra.mxu0 0.0
        %3415 = vmatprep.subr.mxu0 0.0
        %3416 = vmatpush2.xpose.msra.mxu0 0.0
        %3417 = vmatprep.mubr.f32.mxu0 0.0
        %3418 = vmatmul.mubr.f32.gmra.mxu0 %v3345
        %v3419 = vpop.f32.mrf.mxu0
        %v3420 = vadd.f32 0.0, %v3419
        %v3421 = vpop.f32.mrf.mxu0
        %3422 = vmatprep.mubr.f32.mxu0 0.0
        %3423 = vmatmul.mubr.f32.gmra.mxu0 %v3347
        %v3424 = vpop.f32.mrf.mxu0
        %v3425 = vadd.f32 0.0, %v3424
        %v3426 = vpop.f32.mrf.mxu0
        %3427 = vdwg.mxu0
        %v3428 = vsel %vm2431, %v2192, 0
        %v3430 = vsel %vm2431, %v2194, 0
        %v3432 = vsel %vm2431, %v2080, 0
        %v3434 = vsel %vm2431, %v2082, 0
        %3436 = vmatprep.subr.mxu0 0.0
        %3437 = vmatpush1.xpose.msra.mxu0 0.0
        %3438 = vmatprep.subr.mxu0 0.0
        %3439 = vmatpush1.xpose.msra.mxu0 0.0
        %3440 = vmatprep.subr.mxu0 0.0
        %3441 = vmatpush1.xpose.msra.mxu0 0.0
        %3442 = vmatprep.subr.mxu0 0.0
        %3443 = vmatpush1.xpose.msra.mxu0 0.0
        %3444 = vmatprep.subr.mxu0 0.0
        %3445 = vmatpush1.xpose.msra.mxu0 0.0
        %3446 = vmatprep.subr.mxu0 0.0
        %3447 = vmatpush1.xpose.msra.mxu0 0.0
        %3448 = vmatprep.subr.mxu0 0.0
        %3449 = vmatpush1.xpose.msra.mxu0 0.0
        %3450 = vmatprep.subr.mxu0 0.0
        %3451 = vmatpush1.xpose.msra.mxu0 0.0
        %3452 = vmatprep.subr.mxu0 0.0
        %3453 = vmatpush1.xpose.msra.mxu0 0.0
        %3454 = vmatprep.subr.mxu0 0.0
        %3455 = vmatpush1.xpose.msra.mxu0 0.0
        %3456 = vmatprep.subr.mxu0 0.0
        %3457 = vmatpush1.xpose.msra.mxu0 0.0
        %3458 = vmatprep.subr.mxu0 0.0
        %3459 = vmatpush1.xpose.msra.mxu0 0.0
        %3460 = vmatprep.subr.mxu0 0.0
        %3461 = vmatpush1.xpose.msra.mxu0 0.0
        %3462 = vmatprep.subr.mxu0 0.0
        %3463 = vmatpush1.xpose.msra.mxu0 0.0
        %3464 = vmatprep.subr.mxu0 0.0
        %3465 = vmatpush1.xpose.msra.mxu0 %v3434
        %3466 = vmatprep.subr.mxu0 0.0
        %3467 = vmatpush1.xpose.msra.mxu0 %v3432
        %3468 = vmatprep.subr.mxu0 0.0
        %3469 = vmatpush2.xpose.msra.mxu0 0.0
        %3470 = vmatprep.subr.mxu0 0.0
        %3471 = vmatpush2.xpose.msra.mxu0 0.0
        %3472 = vmatprep.subr.mxu0 0.0
        %3473 = vmatpush2.xpose.msra.mxu0 0.0
        %3474 = vmatprep.subr.mxu0 0.0
        %3475 = vmatpush2.xpose.msra.mxu0 0.0
        %3476 = vmatprep.subr.mxu0 0.0
        %3477 = vmatpush2.xpose.msra.mxu0 0.0
        %3478 = vmatprep.subr.mxu0 0.0
        %3479 = vmatpush2.xpose.msra.mxu0 0.0
        %3480 = vmatprep.subr.mxu0 0.0
        %3481 = vmatpush2.xpose.msra.mxu0 0.0
        %3482 = vmatprep.subr.mxu0 0.0
        %3483 = vmatpush2.xpose.msra.mxu0 0.0
        %3484 = vmatprep.subr.mxu0 0.0
        %3485 = vmatpush2.xpose.msra.mxu0 0.0
        %3486 = vmatprep.subr.mxu0 0.0
        %3487 = vmatpush2.xpose.msra.mxu0 0.0
        %3488 = vmatprep.subr.mxu0 0.0
        %3489 = vmatpush2.xpose.msra.mxu0 0.0
        %3490 = vmatprep.subr.mxu0 0.0
        %3491 = vmatpush2.xpose.msra.mxu0 0.0
        %3492 = vmatprep.subr.mxu0 0.0
        %3493 = vmatpush2.xpose.msra.mxu0 0.0
        %3494 = vmatprep.subr.mxu0 0.0
        %3495 = vmatpush2.xpose.msra.mxu0 0.0
        %3496 = vmatprep.subr.mxu0 0.0
        %3497 = vmatpush2.xpose.msra.mxu0 0.0
        %3498 = vmatprep.subr.mxu0 0.0
        %3499 = vmatpush2.xpose.msra.mxu0 0.0
        %3500 = vmatprep.mubr.f32.mxu0 0.0
        %3501 = vmatmul.mubr.f32.gmra.mxu0 %v3428
        %v3502 = vpop.f32.mrf.mxu0
        %v3503 = vadd.f32 0.0, %v3502
        %v3504 = vpop.f32.mrf.mxu0
        %3505 = vmatprep.mubr.f32.mxu0 0.0
        %3506 = vmatmul.mubr.f32.gmra.mxu0 %v3430
        %v3507 = vpop.f32.mrf.mxu0
        %v3508 = vadd.f32 0.0, %v3507
        %v3509 = vpop.f32.mrf.mxu0
        %3510 = vdwg.mxu0
        %v3511 = vsel %vm2431, %v2196, 0
        %v3513 = vsel %vm2431, %v2198, 0
        %v3515 = vsel %vm2431, %v2084, 0
        %v3517 = vsel %vm2431, %v2086, 0
        %3519 = vmatprep.subr.mxu0 0.0
        %3520 = vmatpush1.xpose.msra.mxu0 0.0
        %3521 = vmatprep.subr.mxu0 0.0
        %3522 = vmatpush1.xpose.msra.mxu0 0.0
        %3523 = vmatprep.subr.mxu0 0.0
        %3524 = vmatpush1.xpose.msra.mxu0 0.0
        %3525 = vmatprep.subr.mxu0 0.0
        %3526 = vmatpush1.xpose.msra.mxu0 0.0
        %3527 = vmatprep.subr.mxu0 0.0
        %3528 = vmatpush1.xpose.msra.mxu0 0.0
        %3529 = vmatprep.subr.mxu0 0.0
        %3530 = vmatpush1.xpose.msra.mxu0 0.0
        %3531 = vmatprep.subr.mxu0 0.0
        %3532 = vmatpush1.xpose.msra.mxu0 0.0
        %3533 = vmatprep.subr.mxu0 0.0
        %3534 = vmatpush1.xpose.msra.mxu0 0.0
        %3535 = vmatprep.subr.mxu0 0.0
        %3536 = vmatpush1.xpose.msra.mxu0 0.0
        %3537 = vmatprep.subr.mxu0 0.0
        %3538 = vmatpush1.xpose.msra.mxu0 0.0
        %3539 = vmatprep.subr.mxu0 0.0
        %3540 = vmatpush1.xpose.msra.mxu0 0.0
        %3541 = vmatprep.subr.mxu0 0.0
        %3542 = vmatpush1.xpose.msra.mxu0 0.0
        %3543 = vmatprep.subr.mxu0 0.0
        %3544 = vmatpush1.xpose.msra.mxu0 0.0
        %3545 = vmatprep.subr.mxu0 0.0
        %3546 = vmatpush1.xpose.msra.mxu0 0.0
        %3547 = vmatprep.subr.mxu0 0.0
        %3548 = vmatpush1.xpose.msra.mxu0 %v3517
        %3549 = vmatprep.subr.mxu0 0.0
        %3550 = vmatpush1.xpose.msra.mxu0 %v3515
        %3551 = vmatprep.subr.mxu0 0.0
        %3552 = vmatpush2.xpose.msra.mxu0 0.0
        %3553 = vmatprep.subr.mxu0 0.0
        %3554 = vmatpush2.xpose.msra.mxu0 0.0
        %3555 = vmatprep.subr.mxu0 0.0
        %3556 = vmatpush2.xpose.msra.mxu0 0.0
        %3557 = vmatprep.subr.mxu0 0.0
        %3558 = vmatpush2.xpose.msra.mxu0 0.0
        %3559 = vmatprep.subr.mxu0 0.0
        %3560 = vmatpush2.xpose.msra.mxu0 0.0
        %3561 = vmatprep.subr.mxu0 0.0
        %3562 = vmatpush2.xpose.msra.mxu0 0.0
        %3563 = vmatprep.subr.mxu0 0.0
        %3564 = vmatpush2.xpose.msra.mxu0 0.0
        %3565 = vmatprep.subr.mxu0 0.0
        %3566 = vmatpush2.xpose.msra.mxu0 0.0
        %3567 = vmatprep.subr.mxu0 0.0
        %3568 = vmatpush2.xpose.msra.mxu0 0.0
        %3569 = vmatprep.subr.mxu0 0.0
        %3570 = vmatpush2.xpose.msra.mxu0 0.0
        %3571 = vmatprep.subr.mxu0 0.0
        %3572 = vmatpush2.xpose.msra.mxu0 0.0
        %3573 = vmatprep.subr.mxu0 0.0
        %3574 = vmatpush2.xpose.msra.mxu0 0.0
        %3575 = vmatprep.subr.mxu0 0.0
        %3576 = vmatpush2.xpose.msra.mxu0 0.0
        %3577 = vmatprep.subr.mxu0 0.0
        %3578 = vmatpush2.xpose.msra.mxu0 0.0
        %3579 = vmatprep.subr.mxu0 0.0
        %3580 = vmatpush2.xpose.msra.mxu0 0.0
        %3581 = vmatprep.subr.mxu0 0.0
        %3582 = vmatpush2.xpose.msra.mxu0 0.0
        %3583 = vmatprep.mubr.f32.mxu0 0.0
        %3584 = vmatmul.mubr.f32.gmra.mxu0 %v3511
        %v3585 = vpop.f32.mrf.mxu0
        %v3586 = vadd.f32 0.0, %v3585
        %v3587 = vpop.f32.mrf.mxu0
        %3588 = vmatprep.mubr.f32.mxu0 0.0
        %3589 = vmatmul.mubr.f32.gmra.mxu0 %v3513
        %v3590 = vpop.f32.mrf.mxu0
        %v3591 = vadd.f32 0.0, %v3590
        %v3592 = vpop.f32.mrf.mxu0
        %3593 = vdwg.mxu0
        %v3594 = vsel %vm2431, %v2200, 0
        %v3596 = vsel %vm2431, %v2202, 0
        %v3598 = vsel %vm2431, %v2088, 0
        %v3600 = vsel %vm2431, %v2090, 0
        %3602 = vmatprep.subr.mxu0 0.0
        %3603 = vmatpush1.xpose.msra.mxu0 0.0
        %3604 = vmatprep.subr.mxu0 0.0
        %3605 = vmatpush1.xpose.msra.mxu0 0.0
        %3606 = vmatprep.subr.mxu0 0.0
        %3607 = vmatpush1.xpose.msra.mxu0 0.0
        %3608 = vmatprep.subr.mxu0 0.0
        %3609 = vmatpush1.xpose.msra.mxu0 0.0
        %3610 = vmatprep.subr.mxu0 0.0
        %3611 = vmatpush1.xpose.msra.mxu0 0.0
        %3612 = vmatprep.subr.mxu0 0.0
        %3613 = vmatpush1.xpose.msra.mxu0 0.0
        %3614 = vmatprep.subr.mxu0 0.0
        %3615 = vmatpush1.xpose.msra.mxu0 0.0
        %3616 = vmatprep.subr.mxu0 0.0
        %3617 = vmatpush1.xpose.msra.mxu0 0.0
        %3618 = vmatprep.subr.mxu0 0.0
        %3619 = vmatpush1.xpose.msra.mxu0 0.0
        %3620 = vmatprep.subr.mxu0 0.0
        %3621 = vmatpush1.xpose.msra.mxu0 0.0
        %3622 = vmatprep.subr.mxu0 0.0
        %3623 = vmatpush1.xpose.msra.mxu0 0.0
        %3624 = vmatprep.subr.mxu0 0.0
        %3625 = vmatpush1.xpose.msra.mxu0 0.0
        %3626 = vmatprep.subr.mxu0 0.0
        %3627 = vmatpush1.xpose.msra.mxu0 0.0
        %3628 = vmatprep.subr.mxu0 0.0
        %3629 = vmatpush1.xpose.msra.mxu0 0.0
        %3630 = vmatprep.subr.mxu0 0.0
        %3631 = vmatpush1.xpose.msra.mxu0 %v3600
        %3632 = vmatprep.subr.mxu0 0.0
        %3633 = vmatpush1.xpose.msra.mxu0 %v3598
        %3634 = vmatprep.subr.mxu0 0.0
        %3635 = vmatpush2.xpose.msra.mxu0 0.0
        %3636 = vmatprep.subr.mxu0 0.0
        %3637 = vmatpush2.xpose.msra.mxu0 0.0
        %3638 = vmatprep.subr.mxu0 0.0
        %3639 = vmatpush2.xpose.msra.mxu0 0.0
        %3640 = vmatprep.subr.mxu0 0.0
        %3641 = vmatpush2.xpose.msra.mxu0 0.0
        %3642 = vmatprep.subr.mxu0 0.0
        %3643 = vmatpush2.xpose.msra.mxu0 0.0
        %3644 = vmatprep.subr.mxu0 0.0
        %3645 = vmatpush2.xpose.msra.mxu0 0.0
        %3646 = vmatprep.subr.mxu0 0.0
        %3647 = vmatpush2.xpose.msra.mxu0 0.0
        %3648 = vmatprep.subr.mxu0 0.0
        %3649 = vmatpush2.xpose.msra.mxu0 0.0
        %3650 = vmatprep.subr.mxu0 0.0
        %3651 = vmatpush2.xpose.msra.mxu0 0.0
        %3652 = vmatprep.subr.mxu0 0.0
        %3653 = vmatpush2.xpose.msra.mxu0 0.0
        %3654 = vmatprep.subr.mxu0 0.0
        %3655 = vmatpush2.xpose.msra.mxu0 0.0
        %3656 = vmatprep.subr.mxu0 0.0
        %3657 = vmatpush2.xpose.msra.mxu0 0.0
        %3658 = vmatprep.subr.mxu0 0.0
        %3659 = vmatpush2.xpose.msra.mxu0 0.0
        %3660 = vmatprep.subr.mxu0 0.0
        %3661 = vmatpush2.xpose.msra.mxu0 0.0
        %3662 = vmatprep.subr.mxu0 0.0
        %3663 = vmatpush2.xpose.msra.mxu0 0.0
        %3664 = vmatprep.subr.mxu0 0.0
        %3665 = vmatpush2.xpose.msra.mxu0 0.0
        %3666 = vmatprep.mubr.f32.mxu0 0.0
        %3667 = vmatmul.mubr.f32.gmra.mxu0 %v3594
        %v3668 = vpop.f32.mrf.mxu0
        %v3669 = vadd.f32 0.0, %v3668
        %v3670 = vpop.f32.mrf.mxu0
        %3671 = vmatprep.mubr.f32.mxu0 0.0
        %3672 = vmatmul.mubr.f32.gmra.mxu0 %v3596
        %v3673 = vpop.f32.mrf.mxu0
        %v3674 = vadd.f32 0.0, %v3673
        %v3675 = vpop.f32.mrf.mxu0
        %3676 = vdwg.mxu0
        %v3677 = vsel %vm2431, %v2204, 0
        %v3679 = vsel %vm2431, %v2206, 0
        %v3681 = vsel %vm2431, %v2092, 0
        %v3683 = vsel %vm2431, %v2094, 0
        %3685 = vmatprep.subr.mxu0 0.0
        %3686 = vmatpush1.xpose.msra.mxu0 0.0
        %3687 = vmatprep.subr.mxu0 0.0
        %3688 = vmatpush1.xpose.msra.mxu0 0.0
        %3689 = vmatprep.subr.mxu0 0.0
        %3690 = vmatpush1.xpose.msra.mxu0 0.0
        %3691 = vmatprep.subr.mxu0 0.0
        %3692 = vmatpush1.xpose.msra.mxu0 0.0
        %3693 = vmatprep.subr.mxu0 0.0
        %3694 = vmatpush1.xpose.msra.mxu0 0.0
        %3695 = vmatprep.subr.mxu0 0.0
        %3696 = vmatpush1.xpose.msra.mxu0 0.0
        %3697 = vmatprep.subr.mxu0 0.0
        %3698 = vmatpush1.xpose.msra.mxu0 0.0
        %3699 = vmatprep.subr.mxu0 0.0
        %3700 = vmatpush1.xpose.msra.mxu0 0.0
        %3701 = vmatprep.subr.mxu0 0.0
        %3702 = vmatpush1.xpose.msra.mxu0 0.0
        %3703 = vmatprep.subr.mxu0 0.0
        %3704 = vmatpush1.xpose.msra.mxu0 0.0
        %3705 = vmatprep.subr.mxu0 0.0
        %3706 = vmatpush1.xpose.msra.mxu0 0.0
        %3707 = vmatprep.subr.mxu0 0.0
        %3708 = vmatpush1.xpose.msra.mxu0 0.0
        %3709 = vmatprep.subr.mxu0 0.0
        %3710 = vmatpush1.xpose.msra.mxu0 0.0
        %3711 = vmatprep.subr.mxu0 0.0
        %3712 = vmatpush1.xpose.msra.mxu0 0.0
        %3713 = vmatprep.subr.mxu0 0.0
        %3714 = vmatpush1.xpose.msra.mxu0 %v3683
        %3715 = vmatprep.subr.mxu0 0.0
        %3716 = vmatpush1.xpose.msra.mxu0 %v3681
        %3717 = vmatprep.subr.mxu0 0.0
        %3718 = vmatpush2.xpose.msra.mxu0 0.0
        %3719 = vmatprep.subr.mxu0 0.0
        %3720 = vmatpush2.xpose.msra.mxu0 0.0
        %3721 = vmatprep.subr.mxu0 0.0
        %3722 = vmatpush2.xpose.msra.mxu0 0.0
        %3723 = vmatprep.subr.mxu0 0.0
        %3724 = vmatpush2.xpose.msra.mxu0 0.0
        %3725 = vmatprep.subr.mxu0 0.0
        %3726 = vmatpush2.xpose.msra.mxu0 0.0
        %3727 = vmatprep.subr.mxu0 0.0
        %3728 = vmatpush2.xpose.msra.mxu0 0.0
        %3729 = vmatprep.subr.mxu0 0.0
        %3730 = vmatpush2.xpose.msra.mxu0 0.0
        %3731 = vmatprep.subr.mxu0 0.0
        %3732 = vmatpush2.xpose.msra.mxu0 0.0
        %3733 = vmatprep.subr.mxu0 0.0
        %3734 = vmatpush2.xpose.msra.mxu0 0.0
        %3735 = vmatprep.subr.mxu0 0.0
        %3736 = vmatpush2.xpose.msra.mxu0 0.0
        %3737 = vmatprep.subr.mxu0 0.0
        %3738 = vmatpush2.xpose.msra.mxu0 0.0
        %3739 = vmatprep.subr.mxu0 0.0
        %3740 = vmatpush2.xpose.msra.mxu0 0.0
        %3741 = vmatprep.subr.mxu0 0.0
        %3742 = vmatpush2.xpose.msra.mxu0 0.0
        %3743 = vmatprep.subr.mxu0 0.0
        %3744 = vmatpush2.xpose.msra.mxu0 0.0
        %3745 = vmatprep.subr.mxu0 0.0
        %3746 = vmatpush2.xpose.msra.mxu0 0.0
        %3747 = vmatprep.subr.mxu0 0.0
        %3748 = vmatpush2.xpose.msra.mxu0 0.0
        %3749 = vmatprep.mubr.f32.mxu0 0.0
        %3750 = vmatmul.mubr.f32.gmra.mxu0 %v3677
        %v3751 = vpop.f32.mrf.mxu0
        %v3752 = vadd.f32 0.0, %v3751
        %v3753 = vpop.f32.mrf.mxu0
        %3754 = vmatprep.mubr.f32.mxu0 0.0
        %3755 = vmatmul.mubr.f32.gmra.mxu0 %v3679
        %v3756 = vpop.f32.mrf.mxu0
        %v3757 = vadd.f32 0.0, %v3756
        %v3758 = vpop.f32.mrf.mxu0
        %3759 = vdwg.mxu0
        %v3760 = vsel %vm2431, %v2208, 0
        %v3762 = vsel %vm2431, %v2210, 0
        %v3764 = vsel %vm2431, %v2096, 0
        %v3766 = vsel %vm2431, %v2098, 0
        %3768 = vmatprep.subr.mxu0 0.0
        %3769 = vmatpush1.xpose.msra.mxu0 0.0
        %3770 = vmatprep.subr.mxu0 0.0
        %3771 = vmatpush1.xpose.msra.mxu0 0.0
        %3772 = vmatprep.subr.mxu0 0.0
        %3773 = vmatpush1.xpose.msra.mxu0 0.0
        %3774 = vmatprep.subr.mxu0 0.0
        %3775 = vmatpush1.xpose.msra.mxu0 0.0
        %3776 = vmatprep.subr.mxu0 0.0
        %3777 = vmatpush1.xpose.msra.mxu0 0.0
        %3778 = vmatprep.subr.mxu0 0.0
        %3779 = vmatpush1.xpose.msra.mxu0 0.0
        %3780 = vmatprep.subr.mxu0 0.0
        %3781 = vmatpush1.xpose.msra.mxu0 0.0
        %3782 = vmatprep.subr.mxu0 0.0
        %3783 = vmatpush1.xpose.msra.mxu0 0.0
        %3784 = vmatprep.subr.mxu0 0.0
        %3785 = vmatpush1.xpose.msra.mxu0 0.0
        %3786 = vmatprep.subr.mxu0 0.0
        %3787 = vmatpush1.xpose.msra.mxu0 0.0
        %3788 = vmatprep.subr.mxu0 0.0
        %3789 = vmatpush1.xpose.msra.mxu0 0.0
        %3790 = vmatprep.subr.mxu0 0.0
        %3791 = vmatpush1.xpose.msra.mxu0 0.0
        %3792 = vmatprep.subr.mxu0 0.0
        %3793 = vmatpush1.xpose.msra.mxu0 0.0
        %3794 = vmatprep.subr.mxu0 0.0
        %3795 = vmatpush1.xpose.msra.mxu0 0.0
        %3796 = vmatprep.subr.mxu0 0.0
        %3797 = vmatpush1.xpose.msra.mxu0 %v3766
        %3798 = vmatprep.subr.mxu0 0.0
        %3799 = vmatpush1.xpose.msra.mxu0 %v3764
        %3800 = vmatprep.subr.mxu0 0.0
        %3801 = vmatpush2.xpose.msra.mxu0 0.0
        %3802 = vmatprep.subr.mxu0 0.0
        %3803 = vmatpush2.xpose.msra.mxu0 0.0
        %3804 = vmatprep.subr.mxu0 0.0
        %3805 = vmatpush2.xpose.msra.mxu0 0.0
        %3806 = vmatprep.subr.mxu0 0.0
        %3807 = vmatpush2.xpose.msra.mxu0 0.0
        %3808 = vmatprep.subr.mxu0 0.0
        %3809 = vmatpush2.xpose.msra.mxu0 0.0
        %3810 = vmatprep.subr.mxu0 0.0
        %3811 = vmatpush2.xpose.msra.mxu0 0.0
        %3812 = vmatprep.subr.mxu0 0.0
        %3813 = vmatpush2.xpose.msra.mxu0 0.0
        %3814 = vmatprep.subr.mxu0 0.0
        %3815 = vmatpush2.xpose.msra.mxu0 0.0
        %3816 = vmatprep.subr.mxu0 0.0
        %3817 = vmatpush2.xpose.msra.mxu0 0.0
        %3818 = vmatprep.subr.mxu0 0.0
        %3819 = vmatpush2.xpose.msra.mxu0 0.0
        %3820 = vmatprep.subr.mxu0 0.0
        %3821 = vmatpush2.xpose.msra.mxu0 0.0
        %3822 = vmatprep.subr.mxu0 0.0
        %3823 = vmatpush2.xpose.msra.mxu0 0.0
        %3824 = vmatprep.subr.mxu0 0.0
        %3825 = vmatpush2.xpose.msra.mxu0 0.0
        %3826 = vmatprep.subr.mxu0 0.0
        %3827 = vmatpush2.xpose.msra.mxu0 0.0
        %3828 = vmatprep.subr.mxu0 0.0
        %3829 = vmatpush2.xpose.msra.mxu0 0.0
        %3830 = vmatprep.subr.mxu0 0.0
        %3831 = vmatpush2.xpose.msra.mxu0 0.0
        %3832 = vmatprep.mubr.f32.mxu0 0.0
        %3833 = vmatmul.mubr.f32.gmra.mxu0 %v3760
        %v3834 = vpop.f32.mrf.mxu0
        %v3835 = vadd.f32 0.0, %v3834
        %v3836 = vpop.f32.mrf.mxu0
        %3837 = vmatprep.mubr.f32.mxu0 0.0
        %3838 = vmatmul.mubr.f32.gmra.mxu0 %v3762
        %v3839 = vpop.f32.mrf.mxu0
        %v3840 = vadd.f32 0.0, %v3839
        %v3841 = vpop.f32.mrf.mxu0
        %3842 = vdwg.mxu0
        %v3843 = vsel %vm2431, %v2212, 0
        %v3845 = vsel %vm2431, %v2214, 0
        %v3847 = vsel %vm2431, %v2100, 0
        %v3849 = vsel %vm2431, %v2102, 0
        %3851 = vmatprep.subr.mxu0 0.0
        %3852 = vmatpush1.xpose.msra.mxu0 0.0
        %3853 = vmatprep.subr.mxu0 0.0
        %3854 = vmatpush1.xpose.msra.mxu0 0.0
        %3855 = vmatprep.subr.mxu0 0.0
        %3856 = vmatpush1.xpose.msra.mxu0 0.0
        %3857 = vmatprep.subr.mxu0 0.0
        %3858 = vmatpush1.xpose.msra.mxu0 0.0
        %3859 = vmatprep.subr.mxu0 0.0
        %3860 = vmatpush1.xpose.msra.mxu0 0.0
        %3861 = vmatprep.subr.mxu0 0.0
        %3862 = vmatpush1.xpose.msra.mxu0 0.0
        %3863 = vmatprep.subr.mxu0 0.0
        %3864 = vmatpush1.xpose.msra.mxu0 0.0
        %3865 = vmatprep.subr.mxu0 0.0
        %3866 = vmatpush1.xpose.msra.mxu0 0.0
        %3867 = vmatprep.subr.mxu0 0.0
        %3868 = vmatpush1.xpose.msra.mxu0 0.0
        %3869 = vmatprep.subr.mxu0 0.0
        %3870 = vmatpush1.xpose.msra.mxu0 0.0
        %3871 = vmatprep.subr.mxu0 0.0
        %3872 = vmatpush1.xpose.msra.mxu0 0.0
        %3873 = vmatprep.subr.mxu0 0.0
        %3874 = vmatpush1.xpose.msra.mxu0 0.0
        %3875 = vmatprep.subr.mxu0 0.0
        %3876 = vmatpush1.xpose.msra.mxu0 0.0
        %3877 = vmatprep.subr.mxu0 0.0
        %3878 = vmatpush1.xpose.msra.mxu0 0.0
        %3879 = vmatprep.subr.mxu0 0.0
        %3880 = vmatpush1.xpose.msra.mxu0 %v3849
        %3881 = vmatprep.subr.mxu0 0.0
        %3882 = vmatpush1.xpose.msra.mxu0 %v3847
        %3883 = vmatprep.subr.mxu0 0.0
        %3884 = vmatpush2.xpose.msra.mxu0 0.0
        %3885 = vmatprep.subr.mxu0 0.0
        %3886 = vmatpush2.xpose.msra.mxu0 0.0
        %3887 = vmatprep.subr.mxu0 0.0
        %3888 = vmatpush2.xpose.msra.mxu0 0.0
        %3889 = vmatprep.subr.mxu0 0.0
        %3890 = vmatpush2.xpose.msra.mxu0 0.0
        %3891 = vmatprep.subr.mxu0 0.0
        %3892 = vmatpush2.xpose.msra.mxu0 0.0
        %3893 = vmatprep.subr.mxu0 0.0
        %3894 = vmatpush2.xpose.msra.mxu0 0.0
        %3895 = vmatprep.subr.mxu0 0.0
        %3896 = vmatpush2.xpose.msra.mxu0 0.0
        %3897 = vmatprep.subr.mxu0 0.0
        %3898 = vmatpush2.xpose.msra.mxu0 0.0
        %3899 = vmatprep.subr.mxu0 0.0
        %3900 = vmatpush2.xpose.msra.mxu0 0.0
        %3901 = vmatprep.subr.mxu0 0.0
        %3902 = vmatpush2.xpose.msra.mxu0 0.0
        %3903 = vmatprep.subr.mxu0 0.0
        %3904 = vmatpush2.xpose.msra.mxu0 0.0
        %3905 = vmatprep.subr.mxu0 0.0
        %3906 = vmatpush2.xpose.msra.mxu0 0.0
        %3907 = vmatprep.subr.mxu0 0.0
        %3908 = vmatpush2.xpose.msra.mxu0 0.0
        %3909 = vmatprep.subr.mxu0 0.0
        %3910 = vmatpush2.xpose.msra.mxu0 0.0
        %3911 = vmatprep.subr.mxu0 0.0
        %3912 = vmatpush2.xpose.msra.mxu0 0.0
        %3913 = vmatprep.subr.mxu0 0.0
        %3914 = vmatpush2.xpose.msra.mxu0 0.0
        %3915 = vmatprep.mubr.f32.mxu0 0.0
        %3916 = vmatmul.mubr.f32.gmra.mxu0 %v3843
        %v3917 = vpop.f32.mrf.mxu0
        %v3918 = vadd.f32 0.0, %v3917
        %v3919 = vpop.f32.mrf.mxu0
        %3920 = vmatprep.mubr.f32.mxu0 0.0
        %3921 = vmatmul.mubr.f32.gmra.mxu0 %v3845
        %v3922 = vpop.f32.mrf.mxu0
        %v3923 = vadd.f32 0.0, %v3922
        %v3924 = vpop.f32.mrf.mxu0
        %3925 = vdwg.mxu0
        %v3926 = vsel %vm2431, %v2216, 0
        %v3928 = vsel %vm2431, %v2218, 0
        %v3930 = vsel %vm2431, %v2104, 0
        %v3932 = vsel %vm2431, %v2106, 0
        %3934 = vmatprep.subr.mxu0 0.0
        %3935 = vmatpush1.xpose.msra.mxu0 0.0
        %3936 = vmatprep.subr.mxu0 0.0
        %3937 = vmatpush1.xpose.msra.mxu0 0.0
        %3938 = vmatprep.subr.mxu0 0.0
        %3939 = vmatpush1.xpose.msra.mxu0 0.0
        %3940 = vmatprep.subr.mxu0 0.0
        %3941 = vmatpush1.xpose.msra.mxu0 0.0
        %3942 = vmatprep.subr.mxu0 0.0
        %3943 = vmatpush1.xpose.msra.mxu0 0.0
        %3944 = vmatprep.subr.mxu0 0.0
        %3945 = vmatpush1.xpose.msra.mxu0 0.0
        %3946 = vmatprep.subr.mxu0 0.0
        %3947 = vmatpush1.xpose.msra.mxu0 0.0
        %3948 = vmatprep.subr.mxu0 0.0
        %3949 = vmatpush1.xpose.msra.mxu0 0.0
        %3950 = vmatprep.subr.mxu0 0.0
        %3951 = vmatpush1.xpose.msra.mxu0 0.0
        %3952 = vmatprep.subr.mxu0 0.0
        %3953 = vmatpush1.xpose.msra.mxu0 0.0
        %3954 = vmatprep.subr.mxu0 0.0
        %3955 = vmatpush1.xpose.msra.mxu0 0.0
        %3956 = vmatprep.subr.mxu0 0.0
        %3957 = vmatpush1.xpose.msra.mxu0 0.0
        %3958 = vmatprep.subr.mxu0 0.0
        %3959 = vmatpush1.xpose.msra.mxu0 0.0
        %3960 = vmatprep.subr.mxu0 0.0
        %3961 = vmatpush1.xpose.msra.mxu0 0.0
        %3962 = vmatprep.subr.mxu0 0.0
        %3963 = vmatpush1.xpose.msra.mxu0 %v3932
        %3964 = vmatprep.subr.mxu0 0.0
        %3965 = vmatpush1.xpose.msra.mxu0 %v3930
        %3966 = vmatprep.subr.mxu0 0.0
        %3967 = vmatpush2.xpose.msra.mxu0 0.0
        %3968 = vmatprep.subr.mxu0 0.0
        %3969 = vmatpush2.xpose.msra.mxu0 0.0
        %3970 = vmatprep.subr.mxu0 0.0
        %3971 = vmatpush2.xpose.msra.mxu0 0.0
        %3972 = vmatprep.subr.mxu0 0.0
        %3973 = vmatpush2.xpose.msra.mxu0 0.0
        %3974 = vmatprep.subr.mxu0 0.0
        %3975 = vmatpush2.xpose.msra.mxu0 0.0
        %3976 = vmatprep.subr.mxu0 0.0
        %3977 = vmatpush2.xpose.msra.mxu0 0.0
        %3978 = vmatprep.subr.mxu0 0.0
        %3979 = vmatpush2.xpose.msra.mxu0 0.0
        %3980 = vmatprep.subr.mxu0 0.0
        %3981 = vmatpush2.xpose.msra.mxu0 0.0
        %3982 = vmatprep.subr.mxu0 0.0
        %3983 = vmatpush2.xpose.msra.mxu0 0.0
        %3984 = vmatprep.subr.mxu0 0.0
        %3985 = vmatpush2.xpose.msra.mxu0 0.0
        %3986 = vmatprep.subr.mxu0 0.0
        %3987 = vmatpush2.xpose.msra.mxu0 0.0
        %3988 = vmatprep.subr.mxu0 0.0
        %3989 = vmatpush2.xpose.msra.mxu0 0.0
        %3990 = vmatprep.subr.mxu0 0.0
        %3991 = vmatpush2.xpose.msra.mxu0 0.0
        %3992 = vmatprep.subr.mxu0 0.0
        %3993 = vmatpush2.xpose.msra.mxu0 0.0
        %3994 = vmatprep.subr.mxu0 0.0
        %3995 = vmatpush2.xpose.msra.mxu0 0.0
        %3996 = vmatprep.subr.mxu0 0.0
        %3997 = vmatpush2.xpose.msra.mxu0 0.0
        %3998 = vmatprep.mubr.f32.mxu0 0.0
        %3999 = vmatmul.mubr.f32.gmra.mxu0 %v3926
        %v4000 = vpop.f32.mrf.mxu0
        %v4001 = vadd.f32 0.0, %v4000
        %v4002 = vpop.f32.mrf.mxu0
        %4003 = vmatprep.mubr.f32.mxu0 0.0
        %4004 = vmatmul.mubr.f32.gmra.mxu0 %v3928
        %v4005 = vpop.f32.mrf.mxu0
        %v4006 = vadd.f32 0.0, %v4005
        %v4007 = vpop.f32.mrf.mxu0
        %4008 = vdwg.mxu0
        %v4009 = vsel %vm2431, %v2220, 0
        %v4011 = vsel %vm2431, %v2222, 0
        %v4013 = vsel %vm2431, %v2108, 0
        %v4015 = vsel %vm2431, %v2110, 0
        %4017 = vmatprep.subr.mxu0 0.0
        %4018 = vmatpush1.xpose.msra.mxu0 0.0
        %4019 = vmatprep.subr.mxu0 0.0
        %4020 = vmatpush1.xpose.msra.mxu0 0.0
        %4021 = vmatprep.subr.mxu0 0.0
        %4022 = vmatpush1.xpose.msra.mxu0 0.0
        %4023 = vmatprep.subr.mxu0 0.0
        %4024 = vmatpush1.xpose.msra.mxu0 0.0
        %4025 = vmatprep.subr.mxu0 0.0
        %4026 = vmatpush1.xpose.msra.mxu0 0.0
        %4027 = vmatprep.subr.mxu0 0.0
        %4028 = vmatpush1.xpose.msra.mxu0 0.0
        %4029 = vmatprep.subr.mxu0 0.0
        %4030 = vmatpush1.xpose.msra.mxu0 0.0
        %4031 = vmatprep.subr.mxu0 0.0
        %4032 = vmatpush1.xpose.msra.mxu0 0.0
        %4033 = vmatprep.subr.mxu0 0.0
        %4034 = vmatpush1.xpose.msra.mxu0 0.0
        %4035 = vmatprep.subr.mxu0 0.0
        %4036 = vmatpush1.xpose.msra.mxu0 0.0
        %4037 = vmatprep.subr.mxu0 0.0
        %4038 = vmatpush1.xpose.msra.mxu0 0.0
        %4039 = vmatprep.subr.mxu0 0.0
        %4040 = vmatpush1.xpose.msra.mxu0 0.0
        %4041 = vmatprep.subr.mxu0 0.0
        %4042 = vmatpush1.xpose.msra.mxu0 0.0
        %4043 = vmatprep.subr.mxu0 0.0
        %4044 = vmatpush1.xpose.msra.mxu0 0.0
        %4045 = vmatprep.subr.mxu0 0.0
        %4046 = vmatpush1.xpose.msra.mxu0 %v4015
        %4047 = vmatprep.subr.mxu0 0.0
        %4048 = vmatpush1.xpose.msra.mxu0 %v4013
        %4049 = vmatprep.subr.mxu0 0.0
        %4050 = vmatpush2.xpose.msra.mxu0 0.0
        %4051 = vmatprep.subr.mxu0 0.0
        %4052 = vmatpush2.xpose.msra.mxu0 0.0
        %4053 = vmatprep.subr.mxu0 0.0
        %4054 = vmatpush2.xpose.msra.mxu0 0.0
        %4055 = vmatprep.subr.mxu0 0.0
        %4056 = vmatpush2.xpose.msra.mxu0 0.0
        %4057 = vmatprep.subr.mxu0 0.0
        %4058 = vmatpush2.xpose.msra.mxu0 0.0
        %4059 = vmatprep.subr.mxu0 0.0
        %4060 = vmatpush2.xpose.msra.mxu0 0.0
        %4061 = vmatprep.subr.mxu0 0.0
        %4062 = vmatpush2.xpose.msra.mxu0 0.0
        %4063 = vmatprep.subr.mxu0 0.0
        %4064 = vmatpush2.xpose.msra.mxu0 0.0
        %4065 = vmatprep.subr.mxu0 0.0
        %4066 = vmatpush2.xpose.msra.mxu0 0.0
        %4067 = vmatprep.subr.mxu0 0.0
        %4068 = vmatpush2.xpose.msra.mxu0 0.0
        %4069 = vmatprep.subr.mxu0 0.0
        %4070 = vmatpush2.xpose.msra.mxu0 0.0
        %4071 = vmatprep.subr.mxu0 0.0
        %4072 = vmatpush2.xpose.msra.mxu0 0.0
        %4073 = vmatprep.subr.mxu0 0.0
        %4074 = vmatpush2.xpose.msra.mxu0 0.0
        %4075 = vmatprep.subr.mxu0 0.0
        %4076 = vmatpush2.xpose.msra.mxu0 0.0
        %4077 = vmatprep.subr.mxu0 0.0
        %4078 = vmatpush2.xpose.msra.mxu0 0.0
        %4079 = vmatprep.subr.mxu0 0.0
        %4080 = vmatpush2.xpose.msra.mxu0 0.0
        %4081 = vmatprep.mubr.f32.mxu0 0.0
        %4082 = vmatmul.mubr.f32.gmra.mxu0 %v4009
        %v4083 = vpop.f32.mrf.mxu0
        %v4084 = vadd.f32 0.0, %v4083
        %v4085 = vpop.f32.mrf.mxu0
        %4086 = vmatprep.mubr.f32.mxu0 0.0
        %4087 = vmatmul.mubr.f32.gmra.mxu0 %v4011
        %v4088 = vpop.f32.mrf.mxu0
        %v4089 = vadd.f32 0.0, %v4088
        %v4090 = vpop.f32.mrf.mxu0
        %4091 = vdwg.mxu0
        %v4092 = vsel %vm2431, %v2224, 0
        %v4094 = vsel %vm2431, %v2226, 0
        %v4096 = vsel %vm2431, %v2112, 0
        %v4098 = vsel %vm2431, %v2114, 0
        %4100 = vmatprep.subr.mxu0 0.0
        %4101 = vmatpush1.xpose.msra.mxu0 0.0
        %4102 = vmatprep.subr.mxu0 0.0
        %4103 = vmatpush1.xpose.msra.mxu0 0.0
        %4104 = vmatprep.subr.mxu0 0.0
        %4105 = vmatpush1.xpose.msra.mxu0 0.0
        %4106 = vmatprep.subr.mxu0 0.0
        %4107 = vmatpush1.xpose.msra.mxu0 0.0
        %4108 = vmatprep.subr.mxu0 0.0
        %4109 = vmatpush1.xpose.msra.mxu0 0.0
        %4110 = vmatprep.subr.mxu0 0.0
        %4111 = vmatpush1.xpose.msra.mxu0 0.0
        %4112 = vmatprep.subr.mxu0 0.0
        %4113 = vmatpush1.xpose.msra.mxu0 0.0
        %4114 = vmatprep.subr.mxu0 0.0
        %4115 = vmatpush1.xpose.msra.mxu0 0.0
        %4116 = vmatprep.subr.mxu0 0.0
        %4117 = vmatpush1.xpose.msra.mxu0 0.0
        %4118 = vmatprep.subr.mxu0 0.0
        %4119 = vmatpush1.xpose.msra.mxu0 0.0
        %4120 = vmatprep.subr.mxu0 0.0
        %4121 = vmatpush1.xpose.msra.mxu0 0.0
        %4122 = vmatprep.subr.mxu0 0.0
        %4123 = vmatpush1.xpose.msra.mxu0 0.0
        %4124 = vmatprep.subr.mxu0 0.0
        %4125 = vmatpush1.xpose.msra.mxu0 0.0
        %4126 = vmatprep.subr.mxu0 0.0
        %4127 = vmatpush1.xpose.msra.mxu0 0.0
        %4128 = vmatprep.subr.mxu0 0.0
        %4129 = vmatpush1.xpose.msra.mxu0 %v4098
        %4130 = vmatprep.subr.mxu0 0.0
        %4131 = vmatpush1.xpose.msra.mxu0 %v4096
        %4132 = vmatprep.subr.mxu0 0.0
        %4133 = vmatpush2.xpose.msra.mxu0 0.0
        %4134 = vmatprep.subr.mxu0 0.0
        %4135 = vmatpush2.xpose.msra.mxu0 0.0
        %4136 = vmatprep.subr.mxu0 0.0
        %4137 = vmatpush2.xpose.msra.mxu0 0.0
        %4138 = vmatprep.subr.mxu0 0.0
        %4139 = vmatpush2.xpose.msra.mxu0 0.0
        %4140 = vmatprep.subr.mxu0 0.0
        %4141 = vmatpush2.xpose.msra.mxu0 0.0
        %4142 = vmatprep.subr.mxu0 0.0
        %4143 = vmatpush2.xpose.msra.mxu0 0.0
        %4144 = vmatprep.subr.mxu0 0.0
        %4145 = vmatpush2.xpose.msra.mxu0 0.0
        %4146 = vmatprep.subr.mxu0 0.0
        %4147 = vmatpush2.xpose.msra.mxu0 0.0
        %4148 = vmatprep.subr.mxu0 0.0
        %4149 = vmatpush2.xpose.msra.mxu0 0.0
        %4150 = vmatprep.subr.mxu0 0.0
        %4151 = vmatpush2.xpose.msra.mxu0 0.0
        %4152 = vmatprep.subr.mxu0 0.0
        %4153 = vmatpush2.xpose.msra.mxu0 0.0
        %4154 = vmatprep.subr.mxu0 0.0
        %4155 = vmatpush2.xpose.msra.mxu0 0.0
        %4156 = vmatprep.subr.mxu0 0.0
        %4157 = vmatpush2.xpose.msra.mxu0 0.0
        %4158 = vmatprep.subr.mxu0 0.0
        %4159 = vmatpush2.xpose.msra.mxu0 0.0
        %4160 = vmatprep.subr.mxu0 0.0
        %4161 = vmatpush2.xpose.msra.mxu0 0.0
        %4162 = vmatprep.subr.mxu0 0.0
        %4163 = vmatpush2.xpose.msra.mxu0 0.0
        %4164 = vmatprep.mubr.f32.mxu0 0.0
        %4165 = vmatmul.mubr.f32.gmra.mxu0 %v4092
        %v4166 = vpop.f32.mrf.mxu0
        %v4167 = vadd.f32 0.0, %v4166
        %v4168 = vpop.f32.mrf.mxu0
        %4169 = vmatprep.mubr.f32.mxu0 0.0
        %4170 = vmatmul.mubr.f32.gmra.mxu0 %v4094
        %v4171 = vpop.f32.mrf.mxu0
        %v4172 = vadd.f32 0.0, %v4171
        %v4173 = vpop.f32.mrf.mxu0
        %4174 = vdwg.mxu0
        %v4175 = vsel %vm2431, %v2228, 0
        %v4177 = vsel %vm2431, %v2230, 0
        %v4179 = vsel %vm2431, %v2116, 0
        %v4181 = vsel %vm2431, %v2118, 0
        %4183 = vmatprep.subr.mxu0 0.0
        %4184 = vmatpush1.xpose.msra.mxu0 0.0
        %4185 = vmatprep.subr.mxu0 0.0
        %4186 = vmatpush1.xpose.msra.mxu0 0.0
        %4187 = vmatprep.subr.mxu0 0.0
        %4188 = vmatpush1.xpose.msra.mxu0 0.0
        %4189 = vmatprep.subr.mxu0 0.0
        %4190 = vmatpush1.xpose.msra.mxu0 0.0
        %4191 = vmatprep.subr.mxu0 0.0
        %4192 = vmatpush1.xpose.msra.mxu0 0.0
        %4193 = vmatprep.subr.mxu0 0.0
        %4194 = vmatpush1.xpose.msra.mxu0 0.0
        %4195 = vmatprep.subr.mxu0 0.0
        %4196 = vmatpush1.xpose.msra.mxu0 0.0
        %4197 = vmatprep.subr.mxu0 0.0
        %4198 = vmatpush1.xpose.msra.mxu0 0.0
        %4199 = vmatprep.subr.mxu0 0.0
        %4200 = vmatpush1.xpose.msra.mxu0 0.0
        %4201 = vmatprep.subr.mxu0 0.0
        %4202 = vmatpush1.xpose.msra.mxu0 0.0
        %4203 = vmatprep.subr.mxu0 0.0
        %4204 = vmatpush1.xpose.msra.mxu0 0.0
        %4205 = vmatprep.subr.mxu0 0.0
        %4206 = vmatpush1.xpose.msra.mxu0 0.0
        %4207 = vmatprep.subr.mxu0 0.0
        %4208 = vmatpush1.xpose.msra.mxu0 0.0
        %4209 = vmatprep.subr.mxu0 0.0
        %4210 = vmatpush1.xpose.msra.mxu0 0.0
        %4211 = vmatprep.subr.mxu0 0.0
        %4212 = vmatpush1.xpose.msra.mxu0 %v4181
        %4213 = vmatprep.subr.mxu0 0.0
        %4214 = vmatpush1.xpose.msra.mxu0 %v4179
        %4215 = vmatprep.subr.mxu0 0.0
        %4216 = vmatpush2.xpose.msra.mxu0 0.0
        %4217 = vmatprep.subr.mxu0 0.0
        %4218 = vmatpush2.xpose.msra.mxu0 0.0
        %4219 = vmatprep.subr.mxu0 0.0
        %4220 = vmatpush2.xpose.msra.mxu0 0.0
        %4221 = vmatprep.subr.mxu0 0.0
        %4222 = vmatpush2.xpose.msra.mxu0 0.0
        %4223 = vmatprep.subr.mxu0 0.0
        %4224 = vmatpush2.xpose.msra.mxu0 0.0
        %4225 = vmatprep.subr.mxu0 0.0
        %4226 = vmatpush2.xpose.msra.mxu0 0.0
        %4227 = vmatprep.subr.mxu0 0.0
        %4228 = vmatpush2.xpose.msra.mxu0 0.0
        %4229 = vmatprep.subr.mxu0 0.0
        %4230 = vmatpush2.xpose.msra.mxu0 0.0
        %4231 = vmatprep.subr.mxu0 0.0
        %4232 = vmatpush2.xpose.msra.mxu0 0.0
        %4233 = vmatprep.subr.mxu0 0.0
        %4234 = vmatpush2.xpose.msra.mxu0 0.0
        %4235 = vmatprep.subr.mxu0 0.0
        %4236 = vmatpush2.xpose.msra.mxu0 0.0
        %4237 = vmatprep.subr.mxu0 0.0
        %4238 = vmatpush2.xpose.msra.mxu0 0.0
        %4239 = vmatprep.subr.mxu0 0.0
        %4240 = vmatpush2.xpose.msra.mxu0 0.0
        %4241 = vmatprep.subr.mxu0 0.0
        %4242 = vmatpush2.xpose.msra.mxu0 0.0
        %4243 = vmatprep.subr.mxu0 0.0
        %4244 = vmatpush2.xpose.msra.mxu0 0.0
        %4245 = vmatprep.subr.mxu0 0.0
        %4246 = vmatpush2.xpose.msra.mxu0 0.0
        %4247 = vmatprep.mubr.f32.mxu0 0.0
        %4248 = vmatmul.mubr.f32.gmra.mxu0 %v4175
        %v4249 = vpop.f32.mrf.mxu0
        %v4250 = vadd.f32 0.0, %v4249
        %v4251 = vpop.f32.mrf.mxu0
        %4252 = vmatprep.mubr.f32.mxu0 0.0
        %4253 = vmatmul.mubr.f32.gmra.mxu0 %v4177
        %v4254 = vpop.f32.mrf.mxu0
        %v4255 = vadd.f32 0.0, %v4254
        %v4256 = vpop.f32.mrf.mxu0
        %4257 = vdwg.mxu0
        %v4258 = vsel %vm2431, %v2232, 0
        %v4260 = vsel %vm2431, %v2234, 0
        %v4262 = vsel %vm2431, %v2120, 0
        %v4264 = vsel %vm2431, %v2122, 0
        %4266 = vmatprep.subr.mxu0 0.0
        %4267 = vmatpush1.xpose.msra.mxu0 0.0
        %4268 = vmatprep.subr.mxu0 0.0
        %4269 = vmatpush1.xpose.msra.mxu0 0.0
        %4270 = vmatprep.subr.mxu0 0.0
        %4271 = vmatpush1.xpose.msra.mxu0 0.0
        %4272 = vmatprep.subr.mxu0 0.0
        %4273 = vmatpush1.xpose.msra.mxu0 0.0
        %4274 = vmatprep.subr.mxu0 0.0
        %4275 = vmatpush1.xpose.msra.mxu0 0.0
        %4276 = vmatprep.subr.mxu0 0.0
        %4277 = vmatpush1.xpose.msra.mxu0 0.0
        %4278 = vmatprep.subr.mxu0 0.0
        %4279 = vmatpush1.xpose.msra.mxu0 0.0
        %4280 = vmatprep.subr.mxu0 0.0
        %4281 = vmatpush1.xpose.msra.mxu0 0.0
        %4282 = vmatprep.subr.mxu0 0.0
        %4283 = vmatpush1.xpose.msra.mxu0 0.0
        %4284 = vmatprep.subr.mxu0 0.0
        %4285 = vmatpush1.xpose.msra.mxu0 0.0
        %4286 = vmatprep.subr.mxu0 0.0
        %4287 = vmatpush1.xpose.msra.mxu0 0.0
        %4288 = vmatprep.subr.mxu0 0.0
        %4289 = vmatpush1.xpose.msra.mxu0 0.0
        %4290 = vmatprep.subr.mxu0 0.0
        %4291 = vmatpush1.xpose.msra.mxu0 0.0
        %4292 = vmatprep.subr.mxu0 0.0
        %4293 = vmatpush1.xpose.msra.mxu0 0.0
        %4294 = vmatprep.subr.mxu0 0.0
        %4295 = vmatpush1.xpose.msra.mxu0 %v4264
        %4296 = vmatprep.subr.mxu0 0.0
        %4297 = vmatpush1.xpose.msra.mxu0 %v4262
        %4298 = vmatprep.subr.mxu0 0.0
        %4299 = vmatpush2.xpose.msra.mxu0 0.0
        %4300 = vmatprep.subr.mxu0 0.0
        %4301 = vmatpush2.xpose.msra.mxu0 0.0
        %4302 = vmatprep.subr.mxu0 0.0
        %4303 = vmatpush2.xpose.msra.mxu0 0.0
        %4304 = vmatprep.subr.mxu0 0.0
        %4305 = vmatpush2.xpose.msra.mxu0 0.0
        %4306 = vmatprep.subr.mxu0 0.0
        %4307 = vmatpush2.xpose.msra.mxu0 0.0
        %4308 = vmatprep.subr.mxu0 0.0
        %4309 = vmatpush2.xpose.msra.mxu0 0.0
        %4310 = vmatprep.subr.mxu0 0.0
        %4311 = vmatpush2.xpose.msra.mxu0 0.0
        %4312 = vmatprep.subr.mxu0 0.0
        %4313 = vmatpush2.xpose.msra.mxu0 0.0
        %4314 = vmatprep.subr.mxu0 0.0
        %4315 = vmatpush2.xpose.msra.mxu0 0.0
        %4316 = vmatprep.subr.mxu0 0.0
        %4317 = vmatpush2.xpose.msra.mxu0 0.0
        %4318 = vmatprep.subr.mxu0 0.0
        %4319 = vmatpush2.xpose.msra.mxu0 0.0
        %4320 = vmatprep.subr.mxu0 0.0
        %4321 = vmatpush2.xpose.msra.mxu0 0.0
        %4322 = vmatprep.subr.mxu0 0.0
        %4323 = vmatpush2.xpose.msra.mxu0 0.0
        %4324 = vmatprep.subr.mxu0 0.0
        %4325 = vmatpush2.xpose.msra.mxu0 0.0
        %4326 = vmatprep.subr.mxu0 0.0
        %4327 = vmatpush2.xpose.msra.mxu0 0.0
        %4328 = vmatprep.subr.mxu0 0.0
        %4329 = vmatpush2.xpose.msra.mxu0 0.0
        %4330 = vmatprep.mubr.f32.mxu0 0.0
        %4331 = vmatmul.mubr.f32.gmra.mxu0 %v4258
        %v4332 = vpop.f32.mrf.mxu0
        %v4333 = vadd.f32 0.0, %v4332
        %v4334 = vpop.f32.mrf.mxu0
        %4335 = vmatprep.mubr.f32.mxu0 0.0
        %4336 = vmatmul.mubr.f32.gmra.mxu0 %v4260
        %v4337 = vpop.f32.mrf.mxu0
        %v4338 = vadd.f32 0.0, %v4337
        %v4339 = vpop.f32.mrf.mxu0
        %4340 = vdwg.mxu0
        %v4341 = vsel %vm2431, %v2236, 0
        %v4343 = vsel %vm2431, %v2238, 0
        %v4345 = vsel %vm2431, %v2124, 0
        %v4347 = vsel %vm2431, %v2126, 0
        %4349 = vmatprep.subr.mxu0 0.0
        %4350 = vmatpush1.xpose.msra.mxu0 0.0
        %4351 = vmatprep.subr.mxu0 0.0
        %4352 = vmatpush1.xpose.msra.mxu0 0.0
        %4353 = vmatprep.subr.mxu0 0.0
        %4354 = vmatpush1.xpose.msra.mxu0 0.0
        %4355 = vmatprep.subr.mxu0 0.0
        %4356 = vmatpush1.xpose.msra.mxu0 0.0
        %4357 = vmatprep.subr.mxu0 0.0
        %4358 = vmatpush1.xpose.msra.mxu0 0.0
        %4359 = vmatprep.subr.mxu0 0.0
        %4360 = vmatpush1.xpose.msra.mxu0 0.0
        %4361 = vmatprep.subr.mxu0 0.0
        %4362 = vmatpush1.xpose.msra.mxu0 0.0
        %4363 = vmatprep.subr.mxu0 0.0
        %4364 = vmatpush1.xpose.msra.mxu0 0.0
        %4365 = vmatprep.subr.mxu0 0.0
        %4366 = vmatpush1.xpose.msra.mxu0 0.0
        %4367 = vmatprep.subr.mxu0 0.0
        %4368 = vmatpush1.xpose.msra.mxu0 0.0
        %4369 = vmatprep.subr.mxu0 0.0
        %4370 = vmatpush1.xpose.msra.mxu0 0.0
        %4371 = vmatprep.subr.mxu0 0.0
        %4372 = vmatpush1.xpose.msra.mxu0 0.0
        %4373 = vmatprep.subr.mxu0 0.0
        %4374 = vmatpush1.xpose.msra.mxu0 0.0
        %4375 = vmatprep.subr.mxu0 0.0
        %4376 = vmatpush1.xpose.msra.mxu0 0.0
        %4377 = vmatprep.subr.mxu0 0.0
        %4378 = vmatpush1.xpose.msra.mxu0 %v4347
        %4379 = vmatprep.subr.mxu0 0.0
        %4380 = vmatpush1.xpose.msra.mxu0 %v4345
        %4381 = vmatprep.subr.mxu0 0.0
        %4382 = vmatpush2.xpose.msra.mxu0 0.0
        %4383 = vmatprep.subr.mxu0 0.0
        %4384 = vmatpush2.xpose.msra.mxu0 0.0
        %4385 = vmatprep.subr.mxu0 0.0
        %4386 = vmatpush2.xpose.msra.mxu0 0.0
        %4387 = vmatprep.subr.mxu0 0.0
        %4388 = vmatpush2.xpose.msra.mxu0 0.0
        %4389 = vmatprep.subr.mxu0 0.0
        %4390 = vmatpush2.xpose.msra.mxu0 0.0
        %4391 = vmatprep.subr.mxu0 0.0
        %4392 = vmatpush2.xpose.msra.mxu0 0.0
        %4393 = vmatprep.subr.mxu0 0.0
        %4394 = vmatpush2.xpose.msra.mxu0 0.0
        %4395 = vmatprep.subr.mxu0 0.0
        %4396 = vmatpush2.xpose.msra.mxu0 0.0
        %4397 = vmatprep.subr.mxu0 0.0
        %4398 = vmatpush2.xpose.msra.mxu0 0.0
        %4399 = vmatprep.subr.mxu0 0.0
        %4400 = vmatpush2.xpose.msra.mxu0 0.0
        %4401 = vmatprep.subr.mxu0 0.0
        %4402 = vmatpush2.xpose.msra.mxu0 0.0
        %4403 = vmatprep.subr.mxu0 0.0
        %4404 = vmatpush2.xpose.msra.mxu0 0.0
        %4405 = vmatprep.subr.mxu0 0.0
        %4406 = vmatpush2.xpose.msra.mxu0 0.0
        %4407 = vmatprep.subr.mxu0 0.0
        %4408 = vmatpush2.xpose.msra.mxu0 0.0
        %4409 = vmatprep.subr.mxu0 0.0
        %4410 = vmatpush2.xpose.msra.mxu0 0.0
        %4411 = vmatprep.subr.mxu0 0.0
        %4412 = vmatpush2.xpose.msra.mxu0 0.0
        %4413 = vmatprep.mubr.f32.mxu0 0.0
        %4414 = vmatmul.mubr.f32.gmra.mxu0 %v4341
        %v4415 = vpop.f32.mrf.mxu0
        %v4416 = vadd.f32 0.0, %v4415
        %v4417 = vpop.f32.mrf.mxu0
        %4418 = vmatprep.mubr.f32.mxu0 0.0
        %4419 = vmatmul.mubr.f32.gmra.mxu0 %v4343
        %v4420 = vpop.f32.mrf.mxu0
        %v4421 = vadd.f32 0.0, %v4420
        %v4422 = vpop.f32.mrf.mxu0
        %4423 = vdwg.mxu0
        %v4424 = vsel %vm2431, %v2240, 0
        %v4426 = vsel %vm2431, %v2242, 0
        %v4428 = vsel %vm2431, %v2128, 0
        %v4430 = vsel %vm2431, %v2130, 0
        %4432 = vmatprep.subr.mxu0 0.0
        %4433 = vmatpush1.xpose.msra.mxu0 0.0
        %4434 = vmatprep.subr.mxu0 0.0
        %4435 = vmatpush1.xpose.msra.mxu0 0.0
        %4436 = vmatprep.subr.mxu0 0.0
        %4437 = vmatpush1.xpose.msra.mxu0 0.0
        %4438 = vmatprep.subr.mxu0 0.0
        %4439 = vmatpush1.xpose.msra.mxu0 0.0
        %4440 = vmatprep.subr.mxu0 0.0
        %4441 = vmatpush1.xpose.msra.mxu0 0.0
        %4442 = vmatprep.subr.mxu0 0.0
        %4443 = vmatpush1.xpose.msra.mxu0 0.0
        %4444 = vmatprep.subr.mxu0 0.0
        %4445 = vmatpush1.xpose.msra.mxu0 0.0
        %4446 = vmatprep.subr.mxu0 0.0
        %4447 = vmatpush1.xpose.msra.mxu0 0.0
        %4448 = vmatprep.subr.mxu0 0.0
        %4449 = vmatpush1.xpose.msra.mxu0 0.0
        %4450 = vmatprep.subr.mxu0 0.0
        %4451 = vmatpush1.xpose.msra.mxu0 0.0
        %4452 = vmatprep.subr.mxu0 0.0
        %4453 = vmatpush1.xpose.msra.mxu0 0.0
        %4454 = vmatprep.subr.mxu0 0.0
        %4455 = vmatpush1.xpose.msra.mxu0 0.0
        %4456 = vmatprep.subr.mxu0 0.0
        %4457 = vmatpush1.xpose.msra.mxu0 0.0
        %4458 = vmatprep.subr.mxu0 0.0
        %4459 = vmatpush1.xpose.msra.mxu0 0.0
        %4460 = vmatprep.subr.mxu0 0.0
        %4461 = vmatpush1.xpose.msra.mxu0 %v4430
        %4462 = vmatprep.subr.mxu0 0.0
        %4463 = vmatpush1.xpose.msra.mxu0 %v4428
        %4464 = vmatprep.subr.mxu0 0.0
        %4465 = vmatpush2.xpose.msra.mxu0 0.0
        %4466 = vmatprep.subr.mxu0 0.0
        %4467 = vmatpush2.xpose.msra.mxu0 0.0
        %4468 = vmatprep.subr.mxu0 0.0
        %4469 = vmatpush2.xpose.msra.mxu0 0.0
        %4470 = vmatprep.subr.mxu0 0.0
        %4471 = vmatpush2.xpose.msra.mxu0 0.0
        %4472 = vmatprep.subr.mxu0 0.0
        %4473 = vmatpush2.xpose.msra.mxu0 0.0
        %4474 = vmatprep.subr.mxu0 0.0
        %4475 = vmatpush2.xpose.msra.mxu0 0.0
        %4476 = vmatprep.subr.mxu0 0.0
        %4477 = vmatpush2.xpose.msra.mxu0 0.0
        %4478 = vmatprep.subr.mxu0 0.0
        %4479 = vmatpush2.xpose.msra.mxu0 0.0
        %4480 = vmatprep.subr.mxu0 0.0
        %4481 = vmatpush2.xpose.msra.mxu0 0.0
        %4482 = vmatprep.subr.mxu0 0.0
        %4483 = vmatpush2.xpose.msra.mxu0 0.0
        %4484 = vmatprep.subr.mxu0 0.0
        %4485 = vmatpush2.xpose.msra.mxu0 0.0
        %4486 = vmatprep.subr.mxu0 0.0
        %4487 = vmatpush2.xpose.msra.mxu0 0.0
        %4488 = vmatprep.subr.mxu0 0.0
        %4489 = vmatpush2.xpose.msra.mxu0 0.0
        %4490 = vmatprep.subr.mxu0 0.0
        %4491 = vmatpush2.xpose.msra.mxu0 0.0
        %4492 = vmatprep.subr.mxu0 0.0
        %4493 = vmatpush2.xpose.msra.mxu0 0.0
        %4494 = vmatprep.subr.mxu0 0.0
        %4495 = vmatpush2.xpose.msra.mxu0 0.0
        %4496 = vmatprep.mubr.f32.mxu0 0.0
        %4497 = vmatmul.mubr.f32.gmra.mxu0 %v4424
        %v4498 = vpop.f32.mrf.mxu0
        %v4499 = vadd.f32 0.0, %v4498
        %v4500 = vpop.f32.mrf.mxu0
        %4501 = vmatprep.mubr.f32.mxu0 0.0
        %4502 = vmatmul.mubr.f32.gmra.mxu0 %v4426
        %v4503 = vpop.f32.mrf.mxu0
        %v4504 = vadd.f32 0.0, %v4503
        %v4505 = vpop.f32.mrf.mxu0
        %4506 = vdwg.mxu0
        %v4507 = vsel %vm2431, %v2244, 0
        %v4509 = vsel %vm2431, %v2246, 0
        %v4511 = vsel %vm2431, %v2132, 0
        %v4513 = vsel %vm2431, %v2134, 0
        %4515 = vmatprep.subr.mxu0 0.0
        %4516 = vmatpush1.xpose.msra.mxu0 0.0
        %4517 = vmatprep.subr.mxu0 0.0
        %4518 = vmatpush1.xpose.msra.mxu0 0.0
        %4519 = vmatprep.subr.mxu0 0.0
        %4520 = vmatpush1.xpose.msra.mxu0 0.0
        %4521 = vmatprep.subr.mxu0 0.0
        %4522 = vmatpush1.xpose.msra.mxu0 0.0
        %4523 = vmatprep.subr.mxu0 0.0
        %4524 = vmatpush1.xpose.msra.mxu0 0.0
        %4525 = vmatprep.subr.mxu0 0.0
        %4526 = vmatpush1.xpose.msra.mxu0 0.0
        %4527 = vmatprep.subr.mxu0 0.0
        %4528 = vmatpush1.xpose.msra.mxu0 0.0
        %4529 = vmatprep.subr.mxu0 0.0
        %4530 = vmatpush1.xpose.msra.mxu0 0.0
        %4531 = vmatprep.subr.mxu0 0.0
        %4532 = vmatpush1.xpose.msra.mxu0 0.0
        %4533 = vmatprep.subr.mxu0 0.0
        %4534 = vmatpush1.xpose.msra.mxu0 0.0
        %4535 = vmatprep.subr.mxu0 0.0
        %4536 = vmatpush1.xpose.msra.mxu0 0.0
        %4537 = vmatprep.subr.mxu0 0.0
        %4538 = vmatpush1.xpose.msra.mxu0 0.0
        %4539 = vmatprep.subr.mxu0 0.0
        %4540 = vmatpush1.xpose.msra.mxu0 0.0
        %4541 = vmatprep.subr.mxu0 0.0
        %4542 = vmatpush1.xpose.msra.mxu0 0.0
        %4543 = vmatprep.subr.mxu0 0.0
        %4544 = vmatpush1.xpose.msra.mxu0 %v4513
        %4545 = vmatprep.subr.mxu0 0.0
        %4546 = vmatpush1.xpose.msra.mxu0 %v4511
        %4547 = vmatprep.subr.mxu0 0.0
        %4548 = vmatpush2.xpose.msra.mxu0 0.0
        %4549 = vmatprep.subr.mxu0 0.0
        %4550 = vmatpush2.xpose.msra.mxu0 0.0
        %4551 = vmatprep.subr.mxu0 0.0
        %4552 = vmatpush2.xpose.msra.mxu0 0.0
        %4553 = vmatprep.subr.mxu0 0.0
        %4554 = vmatpush2.xpose.msra.mxu0 0.0
        %4555 = vmatprep.subr.mxu0 0.0
        %4556 = vmatpush2.xpose.msra.mxu0 0.0
        %4557 = vmatprep.subr.mxu0 0.0
        %4558 = vmatpush2.xpose.msra.mxu0 0.0
        %4559 = vmatprep.subr.mxu0 0.0
        %4560 = vmatpush2.xpose.msra.mxu0 0.0
        %4561 = vmatprep.subr.mxu0 0.0
        %4562 = vmatpush2.xpose.msra.mxu0 0.0
        %4563 = vmatprep.subr.mxu0 0.0
        %4564 = vmatpush2.xpose.msra.mxu0 0.0
        %4565 = vmatprep.subr.mxu0 0.0
        %4566 = vmatpush2.xpose.msra.mxu0 0.0
        %4567 = vmatprep.subr.mxu0 0.0
        %4568 = vmatpush2.xpose.msra.mxu0 0.0
        %4569 = vmatprep.subr.mxu0 0.0
        %4570 = vmatpush2.xpose.msra.mxu0 0.0
        %4571 = vmatprep.subr.mxu0 0.0
        %4572 = vmatpush2.xpose.msra.mxu0 0.0
        %4573 = vmatprep.subr.mxu0 0.0
        %4574 = vmatpush2.xpose.msra.mxu0 0.0
        %4575 = vmatprep.subr.mxu0 0.0
        %4576 = vmatpush2.xpose.msra.mxu0 0.0
        %4577 = vmatprep.subr.mxu0 0.0
        %4578 = vmatpush2.xpose.msra.mxu0 0.0
        %4579 = vmatprep.mubr.f32.mxu0 0.0
        %4580 = vmatmul.mubr.f32.gmra.mxu0 %v4507
        %v4581 = vpop.f32.mrf.mxu0
        %v4582 = vadd.f32 0.0, %v4581
        %v4583 = vpop.f32.mrf.mxu0
        %4584 = vmatprep.mubr.f32.mxu0 0.0
        %4585 = vmatmul.mubr.f32.gmra.mxu0 %v4509
        %v4586 = vpop.f32.mrf.mxu0
        %v4587 = vadd.f32 0.0, %v4586
        %v4588 = vpop.f32.mrf.mxu0
        %4589 = vdwg.mxu0
        %v4590 = vsel %vm2431, %v2248, 0
        %v4592 = vsel %vm2431, %v2250, 0
        %v4594 = vsel %vm2431, %v2136, 0
        %v4596 = vsel %vm2431, %v2138, 0
        %4598 = vmatprep.subr.mxu0 0.0
        %4599 = vmatpush1.xpose.msra.mxu0 0.0
        %4600 = vmatprep.subr.mxu0 0.0
        %4601 = vmatpush1.xpose.msra.mxu0 0.0
        %4602 = vmatprep.subr.mxu0 0.0
        %4603 = vmatpush1.xpose.msra.mxu0 0.0
        %4604 = vmatprep.subr.mxu0 0.0
        %4605 = vmatpush1.xpose.msra.mxu0 0.0
        %4606 = vmatprep.subr.mxu0 0.0
        %4607 = vmatpush1.xpose.msra.mxu0 0.0
        %4608 = vmatprep.subr.mxu0 0.0
        %4609 = vmatpush1.xpose.msra.mxu0 0.0
        %4610 = vmatprep.subr.mxu0 0.0
        %4611 = vmatpush1.xpose.msra.mxu0 0.0
        %4612 = vmatprep.subr.mxu0 0.0
        %4613 = vmatpush1.xpose.msra.mxu0 0.0
        %4614 = vmatprep.subr.mxu0 0.0
        %4615 = vmatpush1.xpose.msra.mxu0 0.0
        %4616 = vmatprep.subr.mxu0 0.0
        %4617 = vmatpush1.xpose.msra.mxu0 0.0
        %4618 = vmatprep.subr.mxu0 0.0
        %4619 = vmatpush1.xpose.msra.mxu0 0.0
        %4620 = vmatprep.subr.mxu0 0.0
        %4621 = vmatpush1.xpose.msra.mxu0 0.0
        %4622 = vmatprep.subr.mxu0 0.0
        %4623 = vmatpush1.xpose.msra.mxu0 0.0
        %4624 = vmatprep.subr.mxu0 0.0
        %4625 = vmatpush1.xpose.msra.mxu0 0.0
        %4626 = vmatprep.subr.mxu0 0.0
        %4627 = vmatpush1.xpose.msra.mxu0 %v4596
        %4628 = vmatprep.subr.mxu0 0.0
        %4629 = vmatpush1.xpose.msra.mxu0 %v4594
        %4630 = vmatprep.subr.mxu0 0.0
        %4631 = vmatpush2.xpose.msra.mxu0 0.0
        %4632 = vmatprep.subr.mxu0 0.0
        %4633 = vmatpush2.xpose.msra.mxu0 0.0
        %4634 = vmatprep.subr.mxu0 0.0
        %4635 = vmatpush2.xpose.msra.mxu0 0.0
        %4636 = vmatprep.subr.mxu0 0.0
        %4637 = vmatpush2.xpose.msra.mxu0 0.0
        %4638 = vmatprep.subr.mxu0 0.0
        %4639 = vmatpush2.xpose.msra.mxu0 0.0
        %4640 = vmatprep.subr.mxu0 0.0
        %4641 = vmatpush2.xpose.msra.mxu0 0.0
        %4642 = vmatprep.subr.mxu0 0.0
        %4643 = vmatpush2.xpose.msra.mxu0 0.0
        %4644 = vmatprep.subr.mxu0 0.0
        %4645 = vmatpush2.xpose.msra.mxu0 0.0
        %4646 = vmatprep.subr.mxu0 0.0
        %4647 = vmatpush2.xpose.msra.mxu0 0.0
        %4648 = vmatprep.subr.mxu0 0.0
        %4649 = vmatpush2.xpose.msra.mxu0 0.0
        %4650 = vmatprep.subr.mxu0 0.0
        %4651 = vmatpush2.xpose.msra.mxu0 0.0
        %4652 = vmatprep.subr.mxu0 0.0
        %4653 = vmatpush2.xpose.msra.mxu0 0.0
        %4654 = vmatprep.subr.mxu0 0.0
        %4655 = vmatpush2.xpose.msra.mxu0 0.0
        %4656 = vmatprep.subr.mxu0 0.0
        %4657 = vmatpush2.xpose.msra.mxu0 0.0
        %4658 = vmatprep.subr.mxu0 0.0
        %4659 = vmatpush2.xpose.msra.mxu0 0.0
        %4660 = vmatprep.subr.mxu0 0.0
        %4661 = vmatpush2.xpose.msra.mxu0 0.0
        %4662 = vmatprep.mubr.f32.mxu0 0.0
        %4663 = vmatmul.mubr.f32.gmra.mxu0 %v4590
        %v4664 = vpop.f32.mrf.mxu0
        %v4665 = vadd.f32 0.0, %v4664
        %v4666 = vpop.f32.mrf.mxu0
        %4667 = vmatprep.mubr.f32.mxu0 0.0
        %4668 = vmatmul.mubr.f32.gmra.mxu0 %v4592
        %v4669 = vpop.f32.mrf.mxu0
        %v4670 = vadd.f32 0.0, %v4669
        %v4671 = vpop.f32.mrf.mxu0
        %4672 = vdwg.mxu0
        %v4673 = vsel %vm2431, %v2252, 0
        %v4675 = vsel %vm2431, %v2254, 0
        %v4677 = vsel %vm2431, %v2140, 0
        %v4679 = vsel %vm2431, %v2142, 0
        %4681 = vmatprep.subr.mxu0 0.0
        %4682 = vmatpush1.xpose.msra.mxu0 0.0
        %4683 = vmatprep.subr.mxu0 0.0
        %4684 = vmatpush1.xpose.msra.mxu0 0.0
        %4685 = vmatprep.subr.mxu0 0.0
        %4686 = vmatpush1.xpose.msra.mxu0 0.0
        %4687 = vmatprep.subr.mxu0 0.0
        %4688 = vmatpush1.xpose.msra.mxu0 0.0
        %4689 = vmatprep.subr.mxu0 0.0
        %4690 = vmatpush1.xpose.msra.mxu0 0.0
        %4691 = vmatprep.subr.mxu0 0.0
        %4692 = vmatpush1.xpose.msra.mxu0 0.0
        %4693 = vmatprep.subr.mxu0 0.0
        %4694 = vmatpush1.xpose.msra.mxu0 0.0
        %4695 = vmatprep.subr.mxu0 0.0
        %4696 = vmatpush1.xpose.msra.mxu0 0.0
        %4697 = vmatprep.subr.mxu0 0.0
        %4698 = vmatpush1.xpose.msra.mxu0 0.0
        %4699 = vmatprep.subr.mxu0 0.0
        %4700 = vmatpush1.xpose.msra.mxu0 0.0
        %4701 = vmatprep.subr.mxu0 0.0
        %4702 = vmatpush1.xpose.msra.mxu0 0.0
        %4703 = vmatprep.subr.mxu0 0.0
        %4704 = vmatpush1.xpose.msra.mxu0 0.0
        %4705 = vmatprep.subr.mxu0 0.0
        %4706 = vmatpush1.xpose.msra.mxu0 0.0
        %4707 = vmatprep.subr.mxu0 0.0
        %4708 = vmatpush1.xpose.msra.mxu0 0.0
        %4709 = vmatprep.subr.mxu0 0.0
        %4710 = vmatpush1.xpose.msra.mxu0 %v4679
        %4711 = vmatprep.subr.mxu0 0.0
        %4712 = vmatpush1.xpose.msra.mxu0 %v4677
        %4713 = vmatprep.subr.mxu0 0.0
        %4714 = vmatpush2.xpose.msra.mxu0 0.0
        %4715 = vmatprep.subr.mxu0 0.0
        %4716 = vmatpush2.xpose.msra.mxu0 0.0
        %4717 = vmatprep.subr.mxu0 0.0
        %4718 = vmatpush2.xpose.msra.mxu0 0.0
        %4719 = vmatprep.subr.mxu0 0.0
        %4720 = vmatpush2.xpose.msra.mxu0 0.0
        %4721 = vmatprep.subr.mxu0 0.0
        %4722 = vmatpush2.xpose.msra.mxu0 0.0
        %4723 = vmatprep.subr.mxu0 0.0
        %4724 = vmatpush2.xpose.msra.mxu0 0.0
        %4725 = vmatprep.subr.mxu0 0.0
        %4726 = vmatpush2.xpose.msra.mxu0 0.0
        %4727 = vmatprep.subr.mxu0 0.0
        %4728 = vmatpush2.xpose.msra.mxu0 0.0
        %4729 = vmatprep.subr.mxu0 0.0
        %4730 = vmatpush2.xpose.msra.mxu0 0.0
        %4731 = vmatprep.subr.mxu0 0.0
        %4732 = vmatpush2.xpose.msra.mxu0 0.0
        %4733 = vmatprep.subr.mxu0 0.0
        %4734 = vmatpush2.xpose.msra.mxu0 0.0
        %4735 = vmatprep.subr.mxu0 0.0
        %4736 = vmatpush2.xpose.msra.mxu0 0.0
        %4737 = vmatprep.subr.mxu0 0.0
        %4738 = vmatpush2.xpose.msra.mxu0 0.0
        %4739 = vmatprep.subr.mxu0 0.0
        %4740 = vmatpush2.xpose.msra.mxu0 0.0
        %4741 = vmatprep.subr.mxu0 0.0
        %4742 = vmatpush2.xpose.msra.mxu0 0.0
        %4743 = vmatprep.subr.mxu0 0.0
        %4744 = vmatpush2.xpose.msra.mxu0 0.0
        %4745 = vmatprep.mubr.f32.mxu0 0.0
        %4746 = vmatmul.mubr.f32.gmra.mxu0 %v4673
        %v4747 = vpop.f32.mrf.mxu0
        %v4748 = vadd.f32 0.0, %v4747
        %v4749 = vpop.f32.mrf.mxu0
        %4750 = vmatprep.mubr.f32.mxu0 0.0
        %4751 = vmatmul.mubr.f32.gmra.mxu0 %v4675
        %v4752 = vpop.f32.mrf.mxu0
        %v4753 = vadd.f32 0.0, %v4752
        %v4754 = vpop.f32.mrf.mxu0
        %4755 = vdwg.mxu0
        %v4756 = vsel %vm2431, %v2256, 0
        %v4758 = vsel %vm2431, %v2258, 0
        %v4760 = vsel %vm2431, %v2144, 0
        %v4762 = vsel %vm2431, %v2146, 0
        %4764 = vmatprep.subr.mxu0 0.0
        %4765 = vmatpush1.xpose.msra.mxu0 0.0
        %4766 = vmatprep.subr.mxu0 0.0
        %4767 = vmatpush1.xpose.msra.mxu0 0.0
        %4768 = vmatprep.subr.mxu0 0.0
        %4769 = vmatpush1.xpose.msra.mxu0 0.0
        %4770 = vmatprep.subr.mxu0 0.0
        %4771 = vmatpush1.xpose.msra.mxu0 0.0
        %4772 = vmatprep.subr.mxu0 0.0
        %4773 = vmatpush1.xpose.msra.mxu0 0.0
        %4774 = vmatprep.subr.mxu0 0.0
        %4775 = vmatpush1.xpose.msra.mxu0 0.0
        %4776 = vmatprep.subr.mxu0 0.0
        %4777 = vmatpush1.xpose.msra.mxu0 0.0
        %4778 = vmatprep.subr.mxu0 0.0
        %4779 = vmatpush1.xpose.msra.mxu0 0.0
        %4780 = vmatprep.subr.mxu0 0.0
        %4781 = vmatpush1.xpose.msra.mxu0 0.0
        %4782 = vmatprep.subr.mxu0 0.0
        %4783 = vmatpush1.xpose.msra.mxu0 0.0
        %4784 = vmatprep.subr.mxu0 0.0
        %4785 = vmatpush1.xpose.msra.mxu0 0.0
        %4786 = vmatprep.subr.mxu0 0.0
        %4787 = vmatpush1.xpose.msra.mxu0 0.0
        %4788 = vmatprep.subr.mxu0 0.0
        %4789 = vmatpush1.xpose.msra.mxu0 0.0
        %4790 = vmatprep.subr.mxu0 0.0
        %4791 = vmatpush1.xpose.msra.mxu0 0.0
        %4792 = vmatprep.subr.mxu0 0.0
        %4793 = vmatpush1.xpose.msra.mxu0 %v4762
        %4794 = vmatprep.subr.mxu0 0.0
        %4795 = vmatpush1.xpose.msra.mxu0 %v4760
        %4796 = vmatprep.subr.mxu0 0.0
        %4797 = vmatpush2.xpose.msra.mxu0 0.0
        %4798 = vmatprep.subr.mxu0 0.0
        %4799 = vmatpush2.xpose.msra.mxu0 0.0
        %4800 = vmatprep.subr.mxu0 0.0
        %4801 = vmatpush2.xpose.msra.mxu0 0.0
        %4802 = vmatprep.subr.mxu0 0.0
        %4803 = vmatpush2.xpose.msra.mxu0 0.0
        %4804 = vmatprep.subr.mxu0 0.0
        %4805 = vmatpush2.xpose.msra.mxu0 0.0
        %4806 = vmatprep.subr.mxu0 0.0
        %4807 = vmatpush2.xpose.msra.mxu0 0.0
        %4808 = vmatprep.subr.mxu0 0.0
        %4809 = vmatpush2.xpose.msra.mxu0 0.0
        %4810 = vmatprep.subr.mxu0 0.0
        %4811 = vmatpush2.xpose.msra.mxu0 0.0
        %4812 = vmatprep.subr.mxu0 0.0
        %4813 = vmatpush2.xpose.msra.mxu0 0.0
        %4814 = vmatprep.subr.mxu0 0.0
        %4815 = vmatpush2.xpose.msra.mxu0 0.0
        %4816 = vmatprep.subr.mxu0 0.0
        %4817 = vmatpush2.xpose.msra.mxu0 0.0
        %4818 = vmatprep.subr.mxu0 0.0
        %4819 = vmatpush2.xpose.msra.mxu0 0.0
        %4820 = vmatprep.subr.mxu0 0.0
        %4821 = vmatpush2.xpose.msra.mxu0 0.0
        %4822 = vmatprep.subr.mxu0 0.0
        %4823 = vmatpush2.xpose.msra.mxu0 0.0
        %4824 = vmatprep.subr.mxu0 0.0
        %4825 = vmatpush2.xpose.msra.mxu0 0.0
        %4826 = vmatprep.subr.mxu0 0.0
        %4827 = vmatpush2.xpose.msra.mxu0 0.0
        %4828 = vmatprep.mubr.f32.mxu0 0.0
        %4829 = vmatmul.mubr.f32.gmra.mxu0 %v4756
        %v4830 = vpop.f32.mrf.mxu0
        %v4831 = vadd.f32 0.0, %v4830
        %v4832 = vpop.f32.mrf.mxu0
        %4833 = vmatprep.mubr.f32.mxu0 0.0
        %4834 = vmatmul.mubr.f32.gmra.mxu0 %v4758
        %v4835 = vpop.f32.mrf.mxu0
        %v4836 = vadd.f32 0.0, %v4835
        %v4837 = vpop.f32.mrf.mxu0
        %4838 = vdwg.mxu0
        %v4839 = vsel %vm2431, %v2260, 0
        %v4841 = vsel %vm2431, %v2262, 0
        %v4843 = vsel %vm2431, %v2148, 0
        %v4845 = vsel %vm2431, %v2150, 0
        %4847 = vmatprep.subr.mxu0 0.0
        %4848 = vmatpush1.xpose.msra.mxu0 0.0
        %4849 = vmatprep.subr.mxu0 0.0
        %4850 = vmatpush1.xpose.msra.mxu0 0.0
        %4851 = vmatprep.subr.mxu0 0.0
        %4852 = vmatpush1.xpose.msra.mxu0 0.0
        %4853 = vmatprep.subr.mxu0 0.0
        %4854 = vmatpush1.xpose.msra.mxu0 0.0
        %4855 = vmatprep.subr.mxu0 0.0
        %4856 = vmatpush1.xpose.msra.mxu0 0.0
        %4857 = vmatprep.subr.mxu0 0.0
        %4858 = vmatpush1.xpose.msra.mxu0 0.0
        %4859 = vmatprep.subr.mxu0 0.0
        %4860 = vmatpush1.xpose.msra.mxu0 0.0
        %4861 = vmatprep.subr.mxu0 0.0
        %4862 = vmatpush1.xpose.msra.mxu0 0.0
        %4863 = vmatprep.subr.mxu0 0.0
        %4864 = vmatpush1.xpose.msra.mxu0 0.0
        %4865 = vmatprep.subr.mxu0 0.0
        %4866 = vmatpush1.xpose.msra.mxu0 0.0
        %4867 = vmatprep.subr.mxu0 0.0
        %4868 = vmatpush1.xpose.msra.mxu0 0.0
        %4869 = vmatprep.subr.mxu0 0.0
        %4870 = vmatpush1.xpose.msra.mxu0 0.0
        %4871 = vmatprep.subr.mxu0 0.0
        %4872 = vmatpush1.xpose.msra.mxu0 0.0
        %4873 = vmatprep.subr.mxu0 0.0
        %4874 = vmatpush1.xpose.msra.mxu0 0.0
        %4875 = vmatprep.subr.mxu0 0.0
        %4876 = vmatpush1.xpose.msra.mxu0 %v4845
        %4877 = vmatprep.subr.mxu0 0.0
        %4878 = vmatpush1.xpose.msra.mxu0 %v4843
        %4879 = vmatprep.subr.mxu0 0.0
        %4880 = vmatpush2.xpose.msra.mxu0 0.0
        %4881 = vmatprep.subr.mxu0 0.0
        %4882 = vmatpush2.xpose.msra.mxu0 0.0
        %4883 = vmatprep.subr.mxu0 0.0
        %4884 = vmatpush2.xpose.msra.mxu0 0.0
        %4885 = vmatprep.subr.mxu0 0.0
        %4886 = vmatpush2.xpose.msra.mxu0 0.0
        %4887 = vmatprep.subr.mxu0 0.0
        %4888 = vmatpush2.xpose.msra.mxu0 0.0
        %4889 = vmatprep.subr.mxu0 0.0
        %4890 = vmatpush2.xpose.msra.mxu0 0.0
        %4891 = vmatprep.subr.mxu0 0.0
        %4892 = vmatpush2.xpose.msra.mxu0 0.0
        %4893 = vmatprep.subr.mxu0 0.0
        %4894 = vmatpush2.xpose.msra.mxu0 0.0
        %4895 = vmatprep.subr.mxu0 0.0
        %4896 = vmatpush2.xpose.msra.mxu0 0.0
        %4897 = vmatprep.subr.mxu0 0.0
        %4898 = vmatpush2.xpose.msra.mxu0 0.0
        %4899 = vmatprep.subr.mxu0 0.0
        %4900 = vmatpush2.xpose.msra.mxu0 0.0
        %4901 = vmatprep.subr.mxu0 0.0
        %4902 = vmatpush2.xpose.msra.mxu0 0.0
        %4903 = vmatprep.subr.mxu0 0.0
        %4904 = vmatpush2.xpose.msra.mxu0 0.0
        %4905 = vmatprep.subr.mxu0 0.0
        %4906 = vmatpush2.xpose.msra.mxu0 0.0
        %4907 = vmatprep.subr.mxu0 0.0
        %4908 = vmatpush2.xpose.msra.mxu0 0.0
        %4909 = vmatprep.subr.mxu0 0.0
        %4910 = vmatpush2.xpose.msra.mxu0 0.0
        %4911 = vmatprep.mubr.f32.mxu0 0.0
        %4912 = vmatmul.mubr.f32.gmra.mxu0 %v4839
        %v4913 = vpop.f32.mrf.mxu0
        %v4914 = vadd.f32 0.0, %v4913
        %v4915 = vpop.f32.mrf.mxu0
        %4916 = vmatprep.mubr.f32.mxu0 0.0
        %4917 = vmatmul.mubr.f32.gmra.mxu0 %v4841
        %v4918 = vpop.f32.mrf.mxu0
        %v4919 = vadd.f32 0.0, %v4918
        %v4920 = vpop.f32.mrf.mxu0
        %4921 = vdwg.mxu0
        %v4922 = vsel %vm2431, %v2264, 0
        %v4924 = vsel %vm2431, %v2266, 0
        %v4926 = vsel %vm2431, %v2152, 0
        %v4928 = vsel %vm2431, %v2154, 0
        %4930 = vmatprep.subr.mxu0 0.0
        %4931 = vmatpush1.xpose.msra.mxu0 0.0
        %4932 = vmatprep.subr.mxu0 0.0
        %4933 = vmatpush1.xpose.msra.mxu0 0.0
        %4934 = vmatprep.subr.mxu0 0.0
        %4935 = vmatpush1.xpose.msra.mxu0 0.0
        %4936 = vmatprep.subr.mxu0 0.0
        %4937 = vmatpush1.xpose.msra.mxu0 0.0
        %4938 = vmatprep.subr.mxu0 0.0
        %4939 = vmatpush1.xpose.msra.mxu0 0.0
        %4940 = vmatprep.subr.mxu0 0.0
        %4941 = vmatpush1.xpose.msra.mxu0 0.0
        %4942 = vmatprep.subr.mxu0 0.0
        %4943 = vmatpush1.xpose.msra.mxu0 0.0
        %4944 = vmatprep.subr.mxu0 0.0
        %4945 = vmatpush1.xpose.msra.mxu0 0.0
        %4946 = vmatprep.subr.mxu0 0.0
        %4947 = vmatpush1.xpose.msra.mxu0 0.0
        %4948 = vmatprep.subr.mxu0 0.0
        %4949 = vmatpush1.xpose.msra.mxu0 0.0
        %4950 = vmatprep.subr.mxu0 0.0
        %4951 = vmatpush1.xpose.msra.mxu0 0.0
        %4952 = vmatprep.subr.mxu0 0.0
        %4953 = vmatpush1.xpose.msra.mxu0 0.0
        %4954 = vmatprep.subr.mxu0 0.0
        %4955 = vmatpush1.xpose.msra.mxu0 0.0
        %4956 = vmatprep.subr.mxu0 0.0
        %4957 = vmatpush1.xpose.msra.mxu0 0.0
        %4958 = vmatprep.subr.mxu0 0.0
        %4959 = vmatpush1.xpose.msra.mxu0 %v4928
        %4960 = vmatprep.subr.mxu0 0.0
        %4961 = vmatpush1.xpose.msra.mxu0 %v4926
        %4962 = vmatprep.subr.mxu0 0.0
        %4963 = vmatpush2.xpose.msra.mxu0 0.0
        %4964 = vmatprep.subr.mxu0 0.0
        %4965 = vmatpush2.xpose.msra.mxu0 0.0
        %4966 = vmatprep.subr.mxu0 0.0
        %4967 = vmatpush2.xpose.msra.mxu0 0.0
        %4968 = vmatprep.subr.mxu0 0.0
        %4969 = vmatpush2.xpose.msra.mxu0 0.0
        %4970 = vmatprep.subr.mxu0 0.0
        %4971 = vmatpush2.xpose.msra.mxu0 0.0
        %4972 = vmatprep.subr.mxu0 0.0
        %4973 = vmatpush2.xpose.msra.mxu0 0.0
        %4974 = vmatprep.subr.mxu0 0.0
        %4975 = vmatpush2.xpose.msra.mxu0 0.0
        %4976 = vmatprep.subr.mxu0 0.0
        %4977 = vmatpush2.xpose.msra.mxu0 0.0
        %4978 = vmatprep.subr.mxu0 0.0
        %4979 = vmatpush2.xpose.msra.mxu0 0.0
        %4980 = vmatprep.subr.mxu0 0.0
        %4981 = vmatpush2.xpose.msra.mxu0 0.0
        %4982 = vmatprep.subr.mxu0 0.0
        %4983 = vmatpush2.xpose.msra.mxu0 0.0
        %4984 = vmatprep.subr.mxu0 0.0
        %4985 = vmatpush2.xpose.msra.mxu0 0.0
        %4986 = vmatprep.subr.mxu0 0.0
        %4987 = vmatpush2.xpose.msra.mxu0 0.0
        %4988 = vmatprep.subr.mxu0 0.0
        %4989 = vmatpush2.xpose.msra.mxu0 0.0
        %4990 = vmatprep.subr.mxu0 0.0
        %4991 = vmatpush2.xpose.msra.mxu0 0.0
        %4992 = vmatprep.subr.mxu0 0.0
        %4993 = vmatpush2.xpose.msra.mxu0 0.0
        %4994 = vmatprep.mubr.f32.mxu0 0.0
        %4995 = vmatmul.mubr.f32.gmra.mxu0 %v4922
        %v4996 = vpop.f32.mrf.mxu0
        %v4997 = vadd.f32 0.0, %v4996
        %v4998 = vpop.f32.mrf.mxu0
        %4999 = vmatprep.mubr.f32.mxu0 0.0
        %5000 = vmatmul.mubr.f32.gmra.mxu0 %v4924
        %v5001 = vpop.f32.mrf.mxu0
        %v5002 = vadd.f32 0.0, %v5001
        %v5003 = vpop.f32.mrf.mxu0
        %5004 = vdwg.mxu0
        %v5005 = vsel %vm2431, %v2268, 0
        %v5007 = vsel %vm2431, %v2270, 0
        %v5009 = vsel %vm2431, %v2156, 0
        %v5011 = vsel %vm2431, %v2158, 0
        %5013 = vmatprep.subr.mxu0 0.0
        %5014 = vmatpush1.xpose.msra.mxu0 0.0
        %5015 = vmatprep.subr.mxu0 0.0
        %5016 = vmatpush1.xpose.msra.mxu0 0.0
        %5017 = vmatprep.subr.mxu0 0.0
        %5018 = vmatpush1.xpose.msra.mxu0 0.0
        %5019 = vmatprep.subr.mxu0 0.0
        %5020 = vmatpush1.xpose.msra.mxu0 0.0
        %5021 = vmatprep.subr.mxu0 0.0
        %5022 = vmatpush1.xpose.msra.mxu0 0.0
        %5023 = vmatprep.subr.mxu0 0.0
        %5024 = vmatpush1.xpose.msra.mxu0 0.0
        %5025 = vmatprep.subr.mxu0 0.0
        %5026 = vmatpush1.xpose.msra.mxu0 0.0
        %5027 = vmatprep.subr.mxu0 0.0
        %5028 = vmatpush1.xpose.msra.mxu0 0.0
        %5029 = vmatprep.subr.mxu0 0.0
        %5030 = vmatpush1.xpose.msra.mxu0 0.0
        %5031 = vmatprep.subr.mxu0 0.0
        %5032 = vmatpush1.xpose.msra.mxu0 0.0
        %5033 = vmatprep.subr.mxu0 0.0
        %5034 = vmatpush1.xpose.msra.mxu0 0.0
        %5035 = vmatprep.subr.mxu0 0.0
        %5036 = vmatpush1.xpose.msra.mxu0 0.0
        %5037 = vmatprep.subr.mxu0 0.0
        %5038 = vmatpush1.xpose.msra.mxu0 0.0
        %5039 = vmatprep.subr.mxu0 0.0
        %5040 = vmatpush1.xpose.msra.mxu0 0.0
        %5041 = vmatprep.subr.mxu0 0.0
        %5042 = vmatpush1.xpose.msra.mxu0 %v5011
        %5043 = vmatprep.subr.mxu0 0.0
        %5044 = vmatpush1.xpose.msra.mxu0 %v5009
        %5045 = vmatprep.subr.mxu0 0.0
        %5046 = vmatpush2.xpose.msra.mxu0 0.0
        %5047 = vmatprep.subr.mxu0 0.0
        %5048 = vmatpush2.xpose.msra.mxu0 0.0
        %5049 = vmatprep.subr.mxu0 0.0
        %5050 = vmatpush2.xpose.msra.mxu0 0.0
        %5051 = vmatprep.subr.mxu0 0.0
        %5052 = vmatpush2.xpose.msra.mxu0 0.0
        %5053 = vmatprep.subr.mxu0 0.0
        %5054 = vmatpush2.xpose.msra.mxu0 0.0
        %5055 = vmatprep.subr.mxu0 0.0
        %5056 = vmatpush2.xpose.msra.mxu0 0.0
        %5057 = vmatprep.subr.mxu0 0.0
        %5058 = vmatpush2.xpose.msra.mxu0 0.0
        %5059 = vmatprep.subr.mxu0 0.0
        %5060 = vmatpush2.xpose.msra.mxu0 0.0
        %5061 = vmatprep.subr.mxu0 0.0
        %5062 = vmatpush2.xpose.msra.mxu0 0.0
        %5063 = vmatprep.subr.mxu0 0.0
        %5064 = vmatpush2.xpose.msra.mxu0 0.0
        %5065 = vmatprep.subr.mxu0 0.0
        %5066 = vmatpush2.xpose.msra.mxu0 0.0
        %5067 = vmatprep.subr.mxu0 0.0
        %5068 = vmatpush2.xpose.msra.mxu0 0.0
        %5069 = vmatprep.subr.mxu0 0.0
        %5070 = vmatpush2.xpose.msra.mxu0 0.0
        %5071 = vmatprep.subr.mxu0 0.0
        %5072 = vmatpush2.xpose.msra.mxu0 0.0
        %5073 = vmatprep.subr.mxu0 0.0
        %5074 = vmatpush2.xpose.msra.mxu0 0.0
        %5075 = vmatprep.subr.mxu0 0.0
        %5076 = vmatpush2.xpose.msra.mxu0 0.0
        %5077 = vmatprep.mubr.f32.mxu0 0.0
        %5078 = vmatmul.mubr.f32.gmra.mxu0 %v5005
        %v5079 = vpop.f32.mrf.mxu0
        %v5080 = vadd.f32 0.0, %v5079
        %v5081 = vpop.f32.mrf.mxu0
        %5082 = vmatprep.mubr.f32.mxu0 0.0
        %5083 = vmatmul.mubr.f32.gmra.mxu0 %v5007
        %v5084 = vpop.f32.mrf.mxu0
        %v5085 = vadd.f32 0.0, %v5084
        %v5086 = vpop.f32.mrf.mxu0
        %5087 = vdwg.mxu0
        %v5088 = vmul.f32 %v2507, 0.25
        %v5089 = vmul.f32 %v2512, 0.25
        %v5090 = vmul.f32 %v2590, 0.25
        %v5091 = vmul.f32 %v2595, 0.25
        %v5092 = vmul.f32 %v2673, 0.25
        %v5093 = vmul.f32 %v2678, 0.25
        %v5094 = vmul.f32 %v2756, 0.25
        %v5095 = vmul.f32 %v2761, 0.25
        %v5096 = vmul.f32 %v2839, 0.25
        %v5097 = vmul.f32 %v2844, 0.25
        %v5098 = vmul.f32 %v2922, 0.25
        %v5099 = vmul.f32 %v2927, 0.25
        %v5100 = vmul.f32 %v3005, 0.25
        %v5101 = vmul.f32 %v3010, 0.25
        %v5102 = vmul.f32 %v3088, 0.25
        %v5103 = vmul.f32 %v3093, 0.25
        %v5104 = vmul.f32 %v3171, 0.25
        %v5105 = vmul.f32 %v3176, 0.25
        %v5106 = vmul.f32 %v3254, 0.25
        %v5107 = vmul.f32 %v3259, 0.25
        %v5108 = vmul.f32 %v3337, 0.25
        %v5109 = vmul.f32 %v3342, 0.25
        %v5110 = vmul.f32 %v3420, 0.25
        %v5111 = vmul.f32 %v3425, 0.25
        %v5112 = vmul.f32 %v3503, 0.25
        %v5113 = vmul.f32 %v3508, 0.25
        %v5114 = vmul.f32 %v3586, 0.25
        %v5115 = vmul.f32 %v3591, 0.25
        %v5116 = vmul.f32 %v3669, 0.25
        %v5117 = vmul.f32 %v3674, 0.25
        %v5118 = vmul.f32 %v3752, 0.25
        %v5119 = vmul.f32 %v3757, 0.25
        %v5120 = vmul.f32 %v3835, 0.25
        %v5121 = vmul.f32 %v3840, 0.25
        %v5122 = vmul.f32 %v3918, 0.25
        %v5123 = vmul.f32 %v3923, 0.25
        %v5124 = vmul.f32 %v4001, 0.25
        %v5125 = vmul.f32 %v4006, 0.25
        %v5126 = vmul.f32 %v4084, 0.25
        %v5127 = vmul.f32 %v4089, 0.25
        %v5128 = vmul.f32 %v4167, 0.25
        %v5129 = vmul.f32 %v4172, 0.25
        %v5130 = vmul.f32 %v4250, 0.25
        %v5131 = vmul.f32 %v4255, 0.25
        %v5132 = vmul.f32 %v4333, 0.25
        %v5133 = vmul.f32 %v4338, 0.25
        %v5134 = vmul.f32 %v4416, 0.25
        %v5135 = vmul.f32 %v4421, 0.25
        %v5136 = vmul.f32 %v4499, 0.25
        %v5137 = vmul.f32 %v4504, 0.25
        %v5138 = vmul.f32 %v4582, 0.25
        %v5139 = vmul.f32 %v4587, 0.25
        %v5140 = vmul.f32 %v4665, 0.25
        %v5141 = vmul.f32 %v4670, 0.25
        %v5142 = vmul.f32 %v4748, 0.25
        %v5143 = vmul.f32 %v4753, 0.25
        %v5144 = vmul.f32 %v4831, 0.25
        %v5145 = vmul.f32 %v4836, 0.25
        %v5146 = vmul.f32 %v4914, 0.25
        %v5147 = vmul.f32 %v4919, 0.25
        %v5148 = vmul.f32 %v4997, 0.25
        %v5149 = vmul.f32 %v5002, 0.25
        %v5150 = vmul.f32 %v5080, 0.25
        %v5151 = vmul.f32 %v5085, 0.25
        %v5152 = vsel %vm2431, %v5088, -inf
        %5153 = vmax.xlane.f32.xlu0 %v5152
        %v5154 = vpop.xlane.xlu0 %5153
        %v5155 = vsel %vm2431, %v5089, -inf
        %5156 = vmax.xlane.f32.xlu0 %v5155
        %v5157 = vpop.xlane.xlu0 %5156
        %v5158 = vsel %vm2431, %v5090, -inf
        %5159 = vmax.xlane.f32.xlu0 %v5158
        %v5160 = vpop.xlane.xlu0 %5159
        %v5161 = vsel %vm2431, %v5091, -inf
        %5162 = vmax.xlane.f32.xlu0 %v5161
        %v5163 = vpop.xlane.xlu0 %5162
        %v5164 = vsel %vm2431, %v5092, -inf
        %5165 = vmax.xlane.f32.xlu0 %v5164
        %v5166 = vpop.xlane.xlu0 %5165
        %v5167 = vsel %vm2431, %v5093, -inf
        %5168 = vmax.xlane.f32.xlu0 %v5167
        %v5169 = vpop.xlane.xlu0 %5168
        %v5170 = vsel %vm2431, %v5094, -inf
        %5171 = vmax.xlane.f32.xlu0 %v5170
        %v5172 = vpop.xlane.xlu0 %5171
        %v5173 = vsel %vm2431, %v5095, -inf
        %5174 = vmax.xlane.f32.xlu0 %v5173
        %v5175 = vpop.xlane.xlu0 %5174
        %v5176 = vsel %vm2431, %v5096, -inf
        %5177 = vmax.xlane.f32.xlu0 %v5176
        %v5178 = vpop.xlane.xlu0 %5177
        %v5179 = vsel %vm2431, %v5097, -inf
        %5180 = vmax.xlane.f32.xlu0 %v5179
        %v5181 = vpop.xlane.xlu0 %5180
        %v5182 = vsel %vm2431, %v5098, -inf
        %5183 = vmax.xlane.f32.xlu0 %v5182
        %v5184 = vpop.xlane.xlu0 %5183
        %v5185 = vsel %vm2431, %v5099, -inf
        %5186 = vmax.xlane.f32.xlu0 %v5185
        %v5187 = vpop.xlane.xlu0 %5186
        %v5188 = vsel %vm2431, %v5100, -inf
        %5189 = vmax.xlane.f32.xlu0 %v5188
        %v5190 = vpop.xlane.xlu0 %5189
        %v5191 = vsel %vm2431, %v5101, -inf
        %5192 = vmax.xlane.f32.xlu0 %v5191
        %v5193 = vpop.xlane.xlu0 %5192
        %v5194 = vsel %vm2431, %v5102, -inf
        %5195 = vmax.xlane.f32.xlu0 %v5194
        %v5196 = vpop.xlane.xlu0 %5195
        %v5197 = vsel %vm2431, %v5103, -inf
        %5198 = vmax.xlane.f32.xlu0 %v5197
        %v5199 = vpop.xlane.xlu0 %5198
        %v5200 = vsel %vm2431, %v5104, -inf
        %5201 = vmax.xlane.f32.xlu0 %v5200
        %v5202 = vpop.xlane.xlu0 %5201
        %v5203 = vsel %vm2431, %v5105, -inf
        %5204 = vmax.xlane.f32.xlu0 %v5203
        %v5205 = vpop.xlane.xlu0 %5204
        %v5206 = vsel %vm2431, %v5106, -inf
        %5207 = vmax.xlane.f32.xlu0 %v5206
        %v5208 = vpop.xlane.xlu0 %5207
        %v5209 = vsel %vm2431, %v5107, -inf
        %5210 = vmax.xlane.f32.xlu0 %v5209
        %v5211 = vpop.xlane.xlu0 %5210
        %v5212 = vsel %vm2431, %v5108, -inf
        %5213 = vmax.xlane.f32.xlu0 %v5212
        %v5214 = vpop.xlane.xlu0 %5213
        %v5215 = vsel %vm2431, %v5109, -inf
        %5216 = vmax.xlane.f32.xlu0 %v5215
        %v5217 = vpop.xlane.xlu0 %5216
        %v5218 = vsel %vm2431, %v5110, -inf
        %5219 = vmax.xlane.f32.xlu0 %v5218
        %v5220 = vpop.xlane.xlu0 %5219
        %v5221 = vsel %vm2431, %v5111, -inf
        %5222 = vmax.xlane.f32.xlu0 %v5221
        %v5223 = vpop.xlane.xlu0 %5222
        %v5224 = vsel %vm2431, %v5112, -inf
        %5225 = vmax.xlane.f32.xlu0 %v5224
        %v5226 = vpop.xlane.xlu0 %5225
        %v5227 = vsel %vm2431, %v5113, -inf
        %5228 = vmax.xlane.f32.xlu0 %v5227
        %v5229 = vpop.xlane.xlu0 %5228
        %v5230 = vsel %vm2431, %v5114, -inf
        %5231 = vmax.xlane.f32.xlu0 %v5230
        %v5232 = vpop.xlane.xlu0 %5231
        %v5233 = vsel %vm2431, %v5115, -inf
        %5234 = vmax.xlane.f32.xlu0 %v5233
        %v5235 = vpop.xlane.xlu0 %5234
        %v5236 = vsel %vm2431, %v5116, -inf
        %5237 = vmax.xlane.f32.xlu0 %v5236
        %v5238 = vpop.xlane.xlu0 %5237
        %v5239 = vsel %vm2431, %v5117, -inf
        %5240 = vmax.xlane.f32.xlu0 %v5239
        %v5241 = vpop.xlane.xlu0 %5240
        %v5242 = vsel %vm2431, %v5118, -inf
        %5243 = vmax.xlane.f32.xlu0 %v5242
        %v5244 = vpop.xlane.xlu0 %5243
        %v5245 = vsel %vm2431, %v5119, -inf
        %5246 = vmax.xlane.f32.xlu0 %v5245
        %v5247 = vpop.xlane.xlu0 %5246
        %v5248 = vsel %vm2431, %v5120, -inf
        %5249 = vmax.xlane.f32.xlu0 %v5248
        %v5250 = vpop.xlane.xlu0 %5249
        %v5251 = vsel %vm2431, %v5121, -inf
        %5252 = vmax.xlane.f32.xlu0 %v5251
        %v5253 = vpop.xlane.xlu0 %5252
        %v5254 = vsel %vm2431, %v5122, -inf
        %5255 = vmax.xlane.f32.xlu0 %v5254
        %v5256 = vpop.xlane.xlu0 %5255
        %v5257 = vsel %vm2431, %v5123, -inf
        %5258 = vmax.xlane.f32.xlu0 %v5257
        %v5259 = vpop.xlane.xlu0 %5258
        %v5260 = vsel %vm2431, %v5124, -inf
        %5261 = vmax.xlane.f32.xlu0 %v5260
        %v5262 = vpop.xlane.xlu0 %5261
        %v5263 = vsel %vm2431, %v5125, -inf
        %5264 = vmax.xlane.f32.xlu0 %v5263
        %v5265 = vpop.xlane.xlu0 %5264
        %v5266 = vsel %vm2431, %v5126, -inf
        %5267 = vmax.xlane.f32.xlu0 %v5266
        %v5268 = vpop.xlane.xlu0 %5267
        %v5269 = vsel %vm2431, %v5127, -inf
        %5270 = vmax.xlane.f32.xlu0 %v5269
        %v5271 = vpop.xlane.xlu0 %5270
        %v5272 = vsel %vm2431, %v5128, -inf
        %5273 = vmax.xlane.f32.xlu0 %v5272
        %v5274 = vpop.xlane.xlu0 %5273
        %v5275 = vsel %vm2431, %v5129, -inf
        %5276 = vmax.xlane.f32.xlu0 %v5275
        %v5277 = vpop.xlane.xlu0 %5276
        %v5278 = vsel %vm2431, %v5130, -inf
        %5279 = vmax.xlane.f32.xlu0 %v5278
        %v5280 = vpop.xlane.xlu0 %5279
        %v5281 = vsel %vm2431, %v5131, -inf
        %5282 = vmax.xlane.f32.xlu0 %v5281
        %v5283 = vpop.xlane.xlu0 %5282
        %v5284 = vsel %vm2431, %v5132, -inf
        %5285 = vmax.xlane.f32.xlu0 %v5284
        %v5286 = vpop.xlane.xlu0 %5285
        %v5287 = vsel %vm2431, %v5133, -inf
        %5288 = vmax.xlane.f32.xlu0 %v5287
        %v5289 = vpop.xlane.xlu0 %5288
        %v5290 = vsel %vm2431, %v5134, -inf
        %5291 = vmax.xlane.f32.xlu0 %v5290
        %v5292 = vpop.xlane.xlu0 %5291
        %v5293 = vsel %vm2431, %v5135, -inf
        %5294 = vmax.xlane.f32.xlu0 %v5293
        %v5295 = vpop.xlane.xlu0 %5294
        %v5296 = vsel %vm2431, %v5136, -inf
        %5297 = vmax.xlane.f32.xlu0 %v5296
        %v5298 = vpop.xlane.xlu0 %5297
        %v5299 = vsel %vm2431, %v5137, -inf
        %5300 = vmax.xlane.f32.xlu0 %v5299
        %v5301 = vpop.xlane.xlu0 %5300
        %v5302 = vsel %vm2431, %v5138, -inf
        %5303 = vmax.xlane.f32.xlu0 %v5302
        %v5304 = vpop.xlane.xlu0 %5303
        %v5305 = vsel %vm2431, %v5139, -inf
        %5306 = vmax.xlane.f32.xlu0 %v5305
        %v5307 = vpop.xlane.xlu0 %5306
        %v5308 = vsel %vm2431, %v5140, -inf
        %5309 = vmax.xlane.f32.xlu0 %v5308
        %v5310 = vpop.xlane.xlu0 %5309
        %v5311 = vsel %vm2431, %v5141, -inf
        %5312 = vmax.xlane.f32.xlu0 %v5311
        %v5313 = vpop.xlane.xlu0 %5312
        %v5314 = vsel %vm2431, %v5142, -inf
        %5315 = vmax.xlane.f32.xlu0 %v5314
        %v5316 = vpop.xlane.xlu0 %5315
        %v5317 = vsel %vm2431, %v5143, -inf
        %5318 = vmax.xlane.f32.xlu0 %v5317
        %v5319 = vpop.xlane.xlu0 %5318
        %v5320 = vsel %vm2431, %v5144, -inf
        %5321 = vmax.xlane.f32.xlu0 %v5320
        %v5322 = vpop.xlane.xlu0 %5321
        %v5323 = vsel %vm2431, %v5145, -inf
        %5324 = vmax.xlane.f32.xlu0 %v5323
        %v5325 = vpop.xlane.xlu0 %5324
        %v5326 = vsel %vm2431, %v5146, -inf
        %5327 = vmax.xlane.f32.xlu0 %v5326
        %v5328 = vpop.xlane.xlu0 %5327
        %v5329 = vsel %vm2431, %v5147, -inf
        %5330 = vmax.xlane.f32.xlu0 %v5329
        %v5331 = vpop.xlane.xlu0 %5330
        %v5332 = vsel %vm2431, %v5148, -inf
        %5333 = vmax.xlane.f32.xlu0 %v5332
        %v5334 = vpop.xlane.xlu0 %5333
        %v5335 = vsel %vm2431, %v5149, -inf
        %5336 = vmax.xlane.f32.xlu0 %v5335
        %v5337 = vpop.xlane.xlu0 %5336
        %v5338 = vsel %vm2431, %v5150, -inf
        %5339 = vmax.xlane.f32.xlu0 %v5338
        %v5340 = vpop.xlane.xlu0 %5339
        %v5341 = vsel %vm2431, %v5151, -inf
        %5342 = vmax.xlane.f32.xlu0 %v5341
        %v5343 = vpop.xlane.xlu0 %5342
        %v5344 = vsub.f32 %v5088, %v5154
        %v5345 = vsub.f32 %v5089, %v5157
        %v5346 = vsub.f32 %v5090, %v5160
        %v5347 = vsub.f32 %v5091, %v5163
        %v5348 = vsub.f32 %v5092, %v5166
        %v5349 = vsub.f32 %v5093, %v5169
        %v5350 = vsub.f32 %v5094, %v5172
        %v5351 = vsub.f32 %v5095, %v5175
        %v5352 = vsub.f32 %v5096, %v5178
        %v5353 = vsub.f32 %v5097, %v5181
        %v5354 = vsub.f32 %v5098, %v5184
        %v5355 = vsub.f32 %v5099, %v5187
        %v5356 = vsub.f32 %v5100, %v5190
        %v5357 = vsub.f32 %v5101, %v5193
        %v5358 = vsub.f32 %v5102, %v5196
        %v5359 = vsub.f32 %v5103, %v5199
        %v5360 = vsub.f32 %v5104, %v5202
        %v5361 = vsub.f32 %v5105, %v5205
        %v5362 = vsub.f32 %v5106, %v5208
        %v5363 = vsub.f32 %v5107, %v5211
        %v5364 = vsub.f32 %v5108, %v5214
        %v5365 = vsub.f32 %v5109, %v5217
        %v5366 = vsub.f32 %v5110, %v5220
        %v5367 = vsub.f32 %v5111, %v5223
        %v5368 = vsub.f32 %v5112, %v5226
        %v5369 = vsub.f32 %v5113, %v5229
        %v5370 = vsub.f32 %v5114, %v5232
        %v5371 = vsub.f32 %v5115, %v5235
        %v5372 = vsub.f32 %v5116, %v5238
        %v5373 = vsub.f32 %v5117, %v5241
        %v5374 = vsub.f32 %v5118, %v5244
        %v5375 = vsub.f32 %v5119, %v5247
        %v5376 = vsub.f32 %v5120, %v5250
        %v5377 = vsub.f32 %v5121, %v5253
        %v5378 = vsub.f32 %v5122, %v5256
        %v5379 = vsub.f32 %v5123, %v5259
        %v5380 = vsub.f32 %v5124, %v5262
        %v5381 = vsub.f32 %v5125, %v5265
        %v5382 = vsub.f32 %v5126, %v5268
        %v5383 = vsub.f32 %v5127, %v5271
        %v5384 = vsub.f32 %v5128, %v5274
        %v5385 = vsub.f32 %v5129, %v5277
        %v5386 = vsub.f32 %v5130, %v5280
        %v5387 = vsub.f32 %v5131, %v5283
        %v5388 = vsub.f32 %v5132, %v5286
        %v5389 = vsub.f32 %v5133, %v5289
        %v5390 = vsub.f32 %v5134, %v5292
        %v5391 = vsub.f32 %v5135, %v5295
        %v5392 = vsub.f32 %v5136, %v5298
        %v5393 = vsub.f32 %v5137, %v5301
        %v5394 = vsub.f32 %v5138, %v5304
        %v5395 = vsub.f32 %v5139, %v5307
        %v5396 = vsub.f32 %v5140, %v5310
        %v5397 = vsub.f32 %v5141, %v5313
        %v5398 = vsub.f32 %v5142, %v5316
        %v5399 = vsub.f32 %v5143, %v5319
        %v5400 = vsub.f32 %v5144, %v5322
        %v5401 = vsub.f32 %v5145, %v5325
        %v5402 = vsub.f32 %v5146, %v5328
        %v5403 = vsub.f32 %v5147, %v5331
        %v5404 = vsub.f32 %v5148, %v5334
        %v5405 = vsub.f32 %v5149, %v5337
        %v5406 = vsub.f32 %v5150, %v5340
        %v5407 = vsub.f32 %v5151, %v5343
        %v5408 = vmul.f32 %v5344, 1.442695
        %v5409 = vpow.pop %v5408
        %v5410 = vmul.f32 %v5345, 1.442695
        %v5411 = vpow.pop %v5410
        %v5412 = vmul.f32 %v5346, 1.442695
        %v5413 = vpow.pop %v5412
        %v5414 = vmul.f32 %v5347, 1.442695
        %v5415 = vpow.pop %v5414
        %v5416 = vmul.f32 %v5348, 1.442695
        %v5417 = vpow.pop %v5416
        %v5418 = vmul.f32 %v5349, 1.442695
        %v5419 = vpow.pop %v5418
        %v5420 = vmul.f32 %v5350, 1.442695
        %v5421 = vpow.pop %v5420
        %v5422 = vmul.f32 %v5351, 1.442695
        %v5423 = vpow.pop %v5422
        %v5424 = vmul.f32 %v5352, 1.442695
        %v5425 = vpow.pop %v5424
        %v5426 = vmul.f32 %v5353, 1.442695
        %v5427 = vpow.pop %v5426
        %v5428 = vmul.f32 %v5354, 1.442695
        %v5429 = vpow.pop %v5428
        %v5430 = vmul.f32 %v5355, 1.442695
        %v5431 = vpow.pop %v5430
        %v5432 = vmul.f32 %v5356, 1.442695
        %v5433 = vpow.pop %v5432
        %v5434 = vmul.f32 %v5357, 1.442695
        %v5435 = vpow.pop %v5434
        %v5436 = vmul.f32 %v5358, 1.442695
        %v5437 = vpow.pop %v5436
        %v5438 = vmul.f32 %v5359, 1.442695
        %v5439 = vpow.pop %v5438
        %v5440 = vmul.f32 %v5360, 1.442695
        %v5441 = vpow.pop %v5440
        %v5442 = vmul.f32 %v5361, 1.442695
        %v5443 = vpow.pop %v5442
        %v5444 = vmul.f32 %v5362, 1.442695
        %v5445 = vpow.pop %v5444
        %v5446 = vmul.f32 %v5363, 1.442695
        %v5447 = vpow.pop %v5446
        %v5448 = vmul.f32 %v5364, 1.442695
        %v5449 = vpow.pop %v5448
        %v5450 = vmul.f32 %v5365, 1.442695
        %v5451 = vpow.pop %v5450
        %v5452 = vmul.f32 %v5366, 1.442695
        %v5453 = vpow.pop %v5452
        %v5454 = vmul.f32 %v5367, 1.442695
        %v5455 = vpow.pop %v5454
        %v5456 = vmul.f32 %v5368, 1.442695
        %v5457 = vpow.pop %v5456
        %v5458 = vmul.f32 %v5369, 1.442695
        %v5459 = vpow.pop %v5458
        %v5460 = vmul.f32 %v5370, 1.442695
        %v5461 = vpow.pop %v5460
        %v5462 = vmul.f32 %v5371, 1.442695
        %v5463 = vpow.pop %v5462
        %v5464 = vmul.f32 %v5372, 1.442695
        %v5465 = vpow.pop %v5464
        %v5466 = vmul.f32 %v5373, 1.442695
        %v5467 = vpow.pop %v5466
        %v5468 = vmul.f32 %v5374, 1.442695
        %v5469 = vpow.pop %v5468
        %v5470 = vmul.f32 %v5375, 1.442695
        %v5471 = vpow.pop %v5470
        %v5472 = vmul.f32 %v5376, 1.442695
        %v5473 = vpow.pop %v5472
        %v5474 = vmul.f32 %v5377, 1.442695
        %v5475 = vpow.pop %v5474
        %v5476 = vmul.f32 %v5378, 1.442695
        %v5477 = vpow.pop %v5476
        %v5478 = vmul.f32 %v5379, 1.442695
        %v5479 = vpow.pop %v5478
        %v5480 = vmul.f32 %v5380, 1.442695
        %v5481 = vpow.pop %v5480
        %v5482 = vmul.f32 %v5381, 1.442695
        %v5483 = vpow.pop %v5482
        %v5484 = vmul.f32 %v5382, 1.442695
        %v5485 = vpow.pop %v5484
        %v5486 = vmul.f32 %v5383, 1.442695
        %v5487 = vpow.pop %v5486
        %v5488 = vmul.f32 %v5384, 1.442695
        %v5489 = vpow.pop %v5488
        %v5490 = vmul.f32 %v5385, 1.442695
        %v5491 = vpow.pop %v5490
        %v5492 = vmul.f32 %v5386, 1.442695
        %v5493 = vpow.pop %v5492
        %v5494 = vmul.f32 %v5387, 1.442695
        %v5495 = vpow.pop %v5494
        %v5496 = vmul.f32 %v5388, 1.442695
        %v5497 = vpow.pop %v5496
        %v5498 = vmul.f32 %v5389, 1.442695
        %v5499 = vpow.pop %v5498
        %v5500 = vmul.f32 %v5390, 1.442695
        %v5501 = vpow.pop %v5500
        %v5502 = vmul.f32 %v5391, 1.442695
        %v5503 = vpow.pop %v5502
        %v5504 = vmul.f32 %v5392, 1.442695
        %v5505 = vpow.pop %v5504
        %v5506 = vmul.f32 %v5393, 1.442695
        %v5507 = vpow.pop %v5506
        %v5508 = vmul.f32 %v5394, 1.442695
        %v5509 = vpow.pop %v5508
        %v5510 = vmul.f32 %v5395, 1.442695
        %v5511 = vpow.pop %v5510
        %v5512 = vmul.f32 %v5396, 1.442695
        %v5513 = vpow.pop %v5512
        %v5514 = vmul.f32 %v5397, 1.442695
        %v5515 = vpow.pop %v5514
        %v5516 = vmul.f32 %v5398, 1.442695
        %v5517 = vpow.pop %v5516
        %v5518 = vmul.f32 %v5399, 1.442695
        %v5519 = vpow.pop %v5518
        %v5520 = vmul.f32 %v5400, 1.442695
        %v5521 = vpow.pop %v5520
        %v5522 = vmul.f32 %v5401, 1.442695
        %v5523 = vpow.pop %v5522
        %v5524 = vmul.f32 %v5402, 1.442695
        %v5525 = vpow.pop %v5524
        %v5526 = vmul.f32 %v5403, 1.442695
        %v5527 = vpow.pop %v5526
        %v5528 = vmul.f32 %v5404, 1.442695
        %v5529 = vpow.pop %v5528
        %v5530 = vmul.f32 %v5405, 1.442695
        %v5531 = vpow.pop %v5530
        %v5532 = vmul.f32 %v5406, 1.442695
        %v5533 = vpow.pop %v5532
        %v5534 = vmul.f32 %v5407, 1.442695
        %v5535 = vpow.pop %v5534
        %v5536 = vsel %vm2431, %v5409, 0.0
        %5537 = vadd.xlane.f32.xlu0 %v5536
        %v5538 = vpop.xlane.xlu0 %5537
        %v5539 = vsel %vm2431, %v5411, 0.0
        %5540 = vadd.xlane.f32.xlu0 %v5539
        %v5541 = vpop.xlane.xlu0 %5540
        %v5542 = vsel %vm2431, %v5413, 0.0
        %5543 = vadd.xlane.f32.xlu0 %v5542
        %v5544 = vpop.xlane.xlu0 %5543
        %v5545 = vsel %vm2431, %v5415, 0.0
        %5546 = vadd.xlane.f32.xlu0 %v5545
        %v5547 = vpop.xlane.xlu0 %5546
        %v5548 = vsel %vm2431, %v5417, 0.0
        %5549 = vadd.xlane.f32.xlu0 %v5548
        %v5550 = vpop.xlane.xlu0 %5549
        %v5551 = vsel %vm2431, %v5419, 0.0
        %5552 = vadd.xlane.f32.xlu0 %v5551
        %v5553 = vpop.xlane.xlu0 %5552
        %v5554 = vsel %vm2431, %v5421, 0.0
        %5555 = vadd.xlane.f32.xlu0 %v5554
        %v5556 = vpop.xlane.xlu0 %5555
        %v5557 = vsel %vm2431, %v5423, 0.0
        %5558 = vadd.xlane.f32.xlu0 %v5557
        %v5559 = vpop.xlane.xlu0 %5558
        %v5560 = vsel %vm2431, %v5425, 0.0
        %5561 = vadd.xlane.f32.xlu0 %v5560
        %v5562 = vpop.xlane.xlu0 %5561
        %v5563 = vsel %vm2431, %v5427, 0.0
        %5564 = vadd.xlane.f32.xlu0 %v5563
        %v5565 = vpop.xlane.xlu0 %5564
        %v5566 = vsel %vm2431, %v5429, 0.0
        %5567 = vadd.xlane.f32.xlu0 %v5566
        %v5568 = vpop.xlane.xlu0 %5567
        %v5569 = vsel %vm2431, %v5431, 0.0
        %5570 = vadd.xlane.f32.xlu0 %v5569
        %v5571 = vpop.xlane.xlu0 %5570
        %v5572 = vsel %vm2431, %v5433, 0.0
        %5573 = vadd.xlane.f32.xlu0 %v5572
        %v5574 = vpop.xlane.xlu0 %5573
        %v5575 = vsel %vm2431, %v5435, 0.0
        %5576 = vadd.xlane.f32.xlu0 %v5575
        %v5577 = vpop.xlane.xlu0 %5576
        %v5578 = vsel %vm2431, %v5437, 0.0
        %5579 = vadd.xlane.f32.xlu0 %v5578
        %v5580 = vpop.xlane.xlu0 %5579
        %v5581 = vsel %vm2431, %v5439, 0.0
        %5582 = vadd.xlane.f32.xlu0 %v5581
        %v5583 = vpop.xlane.xlu0 %5582
        %v5584 = vsel %vm2431, %v5441, 0.0
        %5585 = vadd.xlane.f32.xlu0 %v5584
        %v5586 = vpop.xlane.xlu0 %5585
        %v5587 = vsel %vm2431, %v5443, 0.0
        %5588 = vadd.xlane.f32.xlu0 %v5587
        %v5589 = vpop.xlane.xlu0 %5588
        %v5590 = vsel %vm2431, %v5445, 0.0
        %5591 = vadd.xlane.f32.xlu0 %v5590
        %v5592 = vpop.xlane.xlu0 %5591
        %v5593 = vsel %vm2431, %v5447, 0.0
        %5594 = vadd.xlane.f32.xlu0 %v5593
        %v5595 = vpop.xlane.xlu0 %5594
        %v5596 = vsel %vm2431, %v5449, 0.0
        %5597 = vadd.xlane.f32.xlu0 %v5596
        %v5598 = vpop.xlane.xlu0 %5597
        %v5599 = vsel %vm2431, %v5451, 0.0
        %5600 = vadd.xlane.f32.xlu0 %v5599
        %v5601 = vpop.xlane.xlu0 %5600
        %v5602 = vsel %vm2431, %v5453, 0.0
        %5603 = vadd.xlane.f32.xlu0 %v5602
        %v5604 = vpop.xlane.xlu0 %5603
        %v5605 = vsel %vm2431, %v5455, 0.0
        %5606 = vadd.xlane.f32.xlu0 %v5605
        %v5607 = vpop.xlane.xlu0 %5606
        %v5608 = vsel %vm2431, %v5457, 0.0
        %5609 = vadd.xlane.f32.xlu0 %v5608
        %v5610 = vpop.xlane.xlu0 %5609
        %v5611 = vsel %vm2431, %v5459, 0.0
        %5612 = vadd.xlane.f32.xlu0 %v5611
        %v5613 = vpop.xlane.xlu0 %5612
        %v5614 = vsel %vm2431, %v5461, 0.0
        %5615 = vadd.xlane.f32.xlu0 %v5614
        %v5616 = vpop.xlane.xlu0 %5615
        %v5617 = vsel %vm2431, %v5463, 0.0
        %5618 = vadd.xlane.f32.xlu0 %v5617
        %v5619 = vpop.xlane.xlu0 %5618
        %v5620 = vsel %vm2431, %v5465, 0.0
        %5621 = vadd.xlane.f32.xlu0 %v5620
        %v5622 = vpop.xlane.xlu0 %5621
        %v5623 = vsel %vm2431, %v5467, 0.0
        %5624 = vadd.xlane.f32.xlu0 %v5623
        %v5625 = vpop.xlane.xlu0 %5624
        %v5626 = vsel %vm2431, %v5469, 0.0
        %5627 = vadd.xlane.f32.xlu0 %v5626
        %v5628 = vpop.xlane.xlu0 %5627
        %v5629 = vsel %vm2431, %v5471, 0.0
        %5630 = vadd.xlane.f32.xlu0 %v5629
        %v5631 = vpop.xlane.xlu0 %5630
        %v5632 = vsel %vm2431, %v5473, 0.0
        %5633 = vadd.xlane.f32.xlu0 %v5632
        %v5634 = vpop.xlane.xlu0 %5633
        %v5635 = vsel %vm2431, %v5475, 0.0
        %5636 = vadd.xlane.f32.xlu0 %v5635
        %v5637 = vpop.xlane.xlu0 %5636
        %v5638 = vsel %vm2431, %v5477, 0.0
        %5639 = vadd.xlane.f32.xlu0 %v5638
        %v5640 = vpop.xlane.xlu0 %5639
        %v5641 = vsel %vm2431, %v5479, 0.0
        %5642 = vadd.xlane.f32.xlu0 %v5641
        %v5643 = vpop.xlane.xlu0 %5642
        %v5644 = vsel %vm2431, %v5481, 0.0
        %5645 = vadd.xlane.f32.xlu0 %v5644
        %v5646 = vpop.xlane.xlu0 %5645
        %v5647 = vsel %vm2431, %v5483, 0.0
        %5648 = vadd.xlane.f32.xlu0 %v5647
        %v5649 = vpop.xlane.xlu0 %5648
        %v5650 = vsel %vm2431, %v5485, 0.0
        %5651 = vadd.xlane.f32.xlu0 %v5650
        %v5652 = vpop.xlane.xlu0 %5651
        %v5653 = vsel %vm2431, %v5487, 0.0
        %5654 = vadd.xlane.f32.xlu0 %v5653
        %v5655 = vpop.xlane.xlu0 %5654
        %v5656 = vsel %vm2431, %v5489, 0.0
        %5657 = vadd.xlane.f32.xlu0 %v5656
        %v5658 = vpop.xlane.xlu0 %5657
        %v5659 = vsel %vm2431, %v5491, 0.0
        %5660 = vadd.xlane.f32.xlu0 %v5659
        %v5661 = vpop.xlane.xlu0 %5660
        %v5662 = vsel %vm2431, %v5493, 0.0
        %5663 = vadd.xlane.f32.xlu0 %v5662
        %v5664 = vpop.xlane.xlu0 %5663
        %v5665 = vsel %vm2431, %v5495, 0.0
        %5666 = vadd.xlane.f32.xlu0 %v5665
        %v5667 = vpop.xlane.xlu0 %5666
        %v5668 = vsel %vm2431, %v5497, 0.0
        %5669 = vadd.xlane.f32.xlu0 %v5668
        %v5670 = vpop.xlane.xlu0 %5669
        %v5671 = vsel %vm2431, %v5499, 0.0
        %5672 = vadd.xlane.f32.xlu0 %v5671
        %v5673 = vpop.xlane.xlu0 %5672
        %v5674 = vsel %vm2431, %v5501, 0.0
        %5675 = vadd.xlane.f32.xlu0 %v5674
        %v5676 = vpop.xlane.xlu0 %5675
        %v5677 = vsel %vm2431, %v5503, 0.0
        %5678 = vadd.xlane.f32.xlu0 %v5677
        %v5679 = vpop.xlane.xlu0 %5678
        %v5680 = vsel %vm2431, %v5505, 0.0
        %5681 = vadd.xlane.f32.xlu0 %v5680
        %v5682 = vpop.xlane.xlu0 %5681
        %v5683 = vsel %vm2431, %v5507, 0.0
        %5684 = vadd.xlane.f32.xlu0 %v5683
        %v5685 = vpop.xlane.xlu0 %5684
        %v5686 = vsel %vm2431, %v5509, 0.0
        %5687 = vadd.xlane.f32.xlu0 %v5686
        %v5688 = vpop.xlane.xlu0 %5687
        %v5689 = vsel %vm2431, %v5511, 0.0
        %5690 = vadd.xlane.f32.xlu0 %v5689
        %v5691 = vpop.xlane.xlu0 %5690
        %v5692 = vsel %vm2431, %v5513, 0.0
        %5693 = vadd.xlane.f32.xlu0 %v5692
        %v5694 = vpop.xlane.xlu0 %5693
        %v5695 = vsel %vm2431, %v5515, 0.0
        %5696 = vadd.xlane.f32.xlu0 %v5695
        %v5697 = vpop.xlane.xlu0 %5696
        %v5698 = vsel %vm2431, %v5517, 0.0
        %5699 = vadd.xlane.f32.xlu0 %v5698
        %v5700 = vpop.xlane.xlu0 %5699
        %v5701 = vsel %vm2431, %v5519, 0.0
        %5702 = vadd.xlane.f32.xlu0 %v5701
        %v5703 = vpop.xlane.xlu0 %5702
        %v5704 = vsel %vm2431, %v5521, 0.0
        %5705 = vadd.xlane.f32.xlu0 %v5704
        %v5706 = vpop.xlane.xlu0 %5705
        %v5707 = vsel %vm2431, %v5523, 0.0
        %5708 = vadd.xlane.f32.xlu0 %v5707
        %v5709 = vpop.xlane.xlu0 %5708
        %v5710 = vsel %vm2431, %v5525, 0.0
        %5711 = vadd.xlane.f32.xlu0 %v5710
        %v5712 = vpop.xlane.xlu0 %5711
        %v5713 = vsel %vm2431, %v5527, 0.0
        %5714 = vadd.xlane.f32.xlu0 %v5713
        %v5715 = vpop.xlane.xlu0 %5714
        %v5716 = vsel %vm2431, %v5529, 0.0
        %5717 = vadd.xlane.f32.xlu0 %v5716
        %v5718 = vpop.xlane.xlu0 %5717
        %v5719 = vsel %vm2431, %v5531, 0.0
        %5720 = vadd.xlane.f32.xlu0 %v5719
        %v5721 = vpop.xlane.xlu0 %5720
        %v5722 = vsel %vm2431, %v5533, 0.0
        %5723 = vadd.xlane.f32.xlu0 %v5722
        %v5724 = vpop.xlane.xlu0 %5723
        %v5725 = vsel %vm2431, %v5535, 0.0
        %5726 = vadd.xlane.f32.xlu0 %v5725
        %v5727 = vpop.xlane.xlu0 %5726
        %v5728 = vrcp.pop %v5538
        %v5729 = vrcp.pop %v5541
        %v5730 = vrcp.pop %v5544
        %v5731 = vrcp.pop %v5547
        %v5732 = vrcp.pop %v5550
        %v5733 = vrcp.pop %v5553
        %v5734 = vrcp.pop %v5556
        %v5735 = vrcp.pop %v5559
        %v5736 = vrcp.pop %v5562
        %v5737 = vrcp.pop %v5565
        %v5738 = vrcp.pop %v5568
        %v5739 = vrcp.pop %v5571
        %v5740 = vrcp.pop %v5574
        %v5741 = vrcp.pop %v5577
        %v5742 = vrcp.pop %v5580
        %v5743 = vrcp.pop %v5583
        %v5744 = vrcp.pop %v5586
        %v5745 = vrcp.pop %v5589
        %v5746 = vrcp.pop %v5592
        %v5747 = vrcp.pop %v5595
        %v5748 = vrcp.pop %v5598
        %v5749 = vrcp.pop %v5601
        %v5750 = vrcp.pop %v5604
        %v5751 = vrcp.pop %v5607
        %v5752 = vrcp.pop %v5610
        %v5753 = vrcp.pop %v5613
        %v5754 = vrcp.pop %v5616
        %v5755 = vrcp.pop %v5619
        %v5756 = vrcp.pop %v5622
        %v5757 = vrcp.pop %v5625
        %v5758 = vrcp.pop %v5628
        %v5759 = vrcp.pop %v5631
        %v5760 = vrcp.pop %v5634
        %v5761 = vrcp.pop %v5637
        %v5762 = vrcp.pop %v5640
        %v5763 = vrcp.pop %v5643
        %v5764 = vrcp.pop %v5646
        %v5765 = vrcp.pop %v5649
        %v5766 = vrcp.pop %v5652
        %v5767 = vrcp.pop %v5655
        %v5768 = vrcp.pop %v5658
        %v5769 = vrcp.pop %v5661
        %v5770 = vrcp.pop %v5664
        %v5771 = vrcp.pop %v5667
        %v5772 = vrcp.pop %v5670
        %v5773 = vrcp.pop %v5673
        %v5774 = vrcp.pop %v5676
        %v5775 = vrcp.pop %v5679
        %v5776 = vrcp.pop %v5682
        %v5777 = vrcp.pop %v5685
        %v5778 = vrcp.pop %v5688
        %v5779 = vrcp.pop %v5691
        %v5780 = vrcp.pop %v5694
        %v5781 = vrcp.pop %v5697
        %v5782 = vrcp.pop %v5700
        %v5783 = vrcp.pop %v5703
        %v5784 = vrcp.pop %v5706
        %v5785 = vrcp.pop %v5709
        %v5786 = vrcp.pop %v5712
        %v5787 = vrcp.pop %v5715
        %v5788 = vrcp.pop %v5718
        %v5789 = vrcp.pop %v5721
        %v5790 = vrcp.pop %v5724
        %v5791 = vrcp.pop %v5727
        %v5792 = vmul.f32 %v5409, %v5728
        %v5793 = vmul.f32 %v5411, %v5729
        %v5794 = vmul.f32 %v5413, %v5730
        %v5795 = vmul.f32 %v5415, %v5731
        %v5796 = vmul.f32 %v5417, %v5732
        %v5797 = vmul.f32 %v5419, %v5733
        %v5798 = vmul.f32 %v5421, %v5734
        %v5799 = vmul.f32 %v5423, %v5735
        %v5800 = vmul.f32 %v5425, %v5736
        %v5801 = vmul.f32 %v5427, %v5737
        %v5802 = vmul.f32 %v5429, %v5738
        %v5803 = vmul.f32 %v5431, %v5739
        %v5804 = vmul.f32 %v5433, %v5740
        %v5805 = vmul.f32 %v5435, %v5741
        %v5806 = vmul.f32 %v5437, %v5742
        %v5807 = vmul.f32 %v5439, %v5743
        %v5808 = vmul.f32 %v5441, %v5744
        %v5809 = vmul.f32 %v5443, %v5745
        %v5810 = vmul.f32 %v5445, %v5746
        %v5811 = vmul.f32 %v5447, %v5747
        %v5812 = vmul.f32 %v5449, %v5748
        %v5813 = vmul.f32 %v5451, %v5749
        %v5814 = vmul.f32 %v5453, %v5750
        %v5815 = vmul.f32 %v5455, %v5751
        %v5816 = vmul.f32 %v5457, %v5752
        %v5817 = vmul.f32 %v5459, %v5753
        %v5818 = vmul.f32 %v5461, %v5754
        %v5819 = vmul.f32 %v5463, %v5755
        %v5820 = vmul.f32 %v5465, %v5756
        %v5821 = vmul.f32 %v5467, %v5757
        %v5822 = vmul.f32 %v5469, %v5758
        %v5823 = vmul.f32 %v5471, %v5759
        %v5824 = vmul.f32 %v5473, %v5760
        %v5825 = vmul.f32 %v5475, %v5761
        %v5826 = vmul.f32 %v5477, %v5762
        %v5827 = vmul.f32 %v5479, %v5763
        %v5828 = vmul.f32 %v5481, %v5764
        %v5829 = vmul.f32 %v5483, %v5765
        %v5830 = vmul.f32 %v5485, %v5766
        %v5831 = vmul.f32 %v5487, %v5767
        %v5832 = vmul.f32 %v5489, %v5768
        %v5833 = vmul.f32 %v5491, %v5769
        %v5834 = vmul.f32 %v5493, %v5770
        %v5835 = vmul.f32 %v5495, %v5771
        %v5836 = vmul.f32 %v5497, %v5772
        %v5837 = vmul.f32 %v5499, %v5773
        %v5838 = vmul.f32 %v5501, %v5774
        %v5839 = vmul.f32 %v5503, %v5775
        %v5840 = vmul.f32 %v5505, %v5776
        %v5841 = vmul.f32 %v5507, %v5777
        %v5842 = vmul.f32 %v5509, %v5778
        %v5843 = vmul.f32 %v5511, %v5779
        %v5844 = vmul.f32 %v5513, %v5780
        %v5845 = vmul.f32 %v5515, %v5781
        %v5846 = vmul.f32 %v5517, %v5782
        %v5847 = vmul.f32 %v5519, %v5783
        %v5848 = vmul.f32 %v5521, %v5784
        %v5849 = vmul.f32 %v5523, %v5785
        %v5850 = vmul.f32 %v5525, %v5786
        %v5851 = vmul.f32 %v5527, %v5787
        %v5852 = vmul.f32 %v5529, %v5788
        %v5853 = vmul.f32 %v5531, %v5789
        %v5854 = vmul.f32 %v5533, %v5790
        %v5855 = vmul.f32 %v5535, %v5791
        %v5857 = vsel %vm2431, %v5792, 0
        %v5860 = vsel %vm2431, %v5793, 0
        %5862 = vmatprep.subr.mxu0 0.0
        %5863 = vmatpush1.msra.mxu0 0.0
        %5864 = vmatprep.subr.mxu0 0.0
        %5865 = vmatpush1.msra.mxu0 0.0
        %5866 = vmatprep.subr.mxu0 0.0
        %5867 = vmatpush1.msra.mxu0 0.0
        %5868 = vmatprep.subr.mxu0 0.0
        %5869 = vmatpush1.msra.mxu0 0.0
        %5870 = vmatprep.subr.mxu0 0.0
        %5871 = vmatpush1.msra.mxu0 0.0
        %5872 = vmatprep.subr.mxu0 0.0
        %5873 = vmatpush1.msra.mxu0 0.0
        %5874 = vmatprep.subr.mxu0 0.0
        %5875 = vmatpush1.msra.mxu0 0.0
        %5876 = vmatprep.subr.mxu0 0.0
        %5877 = vmatpush1.msra.mxu0 0.0
        %5878 = vmatprep.subr.mxu0 0.0
        %5879 = vmatpush1.msra.mxu0 0.0
        %5880 = vmatprep.subr.mxu0 0.0
        %5881 = vmatpush1.msra.mxu0 0.0
        %5882 = vmatprep.subr.mxu0 0.0
        %5883 = vmatpush1.msra.mxu0 0.0
        %5884 = vmatprep.subr.mxu0 0.0
        %5885 = vmatpush1.msra.mxu0 0.0
        %5886 = vmatprep.subr.mxu0 0.0
        %5887 = vmatpush1.msra.mxu0 0.0
        %5888 = vmatprep.subr.mxu0 0.0
        %5889 = vmatpush1.msra.mxu0 0.0
        %5890 = vmatprep.subr.mxu0 0.0
        %5891 = vmatpush1.msra.mxu0 %v1974
        %5892 = vmatprep.subr.mxu0 0.0
        %5893 = vmatpush1.msra.mxu0 %v1969
        %5894 = vmatprep.subr.mxu0 0.0
        %5895 = vmatpush2.msra.mxu0 0.0
        %5896 = vmatprep.subr.mxu0 0.0
        %5897 = vmatpush2.msra.mxu0 0.0
        %5898 = vmatprep.subr.mxu0 0.0
        %5899 = vmatpush2.msra.mxu0 0.0
        %5900 = vmatprep.subr.mxu0 0.0
        %5901 = vmatpush2.msra.mxu0 0.0
        %5902 = vmatprep.subr.mxu0 0.0
        %5903 = vmatpush2.msra.mxu0 0.0
        %5904 = vmatprep.subr.mxu0 0.0
        %5905 = vmatpush2.msra.mxu0 0.0
        %5906 = vmatprep.subr.mxu0 0.0
        %5907 = vmatpush2.msra.mxu0 0.0
        %5908 = vmatprep.subr.mxu0 0.0
        %5909 = vmatpush2.msra.mxu0 0.0
        %5910 = vmatprep.subr.mxu0 0.0
        %5911 = vmatpush2.msra.mxu0 0.0
        %5912 = vmatprep.subr.mxu0 0.0
        %5913 = vmatpush2.msra.mxu0 0.0
        %5914 = vmatprep.subr.mxu0 0.0
        %5915 = vmatpush2.msra.mxu0 0.0
        %5916 = vmatprep.subr.mxu0 0.0
        %5917 = vmatpush2.msra.mxu0 0.0
        %5918 = vmatprep.subr.mxu0 0.0
        %5919 = vmatpush2.msra.mxu0 0.0
        %5920 = vmatprep.subr.mxu0 0.0
        %5921 = vmatpush2.msra.mxu0 0.0
        %5922 = vmatprep.subr.mxu0 0.0
        %5923 = vmatpush2.msra.mxu0 0.0
        %5924 = vmatprep.subr.mxu0 0.0
        %5925 = vmatpush2.msra.mxu0 0.0
        %5926 = vmatprep.mubr.f32.mxu0 0.0
        %5927 = vmatmul.mubr.f32.gmra.mxu0 %v5857
        %v5928 = vpop.f32.mrf.mxu0
        %v5929 = vadd.f32 0.0, %v5928
        %v5930 = vpop.f32.mrf.mxu0
        %5931 = vmatprep.mubr.f32.mxu0 0.0
        %5932 = vmatmul.mubr.f32.gmra.mxu0 %v5860
        %v5933 = vpop.f32.mrf.mxu0
        %v5934 = vadd.f32 0.0, %v5933
        %v5935 = vpop.f32.mrf.mxu0
        %5936 = vdwg.mxu0
        %v5938 = vsel %vm2431, %v5794, 0
        %v5941 = vsel %vm2431, %v5795, 0
        %5943 = vmatprep.subr.mxu0 0.0
        %5944 = vmatpush1.msra.mxu0 0.0
        %5945 = vmatprep.subr.mxu0 0.0
        %5946 = vmatpush1.msra.mxu0 0.0
        %5947 = vmatprep.subr.mxu0 0.0
        %5948 = vmatpush1.msra.mxu0 0.0
        %5949 = vmatprep.subr.mxu0 0.0
        %5950 = vmatpush1.msra.mxu0 0.0
        %5951 = vmatprep.subr.mxu0 0.0
        %5952 = vmatpush1.msra.mxu0 0.0
        %5953 = vmatprep.subr.mxu0 0.0
        %5954 = vmatpush1.msra.mxu0 0.0
        %5955 = vmatprep.subr.mxu0 0.0
        %5956 = vmatpush1.msra.mxu0 0.0
        %5957 = vmatprep.subr.mxu0 0.0
        %5958 = vmatpush1.msra.mxu0 0.0
        %5959 = vmatprep.subr.mxu0 0.0
        %5960 = vmatpush1.msra.mxu0 0.0
        %5961 = vmatprep.subr.mxu0 0.0
        %5962 = vmatpush1.msra.mxu0 0.0
        %5963 = vmatprep.subr.mxu0 0.0
        %5964 = vmatpush1.msra.mxu0 0.0
        %5965 = vmatprep.subr.mxu0 0.0
        %5966 = vmatpush1.msra.mxu0 0.0
        %5967 = vmatprep.subr.mxu0 0.0
        %5968 = vmatpush1.msra.mxu0 0.0
        %5969 = vmatprep.subr.mxu0 0.0
        %5970 = vmatpush1.msra.mxu0 0.0
        %5971 = vmatprep.subr.mxu0 0.0
        %5972 = vmatpush1.msra.mxu0 %v1984
        %5973 = vmatprep.subr.mxu0 0.0
        %5974 = vmatpush1.msra.mxu0 %v1979
        %5975 = vmatprep.subr.mxu0 0.0
        %5976 = vmatpush2.msra.mxu0 0.0
        %5977 = vmatprep.subr.mxu0 0.0
        %5978 = vmatpush2.msra.mxu0 0.0
        %5979 = vmatprep.subr.mxu0 0.0
        %5980 = vmatpush2.msra.mxu0 0.0
        %5981 = vmatprep.subr.mxu0 0.0
        %5982 = vmatpush2.msra.mxu0 0.0
        %5983 = vmatprep.subr.mxu0 0.0
        %5984 = vmatpush2.msra.mxu0 0.0
        %5985 = vmatprep.subr.mxu0 0.0
        %5986 = vmatpush2.msra.mxu0 0.0
        %5987 = vmatprep.subr.mxu0 0.0
        %5988 = vmatpush2.msra.mxu0 0.0
        %5989 = vmatprep.subr.mxu0 0.0
        %5990 = vmatpush2.msra.mxu0 0.0
        %5991 = vmatprep.subr.mxu0 0.0
        %5992 = vmatpush2.msra.mxu0 0.0
        %5993 = vmatprep.subr.mxu0 0.0
        %5994 = vmatpush2.msra.mxu0 0.0
        %5995 = vmatprep.subr.mxu0 0.0
        %5996 = vmatpush2.msra.mxu0 0.0
        %5997 = vmatprep.subr.mxu0 0.0
        %5998 = vmatpush2.msra.mxu0 0.0
        %5999 = vmatprep.subr.mxu0 0.0
        %6000 = vmatpush2.msra.mxu0 0.0
        %6001 = vmatprep.subr.mxu0 0.0
        %6002 = vmatpush2.msra.mxu0 0.0
        %6003 = vmatprep.subr.mxu0 0.0
        %6004 = vmatpush2.msra.mxu0 0.0
        %6005 = vmatprep.subr.mxu0 0.0
        %6006 = vmatpush2.msra.mxu0 0.0
        %6007 = vmatprep.mubr.f32.mxu0 0.0
        %6008 = vmatmul.mubr.f32.gmra.mxu0 %v5938
        %v6009 = vpop.f32.mrf.mxu0
        %v6010 = vadd.f32 0.0, %v6009
        %v6011 = vpop.f32.mrf.mxu0
        %6012 = vmatprep.mubr.f32.mxu0 0.0
        %6013 = vmatmul.mubr.f32.gmra.mxu0 %v5941
        %v6014 = vpop.f32.mrf.mxu0
        %v6015 = vadd.f32 0.0, %v6014
        %v6016 = vpop.f32.mrf.mxu0
        %6017 = vdwg.mxu0
        %v6019 = vsel %vm2431, %v5796, 0
        %v6022 = vsel %vm2431, %v5797, 0
        %6024 = vmatprep.subr.mxu0 0.0
        %6025 = vmatpush1.msra.mxu0 0.0
        %6026 = vmatprep.subr.mxu0 0.0
        %6027 = vmatpush1.msra.mxu0 0.0
        %6028 = vmatprep.subr.mxu0 0.0
        %6029 = vmatpush1.msra.mxu0 0.0
        %6030 = vmatprep.subr.mxu0 0.0
        %6031 = vmatpush1.msra.mxu0 0.0
        %6032 = vmatprep.subr.mxu0 0.0
        %6033 = vmatpush1.msra.mxu0 0.0
        %6034 = vmatprep.subr.mxu0 0.0
        %6035 = vmatpush1.msra.mxu0 0.0
        %6036 = vmatprep.subr.mxu0 0.0
        %6037 = vmatpush1.msra.mxu0 0.0
        %6038 = vmatprep.subr.mxu0 0.0
        %6039 = vmatpush1.msra.mxu0 0.0
        %6040 = vmatprep.subr.mxu0 0.0
        %6041 = vmatpush1.msra.mxu0 0.0
        %6042 = vmatprep.subr.mxu0 0.0
        %6043 = vmatpush1.msra.mxu0 0.0
        %6044 = vmatprep.subr.mxu0 0.0
        %6045 = vmatpush1.msra.mxu0 0.0
        %6046 = vmatprep.subr.mxu0 0.0
        %6047 = vmatpush1.msra.mxu0 0.0
        %6048 = vmatprep.subr.mxu0 0.0
        %6049 = vmatpush1.msra.mxu0 0.0
        %6050 = vmatprep.subr.mxu0 0.0
        %6051 = vmatpush1.msra.mxu0 0.0
        %6052 = vmatprep.subr.mxu0 0.0
        %6053 = vmatpush1.msra.mxu0 %v1994
        %6054 = vmatprep.subr.mxu0 0.0
        %6055 = vmatpush1.msra.mxu0 %v1989
        %6056 = vmatprep.subr.mxu0 0.0
        %6057 = vmatpush2.msra.mxu0 0.0
        %6058 = vmatprep.subr.mxu0 0.0
        %6059 = vmatpush2.msra.mxu0 0.0
        %6060 = vmatprep.subr.mxu0 0.0
        %6061 = vmatpush2.msra.mxu0 0.0
        %6062 = vmatprep.subr.mxu0 0.0
        %6063 = vmatpush2.msra.mxu0 0.0
        %6064 = vmatprep.subr.mxu0 0.0
        %6065 = vmatpush2.msra.mxu0 0.0
        %6066 = vmatprep.subr.mxu0 0.0
        %6067 = vmatpush2.msra.mxu0 0.0
        %6068 = vmatprep.subr.mxu0 0.0
        %6069 = vmatpush2.msra.mxu0 0.0
        %6070 = vmatprep.subr.mxu0 0.0
        %6071 = vmatpush2.msra.mxu0 0.0
        %6072 = vmatprep.subr.mxu0 0.0
        %6073 = vmatpush2.msra.mxu0 0.0
        %6074 = vmatprep.subr.mxu0 0.0
        %6075 = vmatpush2.msra.mxu0 0.0
        %6076 = vmatprep.subr.mxu0 0.0
        %6077 = vmatpush2.msra.mxu0 0.0
        %6078 = vmatprep.subr.mxu0 0.0
        %6079 = vmatpush2.msra.mxu0 0.0
        %6080 = vmatprep.subr.mxu0 0.0
        %6081 = vmatpush2.msra.mxu0 0.0
        %6082 = vmatprep.subr.mxu0 0.0
        %6083 = vmatpush2.msra.mxu0 0.0
        %6084 = vmatprep.subr.mxu0 0.0
        %6085 = vmatpush2.msra.mxu0 0.0
        %6086 = vmatprep.subr.mxu0 0.0
        %6087 = vmatpush2.msra.mxu0 0.0
        %6088 = vmatprep.mubr.f32.mxu0 0.0
        %6089 = vmatmul.mubr.f32.gmra.mxu0 %v6019
        %v6090 = vpop.f32.mrf.mxu0
        %v6091 = vadd.f32 0.0, %v6090
        %v6092 = vpop.f32.mrf.mxu0
        %6093 = vmatprep.mubr.f32.mxu0 0.0
        %6094 = vmatmul.mubr.f32.gmra.mxu0 %v6022
        %v6095 = vpop.f32.mrf.mxu0
        %v6096 = vadd.f32 0.0, %v6095
        %v6097 = vpop.f32.mrf.mxu0
        %6098 = vdwg.mxu0
        %v6100 = vsel %vm2431, %v5798, 0
        %v6103 = vsel %vm2431, %v5799, 0
        %6105 = vmatprep.subr.mxu0 0.0
        %6106 = vmatpush1.msra.mxu0 0.0
        %6107 = vmatprep.subr.mxu0 0.0
        %6108 = vmatpush1.msra.mxu0 0.0
        %6109 = vmatprep.subr.mxu0 0.0
        %6110 = vmatpush1.msra.mxu0 0.0
        %6111 = vmatprep.subr.mxu0 0.0
        %6112 = vmatpush1.msra.mxu0 0.0
        %6113 = vmatprep.subr.mxu0 0.0
        %6114 = vmatpush1.msra.mxu0 0.0
        %6115 = vmatprep.subr.mxu0 0.0
        %6116 = vmatpush1.msra.mxu0 0.0
        %6117 = vmatprep.subr.mxu0 0.0
        %6118 = vmatpush1.msra.mxu0 0.0
        %6119 = vmatprep.subr.mxu0 0.0
        %6120 = vmatpush1.msra.mxu0 0.0
        %6121 = vmatprep.subr.mxu0 0.0
        %6122 = vmatpush1.msra.mxu0 0.0
        %6123 = vmatprep.subr.mxu0 0.0
        %6124 = vmatpush1.msra.mxu0 0.0
        %6125 = vmatprep.subr.mxu0 0.0
        %6126 = vmatpush1.msra.mxu0 0.0
        %6127 = vmatprep.subr.mxu0 0.0
        %6128 = vmatpush1.msra.mxu0 0.0
        %6129 = vmatprep.subr.mxu0 0.0
        %6130 = vmatpush1.msra.mxu0 0.0
        %6131 = vmatprep.subr.mxu0 0.0
        %6132 = vmatpush1.msra.mxu0 0.0
        %6133 = vmatprep.subr.mxu0 0.0
        %6134 = vmatpush1.msra.mxu0 %v2004
        %6135 = vmatprep.subr.mxu0 0.0
        %6136 = vmatpush1.msra.mxu0 %v1999
        %6137 = vmatprep.subr.mxu0 0.0
        %6138 = vmatpush2.msra.mxu0 0.0
        %6139 = vmatprep.subr.mxu0 0.0
        %6140 = vmatpush2.msra.mxu0 0.0
        %6141 = vmatprep.subr.mxu0 0.0
        %6142 = vmatpush2.msra.mxu0 0.0
        %6143 = vmatprep.subr.mxu0 0.0
        %6144 = vmatpush2.msra.mxu0 0.0
        %6145 = vmatprep.subr.mxu0 0.0
        %6146 = vmatpush2.msra.mxu0 0.0
        %6147 = vmatprep.subr.mxu0 0.0
        %6148 = vmatpush2.msra.mxu0 0.0
        %6149 = vmatprep.subr.mxu0 0.0
        %6150 = vmatpush2.msra.mxu0 0.0
        %6151 = vmatprep.subr.mxu0 0.0
        %6152 = vmatpush2.msra.mxu0 0.0
        %6153 = vmatprep.subr.mxu0 0.0
        %6154 = vmatpush2.msra.mxu0 0.0
        %6155 = vmatprep.subr.mxu0 0.0
        %6156 = vmatpush2.msra.mxu0 0.0
        %6157 = vmatprep.subr.mxu0 0.0
        %6158 = vmatpush2.msra.mxu0 0.0
        %6159 = vmatprep.subr.mxu0 0.0
        %6160 = vmatpush2.msra.mxu0 0.0
        %6161 = vmatprep.subr.mxu0 0.0
        %6162 = vmatpush2.msra.mxu0 0.0
        %6163 = vmatprep.subr.mxu0 0.0
        %6164 = vmatpush2.msra.mxu0 0.0
        %6165 = vmatprep.subr.mxu0 0.0
        %6166 = vmatpush2.msra.mxu0 0.0
        %6167 = vmatprep.subr.mxu0 0.0
        %6168 = vmatpush2.msra.mxu0 0.0
        %6169 = vmatprep.mubr.f32.mxu0 0.0
        %6170 = vmatmul.mubr.f32.gmra.mxu0 %v6100
        %v6171 = vpop.f32.mrf.mxu0
        %v6172 = vadd.f32 0.0, %v6171
        %v6173 = vpop.f32.mrf.mxu0
        %6174 = vmatprep.mubr.f32.mxu0 0.0
        %6175 = vmatmul.mubr.f32.gmra.mxu0 %v6103
        %v6176 = vpop.f32.mrf.mxu0
        %v6177 = vadd.f32 0.0, %v6176
        %v6178 = vpop.f32.mrf.mxu0
        %6179 = vdwg.mxu0
        %v6181 = vsel %vm2431, %v5800, 0
        %v6184 = vsel %vm2431, %v5801, 0
        %6186 = vmatprep.subr.mxu0 0.0
        %6187 = vmatpush1.msra.mxu0 0.0
        %6188 = vmatprep.subr.mxu0 0.0
        %6189 = vmatpush1.msra.mxu0 0.0
        %6190 = vmatprep.subr.mxu0 0.0
        %6191 = vmatpush1.msra.mxu0 0.0
        %6192 = vmatprep.subr.mxu0 0.0
        %6193 = vmatpush1.msra.mxu0 0.0
        %6194 = vmatprep.subr.mxu0 0.0
        %6195 = vmatpush1.msra.mxu0 0.0
        %6196 = vmatprep.subr.mxu0 0.0
        %6197 = vmatpush1.msra.mxu0 0.0
        %6198 = vmatprep.subr.mxu0 0.0
        %6199 = vmatpush1.msra.mxu0 0.0
        %6200 = vmatprep.subr.mxu0 0.0
        %6201 = vmatpush1.msra.mxu0 0.0
        %6202 = vmatprep.subr.mxu0 0.0
        %6203 = vmatpush1.msra.mxu0 0.0
        %6204 = vmatprep.subr.mxu0 0.0
        %6205 = vmatpush1.msra.mxu0 0.0
        %6206 = vmatprep.subr.mxu0 0.0
        %6207 = vmatpush1.msra.mxu0 0.0
        %6208 = vmatprep.subr.mxu0 0.0
        %6209 = vmatpush1.msra.mxu0 0.0
        %6210 = vmatprep.subr.mxu0 0.0
        %6211 = vmatpush1.msra.mxu0 0.0
        %6212 = vmatprep.subr.mxu0 0.0
        %6213 = vmatpush1.msra.mxu0 0.0
        %6214 = vmatprep.subr.mxu0 0.0
        %6215 = vmatpush1.msra.mxu0 %v2014
        %6216 = vmatprep.subr.mxu0 0.0
        %6217 = vmatpush1.msra.mxu0 %v2009
        %6218 = vmatprep.subr.mxu0 0.0
        %6219 = vmatpush2.msra.mxu0 0.0
        %6220 = vmatprep.subr.mxu0 0.0
        %6221 = vmatpush2.msra.mxu0 0.0
        %6222 = vmatprep.subr.mxu0 0.0
        %6223 = vmatpush2.msra.mxu0 0.0
        %6224 = vmatprep.subr.mxu0 0.0
        %6225 = vmatpush2.msra.mxu0 0.0
        %6226 = vmatprep.subr.mxu0 0.0
        %6227 = vmatpush2.msra.mxu0 0.0
        %6228 = vmatprep.subr.mxu0 0.0
        %6229 = vmatpush2.msra.mxu0 0.0
        %6230 = vmatprep.subr.mxu0 0.0
        %6231 = vmatpush2.msra.mxu0 0.0
        %6232 = vmatprep.subr.mxu0 0.0
        %6233 = vmatpush2.msra.mxu0 0.0
        %6234 = vmatprep.subr.mxu0 0.0
        %6235 = vmatpush2.msra.mxu0 0.0
        %6236 = vmatprep.subr.mxu0 0.0
        %6237 = vmatpush2.msra.mxu0 0.0
        %6238 = vmatprep.subr.mxu0 0.0
        %6239 = vmatpush2.msra.mxu0 0.0
        %6240 = vmatprep.subr.mxu0 0.0
        %6241 = vmatpush2.msra.mxu0 0.0
        %6242 = vmatprep.subr.mxu0 0.0
        %6243 = vmatpush2.msra.mxu0 0.0
        %6244 = vmatprep.subr.mxu0 0.0
        %6245 = vmatpush2.msra.mxu0 0.0
        %6246 = vmatprep.subr.mxu0 0.0
        %6247 = vmatpush2.msra.mxu0 0.0
        %6248 = vmatprep.subr.mxu0 0.0
        %6249 = vmatpush2.msra.mxu0 0.0
        %6250 = vmatprep.mubr.f32.mxu0 0.0
        %6251 = vmatmul.mubr.f32.gmra.mxu0 %v6181
        %v6252 = vpop.f32.mrf.mxu0
        %v6253 = vadd.f32 0.0, %v6252
        %v6254 = vpop.f32.mrf.mxu0
        %6255 = vmatprep.mubr.f32.mxu0 0.0
        %6256 = vmatmul.mubr.f32.gmra.mxu0 %v6184
        %v6257 = vpop.f32.mrf.mxu0
        %v6258 = vadd.f32 0.0, %v6257
        %v6259 = vpop.f32.mrf.mxu0
        %6260 = vdwg.mxu0
        %v6262 = vsel %vm2431, %v5802, 0
        %v6265 = vsel %vm2431, %v5803, 0
        %6267 = vmatprep.subr.mxu0 0.0
        %6268 = vmatpush1.msra.mxu0 0.0
        %6269 = vmatprep.subr.mxu0 0.0
        %6270 = vmatpush1.msra.mxu0 0.0
        %6271 = vmatprep.subr.mxu0 0.0
        %6272 = vmatpush1.msra.mxu0 0.0
        %6273 = vmatprep.subr.mxu0 0.0
        %6274 = vmatpush1.msra.mxu0 0.0
        %6275 = vmatprep.subr.mxu0 0.0
        %6276 = vmatpush1.msra.mxu0 0.0
        %6277 = vmatprep.subr.mxu0 0.0
        %6278 = vmatpush1.msra.mxu0 0.0
        %6279 = vmatprep.subr.mxu0 0.0
        %6280 = vmatpush1.msra.mxu0 0.0
        %6281 = vmatprep.subr.mxu0 0.0
        %6282 = vmatpush1.msra.mxu0 0.0
        %6283 = vmatprep.subr.mxu0 0.0
        %6284 = vmatpush1.msra.mxu0 0.0
        %6285 = vmatprep.subr.mxu0 0.0
        %6286 = vmatpush1.msra.mxu0 0.0
        %6287 = vmatprep.subr.mxu0 0.0
        %6288 = vmatpush1.msra.mxu0 0.0
        %6289 = vmatprep.subr.mxu0 0.0
        %6290 = vmatpush1.msra.mxu0 0.0
        %6291 = vmatprep.subr.mxu0 0.0
        %6292 = vmatpush1.msra.mxu0 0.0
        %6293 = vmatprep.subr.mxu0 0.0
        %6294 = vmatpush1.msra.mxu0 0.0
        %6295 = vmatprep.subr.mxu0 0.0
        %6296 = vmatpush1.msra.mxu0 %v2024
        %6297 = vmatprep.subr.mxu0 0.0
        %6298 = vmatpush1.msra.mxu0 %v2019
        %6299 = vmatprep.subr.mxu0 0.0
        %6300 = vmatpush2.msra.mxu0 0.0
        %6301 = vmatprep.subr.mxu0 0.0
        %6302 = vmatpush2.msra.mxu0 0.0
        %6303 = vmatprep.subr.mxu0 0.0
        %6304 = vmatpush2.msra.mxu0 0.0
        %6305 = vmatprep.subr.mxu0 0.0
        %6306 = vmatpush2.msra.mxu0 0.0
        %6307 = vmatprep.subr.mxu0 0.0
        %6308 = vmatpush2.msra.mxu0 0.0
        %6309 = vmatprep.subr.mxu0 0.0
        %6310 = vmatpush2.msra.mxu0 0.0
        %6311 = vmatprep.subr.mxu0 0.0
        %6312 = vmatpush2.msra.mxu0 0.0
        %6313 = vmatprep.subr.mxu0 0.0
        %6314 = vmatpush2.msra.mxu0 0.0
        %6315 = vmatprep.subr.mxu0 0.0
        %6316 = vmatpush2.msra.mxu0 0.0
        %6317 = vmatprep.subr.mxu0 0.0
        %6318 = vmatpush2.msra.mxu0 0.0
        %6319 = vmatprep.subr.mxu0 0.0
        %6320 = vmatpush2.msra.mxu0 0.0
        %6321 = vmatprep.subr.mxu0 0.0
        %6322 = vmatpush2.msra.mxu0 0.0
        %6323 = vmatprep.subr.mxu0 0.0
        %6324 = vmatpush2.msra.mxu0 0.0
        %6325 = vmatprep.subr.mxu0 0.0
        %6326 = vmatpush2.msra.mxu0 0.0
        %6327 = vmatprep.subr.mxu0 0.0
        %6328 = vmatpush2.msra.mxu0 0.0
        %6329 = vmatprep.subr.mxu0 0.0
        %6330 = vmatpush2.msra.mxu0 0.0
        %6331 = vmatprep.mubr.f32.mxu0 0.0
        %6332 = vmatmul.mubr.f32.gmra.mxu0 %v6262
        %v6333 = vpop.f32.mrf.mxu0
        %v6334 = vadd.f32 0.0, %v6333
        %v6335 = vpop.f32.mrf.mxu0
        %6336 = vmatprep.mubr.f32.mxu0 0.0
        %6337 = vmatmul.mubr.f32.gmra.mxu0 %v6265
        %v6338 = vpop.f32.mrf.mxu0
        %v6339 = vadd.f32 0.0, %v6338
        %v6340 = vpop.f32.mrf.mxu0
        %6341 = vdwg.mxu0
        %v6343 = vsel %vm2431, %v5804, 0
        %v6346 = vsel %vm2431, %v5805, 0
        %6348 = vmatprep.subr.mxu0 0.0
        %6349 = vmatpush1.msra.mxu0 0.0
        %6350 = vmatprep.subr.mxu0 0.0
        %6351 = vmatpush1.msra.mxu0 0.0
        %6352 = vmatprep.subr.mxu0 0.0
        %6353 = vmatpush1.msra.mxu0 0.0
        %6354 = vmatprep.subr.mxu0 0.0
        %6355 = vmatpush1.msra.mxu0 0.0
        %6356 = vmatprep.subr.mxu0 0.0
        %6357 = vmatpush1.msra.mxu0 0.0
        %6358 = vmatprep.subr.mxu0 0.0
        %6359 = vmatpush1.msra.mxu0 0.0
        %6360 = vmatprep.subr.mxu0 0.0
        %6361 = vmatpush1.msra.mxu0 0.0
        %6362 = vmatprep.subr.mxu0 0.0
        %6363 = vmatpush1.msra.mxu0 0.0
        %6364 = vmatprep.subr.mxu0 0.0
        %6365 = vmatpush1.msra.mxu0 0.0
        %6366 = vmatprep.subr.mxu0 0.0
        %6367 = vmatpush1.msra.mxu0 0.0
        %6368 = vmatprep.subr.mxu0 0.0
        %6369 = vmatpush1.msra.mxu0 0.0
        %6370 = vmatprep.subr.mxu0 0.0
        %6371 = vmatpush1.msra.mxu0 0.0
        %6372 = vmatprep.subr.mxu0 0.0
        %6373 = vmatpush1.msra.mxu0 0.0
        %6374 = vmatprep.subr.mxu0 0.0
        %6375 = vmatpush1.msra.mxu0 0.0
        %6376 = vmatprep.subr.mxu0 0.0
        %6377 = vmatpush1.msra.mxu0 %v2034
        %6378 = vmatprep.subr.mxu0 0.0
        %6379 = vmatpush1.msra.mxu0 %v2029
        %6380 = vmatprep.subr.mxu0 0.0
        %6381 = vmatpush2.msra.mxu0 0.0
        %6382 = vmatprep.subr.mxu0 0.0
        %6383 = vmatpush2.msra.mxu0 0.0
        %6384 = vmatprep.subr.mxu0 0.0
        %6385 = vmatpush2.msra.mxu0 0.0
        %6386 = vmatprep.subr.mxu0 0.0
        %6387 = vmatpush2.msra.mxu0 0.0
        %6388 = vmatprep.subr.mxu0 0.0
        %6389 = vmatpush2.msra.mxu0 0.0
        %6390 = vmatprep.subr.mxu0 0.0
        %6391 = vmatpush2.msra.mxu0 0.0
        %6392 = vmatprep.subr.mxu0 0.0
        %6393 = vmatpush2.msra.mxu0 0.0
        %6394 = vmatprep.subr.mxu0 0.0
        %6395 = vmatpush2.msra.mxu0 0.0
        %6396 = vmatprep.subr.mxu0 0.0
        %6397 = vmatpush2.msra.mxu0 0.0
        %6398 = vmatprep.subr.mxu0 0.0
        %6399 = vmatpush2.msra.mxu0 0.0
        %6400 = vmatprep.subr.mxu0 0.0
        %6401 = vmatpush2.msra.mxu0 0.0
        %6402 = vmatprep.subr.mxu0 0.0
        %6403 = vmatpush2.msra.mxu0 0.0
        %6404 = vmatprep.subr.mxu0 0.0
        %6405 = vmatpush2.msra.mxu0 0.0
        %6406 = vmatprep.subr.mxu0 0.0
        %6407 = vmatpush2.msra.mxu0 0.0
        %6408 = vmatprep.subr.mxu0 0.0
        %6409 = vmatpush2.msra.mxu0 0.0
        %6410 = vmatprep.subr.mxu0 0.0
        %6411 = vmatpush2.msra.mxu0 0.0
        %6412 = vmatprep.mubr.f32.mxu0 0.0
        %6413 = vmatmul.mubr.f32.gmra.mxu0 %v6343
        %v6414 = vpop.f32.mrf.mxu0
        %v6415 = vadd.f32 0.0, %v6414
        %v6416 = vpop.f32.mrf.mxu0
        %6417 = vmatprep.mubr.f32.mxu0 0.0
        %6418 = vmatmul.mubr.f32.gmra.mxu0 %v6346
        %v6419 = vpop.f32.mrf.mxu0
        %v6420 = vadd.f32 0.0, %v6419
        %v6421 = vpop.f32.mrf.mxu0
        %6422 = vdwg.mxu0
        %v6424 = vsel %vm2431, %v5806, 0
        %v6427 = vsel %vm2431, %v5807, 0
        %6429 = vmatprep.subr.mxu0 0.0
        %6430 = vmatpush1.msra.mxu0 0.0
        %6431 = vmatprep.subr.mxu0 0.0
        %6432 = vmatpush1.msra.mxu0 0.0
        %6433 = vmatprep.subr.mxu0 0.0
        %6434 = vmatpush1.msra.mxu0 0.0
        %6435 = vmatprep.subr.mxu0 0.0
        %6436 = vmatpush1.msra.mxu0 0.0
        %6437 = vmatprep.subr.mxu0 0.0
        %6438 = vmatpush1.msra.mxu0 0.0
        %6439 = vmatprep.subr.mxu0 0.0
        %6440 = vmatpush1.msra.mxu0 0.0
        %6441 = vmatprep.subr.mxu0 0.0
        %6442 = vmatpush1.msra.mxu0 0.0
        %6443 = vmatprep.subr.mxu0 0.0
        %6444 = vmatpush1.msra.mxu0 0.0
        %6445 = vmatprep.subr.mxu0 0.0
        %6446 = vmatpush1.msra.mxu0 0.0
        %6447 = vmatprep.subr.mxu0 0.0
        %6448 = vmatpush1.msra.mxu0 0.0
        %6449 = vmatprep.subr.mxu0 0.0
        %6450 = vmatpush1.msra.mxu0 0.0
        %6451 = vmatprep.subr.mxu0 0.0
        %6452 = vmatpush1.msra.mxu0 0.0
        %6453 = vmatprep.subr.mxu0 0.0
        %6454 = vmatpush1.msra.mxu0 0.0
        %6455 = vmatprep.subr.mxu0 0.0
        %6456 = vmatpush1.msra.mxu0 0.0
        %6457 = vmatprep.subr.mxu0 0.0
        %6458 = vmatpush1.msra.mxu0 %v2044
        %6459 = vmatprep.subr.mxu0 0.0
        %6460 = vmatpush1.msra.mxu0 %v2039
        %6461 = vmatprep.subr.mxu0 0.0
        %6462 = vmatpush2.msra.mxu0 0.0
        %6463 = vmatprep.subr.mxu0 0.0
        %6464 = vmatpush2.msra.mxu0 0.0
        %6465 = vmatprep.subr.mxu0 0.0
        %6466 = vmatpush2.msra.mxu0 0.0
        %6467 = vmatprep.subr.mxu0 0.0
        %6468 = vmatpush2.msra.mxu0 0.0
        %6469 = vmatprep.subr.mxu0 0.0
        %6470 = vmatpush2.msra.mxu0 0.0
        %6471 = vmatprep.subr.mxu0 0.0
        %6472 = vmatpush2.msra.mxu0 0.0
        %6473 = vmatprep.subr.mxu0 0.0
        %6474 = vmatpush2.msra.mxu0 0.0
        %6475 = vmatprep.subr.mxu0 0.0
        %6476 = vmatpush2.msra.mxu0 0.0
        %6477 = vmatprep.subr.mxu0 0.0
        %6478 = vmatpush2.msra.mxu0 0.0
        %6479 = vmatprep.subr.mxu0 0.0
        %6480 = vmatpush2.msra.mxu0 0.0
        %6481 = vmatprep.subr.mxu0 0.0
        %6482 = vmatpush2.msra.mxu0 0.0
        %6483 = vmatprep.subr.mxu0 0.0
        %6484 = vmatpush2.msra.mxu0 0.0
        %6485 = vmatprep.subr.mxu0 0.0
        %6486 = vmatpush2.msra.mxu0 0.0
        %6487 = vmatprep.subr.mxu0 0.0
        %6488 = vmatpush2.msra.mxu0 0.0
        %6489 = vmatprep.subr.mxu0 0.0
        %6490 = vmatpush2.msra.mxu0 0.0
        %6491 = vmatprep.subr.mxu0 0.0
        %6492 = vmatpush2.msra.mxu0 0.0
        %6493 = vmatprep.mubr.f32.mxu0 0.0
        %6494 = vmatmul.mubr.f32.gmra.mxu0 %v6424
        %v6495 = vpop.f32.mrf.mxu0
        %v6496 = vadd.f32 0.0, %v6495
        %v6497 = vpop.f32.mrf.mxu0
        %6498 = vmatprep.mubr.f32.mxu0 0.0
        %6499 = vmatmul.mubr.f32.gmra.mxu0 %v6427
        %v6500 = vpop.f32.mrf.mxu0
        %v6501 = vadd.f32 0.0, %v6500
        %v6502 = vpop.f32.mrf.mxu0
        %6503 = vdwg.mxu0
        %v6505 = vsel %vm2431, %v5808, 0
        %v6508 = vsel %vm2431, %v5809, 0
        %6510 = vmatprep.subr.mxu0 0.0
        %6511 = vmatpush1.msra.mxu0 0.0
        %6512 = vmatprep.subr.mxu0 0.0
        %6513 = vmatpush1.msra.mxu0 0.0
        %6514 = vmatprep.subr.mxu0 0.0
        %6515 = vmatpush1.msra.mxu0 0.0
        %6516 = vmatprep.subr.mxu0 0.0
        %6517 = vmatpush1.msra.mxu0 0.0
        %6518 = vmatprep.subr.mxu0 0.0
        %6519 = vmatpush1.msra.mxu0 0.0
        %6520 = vmatprep.subr.mxu0 0.0
        %6521 = vmatpush1.msra.mxu0 0.0
        %6522 = vmatprep.subr.mxu0 0.0
        %6523 = vmatpush1.msra.mxu0 0.0
        %6524 = vmatprep.subr.mxu0 0.0
        %6525 = vmatpush1.msra.mxu0 0.0
        %6526 = vmatprep.subr.mxu0 0.0
        %6527 = vmatpush1.msra.mxu0 0.0
        %6528 = vmatprep.subr.mxu0 0.0
        %6529 = vmatpush1.msra.mxu0 0.0
        %6530 = vmatprep.subr.mxu0 0.0
        %6531 = vmatpush1.msra.mxu0 0.0
        %6532 = vmatprep.subr.mxu0 0.0
        %6533 = vmatpush1.msra.mxu0 0.0
        %6534 = vmatprep.subr.mxu0 0.0
        %6535 = vmatpush1.msra.mxu0 0.0
        %6536 = vmatprep.subr.mxu0 0.0
        %6537 = vmatpush1.msra.mxu0 0.0
        %6538 = vmatprep.subr.mxu0 0.0
        %6539 = vmatpush1.msra.mxu0 %v2290
        %6540 = vmatprep.subr.mxu0 0.0
        %6541 = vmatpush1.msra.mxu0 %v2288
        %6542 = vmatprep.subr.mxu0 0.0
        %6543 = vmatpush2.msra.mxu0 0.0
        %6544 = vmatprep.subr.mxu0 0.0
        %6545 = vmatpush2.msra.mxu0 0.0
        %6546 = vmatprep.subr.mxu0 0.0
        %6547 = vmatpush2.msra.mxu0 0.0
        %6548 = vmatprep.subr.mxu0 0.0
        %6549 = vmatpush2.msra.mxu0 0.0
        %6550 = vmatprep.subr.mxu0 0.0
        %6551 = vmatpush2.msra.mxu0 0.0
        %6552 = vmatprep.subr.mxu0 0.0
        %6553 = vmatpush2.msra.mxu0 0.0
        %6554 = vmatprep.subr.mxu0 0.0
        %6555 = vmatpush2.msra.mxu0 0.0
        %6556 = vmatprep.subr.mxu0 0.0
        %6557 = vmatpush2.msra.mxu0 0.0
        %6558 = vmatprep.subr.mxu0 0.0
        %6559 = vmatpush2.msra.mxu0 0.0
        %6560 = vmatprep.subr.mxu0 0.0
        %6561 = vmatpush2.msra.mxu0 0.0
        %6562 = vmatprep.subr.mxu0 0.0
        %6563 = vmatpush2.msra.mxu0 0.0
        %6564 = vmatprep.subr.mxu0 0.0
        %6565 = vmatpush2.msra.mxu0 0.0
        %6566 = vmatprep.subr.mxu0 0.0
        %6567 = vmatpush2.msra.mxu0 0.0
        %6568 = vmatprep.subr.mxu0 0.0
        %6569 = vmatpush2.msra.mxu0 0.0
        %6570 = vmatprep.subr.mxu0 0.0
        %6571 = vmatpush2.msra.mxu0 0.0
        %6572 = vmatprep.subr.mxu0 0.0
        %6573 = vmatpush2.msra.mxu0 0.0
        %6574 = vmatprep.mubr.f32.mxu0 0.0
        %6575 = vmatmul.mubr.f32.gmra.mxu0 %v6505
        %v6576 = vpop.f32.mrf.mxu0
        %v6577 = vadd.f32 0.0, %v6576
        %v6578 = vpop.f32.mrf.mxu0
        %6579 = vmatprep.mubr.f32.mxu0 0.0
        %6580 = vmatmul.mubr.f32.gmra.mxu0 %v6508
        %v6581 = vpop.f32.mrf.mxu0
        %v6582 = vadd.f32 0.0, %v6581
        %v6583 = vpop.f32.mrf.mxu0
        %6584 = vdwg.mxu0
        %v6586 = vsel %vm2431, %v5810, 0
        %v6589 = vsel %vm2431, %v5811, 0
        %6591 = vmatprep.subr.mxu0 0.0
        %6592 = vmatpush1.msra.mxu0 0.0
        %6593 = vmatprep.subr.mxu0 0.0
        %6594 = vmatpush1.msra.mxu0 0.0
        %6595 = vmatprep.subr.mxu0 0.0
        %6596 = vmatpush1.msra.mxu0 0.0
        %6597 = vmatprep.subr.mxu0 0.0
        %6598 = vmatpush1.msra.mxu0 0.0
        %6599 = vmatprep.subr.mxu0 0.0
        %6600 = vmatpush1.msra.mxu0 0.0
        %6601 = vmatprep.subr.mxu0 0.0
        %6602 = vmatpush1.msra.mxu0 0.0
        %6603 = vmatprep.subr.mxu0 0.0
        %6604 = vmatpush1.msra.mxu0 0.0
        %6605 = vmatprep.subr.mxu0 0.0
        %6606 = vmatpush1.msra.mxu0 0.0
        %6607 = vmatprep.subr.mxu0 0.0
        %6608 = vmatpush1.msra.mxu0 0.0
        %6609 = vmatprep.subr.mxu0 0.0
        %6610 = vmatpush1.msra.mxu0 0.0
        %6611 = vmatprep.subr.mxu0 0.0
        %6612 = vmatpush1.msra.mxu0 0.0
        %6613 = vmatprep.subr.mxu0 0.0
        %6614 = vmatpush1.msra.mxu0 0.0
        %6615 = vmatprep.subr.mxu0 0.0
        %6616 = vmatpush1.msra.mxu0 0.0
        %6617 = vmatprep.subr.mxu0 0.0
        %6618 = vmatpush1.msra.mxu0 0.0
        %6619 = vmatprep.subr.mxu0 0.0
        %6620 = vmatpush1.msra.mxu0 %v2294
        %6621 = vmatprep.subr.mxu0 0.0
        %6622 = vmatpush1.msra.mxu0 %v2292
        %6623 = vmatprep.subr.mxu0 0.0
        %6624 = vmatpush2.msra.mxu0 0.0
        %6625 = vmatprep.subr.mxu0 0.0
        %6626 = vmatpush2.msra.mxu0 0.0
        %6627 = vmatprep.subr.mxu0 0.0
        %6628 = vmatpush2.msra.mxu0 0.0
        %6629 = vmatprep.subr.mxu0 0.0
        %6630 = vmatpush2.msra.mxu0 0.0
        %6631 = vmatprep.subr.mxu0 0.0
        %6632 = vmatpush2.msra.mxu0 0.0
        %6633 = vmatprep.subr.mxu0 0.0
        %6634 = vmatpush2.msra.mxu0 0.0
        %6635 = vmatprep.subr.mxu0 0.0
        %6636 = vmatpush2.msra.mxu0 0.0
        %6637 = vmatprep.subr.mxu0 0.0
        %6638 = vmatpush2.msra.mxu0 0.0
        %6639 = vmatprep.subr.mxu0 0.0
        %6640 = vmatpush2.msra.mxu0 0.0
        %6641 = vmatprep.subr.mxu0 0.0
        %6642 = vmatpush2.msra.mxu0 0.0
        %6643 = vmatprep.subr.mxu0 0.0
        %6644 = vmatpush2.msra.mxu0 0.0
        %6645 = vmatprep.subr.mxu0 0.0
        %6646 = vmatpush2.msra.mxu0 0.0
        %6647 = vmatprep.subr.mxu0 0.0
        %6648 = vmatpush2.msra.mxu0 0.0
        %6649 = vmatprep.subr.mxu0 0.0
        %6650 = vmatpush2.msra.mxu0 0.0
        %6651 = vmatprep.subr.mxu0 0.0
        %6652 = vmatpush2.msra.mxu0 0.0
        %6653 = vmatprep.subr.mxu0 0.0
        %6654 = vmatpush2.msra.mxu0 0.0
        %6655 = vmatprep.mubr.f32.mxu0 0.0
        %6656 = vmatmul.mubr.f32.gmra.mxu0 %v6586
        %v6657 = vpop.f32.mrf.mxu0
        %v6658 = vadd.f32 0.0, %v6657
        %v6659 = vpop.f32.mrf.mxu0
        %6660 = vmatprep.mubr.f32.mxu0 0.0
        %6661 = vmatmul.mubr.f32.gmra.mxu0 %v6589
        %v6662 = vpop.f32.mrf.mxu0
        %v6663 = vadd.f32 0.0, %v6662
        %v6664 = vpop.f32.mrf.mxu0
        %6665 = vdwg.mxu0
        %v6667 = vsel %vm2431, %v5812, 0
        %v6670 = vsel %vm2431, %v5813, 0
        %6672 = vmatprep.subr.mxu0 0.0
        %6673 = vmatpush1.msra.mxu0 0.0
        %6674 = vmatprep.subr.mxu0 0.0
        %6675 = vmatpush1.msra.mxu0 0.0
        %6676 = vmatprep.subr.mxu0 0.0
        %6677 = vmatpush1.msra.mxu0 0.0
        %6678 = vmatprep.subr.mxu0 0.0
        %6679 = vmatpush1.msra.mxu0 0.0
        %6680 = vmatprep.subr.mxu0 0.0
        %6681 = vmatpush1.msra.mxu0 0.0
        %6682 = vmatprep.subr.mxu0 0.0
        %6683 = vmatpush1.msra.mxu0 0.0
        %6684 = vmatprep.subr.mxu0 0.0
        %6685 = vmatpush1.msra.mxu0 0.0
        %6686 = vmatprep.subr.mxu0 0.0
        %6687 = vmatpush1.msra.mxu0 0.0
        %6688 = vmatprep.subr.mxu0 0.0
        %6689 = vmatpush1.msra.mxu0 0.0
        %6690 = vmatprep.subr.mxu0 0.0
        %6691 = vmatpush1.msra.mxu0 0.0
        %6692 = vmatprep.subr.mxu0 0.0
        %6693 = vmatpush1.msra.mxu0 0.0
        %6694 = vmatprep.subr.mxu0 0.0
        %6695 = vmatpush1.msra.mxu0 0.0
        %6696 = vmatprep.subr.mxu0 0.0
        %6697 = vmatpush1.msra.mxu0 0.0
        %6698 = vmatprep.subr.mxu0 0.0
        %6699 = vmatpush1.msra.mxu0 0.0
        %6700 = vmatprep.subr.mxu0 0.0
        %6701 = vmatpush1.msra.mxu0 %v2298
        %6702 = vmatprep.subr.mxu0 0.0
        %6703 = vmatpush1.msra.mxu0 %v2296
        %6704 = vmatprep.subr.mxu0 0.0
        %6705 = vmatpush2.msra.mxu0 0.0
        %6706 = vmatprep.subr.mxu0 0.0
        %6707 = vmatpush2.msra.mxu0 0.0
        %6708 = vmatprep.subr.mxu0 0.0
        %6709 = vmatpush2.msra.mxu0 0.0
        %6710 = vmatprep.subr.mxu0 0.0
        %6711 = vmatpush2.msra.mxu0 0.0
        %6712 = vmatprep.subr.mxu0 0.0
        %6713 = vmatpush2.msra.mxu0 0.0
        %6714 = vmatprep.subr.mxu0 0.0
        %6715 = vmatpush2.msra.mxu0 0.0
        %6716 = vmatprep.subr.mxu0 0.0
        %6717 = vmatpush2.msra.mxu0 0.0
        %6718 = vmatprep.subr.mxu0 0.0
        %6719 = vmatpush2.msra.mxu0 0.0
        %6720 = vmatprep.subr.mxu0 0.0
        %6721 = vmatpush2.msra.mxu0 0.0
        %6722 = vmatprep.subr.mxu0 0.0
        %6723 = vmatpush2.msra.mxu0 0.0
        %6724 = vmatprep.subr.mxu0 0.0
        %6725 = vmatpush2.msra.mxu0 0.0
        %6726 = vmatprep.subr.mxu0 0.0
        %6727 = vmatpush2.msra.mxu0 0.0
        %6728 = vmatprep.subr.mxu0 0.0
        %6729 = vmatpush2.msra.mxu0 0.0
        %6730 = vmatprep.subr.mxu0 0.0
        %6731 = vmatpush2.msra.mxu0 0.0
        %6732 = vmatprep.subr.mxu0 0.0
        %6733 = vmatpush2.msra.mxu0 0.0
        %6734 = vmatprep.subr.mxu0 0.0
        %6735 = vmatpush2.msra.mxu0 0.0
        %6736 = vmatprep.mubr.f32.mxu0 0.0
        %6737 = vmatmul.mubr.f32.gmra.mxu0 %v6667
        %v6738 = vpop.f32.mrf.mxu0
        %v6739 = vadd.f32 0.0, %v6738
        %v6740 = vpop.f32.mrf.mxu0
        %6741 = vmatprep.mubr.f32.mxu0 0.0
        %6742 = vmatmul.mubr.f32.gmra.mxu0 %v6670
        %v6743 = vpop.f32.mrf.mxu0
        %v6744 = vadd.f32 0.0, %v6743
        %v6745 = vpop.f32.mrf.mxu0
        %6746 = vdwg.mxu0
        %v6748 = vsel %vm2431, %v5814, 0
        %v6751 = vsel %vm2431, %v5815, 0
        %6753 = vmatprep.subr.mxu0 0.0
        %6754 = vmatpush1.msra.mxu0 0.0
        %6755 = vmatprep.subr.mxu0 0.0
        %6756 = vmatpush1.msra.mxu0 0.0
        %6757 = vmatprep.subr.mxu0 0.0
        %6758 = vmatpush1.msra.mxu0 0.0
        %6759 = vmatprep.subr.mxu0 0.0
        %6760 = vmatpush1.msra.mxu0 0.0
        %6761 = vmatprep.subr.mxu0 0.0
        %6762 = vmatpush1.msra.mxu0 0.0
        %6763 = vmatprep.subr.mxu0 0.0
        %6764 = vmatpush1.msra.mxu0 0.0
        %6765 = vmatprep.subr.mxu0 0.0
        %6766 = vmatpush1.msra.mxu0 0.0
        %6767 = vmatprep.subr.mxu0 0.0
        %6768 = vmatpush1.msra.mxu0 0.0
        %6769 = vmatprep.subr.mxu0 0.0
        %6770 = vmatpush1.msra.mxu0 0.0
        %6771 = vmatprep.subr.mxu0 0.0
        %6772 = vmatpush1.msra.mxu0 0.0
        %6773 = vmatprep.subr.mxu0 0.0
        %6774 = vmatpush1.msra.mxu0 0.0
        %6775 = vmatprep.subr.mxu0 0.0
        %6776 = vmatpush1.msra.mxu0 0.0
        %6777 = vmatprep.subr.mxu0 0.0
        %6778 = vmatpush1.msra.mxu0 0.0
        %6779 = vmatprep.subr.mxu0 0.0
        %6780 = vmatpush1.msra.mxu0 0.0
        %6781 = vmatprep.subr.mxu0 0.0
        %6782 = vmatpush1.msra.mxu0 %v2302
        %6783 = vmatprep.subr.mxu0 0.0
        %6784 = vmatpush1.msra.mxu0 %v2300
        %6785 = vmatprep.subr.mxu0 0.0
        %6786 = vmatpush2.msra.mxu0 0.0
        %6787 = vmatprep.subr.mxu0 0.0
        %6788 = vmatpush2.msra.mxu0 0.0
        %6789 = vmatprep.subr.mxu0 0.0
        %6790 = vmatpush2.msra.mxu0 0.0
        %6791 = vmatprep.subr.mxu0 0.0
        %6792 = vmatpush2.msra.mxu0 0.0
        %6793 = vmatprep.subr.mxu0 0.0
        %6794 = vmatpush2.msra.mxu0 0.0
        %6795 = vmatprep.subr.mxu0 0.0
        %6796 = vmatpush2.msra.mxu0 0.0
        %6797 = vmatprep.subr.mxu0 0.0
        %6798 = vmatpush2.msra.mxu0 0.0
        %6799 = vmatprep.subr.mxu0 0.0
        %6800 = vmatpush2.msra.mxu0 0.0
        %6801 = vmatprep.subr.mxu0 0.0
        %6802 = vmatpush2.msra.mxu0 0.0
        %6803 = vmatprep.subr.mxu0 0.0
        %6804 = vmatpush2.msra.mxu0 0.0
        %6805 = vmatprep.subr.mxu0 0.0
        %6806 = vmatpush2.msra.mxu0 0.0
        %6807 = vmatprep.subr.mxu0 0.0
        %6808 = vmatpush2.msra.mxu0 0.0
        %6809 = vmatprep.subr.mxu0 0.0
        %6810 = vmatpush2.msra.mxu0 0.0
        %6811 = vmatprep.subr.mxu0 0.0
        %6812 = vmatpush2.msra.mxu0 0.0
        %6813 = vmatprep.subr.mxu0 0.0
        %6814 = vmatpush2.msra.mxu0 0.0
        %6815 = vmatprep.subr.mxu0 0.0
        %6816 = vmatpush2.msra.mxu0 0.0
        %6817 = vmatprep.mubr.f32.mxu0 0.0
        %6818 = vmatmul.mubr.f32.gmra.mxu0 %v6748
        %v6819 = vpop.f32.mrf.mxu0
        %v6820 = vadd.f32 0.0, %v6819
        %v6821 = vpop.f32.mrf.mxu0
        %6822 = vmatprep.mubr.f32.mxu0 0.0
        %6823 = vmatmul.mubr.f32.gmra.mxu0 %v6751
        %v6824 = vpop.f32.mrf.mxu0
        %v6825 = vadd.f32 0.0, %v6824
        %v6826 = vpop.f32.mrf.mxu0
        %6827 = vdwg.mxu0
        %v6829 = vsel %vm2431, %v5816, 0
        %v6832 = vsel %vm2431, %v5817, 0
        %6834 = vmatprep.subr.mxu0 0.0
        %6835 = vmatpush1.msra.mxu0 0.0
        %6836 = vmatprep.subr.mxu0 0.0
        %6837 = vmatpush1.msra.mxu0 0.0
        %6838 = vmatprep.subr.mxu0 0.0
        %6839 = vmatpush1.msra.mxu0 0.0
        %6840 = vmatprep.subr.mxu0 0.0
        %6841 = vmatpush1.msra.mxu0 0.0
        %6842 = vmatprep.subr.mxu0 0.0
        %6843 = vmatpush1.msra.mxu0 0.0
        %6844 = vmatprep.subr.mxu0 0.0
        %6845 = vmatpush1.msra.mxu0 0.0
        %6846 = vmatprep.subr.mxu0 0.0
        %6847 = vmatpush1.msra.mxu0 0.0
        %6848 = vmatprep.subr.mxu0 0.0
        %6849 = vmatpush1.msra.mxu0 0.0
        %6850 = vmatprep.subr.mxu0 0.0
        %6851 = vmatpush1.msra.mxu0 0.0
        %6852 = vmatprep.subr.mxu0 0.0
        %6853 = vmatpush1.msra.mxu0 0.0
        %6854 = vmatprep.subr.mxu0 0.0
        %6855 = vmatpush1.msra.mxu0 0.0
        %6856 = vmatprep.subr.mxu0 0.0
        %6857 = vmatpush1.msra.mxu0 0.0
        %6858 = vmatprep.subr.mxu0 0.0
        %6859 = vmatpush1.msra.mxu0 0.0
        %6860 = vmatprep.subr.mxu0 0.0
        %6861 = vmatpush1.msra.mxu0 0.0
        %6862 = vmatprep.subr.mxu0 0.0
        %6863 = vmatpush1.msra.mxu0 %v2306
        %6864 = vmatprep.subr.mxu0 0.0
        %6865 = vmatpush1.msra.mxu0 %v2304
        %6866 = vmatprep.subr.mxu0 0.0
        %6867 = vmatpush2.msra.mxu0 0.0
        %6868 = vmatprep.subr.mxu0 0.0
        %6869 = vmatpush2.msra.mxu0 0.0
        %6870 = vmatprep.subr.mxu0 0.0
        %6871 = vmatpush2.msra.mxu0 0.0
        %6872 = vmatprep.subr.mxu0 0.0
        %6873 = vmatpush2.msra.mxu0 0.0
        %6874 = vmatprep.subr.mxu0 0.0
        %6875 = vmatpush2.msra.mxu0 0.0
        %6876 = vmatprep.subr.mxu0 0.0
        %6877 = vmatpush2.msra.mxu0 0.0
        %6878 = vmatprep.subr.mxu0 0.0
        %6879 = vmatpush2.msra.mxu0 0.0
        %6880 = vmatprep.subr.mxu0 0.0
        %6881 = vmatpush2.msra.mxu0 0.0
        %6882 = vmatprep.subr.mxu0 0.0
        %6883 = vmatpush2.msra.mxu0 0.0
        %6884 = vmatprep.subr.mxu0 0.0
        %6885 = vmatpush2.msra.mxu0 0.0
        %6886 = vmatprep.subr.mxu0 0.0
        %6887 = vmatpush2.msra.mxu0 0.0
        %6888 = vmatprep.subr.mxu0 0.0
        %6889 = vmatpush2.msra.mxu0 0.0
        %6890 = vmatprep.subr.mxu0 0.0
        %6891 = vmatpush2.msra.mxu0 0.0
        %6892 = vmatprep.subr.mxu0 0.0
        %6893 = vmatpush2.msra.mxu0 0.0
        %6894 = vmatprep.subr.mxu0 0.0
        %6895 = vmatpush2.msra.mxu0 0.0
        %6896 = vmatprep.subr.mxu0 0.0
        %6897 = vmatpush2.msra.mxu0 0.0
        %6898 = vmatprep.mubr.f32.mxu0 0.0
        %6899 = vmatmul.mubr.f32.gmra.mxu0 %v6829
        %v6900 = vpop.f32.mrf.mxu0
        %v6901 = vadd.f32 0.0, %v6900
        %v6902 = vpop.f32.mrf.mxu0
        %6903 = vmatprep.mubr.f32.mxu0 0.0
        %6904 = vmatmul.mubr.f32.gmra.mxu0 %v6832
        %v6905 = vpop.f32.mrf.mxu0
        %v6906 = vadd.f32 0.0, %v6905
        %v6907 = vpop.f32.mrf.mxu0
        %6908 = vdwg.mxu0
        %v6910 = vsel %vm2431, %v5818, 0
        %v6913 = vsel %vm2431, %v5819, 0
        %6915 = vmatprep.subr.mxu0 0.0
        %6916 = vmatpush1.msra.mxu0 0.0
        %6917 = vmatprep.subr.mxu0 0.0
        %6918 = vmatpush1.msra.mxu0 0.0
        %6919 = vmatprep.subr.mxu0 0.0
        %6920 = vmatpush1.msra.mxu0 0.0
        %6921 = vmatprep.subr.mxu0 0.0
        %6922 = vmatpush1.msra.mxu0 0.0
        %6923 = vmatprep.subr.mxu0 0.0
        %6924 = vmatpush1.msra.mxu0 0.0
        %6925 = vmatprep.subr.mxu0 0.0
        %6926 = vmatpush1.msra.mxu0 0.0
        %6927 = vmatprep.subr.mxu0 0.0
        %6928 = vmatpush1.msra.mxu0 0.0
        %6929 = vmatprep.subr.mxu0 0.0
        %6930 = vmatpush1.msra.mxu0 0.0
        %6931 = vmatprep.subr.mxu0 0.0
        %6932 = vmatpush1.msra.mxu0 0.0
        %6933 = vmatprep.subr.mxu0 0.0
        %6934 = vmatpush1.msra.mxu0 0.0
        %6935 = vmatprep.subr.mxu0 0.0
        %6936 = vmatpush1.msra.mxu0 0.0
        %6937 = vmatprep.subr.mxu0 0.0
        %6938 = vmatpush1.msra.mxu0 0.0
        %6939 = vmatprep.subr.mxu0 0.0
        %6940 = vmatpush1.msra.mxu0 0.0
        %6941 = vmatprep.subr.mxu0 0.0
        %6942 = vmatpush1.msra.mxu0 0.0
        %6943 = vmatprep.subr.mxu0 0.0
        %6944 = vmatpush1.msra.mxu0 %v2310
        %6945 = vmatprep.subr.mxu0 0.0
        %6946 = vmatpush1.msra.mxu0 %v2308
        %6947 = vmatprep.subr.mxu0 0.0
        %6948 = vmatpush2.msra.mxu0 0.0
        %6949 = vmatprep.subr.mxu0 0.0
        %6950 = vmatpush2.msra.mxu0 0.0
        %6951 = vmatprep.subr.mxu0 0.0
        %6952 = vmatpush2.msra.mxu0 0.0
        %6953 = vmatprep.subr.mxu0 0.0
        %6954 = vmatpush2.msra.mxu0 0.0
        %6955 = vmatprep.subr.mxu0 0.0
        %6956 = vmatpush2.msra.mxu0 0.0
        %6957 = vmatprep.subr.mxu0 0.0
        %6958 = vmatpush2.msra.mxu0 0.0
        %6959 = vmatprep.subr.mxu0 0.0
        %6960 = vmatpush2.msra.mxu0 0.0
        %6961 = vmatprep.subr.mxu0 0.0
        %6962 = vmatpush2.msra.mxu0 0.0
        %6963 = vmatprep.subr.mxu0 0.0
        %6964 = vmatpush2.msra.mxu0 0.0
        %6965 = vmatprep.subr.mxu0 0.0
        %6966 = vmatpush2.msra.mxu0 0.0
        %6967 = vmatprep.subr.mxu0 0.0
        %6968 = vmatpush2.msra.mxu0 0.0
        %6969 = vmatprep.subr.mxu0 0.0
        %6970 = vmatpush2.msra.mxu0 0.0
        %6971 = vmatprep.subr.mxu0 0.0
        %6972 = vmatpush2.msra.mxu0 0.0
        %6973 = vmatprep.subr.mxu0 0.0
        %6974 = vmatpush2.msra.mxu0 0.0
        %6975 = vmatprep.subr.mxu0 0.0
        %6976 = vmatpush2.msra.mxu0 0.0
        %6977 = vmatprep.subr.mxu0 0.0
        %6978 = vmatpush2.msra.mxu0 0.0
        %6979 = vmatprep.mubr.f32.mxu0 0.0
        %6980 = vmatmul.mubr.f32.gmra.mxu0 %v6910
        %v6981 = vpop.f32.mrf.mxu0
        %v6982 = vadd.f32 0.0, %v6981
        %v6983 = vpop.f32.mrf.mxu0
        %6984 = vmatprep.mubr.f32.mxu0 0.0
        %6985 = vmatmul.mubr.f32.gmra.mxu0 %v6913
        %v6986 = vpop.f32.mrf.mxu0
        %v6987 = vadd.f32 0.0, %v6986
        %v6988 = vpop.f32.mrf.mxu0
        %6989 = vdwg.mxu0
        %v6991 = vsel %vm2431, %v5820, 0
        %v6994 = vsel %vm2431, %v5821, 0
        %6996 = vmatprep.subr.mxu0 0.0
        %6997 = vmatpush1.msra.mxu0 0.0
        %6998 = vmatprep.subr.mxu0 0.0
        %6999 = vmatpush1.msra.mxu0 0.0
        %7000 = vmatprep.subr.mxu0 0.0
        %7001 = vmatpush1.msra.mxu0 0.0
        %7002 = vmatprep.subr.mxu0 0.0
        %7003 = vmatpush1.msra.mxu0 0.0
        %7004 = vmatprep.subr.mxu0 0.0
        %7005 = vmatpush1.msra.mxu0 0.0
        %7006 = vmatprep.subr.mxu0 0.0
        %7007 = vmatpush1.msra.mxu0 0.0
        %7008 = vmatprep.subr.mxu0 0.0
        %7009 = vmatpush1.msra.mxu0 0.0
        %7010 = vmatprep.subr.mxu0 0.0
        %7011 = vmatpush1.msra.mxu0 0.0
        %7012 = vmatprep.subr.mxu0 0.0
        %7013 = vmatpush1.msra.mxu0 0.0
        %7014 = vmatprep.subr.mxu0 0.0
        %7015 = vmatpush1.msra.mxu0 0.0
        %7016 = vmatprep.subr.mxu0 0.0
        %7017 = vmatpush1.msra.mxu0 0.0
        %7018 = vmatprep.subr.mxu0 0.0
        %7019 = vmatpush1.msra.mxu0 0.0
        %7020 = vmatprep.subr.mxu0 0.0
        %7021 = vmatpush1.msra.mxu0 0.0
        %7022 = vmatprep.subr.mxu0 0.0
        %7023 = vmatpush1.msra.mxu0 0.0
        %7024 = vmatprep.subr.mxu0 0.0
        %7025 = vmatpush1.msra.mxu0 %v2314
        %7026 = vmatprep.subr.mxu0 0.0
        %7027 = vmatpush1.msra.mxu0 %v2312
        %7028 = vmatprep.subr.mxu0 0.0
        %7029 = vmatpush2.msra.mxu0 0.0
        %7030 = vmatprep.subr.mxu0 0.0
        %7031 = vmatpush2.msra.mxu0 0.0
        %7032 = vmatprep.subr.mxu0 0.0
        %7033 = vmatpush2.msra.mxu0 0.0
        %7034 = vmatprep.subr.mxu0 0.0
        %7035 = vmatpush2.msra.mxu0 0.0
        %7036 = vmatprep.subr.mxu0 0.0
        %7037 = vmatpush2.msra.mxu0 0.0
        %7038 = vmatprep.subr.mxu0 0.0
        %7039 = vmatpush2.msra.mxu0 0.0
        %7040 = vmatprep.subr.mxu0 0.0
        %7041 = vmatpush2.msra.mxu0 0.0
        %7042 = vmatprep.subr.mxu0 0.0
        %7043 = vmatpush2.msra.mxu0 0.0
        %7044 = vmatprep.subr.mxu0 0.0
        %7045 = vmatpush2.msra.mxu0 0.0
        %7046 = vmatprep.subr.mxu0 0.0
        %7047 = vmatpush2.msra.mxu0 0.0
        %7048 = vmatprep.subr.mxu0 0.0
        %7049 = vmatpush2.msra.mxu0 0.0
        %7050 = vmatprep.subr.mxu0 0.0
        %7051 = vmatpush2.msra.mxu0 0.0
        %7052 = vmatprep.subr.mxu0 0.0
        %7053 = vmatpush2.msra.mxu0 0.0
        %7054 = vmatprep.subr.mxu0 0.0
        %7055 = vmatpush2.msra.mxu0 0.0
        %7056 = vmatprep.subr.mxu0 0.0
        %7057 = vmatpush2.msra.mxu0 0.0
        %7058 = vmatprep.subr.mxu0 0.0
        %7059 = vmatpush2.msra.mxu0 0.0
        %7060 = vmatprep.mubr.f32.mxu0 0.0
        %7061 = vmatmul.mubr.f32.gmra.mxu0 %v6991
        %v7062 = vpop.f32.mrf.mxu0
        %v7063 = vadd.f32 0.0, %v7062
        %v7064 = vpop.f32.mrf.mxu0
        %7065 = vmatprep.mubr.f32.mxu0 0.0
        %7066 = vmatmul.mubr.f32.gmra.mxu0 %v6994
        %v7067 = vpop.f32.mrf.mxu0
        %v7068 = vadd.f32 0.0, %v7067
        %v7069 = vpop.f32.mrf.mxu0
        %7070 = vdwg.mxu0
        %v7072 = vsel %vm2431, %v5822, 0
        %v7075 = vsel %vm2431, %v5823, 0
        %7077 = vmatprep.subr.mxu0 0.0
        %7078 = vmatpush1.msra.mxu0 0.0
        %7079 = vmatprep.subr.mxu0 0.0
        %7080 = vmatpush1.msra.mxu0 0.0
        %7081 = vmatprep.subr.mxu0 0.0
        %7082 = vmatpush1.msra.mxu0 0.0
        %7083 = vmatprep.subr.mxu0 0.0
        %7084 = vmatpush1.msra.mxu0 0.0
        %7085 = vmatprep.subr.mxu0 0.0
        %7086 = vmatpush1.msra.mxu0 0.0
        %7087 = vmatprep.subr.mxu0 0.0
        %7088 = vmatpush1.msra.mxu0 0.0
        %7089 = vmatprep.subr.mxu0 0.0
        %7090 = vmatpush1.msra.mxu0 0.0
        %7091 = vmatprep.subr.mxu0 0.0
        %7092 = vmatpush1.msra.mxu0 0.0
        %7093 = vmatprep.subr.mxu0 0.0
        %7094 = vmatpush1.msra.mxu0 0.0
        %7095 = vmatprep.subr.mxu0 0.0
        %7096 = vmatpush1.msra.mxu0 0.0
        %7097 = vmatprep.subr.mxu0 0.0
        %7098 = vmatpush1.msra.mxu0 0.0
        %7099 = vmatprep.subr.mxu0 0.0
        %7100 = vmatpush1.msra.mxu0 0.0
        %7101 = vmatprep.subr.mxu0 0.0
        %7102 = vmatpush1.msra.mxu0 0.0
        %7103 = vmatprep.subr.mxu0 0.0
        %7104 = vmatpush1.msra.mxu0 0.0
        %7105 = vmatprep.subr.mxu0 0.0
        %7106 = vmatpush1.msra.mxu0 %v2318
        %7107 = vmatprep.subr.mxu0 0.0
        %7108 = vmatpush1.msra.mxu0 %v2316
        %7109 = vmatprep.subr.mxu0 0.0
        %7110 = vmatpush2.msra.mxu0 0.0
        %7111 = vmatprep.subr.mxu0 0.0
        %7112 = vmatpush2.msra.mxu0 0.0
        %7113 = vmatprep.subr.mxu0 0.0
        %7114 = vmatpush2.msra.mxu0 0.0
        %7115 = vmatprep.subr.mxu0 0.0
        %7116 = vmatpush2.msra.mxu0 0.0
        %7117 = vmatprep.subr.mxu0 0.0
        %7118 = vmatpush2.msra.mxu0 0.0
        %7119 = vmatprep.subr.mxu0 0.0
        %7120 = vmatpush2.msra.mxu0 0.0
        %7121 = vmatprep.subr.mxu0 0.0
        %7122 = vmatpush2.msra.mxu0 0.0
        %7123 = vmatprep.subr.mxu0 0.0
        %7124 = vmatpush2.msra.mxu0 0.0
        %7125 = vmatprep.subr.mxu0 0.0
        %7126 = vmatpush2.msra.mxu0 0.0
        %7127 = vmatprep.subr.mxu0 0.0
        %7128 = vmatpush2.msra.mxu0 0.0
        %7129 = vmatprep.subr.mxu0 0.0
        %7130 = vmatpush2.msra.mxu0 0.0
        %7131 = vmatprep.subr.mxu0 0.0
        %7132 = vmatpush2.msra.mxu0 0.0
        %7133 = vmatprep.subr.mxu0 0.0
        %7134 = vmatpush2.msra.mxu0 0.0
        %7135 = vmatprep.subr.mxu0 0.0
        %7136 = vmatpush2.msra.mxu0 0.0
        %7137 = vmatprep.subr.mxu0 0.0
        %7138 = vmatpush2.msra.mxu0 0.0
        %7139 = vmatprep.subr.mxu0 0.0
        %7140 = vmatpush2.msra.mxu0 0.0
        %7141 = vmatprep.mubr.f32.mxu0 0.0
        %7142 = vmatmul.mubr.f32.gmra.mxu0 %v7072
        %v7143 = vpop.f32.mrf.mxu0
        %v7144 = vadd.f32 0.0, %v7143
        %v7145 = vpop.f32.mrf.mxu0
        %7146 = vmatprep.mubr.f32.mxu0 0.0
        %7147 = vmatmul.mubr.f32.gmra.mxu0 %v7075
        %v7148 = vpop.f32.mrf.mxu0
        %v7149 = vadd.f32 0.0, %v7148
        %v7150 = vpop.f32.mrf.mxu0
        %7151 = vdwg.mxu0
        %v7153 = vsel %vm2431, %v5824, 0
        %v7156 = vsel %vm2431, %v5825, 0
        %7158 = vmatprep.subr.mxu0 0.0
        %7159 = vmatpush1.msra.mxu0 0.0
        %7160 = vmatprep.subr.mxu0 0.0
        %7161 = vmatpush1.msra.mxu0 0.0
        %7162 = vmatprep.subr.mxu0 0.0
        %7163 = vmatpush1.msra.mxu0 0.0
        %7164 = vmatprep.subr.mxu0 0.0
        %7165 = vmatpush1.msra.mxu0 0.0
        %7166 = vmatprep.subr.mxu0 0.0
        %7167 = vmatpush1.msra.mxu0 0.0
        %7168 = vmatprep.subr.mxu0 0.0
        %7169 = vmatpush1.msra.mxu0 0.0
        %7170 = vmatprep.subr.mxu0 0.0
        %7171 = vmatpush1.msra.mxu0 0.0
        %7172 = vmatprep.subr.mxu0 0.0
        %7173 = vmatpush1.msra.mxu0 0.0
        %7174 = vmatprep.subr.mxu0 0.0
        %7175 = vmatpush1.msra.mxu0 0.0
        %7176 = vmatprep.subr.mxu0 0.0
        %7177 = vmatpush1.msra.mxu0 0.0
        %7178 = vmatprep.subr.mxu0 0.0
        %7179 = vmatpush1.msra.mxu0 0.0
        %7180 = vmatprep.subr.mxu0 0.0
        %7181 = vmatpush1.msra.mxu0 0.0
        %7182 = vmatprep.subr.mxu0 0.0
        %7183 = vmatpush1.msra.mxu0 0.0
        %7184 = vmatprep.subr.mxu0 0.0
        %7185 = vmatpush1.msra.mxu0 0.0
        %7186 = vmatprep.subr.mxu0 0.0
        %7187 = vmatpush1.msra.mxu0 %v2338
        %7188 = vmatprep.subr.mxu0 0.0
        %7189 = vmatpush1.msra.mxu0 %v2336
        %7190 = vmatprep.subr.mxu0 0.0
        %7191 = vmatpush2.msra.mxu0 0.0
        %7192 = vmatprep.subr.mxu0 0.0
        %7193 = vmatpush2.msra.mxu0 0.0
        %7194 = vmatprep.subr.mxu0 0.0
        %7195 = vmatpush2.msra.mxu0 0.0
        %7196 = vmatprep.subr.mxu0 0.0
        %7197 = vmatpush2.msra.mxu0 0.0
        %7198 = vmatprep.subr.mxu0 0.0
        %7199 = vmatpush2.msra.mxu0 0.0
        %7200 = vmatprep.subr.mxu0 0.0
        %7201 = vmatpush2.msra.mxu0 0.0
        %7202 = vmatprep.subr.mxu0 0.0
        %7203 = vmatpush2.msra.mxu0 0.0
        %7204 = vmatprep.subr.mxu0 0.0
        %7205 = vmatpush2.msra.mxu0 0.0
        %7206 = vmatprep.subr.mxu0 0.0
        %7207 = vmatpush2.msra.mxu0 0.0
        %7208 = vmatprep.subr.mxu0 0.0
        %7209 = vmatpush2.msra.mxu0 0.0
        %7210 = vmatprep.subr.mxu0 0.0
        %7211 = vmatpush2.msra.mxu0 0.0
        %7212 = vmatprep.subr.mxu0 0.0
        %7213 = vmatpush2.msra.mxu0 0.0
        %7214 = vmatprep.subr.mxu0 0.0
        %7215 = vmatpush2.msra.mxu0 0.0
        %7216 = vmatprep.subr.mxu0 0.0
        %7217 = vmatpush2.msra.mxu0 0.0
        %7218 = vmatprep.subr.mxu0 0.0
        %7219 = vmatpush2.msra.mxu0 0.0
        %7220 = vmatprep.subr.mxu0 0.0
        %7221 = vmatpush2.msra.mxu0 0.0
        %7222 = vmatprep.mubr.f32.mxu0 0.0
        %7223 = vmatmul.mubr.f32.gmra.mxu0 %v7153
        %v7224 = vpop.f32.mrf.mxu0
        %v7225 = vadd.f32 0.0, %v7224
        %v7226 = vpop.f32.mrf.mxu0
        %7227 = vmatprep.mubr.f32.mxu0 0.0
        %7228 = vmatmul.mubr.f32.gmra.mxu0 %v7156
        %v7229 = vpop.f32.mrf.mxu0
        %v7230 = vadd.f32 0.0, %v7229
        %v7231 = vpop.f32.mrf.mxu0
        %7232 = vdwg.mxu0
        %v7234 = vsel %vm2431, %v5826, 0
        %v7237 = vsel %vm2431, %v5827, 0
        %7239 = vmatprep.subr.mxu0 0.0
        %7240 = vmatpush1.msra.mxu0 0.0
        %7241 = vmatprep.subr.mxu0 0.0
        %7242 = vmatpush1.msra.mxu0 0.0
        %7243 = vmatprep.subr.mxu0 0.0
        %7244 = vmatpush1.msra.mxu0 0.0
        %7245 = vmatprep.subr.mxu0 0.0
        %7246 = vmatpush1.msra.mxu0 0.0
        %7247 = vmatprep.subr.mxu0 0.0
        %7248 = vmatpush1.msra.mxu0 0.0
        %7249 = vmatprep.subr.mxu0 0.0
        %7250 = vmatpush1.msra.mxu0 0.0
        %7251 = vmatprep.subr.mxu0 0.0
        %7252 = vmatpush1.msra.mxu0 0.0
        %7253 = vmatprep.subr.mxu0 0.0
        %7254 = vmatpush1.msra.mxu0 0.0
        %7255 = vmatprep.subr.mxu0 0.0
        %7256 = vmatpush1.msra.mxu0 0.0
        %7257 = vmatprep.subr.mxu0 0.0
        %7258 = vmatpush1.msra.mxu0 0.0
        %7259 = vmatprep.subr.mxu0 0.0
        %7260 = vmatpush1.msra.mxu0 0.0
        %7261 = vmatprep.subr.mxu0 0.0
        %7262 = vmatpush1.msra.mxu0 0.0
        %7263 = vmatprep.subr.mxu0 0.0
        %7264 = vmatpush1.msra.mxu0 0.0
        %7265 = vmatprep.subr.mxu0 0.0
        %7266 = vmatpush1.msra.mxu0 0.0
        %7267 = vmatprep.subr.mxu0 0.0
        %7268 = vmatpush1.msra.mxu0 %v2342
        %7269 = vmatprep.subr.mxu0 0.0
        %7270 = vmatpush1.msra.mxu0 %v2340
        %7271 = vmatprep.subr.mxu0 0.0
        %7272 = vmatpush2.msra.mxu0 0.0
        %7273 = vmatprep.subr.mxu0 0.0
        %7274 = vmatpush2.msra.mxu0 0.0
        %7275 = vmatprep.subr.mxu0 0.0
        %7276 = vmatpush2.msra.mxu0 0.0
        %7277 = vmatprep.subr.mxu0 0.0
        %7278 = vmatpush2.msra.mxu0 0.0
        %7279 = vmatprep.subr.mxu0 0.0
        %7280 = vmatpush2.msra.mxu0 0.0
        %7281 = vmatprep.subr.mxu0 0.0
        %7282 = vmatpush2.msra.mxu0 0.0
        %7283 = vmatprep.subr.mxu0 0.0
        %7284 = vmatpush2.msra.mxu0 0.0
        %7285 = vmatprep.subr.mxu0 0.0
        %7286 = vmatpush2.msra.mxu0 0.0
        %7287 = vmatprep.subr.mxu0 0.0
        %7288 = vmatpush2.msra.mxu0 0.0
        %7289 = vmatprep.subr.mxu0 0.0
        %7290 = vmatpush2.msra.mxu0 0.0
        %7291 = vmatprep.subr.mxu0 0.0
        %7292 = vmatpush2.msra.mxu0 0.0
        %7293 = vmatprep.subr.mxu0 0.0
        %7294 = vmatpush2.msra.mxu0 0.0
        %7295 = vmatprep.subr.mxu0 0.0
        %7296 = vmatpush2.msra.mxu0 0.0
        %7297 = vmatprep.subr.mxu0 0.0
        %7298 = vmatpush2.msra.mxu0 0.0
        %7299 = vmatprep.subr.mxu0 0.0
        %7300 = vmatpush2.msra.mxu0 0.0
        %7301 = vmatprep.subr.mxu0 0.0
        %7302 = vmatpush2.msra.mxu0 0.0
        %7303 = vmatprep.mubr.f32.mxu0 0.0
        %7304 = vmatmul.mubr.f32.gmra.mxu0 %v7234
        %v7305 = vpop.f32.mrf.mxu0
        %v7306 = vadd.f32 0.0, %v7305
        %v7307 = vpop.f32.mrf.mxu0
        %7308 = vmatprep.mubr.f32.mxu0 0.0
        %7309 = vmatmul.mubr.f32.gmra.mxu0 %v7237
        %v7310 = vpop.f32.mrf.mxu0
        %v7311 = vadd.f32 0.0, %v7310
        %v7312 = vpop.f32.mrf.mxu0
        %7313 = vdwg.mxu0
        %v7315 = vsel %vm2431, %v5828, 0
        %v7318 = vsel %vm2431, %v5829, 0
        %7320 = vmatprep.subr.mxu0 0.0
        %7321 = vmatpush1.msra.mxu0 0.0
        %7322 = vmatprep.subr.mxu0 0.0
        %7323 = vmatpush1.msra.mxu0 0.0
        %7324 = vmatprep.subr.mxu0 0.0
        %7325 = vmatpush1.msra.mxu0 0.0
        %7326 = vmatprep.subr.mxu0 0.0
        %7327 = vmatpush1.msra.mxu0 0.0
        %7328 = vmatprep.subr.mxu0 0.0
        %7329 = vmatpush1.msra.mxu0 0.0
        %7330 = vmatprep.subr.mxu0 0.0
        %7331 = vmatpush1.msra.mxu0 0.0
        %7332 = vmatprep.subr.mxu0 0.0
        %7333 = vmatpush1.msra.mxu0 0.0
        %7334 = vmatprep.subr.mxu0 0.0
        %7335 = vmatpush1.msra.mxu0 0.0
        %7336 = vmatprep.subr.mxu0 0.0
        %7337 = vmatpush1.msra.mxu0 0.0
        %7338 = vmatprep.subr.mxu0 0.0
        %7339 = vmatpush1.msra.mxu0 0.0
        %7340 = vmatprep.subr.mxu0 0.0
        %7341 = vmatpush1.msra.mxu0 0.0
        %7342 = vmatprep.subr.mxu0 0.0
        %7343 = vmatpush1.msra.mxu0 0.0
        %7344 = vmatprep.subr.mxu0 0.0
        %7345 = vmatpush1.msra.mxu0 0.0
        %7346 = vmatprep.subr.mxu0 0.0
        %7347 = vmatpush1.msra.mxu0 0.0
        %7348 = vmatprep.subr.mxu0 0.0
        %7349 = vmatpush1.msra.mxu0 %v2346
        %7350 = vmatprep.subr.mxu0 0.0
        %7351 = vmatpush1.msra.mxu0 %v2344
        %7352 = vmatprep.subr.mxu0 0.0
        %7353 = vmatpush2.msra.mxu0 0.0
        %7354 = vmatprep.subr.mxu0 0.0
        %7355 = vmatpush2.msra.mxu0 0.0
        %7356 = vmatprep.subr.mxu0 0.0
        %7357 = vmatpush2.msra.mxu0 0.0
        %7358 = vmatprep.subr.mxu0 0.0
        %7359 = vmatpush2.msra.mxu0 0.0
        %7360 = vmatprep.subr.mxu0 0.0
        %7361 = vmatpush2.msra.mxu0 0.0
        %7362 = vmatprep.subr.mxu0 0.0
        %7363 = vmatpush2.msra.mxu0 0.0
        %7364 = vmatprep.subr.mxu0 0.0
        %7365 = vmatpush2.msra.mxu0 0.0
        %7366 = vmatprep.subr.mxu0 0.0
        %7367 = vmatpush2.msra.mxu0 0.0
        %7368 = vmatprep.subr.mxu0 0.0
        %7369 = vmatpush2.msra.mxu0 0.0
        %7370 = vmatprep.subr.mxu0 0.0
        %7371 = vmatpush2.msra.mxu0 0.0
        %7372 = vmatprep.subr.mxu0 0.0
        %7373 = vmatpush2.msra.mxu0 0.0
        %7374 = vmatprep.subr.mxu0 0.0
        %7375 = vmatpush2.msra.mxu0 0.0
        %7376 = vmatprep.subr.mxu0 0.0
        %7377 = vmatpush2.msra.mxu0 0.0
        %7378 = vmatprep.subr.mxu0 0.0
        %7379 = vmatpush2.msra.mxu0 0.0
        %7380 = vmatprep.subr.mxu0 0.0
        %7381 = vmatpush2.msra.mxu0 0.0
        %7382 = vmatprep.subr.mxu0 0.0
        %7383 = vmatpush2.msra.mxu0 0.0
        %7384 = vmatprep.mubr.f32.mxu0 0.0
        %7385 = vmatmul.mubr.f32.gmra.mxu0 %v7315
        %v7386 = vpop.f32.mrf.mxu0
        %v7387 = vadd.f32 0.0, %v7386
        %v7388 = vpop.f32.mrf.mxu0
        %7389 = vmatprep.mubr.f32.mxu0 0.0
        %7390 = vmatmul.mubr.f32.gmra.mxu0 %v7318
        %v7391 = vpop.f32.mrf.mxu0
        %v7392 = vadd.f32 0.0, %v7391
        %v7393 = vpop.f32.mrf.mxu0
        %7394 = vdwg.mxu0
        %v7396 = vsel %vm2431, %v5830, 0
        %v7399 = vsel %vm2431, %v5831, 0
        %7401 = vmatprep.subr.mxu0 0.0
        %7402 = vmatpush1.msra.mxu0 0.0
        %7403 = vmatprep.subr.mxu0 0.0
        %7404 = vmatpush1.msra.mxu0 0.0
        %7405 = vmatprep.subr.mxu0 0.0
        %7406 = vmatpush1.msra.mxu0 0.0
        %7407 = vmatprep.subr.mxu0 0.0
        %7408 = vmatpush1.msra.mxu0 0.0
        %7409 = vmatprep.subr.mxu0 0.0
        %7410 = vmatpush1.msra.mxu0 0.0
        %7411 = vmatprep.subr.mxu0 0.0
        %7412 = vmatpush1.msra.mxu0 0.0
        %7413 = vmatprep.subr.mxu0 0.0
        %7414 = vmatpush1.msra.mxu0 0.0
        %7415 = vmatprep.subr.mxu0 0.0
        %7416 = vmatpush1.msra.mxu0 0.0
        %7417 = vmatprep.subr.mxu0 0.0
        %7418 = vmatpush1.msra.mxu0 0.0
        %7419 = vmatprep.subr.mxu0 0.0
        %7420 = vmatpush1.msra.mxu0 0.0
        %7421 = vmatprep.subr.mxu0 0.0
        %7422 = vmatpush1.msra.mxu0 0.0
        %7423 = vmatprep.subr.mxu0 0.0
        %7424 = vmatpush1.msra.mxu0 0.0
        %7425 = vmatprep.subr.mxu0 0.0
        %7426 = vmatpush1.msra.mxu0 0.0
        %7427 = vmatprep.subr.mxu0 0.0
        %7428 = vmatpush1.msra.mxu0 0.0
        %7429 = vmatprep.subr.mxu0 0.0
        %7430 = vmatpush1.msra.mxu0 %v2350
        %7431 = vmatprep.subr.mxu0 0.0
        %7432 = vmatpush1.msra.mxu0 %v2348
        %7433 = vmatprep.subr.mxu0 0.0
        %7434 = vmatpush2.msra.mxu0 0.0
        %7435 = vmatprep.subr.mxu0 0.0
        %7436 = vmatpush2.msra.mxu0 0.0
        %7437 = vmatprep.subr.mxu0 0.0
        %7438 = vmatpush2.msra.mxu0 0.0
        %7439 = vmatprep.subr.mxu0 0.0
        %7440 = vmatpush2.msra.mxu0 0.0
        %7441 = vmatprep.subr.mxu0 0.0
        %7442 = vmatpush2.msra.mxu0 0.0
        %7443 = vmatprep.subr.mxu0 0.0
        %7444 = vmatpush2.msra.mxu0 0.0
        %7445 = vmatprep.subr.mxu0 0.0
        %7446 = vmatpush2.msra.mxu0 0.0
        %7447 = vmatprep.subr.mxu0 0.0
        %7448 = vmatpush2.msra.mxu0 0.0
        %7449 = vmatprep.subr.mxu0 0.0
        %7450 = vmatpush2.msra.mxu0 0.0
        %7451 = vmatprep.subr.mxu0 0.0
        %7452 = vmatpush2.msra.mxu0 0.0
        %7453 = vmatprep.subr.mxu0 0.0
        %7454 = vmatpush2.msra.mxu0 0.0
        %7455 = vmatprep.subr.mxu0 0.0
        %7456 = vmatpush2.msra.mxu0 0.0
        %7457 = vmatprep.subr.mxu0 0.0
        %7458 = vmatpush2.msra.mxu0 0.0
        %7459 = vmatprep.subr.mxu0 0.0
        %7460 = vmatpush2.msra.mxu0 0.0
        %7461 = vmatprep.subr.mxu0 0.0
        %7462 = vmatpush2.msra.mxu0 0.0
        %7463 = vmatprep.subr.mxu0 0.0
        %7464 = vmatpush2.msra.mxu0 0.0
        %7465 = vmatprep.mubr.f32.mxu0 0.0
        %7466 = vmatmul.mubr.f32.gmra.mxu0 %v7396
        %v7467 = vpop.f32.mrf.mxu0
        %v7468 = vadd.f32 0.0, %v7467
        %v7469 = vpop.f32.mrf.mxu0
        %7470 = vmatprep.mubr.f32.mxu0 0.0
        %7471 = vmatmul.mubr.f32.gmra.mxu0 %v7399
        %v7472 = vpop.f32.mrf.mxu0
        %v7473 = vadd.f32 0.0, %v7472
        %v7474 = vpop.f32.mrf.mxu0
        %7475 = vdwg.mxu0
        %v7477 = vsel %vm2431, %v5832, 0
        %v7480 = vsel %vm2431, %v5833, 0
        %7482 = vmatprep.subr.mxu0 0.0
        %7483 = vmatpush1.msra.mxu0 0.0
        %7484 = vmatprep.subr.mxu0 0.0
        %7485 = vmatpush1.msra.mxu0 0.0
        %7486 = vmatprep.subr.mxu0 0.0
        %7487 = vmatpush1.msra.mxu0 0.0
        %7488 = vmatprep.subr.mxu0 0.0
        %7489 = vmatpush1.msra.mxu0 0.0
        %7490 = vmatprep.subr.mxu0 0.0
        %7491 = vmatpush1.msra.mxu0 0.0
        %7492 = vmatprep.subr.mxu0 0.0
        %7493 = vmatpush1.msra.mxu0 0.0
        %7494 = vmatprep.subr.mxu0 0.0
        %7495 = vmatpush1.msra.mxu0 0.0
        %7496 = vmatprep.subr.mxu0 0.0
        %7497 = vmatpush1.msra.mxu0 0.0
        %7498 = vmatprep.subr.mxu0 0.0
        %7499 = vmatpush1.msra.mxu0 0.0
        %7500 = vmatprep.subr.mxu0 0.0
        %7501 = vmatpush1.msra.mxu0 0.0
        %7502 = vmatprep.subr.mxu0 0.0
        %7503 = vmatpush1.msra.mxu0 0.0
        %7504 = vmatprep.subr.mxu0 0.0
        %7505 = vmatpush1.msra.mxu0 0.0
        %7506 = vmatprep.subr.mxu0 0.0
        %7507 = vmatpush1.msra.mxu0 0.0
        %7508 = vmatprep.subr.mxu0 0.0
        %7509 = vmatpush1.msra.mxu0 0.0
        %7510 = vmatprep.subr.mxu0 0.0
        %7511 = vmatpush1.msra.mxu0 %v2354
        %7512 = vmatprep.subr.mxu0 0.0
        %7513 = vmatpush1.msra.mxu0 %v2352
        %7514 = vmatprep.subr.mxu0 0.0
        %7515 = vmatpush2.msra.mxu0 0.0
        %7516 = vmatprep.subr.mxu0 0.0
        %7517 = vmatpush2.msra.mxu0 0.0
        %7518 = vmatprep.subr.mxu0 0.0
        %7519 = vmatpush2.msra.mxu0 0.0
        %7520 = vmatprep.subr.mxu0 0.0
        %7521 = vmatpush2.msra.mxu0 0.0
        %7522 = vmatprep.subr.mxu0 0.0
        %7523 = vmatpush2.msra.mxu0 0.0
        %7524 = vmatprep.subr.mxu0 0.0
        %7525 = vmatpush2.msra.mxu0 0.0
        %7526 = vmatprep.subr.mxu0 0.0
        %7527 = vmatpush2.msra.mxu0 0.0
        %7528 = vmatprep.subr.mxu0 0.0
        %7529 = vmatpush2.msra.mxu0 0.0
        %7530 = vmatprep.subr.mxu0 0.0
        %7531 = vmatpush2.msra.mxu0 0.0
        %7532 = vmatprep.subr.mxu0 0.0
        %7533 = vmatpush2.msra.mxu0 0.0
        %7534 = vmatprep.subr.mxu0 0.0
        %7535 = vmatpush2.msra.mxu0 0.0
        %7536 = vmatprep.subr.mxu0 0.0
        %7537 = vmatpush2.msra.mxu0 0.0
        %7538 = vmatprep.subr.mxu0 0.0
        %7539 = vmatpush2.msra.mxu0 0.0
        %7540 = vmatprep.subr.mxu0 0.0
        %7541 = vmatpush2.msra.mxu0 0.0
        %7542 = vmatprep.subr.mxu0 0.0
        %7543 = vmatpush2.msra.mxu0 0.0
        %7544 = vmatprep.subr.mxu0 0.0
        %7545 = vmatpush2.msra.mxu0 0.0
        %7546 = vmatprep.mubr.f32.mxu0 0.0
        %7547 = vmatmul.mubr.f32.gmra.mxu0 %v7477
        %v7548 = vpop.f32.mrf.mxu0
        %v7549 = vadd.f32 0.0, %v7548
        %v7550 = vpop.f32.mrf.mxu0
        %7551 = vmatprep.mubr.f32.mxu0 0.0
        %7552 = vmatmul.mubr.f32.gmra.mxu0 %v7480
        %v7553 = vpop.f32.mrf.mxu0
        %v7554 = vadd.f32 0.0, %v7553
        %v7555 = vpop.f32.mrf.mxu0
        %7556 = vdwg.mxu0
        %v7558 = vsel %vm2431, %v5834, 0
        %v7561 = vsel %vm2431, %v5835, 0
        %7563 = vmatprep.subr.mxu0 0.0
        %7564 = vmatpush1.msra.mxu0 0.0
        %7565 = vmatprep.subr.mxu0 0.0
        %7566 = vmatpush1.msra.mxu0 0.0
        %7567 = vmatprep.subr.mxu0 0.0
        %7568 = vmatpush1.msra.mxu0 0.0
        %7569 = vmatprep.subr.mxu0 0.0
        %7570 = vmatpush1.msra.mxu0 0.0
        %7571 = vmatprep.subr.mxu0 0.0
        %7572 = vmatpush1.msra.mxu0 0.0
        %7573 = vmatprep.subr.mxu0 0.0
        %7574 = vmatpush1.msra.mxu0 0.0
        %7575 = vmatprep.subr.mxu0 0.0
        %7576 = vmatpush1.msra.mxu0 0.0
        %7577 = vmatprep.subr.mxu0 0.0
        %7578 = vmatpush1.msra.mxu0 0.0
        %7579 = vmatprep.subr.mxu0 0.0
        %7580 = vmatpush1.msra.mxu0 0.0
        %7581 = vmatprep.subr.mxu0 0.0
        %7582 = vmatpush1.msra.mxu0 0.0
        %7583 = vmatprep.subr.mxu0 0.0
        %7584 = vmatpush1.msra.mxu0 0.0
        %7585 = vmatprep.subr.mxu0 0.0
        %7586 = vmatpush1.msra.mxu0 0.0
        %7587 = vmatprep.subr.mxu0 0.0
        %7588 = vmatpush1.msra.mxu0 0.0
        %7589 = vmatprep.subr.mxu0 0.0
        %7590 = vmatpush1.msra.mxu0 0.0
        %7591 = vmatprep.subr.mxu0 0.0
        %7592 = vmatpush1.msra.mxu0 %v2358
        %7593 = vmatprep.subr.mxu0 0.0
        %7594 = vmatpush1.msra.mxu0 %v2356
        %7595 = vmatprep.subr.mxu0 0.0
        %7596 = vmatpush2.msra.mxu0 0.0
        %7597 = vmatprep.subr.mxu0 0.0
        %7598 = vmatpush2.msra.mxu0 0.0
        %7599 = vmatprep.subr.mxu0 0.0
        %7600 = vmatpush2.msra.mxu0 0.0
        %7601 = vmatprep.subr.mxu0 0.0
        %7602 = vmatpush2.msra.mxu0 0.0
        %7603 = vmatprep.subr.mxu0 0.0
        %7604 = vmatpush2.msra.mxu0 0.0
        %7605 = vmatprep.subr.mxu0 0.0
        %7606 = vmatpush2.msra.mxu0 0.0
        %7607 = vmatprep.subr.mxu0 0.0
        %7608 = vmatpush2.msra.mxu0 0.0
        %7609 = vmatprep.subr.mxu0 0.0
        %7610 = vmatpush2.msra.mxu0 0.0
        %7611 = vmatprep.subr.mxu0 0.0
        %7612 = vmatpush2.msra.mxu0 0.0
        %7613 = vmatprep.subr.mxu0 0.0
        %7614 = vmatpush2.msra.mxu0 0.0
        %7615 = vmatprep.subr.mxu0 0.0
        %7616 = vmatpush2.msra.mxu0 0.0
        %7617 = vmatprep.subr.mxu0 0.0
        %7618 = vmatpush2.msra.mxu0 0.0
        %7619 = vmatprep.subr.mxu0 0.0
        %7620 = vmatpush2.msra.mxu0 0.0
        %7621 = vmatprep.subr.mxu0 0.0
        %7622 = vmatpush2.msra.mxu0 0.0
        %7623 = vmatprep.subr.mxu0 0.0
        %7624 = vmatpush2.msra.mxu0 0.0
        %7625 = vmatprep.subr.mxu0 0.0
        %7626 = vmatpush2.msra.mxu0 0.0
        %7627 = vmatprep.mubr.f32.mxu0 0.0
        %7628 = vmatmul.mubr.f32.gmra.mxu0 %v7558
        %v7629 = vpop.f32.mrf.mxu0
        %v7630 = vadd.f32 0.0, %v7629
        %v7631 = vpop.f32.mrf.mxu0
        %7632 = vmatprep.mubr.f32.mxu0 0.0
        %7633 = vmatmul.mubr.f32.gmra.mxu0 %v7561
        %v7634 = vpop.f32.mrf.mxu0
        %v7635 = vadd.f32 0.0, %v7634
        %v7636 = vpop.f32.mrf.mxu0
        %7637 = vdwg.mxu0
        %v7639 = vsel %vm2431, %v5836, 0
        %v7642 = vsel %vm2431, %v5837, 0
        %7644 = vmatprep.subr.mxu0 0.0
        %7645 = vmatpush1.msra.mxu0 0.0
        %7646 = vmatprep.subr.mxu0 0.0
        %7647 = vmatpush1.msra.mxu0 0.0
        %7648 = vmatprep.subr.mxu0 0.0
        %7649 = vmatpush1.msra.mxu0 0.0
        %7650 = vmatprep.subr.mxu0 0.0
        %7651 = vmatpush1.msra.mxu0 0.0
        %7652 = vmatprep.subr.mxu0 0.0
        %7653 = vmatpush1.msra.mxu0 0.0
        %7654 = vmatprep.subr.mxu0 0.0
        %7655 = vmatpush1.msra.mxu0 0.0
        %7656 = vmatprep.subr.mxu0 0.0
        %7657 = vmatpush1.msra.mxu0 0.0
        %7658 = vmatprep.subr.mxu0 0.0
        %7659 = vmatpush1.msra.mxu0 0.0
        %7660 = vmatprep.subr.mxu0 0.0
        %7661 = vmatpush1.msra.mxu0 0.0
        %7662 = vmatprep.subr.mxu0 0.0
        %7663 = vmatpush1.msra.mxu0 0.0
        %7664 = vmatprep.subr.mxu0 0.0
        %7665 = vmatpush1.msra.mxu0 0.0
        %7666 = vmatprep.subr.mxu0 0.0
        %7667 = vmatpush1.msra.mxu0 0.0
        %7668 = vmatprep.subr.mxu0 0.0
        %7669 = vmatpush1.msra.mxu0 0.0
        %7670 = vmatprep.subr.mxu0 0.0
        %7671 = vmatpush1.msra.mxu0 0.0
        %7672 = vmatprep.subr.mxu0 0.0
        %7673 = vmatpush1.msra.mxu0 %v2362
        %7674 = vmatprep.subr.mxu0 0.0
        %7675 = vmatpush1.msra.mxu0 %v2360
        %7676 = vmatprep.subr.mxu0 0.0
        %7677 = vmatpush2.msra.mxu0 0.0
        %7678 = vmatprep.subr.mxu0 0.0
        %7679 = vmatpush2.msra.mxu0 0.0
        %7680 = vmatprep.subr.mxu0 0.0
        %7681 = vmatpush2.msra.mxu0 0.0
        %7682 = vmatprep.subr.mxu0 0.0
        %7683 = vmatpush2.msra.mxu0 0.0
        %7684 = vmatprep.subr.mxu0 0.0
        %7685 = vmatpush2.msra.mxu0 0.0
        %7686 = vmatprep.subr.mxu0 0.0
        %7687 = vmatpush2.msra.mxu0 0.0
        %7688 = vmatprep.subr.mxu0 0.0
        %7689 = vmatpush2.msra.mxu0 0.0
        %7690 = vmatprep.subr.mxu0 0.0
        %7691 = vmatpush2.msra.mxu0 0.0
        %7692 = vmatprep.subr.mxu0 0.0
        %7693 = vmatpush2.msra.mxu0 0.0
        %7694 = vmatprep.subr.mxu0 0.0
        %7695 = vmatpush2.msra.mxu0 0.0
        %7696 = vmatprep.subr.mxu0 0.0
        %7697 = vmatpush2.msra.mxu0 0.0
        %7698 = vmatprep.subr.mxu0 0.0
        %7699 = vmatpush2.msra.mxu0 0.0
        %7700 = vmatprep.subr.mxu0 0.0
        %7701 = vmatpush2.msra.mxu0 0.0
        %7702 = vmatprep.subr.mxu0 0.0
        %7703 = vmatpush2.msra.mxu0 0.0
        %7704 = vmatprep.subr.mxu0 0.0
        %7705 = vmatpush2.msra.mxu0 0.0
        %7706 = vmatprep.subr.mxu0 0.0
        %7707 = vmatpush2.msra.mxu0 0.0
        %7708 = vmatprep.mubr.f32.mxu0 0.0
        %7709 = vmatmul.mubr.f32.gmra.mxu0 %v7639
        %v7710 = vpop.f32.mrf.mxu0
        %v7711 = vadd.f32 0.0, %v7710
        %v7712 = vpop.f32.mrf.mxu0
        %7713 = vmatprep.mubr.f32.mxu0 0.0
        %7714 = vmatmul.mubr.f32.gmra.mxu0 %v7642
        %v7715 = vpop.f32.mrf.mxu0
        %v7716 = vadd.f32 0.0, %v7715
        %v7717 = vpop.f32.mrf.mxu0
        %7718 = vdwg.mxu0
        %v7720 = vsel %vm2431, %v5838, 0
        %v7723 = vsel %vm2431, %v5839, 0
        %7725 = vmatprep.subr.mxu0 0.0
        %7726 = vmatpush1.msra.mxu0 0.0
        %7727 = vmatprep.subr.mxu0 0.0
        %7728 = vmatpush1.msra.mxu0 0.0
        %7729 = vmatprep.subr.mxu0 0.0
        %7730 = vmatpush1.msra.mxu0 0.0
        %7731 = vmatprep.subr.mxu0 0.0
        %7732 = vmatpush1.msra.mxu0 0.0
        %7733 = vmatprep.subr.mxu0 0.0
        %7734 = vmatpush1.msra.mxu0 0.0
        %7735 = vmatprep.subr.mxu0 0.0
        %7736 = vmatpush1.msra.mxu0 0.0
        %7737 = vmatprep.subr.mxu0 0.0
        %7738 = vmatpush1.msra.mxu0 0.0
        %7739 = vmatprep.subr.mxu0 0.0
        %7740 = vmatpush1.msra.mxu0 0.0
        %7741 = vmatprep.subr.mxu0 0.0
        %7742 = vmatpush1.msra.mxu0 0.0
        %7743 = vmatprep.subr.mxu0 0.0
        %7744 = vmatpush1.msra.mxu0 0.0
        %7745 = vmatprep.subr.mxu0 0.0
        %7746 = vmatpush1.msra.mxu0 0.0
        %7747 = vmatprep.subr.mxu0 0.0
        %7748 = vmatpush1.msra.mxu0 0.0
        %7749 = vmatprep.subr.mxu0 0.0
        %7750 = vmatpush1.msra.mxu0 0.0
        %7751 = vmatprep.subr.mxu0 0.0
        %7752 = vmatpush1.msra.mxu0 0.0
        %7753 = vmatprep.subr.mxu0 0.0
        %7754 = vmatpush1.msra.mxu0 %v2366
        %7755 = vmatprep.subr.mxu0 0.0
        %7756 = vmatpush1.msra.mxu0 %v2364
        %7757 = vmatprep.subr.mxu0 0.0
        %7758 = vmatpush2.msra.mxu0 0.0
        %7759 = vmatprep.subr.mxu0 0.0
        %7760 = vmatpush2.msra.mxu0 0.0
        %7761 = vmatprep.subr.mxu0 0.0
        %7762 = vmatpush2.msra.mxu0 0.0
        %7763 = vmatprep.subr.mxu0 0.0
        %7764 = vmatpush2.msra.mxu0 0.0
        %7765 = vmatprep.subr.mxu0 0.0
        %7766 = vmatpush2.msra.mxu0 0.0
        %7767 = vmatprep.subr.mxu0 0.0
        %7768 = vmatpush2.msra.mxu0 0.0
        %7769 = vmatprep.subr.mxu0 0.0
        %7770 = vmatpush2.msra.mxu0 0.0
        %7771 = vmatprep.subr.mxu0 0.0
        %7772 = vmatpush2.msra.mxu0 0.0
        %7773 = vmatprep.subr.mxu0 0.0
        %7774 = vmatpush2.msra.mxu0 0.0
        %7775 = vmatprep.subr.mxu0 0.0
        %7776 = vmatpush2.msra.mxu0 0.0
        %7777 = vmatprep.subr.mxu0 0.0
        %7778 = vmatpush2.msra.mxu0 0.0
        %7779 = vmatprep.subr.mxu0 0.0
        %7780 = vmatpush2.msra.mxu0 0.0
        %7781 = vmatprep.subr.mxu0 0.0
        %7782 = vmatpush2.msra.mxu0 0.0
        %7783 = vmatprep.subr.mxu0 0.0
        %7784 = vmatpush2.msra.mxu0 0.0
        %7785 = vmatprep.subr.mxu0 0.0
        %7786 = vmatpush2.msra.mxu0 0.0
        %7787 = vmatprep.subr.mxu0 0.0
        %7788 = vmatpush2.msra.mxu0 0.0
        %7789 = vmatprep.mubr.f32.mxu0 0.0
        %7790 = vmatmul.mubr.f32.gmra.mxu0 %v7720
        %v7791 = vpop.f32.mrf.mxu0
        %v7792 = vadd.f32 0.0, %v7791
        %v7793 = vpop.f32.mrf.mxu0
        %7794 = vmatprep.mubr.f32.mxu0 0.0
        %7795 = vmatmul.mubr.f32.gmra.mxu0 %v7723
        %v7796 = vpop.f32.mrf.mxu0
        %v7797 = vadd.f32 0.0, %v7796
        %v7798 = vpop.f32.mrf.mxu0
        %7799 = vdwg.mxu0
        %v7801 = vsel %vm2431, %v5840, 0
        %v7804 = vsel %vm2431, %v5841, 0
        %7806 = vmatprep.subr.mxu0 0.0
        %7807 = vmatpush1.msra.mxu0 0.0
        %7808 = vmatprep.subr.mxu0 0.0
        %7809 = vmatpush1.msra.mxu0 0.0
        %7810 = vmatprep.subr.mxu0 0.0
        %7811 = vmatpush1.msra.mxu0 0.0
        %7812 = vmatprep.subr.mxu0 0.0
        %7813 = vmatpush1.msra.mxu0 0.0
        %7814 = vmatprep.subr.mxu0 0.0
        %7815 = vmatpush1.msra.mxu0 0.0
        %7816 = vmatprep.subr.mxu0 0.0
        %7817 = vmatpush1.msra.mxu0 0.0
        %7818 = vmatprep.subr.mxu0 0.0
        %7819 = vmatpush1.msra.mxu0 0.0
        %7820 = vmatprep.subr.mxu0 0.0
        %7821 = vmatpush1.msra.mxu0 0.0
        %7822 = vmatprep.subr.mxu0 0.0
        %7823 = vmatpush1.msra.mxu0 0.0
        %7824 = vmatprep.subr.mxu0 0.0
        %7825 = vmatpush1.msra.mxu0 0.0
        %7826 = vmatprep.subr.mxu0 0.0
        %7827 = vmatpush1.msra.mxu0 0.0
        %7828 = vmatprep.subr.mxu0 0.0
        %7829 = vmatpush1.msra.mxu0 0.0
        %7830 = vmatprep.subr.mxu0 0.0
        %7831 = vmatpush1.msra.mxu0 0.0
        %7832 = vmatprep.subr.mxu0 0.0
        %7833 = vmatpush1.msra.mxu0 0.0
        %7834 = vmatprep.subr.mxu0 0.0
        %7835 = vmatpush1.msra.mxu0 %v2386
        %7836 = vmatprep.subr.mxu0 0.0
        %7837 = vmatpush1.msra.mxu0 %v2384
        %7838 = vmatprep.subr.mxu0 0.0
        %7839 = vmatpush2.msra.mxu0 0.0
        %7840 = vmatprep.subr.mxu0 0.0
        %7841 = vmatpush2.msra.mxu0 0.0
        %7842 = vmatprep.subr.mxu0 0.0
        %7843 = vmatpush2.msra.mxu0 0.0
        %7844 = vmatprep.subr.mxu0 0.0
        %7845 = vmatpush2.msra.mxu0 0.0
        %7846 = vmatprep.subr.mxu0 0.0
        %7847 = vmatpush2.msra.mxu0 0.0
        %7848 = vmatprep.subr.mxu0 0.0
        %7849 = vmatpush2.msra.mxu0 0.0
        %7850 = vmatprep.subr.mxu0 0.0
        %7851 = vmatpush2.msra.mxu0 0.0
        %7852 = vmatprep.subr.mxu0 0.0
        %7853 = vmatpush2.msra.mxu0 0.0
        %7854 = vmatprep.subr.mxu0 0.0
        %7855 = vmatpush2.msra.mxu0 0.0
        %7856 = vmatprep.subr.mxu0 0.0
        %7857 = vmatpush2.msra.mxu0 0.0
        %7858 = vmatprep.subr.mxu0 0.0
        %7859 = vmatpush2.msra.mxu0 0.0
        %7860 = vmatprep.subr.mxu0 0.0
        %7861 = vmatpush2.msra.mxu0 0.0
        %7862 = vmatprep.subr.mxu0 0.0
        %7863 = vmatpush2.msra.mxu0 0.0
        %7864 = vmatprep.subr.mxu0 0.0
        %7865 = vmatpush2.msra.mxu0 0.0
        %7866 = vmatprep.subr.mxu0 0.0
        %7867 = vmatpush2.msra.mxu0 0.0
        %7868 = vmatprep.subr.mxu0 0.0
        %7869 = vmatpush2.msra.mxu0 0.0
        %7870 = vmatprep.mubr.f32.mxu0 0.0
        %7871 = vmatmul.mubr.f32.gmra.mxu0 %v7801
        %v7872 = vpop.f32.mrf.mxu0
        %v7873 = vadd.f32 0.0, %v7872
        %v7874 = vpop.f32.mrf.mxu0
        %7875 = vmatprep.mubr.f32.mxu0 0.0
        %7876 = vmatmul.mubr.f32.gmra.mxu0 %v7804
        %v7877 = vpop.f32.mrf.mxu0
        %v7878 = vadd.f32 0.0, %v7877
        %v7879 = vpop.f32.mrf.mxu0
        %7880 = vdwg.mxu0
        %v7882 = vsel %vm2431, %v5842, 0
        %v7885 = vsel %vm2431, %v5843, 0
        %7887 = vmatprep.subr.mxu0 0.0
        %7888 = vmatpush1.msra.mxu0 0.0
        %7889 = vmatprep.subr.mxu0 0.0
        %7890 = vmatpush1.msra.mxu0 0.0
        %7891 = vmatprep.subr.mxu0 0.0
        %7892 = vmatpush1.msra.mxu0 0.0
        %7893 = vmatprep.subr.mxu0 0.0
        %7894 = vmatpush1.msra.mxu0 0.0
        %7895 = vmatprep.subr.mxu0 0.0
        %7896 = vmatpush1.msra.mxu0 0.0
        %7897 = vmatprep.subr.mxu0 0.0
        %7898 = vmatpush1.msra.mxu0 0.0
        %7899 = vmatprep.subr.mxu0 0.0
        %7900 = vmatpush1.msra.mxu0 0.0
        %7901 = vmatprep.subr.mxu0 0.0
        %7902 = vmatpush1.msra.mxu0 0.0
        %7903 = vmatprep.subr.mxu0 0.0
        %7904 = vmatpush1.msra.mxu0 0.0
        %7905 = vmatprep.subr.mxu0 0.0
        %7906 = vmatpush1.msra.mxu0 0.0
        %7907 = vmatprep.subr.mxu0 0.0
        %7908 = vmatpush1.msra.mxu0 0.0
        %7909 = vmatprep.subr.mxu0 0.0
        %7910 = vmatpush1.msra.mxu0 0.0
        %7911 = vmatprep.subr.mxu0 0.0
        %7912 = vmatpush1.msra.mxu0 0.0
        %7913 = vmatprep.subr.mxu0 0.0
        %7914 = vmatpush1.msra.mxu0 0.0
        %7915 = vmatprep.subr.mxu0 0.0
        %7916 = vmatpush1.msra.mxu0 %v2390
        %7917 = vmatprep.subr.mxu0 0.0
        %7918 = vmatpush1.msra.mxu0 %v2388
        %7919 = vmatprep.subr.mxu0 0.0
        %7920 = vmatpush2.msra.mxu0 0.0
        %7921 = vmatprep.subr.mxu0 0.0
        %7922 = vmatpush2.msra.mxu0 0.0
        %7923 = vmatprep.subr.mxu0 0.0
        %7924 = vmatpush2.msra.mxu0 0.0
        %7925 = vmatprep.subr.mxu0 0.0
        %7926 = vmatpush2.msra.mxu0 0.0
        %7927 = vmatprep.subr.mxu0 0.0
        %7928 = vmatpush2.msra.mxu0 0.0
        %7929 = vmatprep.subr.mxu0 0.0
        %7930 = vmatpush2.msra.mxu0 0.0
        %7931 = vmatprep.subr.mxu0 0.0
        %7932 = vmatpush2.msra.mxu0 0.0
        %7933 = vmatprep.subr.mxu0 0.0
        %7934 = vmatpush2.msra.mxu0 0.0
        %7935 = vmatprep.subr.mxu0 0.0
        %7936 = vmatpush2.msra.mxu0 0.0
        %7937 = vmatprep.subr.mxu0 0.0
        %7938 = vmatpush2.msra.mxu0 0.0
        %7939 = vmatprep.subr.mxu0 0.0
        %7940 = vmatpush2.msra.mxu0 0.0
        %7941 = vmatprep.subr.mxu0 0.0
        %7942 = vmatpush2.msra.mxu0 0.0
        %7943 = vmatprep.subr.mxu0 0.0
        %7944 = vmatpush2.msra.mxu0 0.0
        %7945 = vmatprep.subr.mxu0 0.0
        %7946 = vmatpush2.msra.mxu0 0.0
        %7947 = vmatprep.subr.mxu0 0.0
        %7948 = vmatpush2.msra.mxu0 0.0
        %7949 = vmatprep.subr.mxu0 0.0
        %7950 = vmatpush2.msra.mxu0 0.0
        %7951 = vmatprep.mubr.f32.mxu0 0.0
        %7952 = vmatmul.mubr.f32.gmra.mxu0 %v7882
        %v7953 = vpop.f32.mrf.mxu0
        %v7954 = vadd.f32 0.0, %v7953
        %v7955 = vpop.f32.mrf.mxu0
        %7956 = vmatprep.mubr.f32.mxu0 0.0
        %7957 = vmatmul.mubr.f32.gmra.mxu0 %v7885
        %v7958 = vpop.f32.mrf.mxu0
        %v7959 = vadd.f32 0.0, %v7958
        %v7960 = vpop.f32.mrf.mxu0
        %7961 = vdwg.mxu0
        %v7963 = vsel %vm2431, %v5844, 0
        %v7966 = vsel %vm2431, %v5845, 0
        %7968 = vmatprep.subr.mxu0 0.0
        %7969 = vmatpush1.msra.mxu0 0.0
        %7970 = vmatprep.subr.mxu0 0.0
        %7971 = vmatpush1.msra.mxu0 0.0
        %7972 = vmatprep.subr.mxu0 0.0
        %7973 = vmatpush1.msra.mxu0 0.0
        %7974 = vmatprep.subr.mxu0 0.0
        %7975 = vmatpush1.msra.mxu0 0.0
        %7976 = vmatprep.subr.mxu0 0.0
        %7977 = vmatpush1.msra.mxu0 0.0
        %7978 = vmatprep.subr.mxu0 0.0
        %7979 = vmatpush1.msra.mxu0 0.0
        %7980 = vmatprep.subr.mxu0 0.0
        %7981 = vmatpush1.msra.mxu0 0.0
        %7982 = vmatprep.subr.mxu0 0.0
        %7983 = vmatpush1.msra.mxu0 0.0
        %7984 = vmatprep.subr.mxu0 0.0
        %7985 = vmatpush1.msra.mxu0 0.0
        %7986 = vmatprep.subr.mxu0 0.0
        %7987 = vmatpush1.msra.mxu0 0.0
        %7988 = vmatprep.subr.mxu0 0.0
        %7989 = vmatpush1.msra.mxu0 0.0
        %7990 = vmatprep.subr.mxu0 0.0
        %7991 = vmatpush1.msra.mxu0 0.0
        %7992 = vmatprep.subr.mxu0 0.0
        %7993 = vmatpush1.msra.mxu0 0.0
        %7994 = vmatprep.subr.mxu0 0.0
        %7995 = vmatpush1.msra.mxu0 0.0
        %7996 = vmatprep.subr.mxu0 0.0
        %7997 = vmatpush1.msra.mxu0 %v2394
        %7998 = vmatprep.subr.mxu0 0.0
        %7999 = vmatpush1.msra.mxu0 %v2392
        %8000 = vmatprep.subr.mxu0 0.0
        %8001 = vmatpush2.msra.mxu0 0.0
        %8002 = vmatprep.subr.mxu0 0.0
        %8003 = vmatpush2.msra.mxu0 0.0
        %8004 = vmatprep.subr.mxu0 0.0
        %8005 = vmatpush2.msra.mxu0 0.0
        %8006 = vmatprep.subr.mxu0 0.0
        %8007 = vmatpush2.msra.mxu0 0.0
        %8008 = vmatprep.subr.mxu0 0.0
        %8009 = vmatpush2.msra.mxu0 0.0
        %8010 = vmatprep.subr.mxu0 0.0
        %8011 = vmatpush2.msra.mxu0 0.0
        %8012 = vmatprep.subr.mxu0 0.0
        %8013 = vmatpush2.msra.mxu0 0.0
        %8014 = vmatprep.subr.mxu0 0.0
        %8015 = vmatpush2.msra.mxu0 0.0
        %8016 = vmatprep.subr.mxu0 0.0
        %8017 = vmatpush2.msra.mxu0 0.0
        %8018 = vmatprep.subr.mxu0 0.0
        %8019 = vmatpush2.msra.mxu0 0.0
        %8020 = vmatprep.subr.mxu0 0.0
        %8021 = vmatpush2.msra.mxu0 0.0
        %8022 = vmatprep.subr.mxu0 0.0
        %8023 = vmatpush2.msra.mxu0 0.0
        %8024 = vmatprep.subr.mxu0 0.0
        %8025 = vmatpush2.msra.mxu0 0.0
        %8026 = vmatprep.subr.mxu0 0.0
        %8027 = vmatpush2.msra.mxu0 0.0
        %8028 = vmatprep.subr.mxu0 0.0
        %8029 = vmatpush2.msra.mxu0 0.0
        %8030 = vmatprep.subr.mxu0 0.0
        %8031 = vmatpush2.msra.mxu0 0.0
        %8032 = vmatprep.mubr.f32.mxu0 0.0
        %8033 = vmatmul.mubr.f32.gmra.mxu0 %v7963
        %v8034 = vpop.f32.mrf.mxu0
        %v8035 = vadd.f32 0.0, %v8034
        %v8036 = vpop.f32.mrf.mxu0
        %8037 = vmatprep.mubr.f32.mxu0 0.0
        %8038 = vmatmul.mubr.f32.gmra.mxu0 %v7966
        %v8039 = vpop.f32.mrf.mxu0
        %v8040 = vadd.f32 0.0, %v8039
        %v8041 = vpop.f32.mrf.mxu0
        %8042 = vdwg.mxu0
        %v8044 = vsel %vm2431, %v5846, 0
        %v8047 = vsel %vm2431, %v5847, 0
        %8049 = vmatprep.subr.mxu0 0.0
        %8050 = vmatpush1.msra.mxu0 0.0
        %8051 = vmatprep.subr.mxu0 0.0
        %8052 = vmatpush1.msra.mxu0 0.0
        %8053 = vmatprep.subr.mxu0 0.0
        %8054 = vmatpush1.msra.mxu0 0.0
        %8055 = vmatprep.subr.mxu0 0.0
        %8056 = vmatpush1.msra.mxu0 0.0
        %8057 = vmatprep.subr.mxu0 0.0
        %8058 = vmatpush1.msra.mxu0 0.0
        %8059 = vmatprep.subr.mxu0 0.0
        %8060 = vmatpush1.msra.mxu0 0.0
        %8061 = vmatprep.subr.mxu0 0.0
        %8062 = vmatpush1.msra.mxu0 0.0
        %8063 = vmatprep.subr.mxu0 0.0
        %8064 = vmatpush1.msra.mxu0 0.0
        %8065 = vmatprep.subr.mxu0 0.0
        %8066 = vmatpush1.msra.mxu0 0.0
        %8067 = vmatprep.subr.mxu0 0.0
        %8068 = vmatpush1.msra.mxu0 0.0
        %8069 = vmatprep.subr.mxu0 0.0
        %8070 = vmatpush1.msra.mxu0 0.0
        %8071 = vmatprep.subr.mxu0 0.0
        %8072 = vmatpush1.msra.mxu0 0.0
        %8073 = vmatprep.subr.mxu0 0.0
        %8074 = vmatpush1.msra.mxu0 0.0
        %8075 = vmatprep.subr.mxu0 0.0
        %8076 = vmatpush1.msra.mxu0 0.0
        %8077 = vmatprep.subr.mxu0 0.0
        %8078 = vmatpush1.msra.mxu0 %v2398
        %8079 = vmatprep.subr.mxu0 0.0
        %8080 = vmatpush1.msra.mxu0 %v2396
        %8081 = vmatprep.subr.mxu0 0.0
        %8082 = vmatpush2.msra.mxu0 0.0
        %8083 = vmatprep.subr.mxu0 0.0
        %8084 = vmatpush2.msra.mxu0 0.0
        %8085 = vmatprep.subr.mxu0 0.0
        %8086 = vmatpush2.msra.mxu0 0.0
        %8087 = vmatprep.subr.mxu0 0.0
        %8088 = vmatpush2.msra.mxu0 0.0
        %8089 = vmatprep.subr.mxu0 0.0
        %8090 = vmatpush2.msra.mxu0 0.0
        %8091 = vmatprep.subr.mxu0 0.0
        %8092 = vmatpush2.msra.mxu0 0.0
        %8093 = vmatprep.subr.mxu0 0.0
        %8094 = vmatpush2.msra.mxu0 0.0
        %8095 = vmatprep.subr.mxu0 0.0
        %8096 = vmatpush2.msra.mxu0 0.0
        %8097 = vmatprep.subr.mxu0 0.0
        %8098 = vmatpush2.msra.mxu0 0.0
        %8099 = vmatprep.subr.mxu0 0.0
        %8100 = vmatpush2.msra.mxu0 0.0
        %8101 = vmatprep.subr.mxu0 0.0
        %8102 = vmatpush2.msra.mxu0 0.0
        %8103 = vmatprep.subr.mxu0 0.0
        %8104 = vmatpush2.msra.mxu0 0.0
        %8105 = vmatprep.subr.mxu0 0.0
        %8106 = vmatpush2.msra.mxu0 0.0
        %8107 = vmatprep.subr.mxu0 0.0
        %8108 = vmatpush2.msra.mxu0 0.0
        %8109 = vmatprep.subr.mxu0 0.0
        %8110 = vmatpush2.msra.mxu0 0.0
        %8111 = vmatprep.subr.mxu0 0.0
        %8112 = vmatpush2.msra.mxu0 0.0
        %8113 = vmatprep.mubr.f32.mxu0 0.0
        %8114 = vmatmul.mubr.f32.gmra.mxu0 %v8044
        %v8115 = vpop.f32.mrf.mxu0
        %v8116 = vadd.f32 0.0, %v8115
        %v8117 = vpop.f32.mrf.mxu0
        %8118 = vmatprep.mubr.f32.mxu0 0.0
        %8119 = vmatmul.mubr.f32.gmra.mxu0 %v8047
        %v8120 = vpop.f32.mrf.mxu0
        %v8121 = vadd.f32 0.0, %v8120
        %v8122 = vpop.f32.mrf.mxu0
        %8123 = vdwg.mxu0
        %v8125 = vsel %vm2431, %v5848, 0
        %v8128 = vsel %vm2431, %v5849, 0
        %8130 = vmatprep.subr.mxu0 0.0
        %8131 = vmatpush1.msra.mxu0 0.0
        %8132 = vmatprep.subr.mxu0 0.0
        %8133 = vmatpush1.msra.mxu0 0.0
        %8134 = vmatprep.subr.mxu0 0.0
        %8135 = vmatpush1.msra.mxu0 0.0
        %8136 = vmatprep.subr.mxu0 0.0
        %8137 = vmatpush1.msra.mxu0 0.0
        %8138 = vmatprep.subr.mxu0 0.0
        %8139 = vmatpush1.msra.mxu0 0.0
        %8140 = vmatprep.subr.mxu0 0.0
        %8141 = vmatpush1.msra.mxu0 0.0
        %8142 = vmatprep.subr.mxu0 0.0
        %8143 = vmatpush1.msra.mxu0 0.0
        %8144 = vmatprep.subr.mxu0 0.0
        %8145 = vmatpush1.msra.mxu0 0.0
        %8146 = vmatprep.subr.mxu0 0.0
        %8147 = vmatpush1.msra.mxu0 0.0
        %8148 = vmatprep.subr.mxu0 0.0
        %8149 = vmatpush1.msra.mxu0 0.0
        %8150 = vmatprep.subr.mxu0 0.0
        %8151 = vmatpush1.msra.mxu0 0.0
        %8152 = vmatprep.subr.mxu0 0.0
        %8153 = vmatpush1.msra.mxu0 0.0
        %8154 = vmatprep.subr.mxu0 0.0
        %8155 = vmatpush1.msra.mxu0 0.0
        %8156 = vmatprep.subr.mxu0 0.0
        %8157 = vmatpush1.msra.mxu0 0.0
        %8158 = vmatprep.subr.mxu0 0.0
        %8159 = vmatpush1.msra.mxu0 %v2402
        %8160 = vmatprep.subr.mxu0 0.0
        %8161 = vmatpush1.msra.mxu0 %v2400
        %8162 = vmatprep.subr.mxu0 0.0
        %8163 = vmatpush2.msra.mxu0 0.0
        %8164 = vmatprep.subr.mxu0 0.0
        %8165 = vmatpush2.msra.mxu0 0.0
        %8166 = vmatprep.subr.mxu0 0.0
        %8167 = vmatpush2.msra.mxu0 0.0
        %8168 = vmatprep.subr.mxu0 0.0
        %8169 = vmatpush2.msra.mxu0 0.0
        %8170 = vmatprep.subr.mxu0 0.0
        %8171 = vmatpush2.msra.mxu0 0.0
        %8172 = vmatprep.subr.mxu0 0.0
        %8173 = vmatpush2.msra.mxu0 0.0
        %8174 = vmatprep.subr.mxu0 0.0
        %8175 = vmatpush2.msra.mxu0 0.0
        %8176 = vmatprep.subr.mxu0 0.0
        %8177 = vmatpush2.msra.mxu0 0.0
        %8178 = vmatprep.subr.mxu0 0.0
        %8179 = vmatpush2.msra.mxu0 0.0
        %8180 = vmatprep.subr.mxu0 0.0
        %8181 = vmatpush2.msra.mxu0 0.0
        %8182 = vmatprep.subr.mxu0 0.0
        %8183 = vmatpush2.msra.mxu0 0.0
        %8184 = vmatprep.subr.mxu0 0.0
        %8185 = vmatpush2.msra.mxu0 0.0
        %8186 = vmatprep.subr.mxu0 0.0
        %8187 = vmatpush2.msra.mxu0 0.0
        %8188 = vmatprep.subr.mxu0 0.0
        %8189 = vmatpush2.msra.mxu0 0.0
        %8190 = vmatprep.subr.mxu0 0.0
        %8191 = vmatpush2.msra.mxu0 0.0
        %8192 = vmatprep.subr.mxu0 0.0
        %8193 = vmatpush2.msra.mxu0 0.0
        %8194 = vmatprep.mubr.f32.mxu0 0.0
        %8195 = vmatmul.mubr.f32.gmra.mxu0 %v8125
        %v8196 = vpop.f32.mrf.mxu0
        %v8197 = vadd.f32 0.0, %v8196
        %v8198 = vpop.f32.mrf.mxu0
        %8199 = vmatprep.mubr.f32.mxu0 0.0
        %8200 = vmatmul.mubr.f32.gmra.mxu0 %v8128
        %v8201 = vpop.f32.mrf.mxu0
        %v8202 = vadd.f32 0.0, %v8201
        %v8203 = vpop.f32.mrf.mxu0
        %8204 = vdwg.mxu0
        %v8206 = vsel %vm2431, %v5850, 0
        %v8209 = vsel %vm2431, %v5851, 0
        %8211 = vmatprep.subr.mxu0 0.0
        %8212 = vmatpush1.msra.mxu0 0.0
        %8213 = vmatprep.subr.mxu0 0.0
        %8214 = vmatpush1.msra.mxu0 0.0
        %8215 = vmatprep.subr.mxu0 0.0
        %8216 = vmatpush1.msra.mxu0 0.0
        %8217 = vmatprep.subr.mxu0 0.0
        %8218 = vmatpush1.msra.mxu0 0.0
        %8219 = vmatprep.subr.mxu0 0.0
        %8220 = vmatpush1.msra.mxu0 0.0
        %8221 = vmatprep.subr.mxu0 0.0
        %8222 = vmatpush1.msra.mxu0 0.0
        %8223 = vmatprep.subr.mxu0 0.0
        %8224 = vmatpush1.msra.mxu0 0.0
        %8225 = vmatprep.subr.mxu0 0.0
        %8226 = vmatpush1.msra.mxu0 0.0
        %8227 = vmatprep.subr.mxu0 0.0
        %8228 = vmatpush1.msra.mxu0 0.0
        %8229 = vmatprep.subr.mxu0 0.0
        %8230 = vmatpush1.msra.mxu0 0.0
        %8231 = vmatprep.subr.mxu0 0.0
        %8232 = vmatpush1.msra.mxu0 0.0
        %8233 = vmatprep.subr.mxu0 0.0
        %8234 = vmatpush1.msra.mxu0 0.0
        %8235 = vmatprep.subr.mxu0 0.0
        %8236 = vmatpush1.msra.mxu0 0.0
        %8237 = vmatprep.subr.mxu0 0.0
        %8238 = vmatpush1.msra.mxu0 0.0
        %8239 = vmatprep.subr.mxu0 0.0
        %8240 = vmatpush1.msra.mxu0 %v2406
        %8241 = vmatprep.subr.mxu0 0.0
        %8242 = vmatpush1.msra.mxu0 %v2404
        %8243 = vmatprep.subr.mxu0 0.0
        %8244 = vmatpush2.msra.mxu0 0.0
        %8245 = vmatprep.subr.mxu0 0.0
        %8246 = vmatpush2.msra.mxu0 0.0
        %8247 = vmatprep.subr.mxu0 0.0
        %8248 = vmatpush2.msra.mxu0 0.0
        %8249 = vmatprep.subr.mxu0 0.0
        %8250 = vmatpush2.msra.mxu0 0.0
        %8251 = vmatprep.subr.mxu0 0.0
        %8252 = vmatpush2.msra.mxu0 0.0
        %8253 = vmatprep.subr.mxu0 0.0
        %8254 = vmatpush2.msra.mxu0 0.0
        %8255 = vmatprep.subr.mxu0 0.0
        %8256 = vmatpush2.msra.mxu0 0.0
        %8257 = vmatprep.subr.mxu0 0.0
        %8258 = vmatpush2.msra.mxu0 0.0
        %8259 = vmatprep.subr.mxu0 0.0
        %8260 = vmatpush2.msra.mxu0 0.0
        %8261 = vmatprep.subr.mxu0 0.0
        %8262 = vmatpush2.msra.mxu0 0.0
        %8263 = vmatprep.subr.mxu0 0.0
        %8264 = vmatpush2.msra.mxu0 0.0
        %8265 = vmatprep.subr.mxu0 0.0
        %8266 = vmatpush2.msra.mxu0 0.0
        %8267 = vmatprep.subr.mxu0 0.0
        %8268 = vmatpush2.msra.mxu0 0.0
        %8269 = vmatprep.subr.mxu0 0.0
        %8270 = vmatpush2.msra.mxu0 0.0
        %8271 = vmatprep.subr.mxu0 0.0
        %8272 = vmatpush2.msra.mxu0 0.0
        %8273 = vmatprep.subr.mxu0 0.0
        %8274 = vmatpush2.msra.mxu0 0.0
        %8275 = vmatprep.mubr.f32.mxu0 0.0
        %8276 = vmatmul.mubr.f32.gmra.mxu0 %v8206
        %v8277 = vpop.f32.mrf.mxu0
        %v8278 = vadd.f32 0.0, %v8277
        %v8279 = vpop.f32.mrf.mxu0
        %8280 = vmatprep.mubr.f32.mxu0 0.0
        %8281 = vmatmul.mubr.f32.gmra.mxu0 %v8209
        %v8282 = vpop.f32.mrf.mxu0
        %v8283 = vadd.f32 0.0, %v8282
        %v8284 = vpop.f32.mrf.mxu0
        %8285 = vdwg.mxu0
        %v8287 = vsel %vm2431, %v5852, 0
        %v8290 = vsel %vm2431, %v5853, 0
        %8292 = vmatprep.subr.mxu0 0.0
        %8293 = vmatpush1.msra.mxu0 0.0
        %8294 = vmatprep.subr.mxu0 0.0
        %8295 = vmatpush1.msra.mxu0 0.0
        %8296 = vmatprep.subr.mxu0 0.0
        %8297 = vmatpush1.msra.mxu0 0.0
        %8298 = vmatprep.subr.mxu0 0.0
        %8299 = vmatpush1.msra.mxu0 0.0
        %8300 = vmatprep.subr.mxu0 0.0
        %8301 = vmatpush1.msra.mxu0 0.0
        %8302 = vmatprep.subr.mxu0 0.0
        %8303 = vmatpush1.msra.mxu0 0.0
        %8304 = vmatprep.subr.mxu0 0.0
        %8305 = vmatpush1.msra.mxu0 0.0
        %8306 = vmatprep.subr.mxu0 0.0
        %8307 = vmatpush1.msra.mxu0 0.0
        %8308 = vmatprep.subr.mxu0 0.0
        %8309 = vmatpush1.msra.mxu0 0.0
        %8310 = vmatprep.subr.mxu0 0.0
        %8311 = vmatpush1.msra.mxu0 0.0
        %8312 = vmatprep.subr.mxu0 0.0
        %8313 = vmatpush1.msra.mxu0 0.0
        %8314 = vmatprep.subr.mxu0 0.0
        %8315 = vmatpush1.msra.mxu0 0.0
        %8316 = vmatprep.subr.mxu0 0.0
        %8317 = vmatpush1.msra.mxu0 0.0
        %8318 = vmatprep.subr.mxu0 0.0
        %8319 = vmatpush1.msra.mxu0 0.0
        %8320 = vmatprep.subr.mxu0 0.0
        %8321 = vmatpush1.msra.mxu0 %v2410
        %8322 = vmatprep.subr.mxu0 0.0
        %8323 = vmatpush1.msra.mxu0 %v2408
        %8324 = vmatprep.subr.mxu0 0.0
        %8325 = vmatpush2.msra.mxu0 0.0
        %8326 = vmatprep.subr.mxu0 0.0
        %8327 = vmatpush2.msra.mxu0 0.0
        %8328 = vmatprep.subr.mxu0 0.0
        %8329 = vmatpush2.msra.mxu0 0.0
        %8330 = vmatprep.subr.mxu0 0.0
        %8331 = vmatpush2.msra.mxu0 0.0
        %8332 = vmatprep.subr.mxu0 0.0
        %8333 = vmatpush2.msra.mxu0 0.0
        %8334 = vmatprep.subr.mxu0 0.0
        %8335 = vmatpush2.msra.mxu0 0.0
        %8336 = vmatprep.subr.mxu0 0.0
        %8337 = vmatpush2.msra.mxu0 0.0
        %8338 = vmatprep.subr.mxu0 0.0
        %8339 = vmatpush2.msra.mxu0 0.0
        %8340 = vmatprep.subr.mxu0 0.0
        %8341 = vmatpush2.msra.mxu0 0.0
        %8342 = vmatprep.subr.mxu0 0.0
        %8343 = vmatpush2.msra.mxu0 0.0
        %8344 = vmatprep.subr.mxu0 0.0
        %8345 = vmatpush2.msra.mxu0 0.0
        %8346 = vmatprep.subr.mxu0 0.0
        %8347 = vmatpush2.msra.mxu0 0.0
        %8348 = vmatprep.subr.mxu0 0.0
        %8349 = vmatpush2.msra.mxu0 0.0
        %8350 = vmatprep.subr.mxu0 0.0
        %8351 = vmatpush2.msra.mxu0 0.0
        %8352 = vmatprep.subr.mxu0 0.0
        %8353 = vmatpush2.msra.mxu0 0.0
        %8354 = vmatprep.subr.mxu0 0.0
        %8355 = vmatpush2.msra.mxu0 0.0
        %8356 = vmatprep.mubr.f32.mxu0 0.0
        %8357 = vmatmul.mubr.f32.gmra.mxu0 %v8287
        %v8358 = vpop.f32.mrf.mxu0
        %v8359 = vadd.f32 0.0, %v8358
        %v8360 = vpop.f32.mrf.mxu0
        %8361 = vmatprep.mubr.f32.mxu0 0.0
        %8362 = vmatmul.mubr.f32.gmra.mxu0 %v8290
        %v8363 = vpop.f32.mrf.mxu0
        %v8364 = vadd.f32 0.0, %v8363
        %v8365 = vpop.f32.mrf.mxu0
        %8366 = vdwg.mxu0
        %v8368 = vsel %vm2431, %v5854, 0
        %v8371 = vsel %vm2431, %v5855, 0
        %8373 = vmatprep.subr.mxu0 0.0
        %8374 = vmatpush1.msra.mxu0 0.0
        %8375 = vmatprep.subr.mxu0 0.0
        %8376 = vmatpush1.msra.mxu0 0.0
        %8377 = vmatprep.subr.mxu0 0.0
        %8378 = vmatpush1.msra.mxu0 0.0
        %8379 = vmatprep.subr.mxu0 0.0
        %8380 = vmatpush1.msra.mxu0 0.0
        %8381 = vmatprep.subr.mxu0 0.0
        %8382 = vmatpush1.msra.mxu0 0.0
        %8383 = vmatprep.subr.mxu0 0.0
        %8384 = vmatpush1.msra.mxu0 0.0
        %8385 = vmatprep.subr.mxu0 0.0
        %8386 = vmatpush1.msra.mxu0 0.0
        %8387 = vmatprep.subr.mxu0 0.0
        %8388 = vmatpush1.msra.mxu0 0.0
        %8389 = vmatprep.subr.mxu0 0.0
        %8390 = vmatpush1.msra.mxu0 0.0
        %8391 = vmatprep.subr.mxu0 0.0
        %8392 = vmatpush1.msra.mxu0 0.0
        %8393 = vmatprep.subr.mxu0 0.0
        %8394 = vmatpush1.msra.mxu0 0.0
        %8395 = vmatprep.subr.mxu0 0.0
        %8396 = vmatpush1.msra.mxu0 0.0
        %8397 = vmatprep.subr.mxu0 0.0
        %8398 = vmatpush1.msra.mxu0 0.0
        %8399 = vmatprep.subr.mxu0 0.0
        %8400 = vmatpush1.msra.mxu0 0.0
        %8401 = vmatprep.subr.mxu0 0.0
        %8402 = vmatpush1.msra.mxu0 %v2414
        %8403 = vmatprep.subr.mxu0 0.0
        %8404 = vmatpush1.msra.mxu0 %v2412
        %8405 = vmatprep.subr.mxu0 0.0
        %8406 = vmatpush2.msra.mxu0 0.0
        %8407 = vmatprep.subr.mxu0 0.0
        %8408 = vmatpush2.msra.mxu0 0.0
        %8409 = vmatprep.subr.mxu0 0.0
        %8410 = vmatpush2.msra.mxu0 0.0
        %8411 = vmatprep.subr.mxu0 0.0
        %8412 = vmatpush2.msra.mxu0 0.0
        %8413 = vmatprep.subr.mxu0 0.0
        %8414 = vmatpush2.msra.mxu0 0.0
        %8415 = vmatprep.subr.mxu0 0.0
        %8416 = vmatpush2.msra.mxu0 0.0
        %8417 = vmatprep.subr.mxu0 0.0
        %8418 = vmatpush2.msra.mxu0 0.0
        %8419 = vmatprep.subr.mxu0 0.0
        %8420 = vmatpush2.msra.mxu0 0.0
        %8421 = vmatprep.subr.mxu0 0.0
        %8422 = vmatpush2.msra.mxu0 0.0
        %8423 = vmatprep.subr.mxu0 0.0
        %8424 = vmatpush2.msra.mxu0 0.0
        %8425 = vmatprep.subr.mxu0 0.0
        %8426 = vmatpush2.msra.mxu0 0.0
        %8427 = vmatprep.subr.mxu0 0.0
        %8428 = vmatpush2.msra.mxu0 0.0
        %8429 = vmatprep.subr.mxu0 0.0
        %8430 = vmatpush2.msra.mxu0 0.0
        %8431 = vmatprep.subr.mxu0 0.0
        %8432 = vmatpush2.msra.mxu0 0.0
        %8433 = vmatprep.subr.mxu0 0.0
        %8434 = vmatpush2.msra.mxu0 0.0
        %8435 = vmatprep.subr.mxu0 0.0
        %8436 = vmatpush2.msra.mxu0 0.0
        %8437 = vmatprep.mubr.f32.mxu0 0.0
        %8438 = vmatmul.mubr.f32.gmra.mxu0 %v8368
        %v8439 = vpop.f32.mrf.mxu0
        %v8440 = vadd.f32 0.0, %v8439
        %v8441 = vpop.f32.mrf.mxu0
        %8442 = vmatprep.mubr.f32.mxu0 0.0
        %8443 = vmatmul.mubr.f32.gmra.mxu0 %v8371
        %v8444 = vpop.f32.mrf.mxu0
        %v8445 = vadd.f32 0.0, %v8444
        %v8446 = vpop.f32.mrf.mxu0
        %8447 = vdwg.mxu0
        %8464 = vrot.lane.b32.xlu0 %v6577, 16
        %v8465 = vpop.permute.xlu0 %8464
        %8466 = vrot.lane.b32.xlu0 %v6582, 16
        %v8467 = vpop.permute.xlu0 %8466
        %8468 = vrot.lane.b32.xlu0 %v6658, 16
        %v8469 = vpop.permute.xlu0 %8468
        %8470 = vrot.lane.b32.xlu0 %v6663, 16
        %v8471 = vpop.permute.xlu0 %8470
        %8472 = vrot.lane.b32.xlu0 %v6739, 16
        %v8473 = vpop.permute.xlu0 %8472
        %8474 = vrot.lane.b32.xlu0 %v6744, 16
        %v8475 = vpop.permute.xlu0 %8474
        %8476 = vrot.lane.b32.xlu0 %v6820, 16
        %v8477 = vpop.permute.xlu0 %8476
        %8478 = vrot.lane.b32.xlu0 %v6825, 16
        %v8479 = vpop.permute.xlu0 %8478
        %8480 = vrot.lane.b32.xlu0 %v6901, 16
        %v8481 = vpop.permute.xlu0 %8480
        %8482 = vrot.lane.b32.xlu0 %v6906, 16
        %v8483 = vpop.permute.xlu0 %8482
        %8484 = vrot.lane.b32.xlu0 %v6982, 16
        %v8485 = vpop.permute.xlu0 %8484
        %8486 = vrot.lane.b32.xlu0 %v6987, 16
        %v8487 = vpop.permute.xlu0 %8486
        %8488 = vrot.lane.b32.xlu0 %v7063, 16
        %v8489 = vpop.permute.xlu0 %8488
        %8490 = vrot.lane.b32.xlu0 %v7068, 16
        %v8491 = vpop.permute.xlu0 %8490
        %8492 = vrot.lane.b32.xlu0 %v7144, 16
        %v8493 = vpop.permute.xlu0 %8492
        %8494 = vrot.lane.b32.xlu0 %v7149, 16
        %v8495 = vpop.permute.xlu0 %8494
        %8528 = vrot.lane.b32.xlu0 %v7225, 32
        %v8529 = vpop.permute.xlu0 %8528
        %8530 = vrot.lane.b32.xlu0 %v7230, 32
        %v8531 = vpop.permute.xlu0 %8530
        %8532 = vrot.lane.b32.xlu0 %v7306, 32
        %v8533 = vpop.permute.xlu0 %8532
        %8534 = vrot.lane.b32.xlu0 %v7311, 32
        %v8535 = vpop.permute.xlu0 %8534
        %8536 = vrot.lane.b32.xlu0 %v7387, 32
        %v8537 = vpop.permute.xlu0 %8536
        %8538 = vrot.lane.b32.xlu0 %v7392, 32
        %v8539 = vpop.permute.xlu0 %8538
        %8540 = vrot.lane.b32.xlu0 %v7468, 32
        %v8541 = vpop.permute.xlu0 %8540
        %8542 = vrot.lane.b32.xlu0 %v7473, 32
        %v8543 = vpop.permute.xlu0 %8542
        %8544 = vrot.lane.b32.xlu0 %v7549, 32
        %v8545 = vpop.permute.xlu0 %8544
        %8546 = vrot.lane.b32.xlu0 %v7554, 32
        %v8547 = vpop.permute.xlu0 %8546
        %8548 = vrot.lane.b32.xlu0 %v7630, 32
        %v8549 = vpop.permute.xlu0 %8548
        %8550 = vrot.lane.b32.xlu0 %v7635, 32
        %v8551 = vpop.permute.xlu0 %8550
        %8552 = vrot.lane.b32.xlu0 %v7711, 32
        %v8553 = vpop.permute.xlu0 %8552
        %8554 = vrot.lane.b32.xlu0 %v7716, 32
        %v8555 = vpop.permute.xlu0 %8554
        %8556 = vrot.lane.b32.xlu0 %v7792, 32
        %v8557 = vpop.permute.xlu0 %8556
        %8558 = vrot.lane.b32.xlu0 %v7797, 32
        %v8559 = vpop.permute.xlu0 %8558
        %8592 = vrot.lane.b32.xlu0 %v7873, 48
        %v8593 = vpop.permute.xlu0 %8592
        %8594 = vrot.lane.b32.xlu0 %v7878, 48
        %v8595 = vpop.permute.xlu0 %8594
        %8596 = vrot.lane.b32.xlu0 %v7954, 48
        %v8597 = vpop.permute.xlu0 %8596
        %8598 = vrot.lane.b32.xlu0 %v7959, 48
        %v8599 = vpop.permute.xlu0 %8598
        %8600 = vrot.lane.b32.xlu0 %v8035, 48
        %v8601 = vpop.permute.xlu0 %8600
        %8602 = vrot.lane.b32.xlu0 %v8040, 48
        %v8603 = vpop.permute.xlu0 %8602
        %8604 = vrot.lane.b32.xlu0 %v8116, 48
        %v8605 = vpop.permute.xlu0 %8604
        %8606 = vrot.lane.b32.xlu0 %v8121, 48
        %v8607 = vpop.permute.xlu0 %8606
        %8608 = vrot.lane.b32.xlu0 %v8197, 48
        %v8609 = vpop.permute.xlu0 %8608
        %8610 = vrot.lane.b32.xlu0 %v8202, 48
        %v8611 = vpop.permute.xlu0 %8610
        %8612 = vrot.lane.b32.xlu0 %v8278, 48
        %v8613 = vpop.permute.xlu0 %8612
        %8614 = vrot.lane.b32.xlu0 %v8283, 48
        %v8615 = vpop.permute.xlu0 %8614
        %8616 = vrot.lane.b32.xlu0 %v8359, 48
        %v8617 = vpop.permute.xlu0 %8616
        %8618 = vrot.lane.b32.xlu0 %v8364, 48
        %v8619 = vpop.permute.xlu0 %8618
        %8620 = vrot.lane.b32.xlu0 %v8440, 48
        %v8621 = vpop.permute.xlu0 %8620
        %8622 = vrot.lane.b32.xlu0 %v8445, 48
        %v8623 = vpop.permute.xlu0 %8622
        %v8640 = vsel %vm2431, %v5929, %v8465
        %v8641 = vsel %vm2431, %v5934, %v8467
        %v8642 = vsel %vm2431, %v6010, %v8469
        %v8643 = vsel %vm2431, %v6015, %v8471
        %v8644 = vsel %vm2431, %v6091, %v8473
        %v8645 = vsel %vm2431, %v6096, %v8475
        %v8646 = vsel %vm2431, %v6172, %v8477
        %v8647 = vsel %vm2431, %v6177, %v8479
        %v8648 = vsel %vm2431, %v6253, %v8481
        %v8649 = vsel %vm2431, %v6258, %v8483
        %v8650 = vsel %vm2431, %v6334, %v8485
        %v8651 = vsel %vm2431, %v6339, %v8487
        %v8652 = vsel %vm2431, %v6415, %v8489
        %v8653 = vsel %vm2431, %v6420, %v8491
        %v8654 = vsel %vm2431, %v6496, %v8493
        %v8655 = vsel %vm2431, %v6501, %v8495
        %v8656 = vsel %vm1290, %v8640, %v8529
        %v8657 = vsel %vm1290, %v8641, %v8531
        %v8658 = vsel %vm1290, %v8642, %v8533
        %v8659 = vsel %vm1290, %v8643, %v8535
        %v8660 = vsel %vm1290, %v8644, %v8537
        %v8661 = vsel %vm1290, %v8645, %v8539
        %v8662 = vsel %vm1290, %v8646, %v8541
        %v8663 = vsel %vm1290, %v8647, %v8543
        %v8664 = vsel %vm1290, %v8648, %v8545
        %v8665 = vsel %vm1290, %v8649, %v8547
        %v8666 = vsel %vm1290, %v8650, %v8549
        %v8667 = vsel %vm1290, %v8651, %v8551
        %v8668 = vsel %vm1290, %v8652, %v8553
        %v8669 = vsel %vm1290, %v8653, %v8555
        %v8670 = vsel %vm1290, %v8654, %v8557
        %v8671 = vsel %vm1290, %v8655, %v8559
        %vm8672 = vcmask 392192
        %v8673 = vsel %vm8672, %v8656, %v8593
        %v8674 = vsel %vm8672, %v8657, %v8595
        %v8675 = vsel %vm8672, %v8658, %v8597
        %v8676 = vsel %vm8672, %v8659, %v8599
        %v8677 = vsel %vm8672, %v8660, %v8601
        %v8678 = vsel %vm8672, %v8661, %v8603
        %v8679 = vsel %vm8672, %v8662, %v8605
        %v8680 = vsel %vm8672, %v8663, %v8607
        %v8681 = vsel %vm8672, %v8664, %v8609
        %v8682 = vsel %vm8672, %v8665, %v8611
        %v8683 = vsel %vm8672, %v8666, %v8613
        %v8684 = vsel %vm8672, %v8667, %v8615
        %v8685 = vsel %vm8672, %v8668, %v8617
        %v8686 = vsel %vm8672, %v8669, %v8619
        %v8687 = vsel %vm8672, %v8670, %v8621
        %v8688 = vsel %vm8672, %v8671, %v8623
        %v8689 = vld [vmem:[#allocation16] sm:$0xff]
        %v8690 = vld [vmem:[#allocation16 + $0x8] sm:$0xff]
        %v8691 = vld [vmem:[#allocation16 + $0x10] sm:$0xff]
        %v8692 = vld [vmem:[#allocation16 + $0x18] sm:$0xff]
        %v8693 = vld [vmem:[#allocation16 + $0x20] sm:$0xff]
        %v8694 = vld [vmem:[#allocation16 + $0x28] sm:$0xff]
        %v8695 = vld [vmem:[#allocation16 + $0x30] sm:$0xff]
        %v8696 = vld [vmem:[#allocation16 + $0x38] sm:$0xff]
        %v8697 = vld [vmem:[#allocation17] sm:$0x1]
        %v8699 = vlaneseq
        %v8700 = vshrl.u32 %v8699, 7
        %v8701 = vsub.s32 0, %v8700
        %v8702 = vrot.slane %v8697, %v8701
        %v8705 = vsel %vm1533, %v8673, 0
        %v8708 = vsel %vm1533, %v8674, 0
        %v8711 = vsel %vm1533, %v8675, 0
        %v8714 = vsel %vm1533, %v8676, 0
        %v8717 = vsel %vm1533, %v8677, 0
        %v8720 = vsel %vm1533, %v8678, 0
        %v8723 = vsel %vm1533, %v8679, 0
        %v8726 = vsel %vm1533, %v8680, 0
        %v8729 = vsel %vm1533, %v8681, 0
        %v8732 = vsel %vm1533, %v8682, 0
        %v8735 = vsel %vm1533, %v8683, 0
        %v8738 = vsel %vm1533, %v8684, 0
        %v8741 = vsel %vm1533, %v8685, 0
        %v8744 = vsel %vm1533, %v8686, 0
        %v8747 = vsel %vm1533, %v8687, 0
        %v8750 = vsel %vm1533, %v8688, 0
        %8752 = vmatprep.subr.mxu0 0.0
        %8753 = vmatpush1.msra.mxu0 0.0
        %8754 = vmatprep.subr.mxu0 0.0
        %8755 = vmatpush1.msra.mxu0 0.0
        %8756 = vmatprep.subr.mxu0 0.0
        %8757 = vmatpush1.msra.mxu0 0.0
        %8758 = vmatprep.subr.mxu0 0.0
        %8759 = vmatpush1.msra.mxu0 0.0
        %8760 = vmatprep.subr.mxu0 0.0
        %8761 = vmatpush1.msra.mxu0 0.0
        %8762 = vmatprep.subr.mxu0 0.0
        %8763 = vmatpush1.msra.mxu0 0.0
        %8764 = vmatprep.subr.mxu0 0.0
        %8765 = vmatpush1.msra.mxu0 0.0
        %8766 = vmatprep.subr.mxu0 0.0
        %8767 = vmatpush1.msra.mxu0 0.0
        %8768 = vmatprep.subr.mxu0 0.0
        %8769 = vmatpush1.msra.mxu0 %v8696
        %8770 = vmatprep.subr.mxu0 0.0
        %8771 = vmatpush1.msra.mxu0 %v8695
        %8772 = vmatprep.subr.mxu0 0.0
        %8773 = vmatpush1.msra.mxu0 %v8694
        %8774 = vmatprep.subr.mxu0 0.0
        %8775 = vmatpush1.msra.mxu0 %v8693
        %8776 = vmatprep.subr.mxu0 0.0
        %8777 = vmatpush1.msra.mxu0 %v8692
        %8778 = vmatprep.subr.mxu0 0.0
        %8779 = vmatpush1.msra.mxu0 %v8691
        %8780 = vmatprep.subr.mxu0 0.0
        %8781 = vmatpush1.msra.mxu0 %v8690
        %8782 = vmatprep.subr.mxu0 0.0
        %8783 = vmatpush1.msra.mxu0 %v8689
        %8784 = vmatprep.subr.mxu0 0.0
        %8785 = vmatpush2.msra.mxu0 0.0
        %8786 = vmatprep.subr.mxu0 0.0
        %8787 = vmatpush2.msra.mxu0 0.0
        %8788 = vmatprep.subr.mxu0 0.0
        %8789 = vmatpush2.msra.mxu0 0.0
        %8790 = vmatprep.subr.mxu0 0.0
        %8791 = vmatpush2.msra.mxu0 0.0
        %8792 = vmatprep.subr.mxu0 0.0
        %8793 = vmatpush2.msra.mxu0 0.0
        %8794 = vmatprep.subr.mxu0 0.0
        %8795 = vmatpush2.msra.mxu0 0.0
        %8796 = vmatprep.subr.mxu0 0.0
        %8797 = vmatpush2.msra.mxu0 0.0
        %8798 = vmatprep.subr.mxu0 0.0
        %8799 = vmatpush2.msra.mxu0 0.0
        %8800 = vmatprep.subr.mxu0 0.0
        %8801 = vmatpush2.msra.mxu0 0.0
        %8802 = vmatprep.subr.mxu0 0.0
        %8803 = vmatpush2.msra.mxu0 0.0
        %8804 = vmatprep.subr.mxu0 0.0
        %8805 = vmatpush2.msra.mxu0 0.0
        %8806 = vmatprep.subr.mxu0 0.0
        %8807 = vmatpush2.msra.mxu0 0.0
        %8808 = vmatprep.subr.mxu0 0.0
        %8809 = vmatpush2.msra.mxu0 0.0
        %8810 = vmatprep.subr.mxu0 0.0
        %8811 = vmatpush2.msra.mxu0 0.0
        %8812 = vmatprep.subr.mxu0 0.0
        %8813 = vmatpush2.msra.mxu0 0.0
        %8814 = vmatprep.subr.mxu0 0.0
        %8815 = vmatpush2.msra.mxu0 0.0
        %8816 = vmatprep.mubr.f32.mxu0 0.0
        %8817 = vmatmul.mubr.f32.gmra.mxu0 %v8705
        %v8818 = vpop.f32.mrf.mxu0
        %v8819 = vadd.f32 %v8702, %v8818
        %v8820 = vpop.f32.mrf.mxu0
        %8821 = vmatprep.mubr.f32.mxu0 0.0
        %8822 = vmatmul.mubr.f32.gmra.mxu0 %v8708
        %v8823 = vpop.f32.mrf.mxu0
        %v8824 = vadd.f32 %v8702, %v8823
        %v8825 = vpop.f32.mrf.mxu0
        %8826 = vmatprep.mubr.f32.mxu0 0.0
        %8827 = vmatmul.mubr.f32.gmra.mxu0 %v8711
        %v8828 = vpop.f32.mrf.mxu0
        %v8829 = vadd.f32 %v8702, %v8828
        %v8830 = vpop.f32.mrf.mxu0
        %8831 = vmatprep.mubr.f32.mxu0 0.0
        %8832 = vmatmul.mubr.f32.gmra.mxu0 %v8714
        %v8833 = vpop.f32.mrf.mxu0
        %v8834 = vadd.f32 %v8702, %v8833
        %v8835 = vpop.f32.mrf.mxu0
        %8836 = vmatprep.mubr.f32.mxu0 0.0
        %8837 = vmatmul.mubr.f32.gmra.mxu0 %v8717
        %v8838 = vpop.f32.mrf.mxu0
        %v8839 = vadd.f32 %v8702, %v8838
        %v8840 = vpop.f32.mrf.mxu0
        %8841 = vmatprep.mubr.f32.mxu0 0.0
        %8842 = vmatmul.mubr.f32.gmra.mxu0 %v8720
        %v8843 = vpop.f32.mrf.mxu0
        %v8844 = vadd.f32 %v8702, %v8843
        %v8845 = vpop.f32.mrf.mxu0
        %8846 = vmatprep.mubr.f32.mxu0 0.0
        %8847 = vmatmul.mubr.f32.gmra.mxu0 %v8723
        %v8848 = vpop.f32.mrf.mxu0
        %v8849 = vadd.f32 %v8702, %v8848
        %v8850 = vpop.f32.mrf.mxu0
        %8851 = vmatprep.mubr.f32.mxu0 0.0
        %8852 = vmatmul.mubr.f32.gmra.mxu0 %v8726
        %v8853 = vpop.f32.mrf.mxu0
        %v8854 = vadd.f32 %v8702, %v8853
        %v8855 = vpop.f32.mrf.mxu0
        %8856 = vmatprep.mubr.f32.mxu0 0.0
        %8857 = vmatmul.mubr.f32.gmra.mxu0 %v8729
        %v8858 = vpop.f32.mrf.mxu0
        %v8859 = vadd.f32 %v8702, %v8858
        %v8860 = vpop.f32.mrf.mxu0
        %8861 = vmatprep.mubr.f32.mxu0 0.0
        %8862 = vmatmul.mubr.f32.gmra.mxu0 %v8732
        %v8863 = vpop.f32.mrf.mxu0
        %v8864 = vadd.f32 %v8702, %v8863
        %v8865 = vpop.f32.mrf.mxu0
        %8866 = vmatprep.mubr.f32.mxu0 0.0
        %8867 = vmatmul.mubr.f32.gmra.mxu0 %v8735
        %v8868 = vpop.f32.mrf.mxu0
        %v8869 = vadd.f32 %v8702, %v8868
        %v8870 = vpop.f32.mrf.mxu0
        %8871 = vmatprep.mubr.f32.mxu0 0.0
        %8872 = vmatmul.mubr.f32.gmra.mxu0 %v8738
        %v8873 = vpop.f32.mrf.mxu0
        %v8874 = vadd.f32 %v8702, %v8873
        %v8875 = vpop.f32.mrf.mxu0
        %8876 = vmatprep.mubr.f32.mxu0 0.0
        %8877 = vmatmul.mubr.f32.gmra.mxu0 %v8741
        %v8878 = vpop.f32.mrf.mxu0
        %v8879 = vadd.f32 %v8702, %v8878
        %v8880 = vpop.f32.mrf.mxu0
        %8881 = vmatprep.mubr.f32.mxu0 0.0
        %8882 = vmatmul.mubr.f32.gmra.mxu0 %v8744
        %v8883 = vpop.f32.mrf.mxu0
        %v8884 = vadd.f32 %v8702, %v8883
        %v8885 = vpop.f32.mrf.mxu0
        %8886 = vmatprep.mubr.f32.mxu0 0.0
        %8887 = vmatmul.mubr.f32.gmra.mxu0 %v8747
        %v8888 = vpop.f32.mrf.mxu0
        %v8889 = vadd.f32 %v8702, %v8888
        %v8890 = vpop.f32.mrf.mxu0
        %8891 = vmatprep.mubr.f32.mxu0 0.0
        %8892 = vmatmul.mubr.f32.gmra.mxu0 %v8750
        %v8893 = vpop.f32.mrf.mxu0
        %v8894 = vadd.f32 %v8702, %v8893
        %v8895 = vpop.f32.mrf.mxu0
        %8896 = vdwg.mxu0
        %v8897 = vadd.f32 %v8819, %v1502
        %v8898 = vadd.f32 %v8824, %v1503
        %v8899 = vadd.f32 %v8829, %v1504
        %v8900 = vadd.f32 %v8834, %v1505
        %v8901 = vadd.f32 %v8839, %v1506
        %v8902 = vadd.f32 %v8844, %v1507
        %v8903 = vadd.f32 %v8849, %v1508
        %v8904 = vadd.f32 %v8854, %v1509
        %v8905 = vadd.f32 %v8859, %v1510
        %v8906 = vadd.f32 %v8864, %v1511
        %v8907 = vadd.f32 %v8869, %v1512
        %v8908 = vadd.f32 %v8874, %v1513
        %v8909 = vadd.f32 %v8879, %v1514
        %v8910 = vadd.f32 %v8884, %v1515
        %v8911 = vadd.f32 %v8889, %v1516
        %v8912 = vadd.f32 %v8894, %v1517
        %v8913 = vsel %vm1533, %v8897, 0.0
        %8914 = vadd.xlane.f32.xlu0 %v8913
        %v8915 = vpop.xlane.xlu0 %8914
        %v8916 = vsel %vm1533, %v8898, 0.0
        %8917 = vadd.xlane.f32.xlu0 %v8916
        %v8918 = vpop.xlane.xlu0 %8917
        %v8919 = vsel %vm1533, %v8899, 0.0
        %8920 = vadd.xlane.f32.xlu0 %v8919
        %v8921 = vpop.xlane.xlu0 %8920
        %v8922 = vsel %vm1533, %v8900, 0.0
        %8923 = vadd.xlane.f32.xlu0 %v8922
        %v8924 = vpop.xlane.xlu0 %8923
        %v8925 = vsel %vm1533, %v8901, 0.0
        %8926 = vadd.xlane.f32.xlu0 %v8925
        %v8927 = vpop.xlane.xlu0 %8926
        %v8928 = vsel %vm1533, %v8902, 0.0
        %8929 = vadd.xlane.f32.xlu0 %v8928
        %v8930 = vpop.xlane.xlu0 %8929
        %v8931 = vsel %vm1533, %v8903, 0.0
        %8932 = vadd.xlane.f32.xlu0 %v8931
        %v8933 = vpop.xlane.xlu0 %8932
        %v8934 = vsel %vm1533, %v8904, 0.0
        %8935 = vadd.xlane.f32.xlu0 %v8934
        %v8936 = vpop.xlane.xlu0 %8935
        %v8937 = vsel %vm1533, %v8905, 0.0
        %8938 = vadd.xlane.f32.xlu0 %v8937
        %v8939 = vpop.xlane.xlu0 %8938
        %v8940 = vsel %vm1533, %v8906, 0.0
        %8941 = vadd.xlane.f32.xlu0 %v8940
        %v8942 = vpop.xlane.xlu0 %8941
        %v8943 = vsel %vm1533, %v8907, 0.0
        %8944 = vadd.xlane.f32.xlu0 %v8943
        %v8945 = vpop.xlane.xlu0 %8944
        %v8946 = vsel %vm1533, %v8908, 0.0
        %8947 = vadd.xlane.f32.xlu0 %v8946
        %v8948 = vpop.xlane.xlu0 %8947
        %v8949 = vsel %vm1533, %v8909, 0.0
        %8950 = vadd.xlane.f32.xlu0 %v8949
        %v8951 = vpop.xlane.xlu0 %8950
        %v8952 = vsel %vm1533, %v8910, 0.0
        %8953 = vadd.xlane.f32.xlu0 %v8952
        %v8954 = vpop.xlane.xlu0 %8953
        %v8955 = vsel %vm1533, %v8911, 0.0
        %8956 = vadd.xlane.f32.xlu0 %v8955
        %v8957 = vpop.xlane.xlu0 %8956
        %v8958 = vsel %vm1533, %v8912, 0.0
        %8959 = vadd.xlane.f32.xlu0 %v8958
        %v8960 = vpop.xlane.xlu0 %8959
        %v8961 = vrcp.pop 64.0
        %v8962 = vmul.f32 %v8915, %v8961
        %v8963 = vmul.f32 %v8918, %v8961
        %v8964 = vmul.f32 %v8921, %v8961
        %v8965 = vmul.f32 %v8924, %v8961
        %v8966 = vmul.f32 %v8927, %v8961
        %v8967 = vmul.f32 %v8930, %v8961
        %v8968 = vmul.f32 %v8933, %v8961
        %v8969 = vmul.f32 %v8936, %v8961
        %v8970 = vmul.f32 %v8939, %v8961
        %v8971 = vmul.f32 %v8942, %v8961
        %v8972 = vmul.f32 %v8945, %v8961
        %v8973 = vmul.f32 %v8948, %v8961
        %v8974 = vmul.f32 %v8951, %v8961
        %v8975 = vmul.f32 %v8954, %v8961
        %v8976 = vmul.f32 %v8957, %v8961
        %v8977 = vmul.f32 %v8960, %v8961
        %v8978 = vsub.f32 %v8897, %v8962
        %v8979 = vsub.f32 %v8898, %v8963
        %v8980 = vsub.f32 %v8899, %v8964
        %v8981 = vsub.f32 %v8900, %v8965
        %v8982 = vsub.f32 %v8901, %v8966
        %v8983 = vsub.f32 %v8902, %v8967
        %v8984 = vsub.f32 %v8903, %v8968
        %v8985 = vsub.f32 %v8904, %v8969
        %v8986 = vsub.f32 %v8905, %v8970
        %v8987 = vsub.f32 %v8906, %v8971
        %v8988 = vsub.f32 %v8907, %v8972
        %v8989 = vsub.f32 %v8908, %v8973
        %v8990 = vsub.f32 %v8909, %v8974
        %v8991 = vsub.f32 %v8910, %v8975
        %v8992 = vsub.f32 %v8911, %v8976
        %v8993 = vsub.f32 %v8912, %v8977
        %v8994 = vmul.f32 %v8978, %v8978
        %v8995 = vmul.f32 %v8979, %v8979
        %v8996 = vmul.f32 %v8980, %v8980
        %v8997 = vmul.f32 %v8981, %v8981
        %v8998 = vmul.f32 %v8982, %v8982
        %v8999 = vmul.f32 %v8983, %v8983
        %v9000 = vmul.f32 %v8984, %v8984
        %v9001 = vmul.f32 %v8985, %v8985
        %v9002 = vmul.f32 %v8986, %v8986
        %v9003 = vmul.f32 %v8987, %v8987
        %v9004 = vmul.f32 %v8988, %v8988
        %v9005 = vmul.f32 %v8989, %v8989
        %v9006 = vmul.f32 %v8990, %v8990
        %v9007 = vmul.f32 %v8991, %v8991
        %v9008 = vmul.f32 %v8992, %v8992
        %v9009 = vmul.f32 %v8993, %v8993
        %v9010 = vsel %vm1533, %v8994, 0.0
        %9011 = vadd.xlane.f32.xlu0 %v9010
        %v9012 = vpop.xlane.xlu0 %9011
        %v9013 = vsel %vm1533, %v8995, 0.0
        %9014 = vadd.xlane.f32.xlu0 %v9013
        %v9015 = vpop.xlane.xlu0 %9014
        %v9016 = vsel %vm1533, %v8996, 0.0
        %9017 = vadd.xlane.f32.xlu0 %v9016
        %v9018 = vpop.xlane.xlu0 %9017
        %v9019 = vsel %vm1533, %v8997, 0.0
        %9020 = vadd.xlane.f32.xlu0 %v9019
        %v9021 = vpop.xlane.xlu0 %9020
        %v9022 = vsel %vm1533, %v8998, 0.0
        %9023 = vadd.xlane.f32.xlu0 %v9022
        %v9024 = vpop.xlane.xlu0 %9023
        %v9025 = vsel %vm1533, %v8999, 0.0
        %9026 = vadd.xlane.f32.xlu0 %v9025
        %v9027 = vpop.xlane.xlu0 %9026
        %v9028 = vsel %vm1533, %v9000, 0.0
        %9029 = vadd.xlane.f32.xlu0 %v9028
        %v9030 = vpop.xlane.xlu0 %9029
        %v9031 = vsel %vm1533, %v9001, 0.0
        %9032 = vadd.xlane.f32.xlu0 %v9031
        %v9033 = vpop.xlane.xlu0 %9032
        %v9034 = vsel %vm1533, %v9002, 0.0
        %9035 = vadd.xlane.f32.xlu0 %v9034
        %v9036 = vpop.xlane.xlu0 %9035
        %v9037 = vsel %vm1533, %v9003, 0.0
        %9038 = vadd.xlane.f32.xlu0 %v9037
        %v9039 = vpop.xlane.xlu0 %9038
        %v9040 = vsel %vm1533, %v9004, 0.0
        %9041 = vadd.xlane.f32.xlu0 %v9040
        %v9042 = vpop.xlane.xlu0 %9041
        %v9043 = vsel %vm1533, %v9005, 0.0
        %9044 = vadd.xlane.f32.xlu0 %v9043
        %v9045 = vpop.xlane.xlu0 %9044
        %v9046 = vsel %vm1533, %v9006, 0.0
        %9047 = vadd.xlane.f32.xlu0 %v9046
        %v9048 = vpop.xlane.xlu0 %9047
        %v9049 = vsel %vm1533, %v9007, 0.0
        %9050 = vadd.xlane.f32.xlu0 %v9049
        %v9051 = vpop.xlane.xlu0 %9050
        %v9052 = vsel %vm1533, %v9008, 0.0
        %9053 = vadd.xlane.f32.xlu0 %v9052
        %v9054 = vpop.xlane.xlu0 %9053
        %v9055 = vsel %vm1533, %v9009, 0.0
        %9056 = vadd.xlane.f32.xlu0 %v9055
        %v9057 = vpop.xlane.xlu0 %9056
        %v9058 = vmul.f32 %v9012, %v8961
        %v9059 = vmul.f32 %v9015, %v8961
        %v9060 = vmul.f32 %v9018, %v8961
        %v9061 = vmul.f32 %v9021, %v8961
        %v9062 = vmul.f32 %v9024, %v8961
        %v9063 = vmul.f32 %v9027, %v8961
        %v9064 = vmul.f32 %v9030, %v8961
        %v9065 = vmul.f32 %v9033, %v8961
        %v9066 = vmul.f32 %v9036, %v8961
        %v9067 = vmul.f32 %v9039, %v8961
        %v9068 = vmul.f32 %v9042, %v8961
        %v9069 = vmul.f32 %v9045, %v8961
        %v9070 = vmul.f32 %v9048, %v8961
        %v9071 = vmul.f32 %v9051, %v8961
        %v9072 = vmul.f32 %v9054, %v8961
        %v9073 = vmul.f32 %v9057, %v8961
        %v9074 = vadd.f32 %v9058, 1e-05
        %v9075 = vadd.f32 %v9059, 1e-05
        %v9076 = vadd.f32 %v9060, 1e-05
        %v9077 = vadd.f32 %v9061, 1e-05
        %v9078 = vadd.f32 %v9062, 1e-05
        %v9079 = vadd.f32 %v9063, 1e-05
        %v9080 = vadd.f32 %v9064, 1e-05
        %v9081 = vadd.f32 %v9065, 1e-05
        %v9082 = vadd.f32 %v9066, 1e-05
        %v9083 = vadd.f32 %v9067, 1e-05
        %v9084 = vadd.f32 %v9068, 1e-05
        %v9085 = vadd.f32 %v9069, 1e-05
        %v9086 = vadd.f32 %v9070, 1e-05
        %v9087 = vadd.f32 %v9071, 1e-05
        %v9088 = vadd.f32 %v9072, 1e-05
        %v9089 = vadd.f32 %v9073, 1e-05
        %v9090 = vrsqrt.pop %v9074
        %v9091 = vrsqrt.pop %v9075
        %v9092 = vrsqrt.pop %v9076
        %v9093 = vrsqrt.pop %v9077
        %v9094 = vrsqrt.pop %v9078
        %v9095 = vrsqrt.pop %v9079
        %v9096 = vrsqrt.pop %v9080
        %v9097 = vrsqrt.pop %v9081
        %v9098 = vrsqrt.pop %v9082
        %v9099 = vrsqrt.pop %v9083
        %v9100 = vrsqrt.pop %v9084
        %v9101 = vrsqrt.pop %v9085
        %v9102 = vrsqrt.pop %v9086
        %v9103 = vrsqrt.pop %v9087
        %v9104 = vrsqrt.pop %v9088
        %v9105 = vrsqrt.pop %v9089
        %v9106 = vmul.f32 %v8978, %v9090
        %v9107 = vmul.f32 %v8979, %v9091
        %v9108 = vmul.f32 %v8980, %v9092
        %v9109 = vmul.f32 %v8981, %v9093
        %v9110 = vmul.f32 %v8982, %v9094
        %v9111 = vmul.f32 %v8983, %v9095
        %v9112 = vmul.f32 %v8984, %v9096
        %v9113 = vmul.f32 %v8985, %v9097
        %v9114 = vmul.f32 %v8986, %v9098
        %v9115 = vmul.f32 %v8987, %v9099
        %v9116 = vmul.f32 %v8988, %v9100
        %v9117 = vmul.f32 %v8989, %v9101
        %v9118 = vmul.f32 %v8990, %v9102
        %v9119 = vmul.f32 %v8991, %v9103
        %v9120 = vmul.f32 %v8992, %v9104
        %v9121 = vmul.f32 %v8993, %v9105
        %v9122 = vld [vmem:[#allocation19] sm:$0x1]
        %v9124 = vlaneseq
        %v9125 = vshrl.u32 %v9124, 7
        %v9126 = vsub.s32 0, %v9125
        %v9127 = vrot.slane %v9122, %v9126
        %v9129 = vmul.f32 %v9106, %v9127
        %v9130 = vmul.f32 %v9107, %v9127
        %v9131 = vmul.f32 %v9108, %v9127
        %v9132 = vmul.f32 %v9109, %v9127
        %v9133 = vmul.f32 %v9110, %v9127
        %v9134 = vmul.f32 %v9111, %v9127
        %v9135 = vmul.f32 %v9112, %v9127
        %v9136 = vmul.f32 %v9113, %v9127
        %v9137 = vmul.f32 %v9114, %v9127
        %v9138 = vmul.f32 %v9115, %v9127
        %v9139 = vmul.f32 %v9116, %v9127
        %v9140 = vmul.f32 %v9117, %v9127
        %v9141 = vmul.f32 %v9118, %v9127
        %v9142 = vmul.f32 %v9119, %v9127
        %v9143 = vmul.f32 %v9120, %v9127
        %v9144 = vmul.f32 %v9121, %v9127
        %v9145 = vld [vmem:[#allocation20] sm:$0x1]
        %v9147 = vlaneseq
        %v9148 = vshrl.u32 %v9147, 7
        %v9149 = vsub.s32 0, %v9148
        %v9150 = vrot.slane %v9145, %v9149
        %v9152 = vadd.f32 %v9129, %v9150
        %v9153 = vadd.f32 %v9130, %v9150
        %v9154 = vadd.f32 %v9131, %v9150
        %v9155 = vadd.f32 %v9132, %v9150
        %v9156 = vadd.f32 %v9133, %v9150
        %v9157 = vadd.f32 %v9134, %v9150
        %v9158 = vadd.f32 %v9135, %v9150
        %v9159 = vadd.f32 %v9136, %v9150
        %v9160 = vadd.f32 %v9137, %v9150
        %v9161 = vadd.f32 %v9138, %v9150
        %v9162 = vadd.f32 %v9139, %v9150
        %v9163 = vadd.f32 %v9140, %v9150
        %v9164 = vadd.f32 %v9141, %v9150
        %v9165 = vadd.f32 %v9142, %v9150
        %v9166 = vadd.f32 %v9143, %v9150
        %v9167 = vadd.f32 %v9144, %v9150
        %v9168 = vld [vmem:[#allocation25] sm:$0xff]
        %v9169 = vld [vmem:[#allocation25 + $0x8] sm:$0xff]
        %v9170 = vld [vmem:[#allocation25 + $0x10] sm:$0xff]
        %v9171 = vld [vmem:[#allocation25 + $0x18] sm:$0xff]
        %v9172 = vld [vmem:[#allocation25 + $0x20] sm:$0xff]
        %v9173 = vld [vmem:[#allocation25 + $0x28] sm:$0xff]
        %v9174 = vld [vmem:[#allocation25 + $0x30] sm:$0xff]
        %v9175 = vld [vmem:[#allocation25 + $0x38] sm:$0xff]
        %v9176 = vld [vmem:[#allocation26] sm:$0x1]
        %v9178 = vlaneseq
        %v9179 = vshrl.u32 %v9178, 7
        %v9180 = vsub.s32 0, %v9179
        %v9181 = vrot.slane %v9176, %v9180
        %v9184 = vsel %vm1533, %v9152, 0
        %v9187 = vsel %vm1533, %v9153, 0
        %v9190 = vsel %vm1533, %v9154, 0
        %v9193 = vsel %vm1533, %v9155, 0
        %v9196 = vsel %vm1533, %v9156, 0
        %v9199 = vsel %vm1533, %v9157, 0
        %v9202 = vsel %vm1533, %v9158, 0
        %v9205 = vsel %vm1533, %v9159, 0
        %v9208 = vsel %vm1533, %v9160, 0
        %v9211 = vsel %vm1533, %v9161, 0
        %v9214 = vsel %vm1533, %v9162, 0
        %v9217 = vsel %vm1533, %v9163, 0
        %v9220 = vsel %vm1533, %v9164, 0
        %v9223 = vsel %vm1533, %v9165, 0
        %v9226 = vsel %vm1533, %v9166, 0
        %v9229 = vsel %vm1533, %v9167, 0
        %9231 = vmatprep.subr.mxu0 0.0
        %9232 = vmatpush1.msra.mxu0 0.0
        %9233 = vmatprep.subr.mxu0 0.0
        %9234 = vmatpush1.msra.mxu0 0.0
        %9235 = vmatprep.subr.mxu0 0.0
        %9236 = vmatpush1.msra.mxu0 0.0
        %9237 = vmatprep.subr.mxu0 0.0
        %9238 = vmatpush1.msra.mxu0 0.0
        %9239 = vmatprep.subr.mxu0 0.0
        %9240 = vmatpush1.msra.mxu0 0.0
        %9241 = vmatprep.subr.mxu0 0.0
        %9242 = vmatpush1.msra.mxu0 0.0
        %9243 = vmatprep.subr.mxu0 0.0
        %9244 = vmatpush1.msra.mxu0 0.0
        %9245 = vmatprep.subr.mxu0 0.0
        %9246 = vmatpush1.msra.mxu0 0.0
        %9247 = vmatprep.subr.mxu0 0.0
        %9248 = vmatpush1.msra.mxu0 %v9175
        %9249 = vmatprep.subr.mxu0 0.0
        %9250 = vmatpush1.msra.mxu0 %v9174
        %9251 = vmatprep.subr.mxu0 0.0
        %9252 = vmatpush1.msra.mxu0 %v9173
        %9253 = vmatprep.subr.mxu0 0.0
        %9254 = vmatpush1.msra.mxu0 %v9172
        %9255 = vmatprep.subr.mxu0 0.0
        %9256 = vmatpush1.msra.mxu0 %v9171
        %9257 = vmatprep.subr.mxu0 0.0
        %9258 = vmatpush1.msra.mxu0 %v9170
        %9259 = vmatprep.subr.mxu0 0.0
        %9260 = vmatpush1.msra.mxu0 %v9169
        %9261 = vmatprep.subr.mxu0 0.0
        %9262 = vmatpush1.msra.mxu0 %v9168
        %9263 = vmatprep.subr.mxu0 0.0
        %9264 = vmatpush2.msra.mxu0 0.0
        %9265 = vmatprep.subr.mxu0 0.0
        %9266 = vmatpush2.msra.mxu0 0.0
        %9267 = vmatprep.subr.mxu0 0.0
        %9268 = vmatpush2.msra.mxu0 0.0
        %9269 = vmatprep.subr.mxu0 0.0
        %9270 = vmatpush2.msra.mxu0 0.0
        %9271 = vmatprep.subr.mxu0 0.0
        %9272 = vmatpush2.msra.mxu0 0.0
        %9273 = vmatprep.subr.mxu0 0.0
        %9274 = vmatpush2.msra.mxu0 0.0
        %9275 = vmatprep.subr.mxu0 0.0
        %9276 = vmatpush2.msra.mxu0 0.0
        %9277 = vmatprep.subr.mxu0 0.0
        %9278 = vmatpush2.msra.mxu0 0.0
        %9279 = vmatprep.subr.mxu0 0.0
        %9280 = vmatpush2.msra.mxu0 0.0
        %9281 = vmatprep.subr.mxu0 0.0
        %9282 = vmatpush2.msra.mxu0 0.0
        %9283 = vmatprep.subr.mxu0 0.0
        %9284 = vmatpush2.msra.mxu0 0.0
        %9285 = vmatprep.subr.mxu0 0.0
        %9286 = vmatpush2.msra.mxu0 0.0
        %9287 = vmatprep.subr.mxu0 0.0
        %9288 = vmatpush2.msra.mxu0 0.0
        %9289 = vmatprep.subr.mxu0 0.0
        %9290 = vmatpush2.msra.mxu0 0.0
        %9291 = vmatprep.subr.mxu0 0.0
        %9292 = vmatpush2.msra.mxu0 0.0
        %9293 = vmatprep.subr.mxu0 0.0
        %9294 = vmatpush2.msra.mxu0 0.0
        %9295 = vmatprep.mubr.f32.mxu0 0.0
        %9296 = vmatmul.mubr.f32.gmra.mxu0 %v9184
        %v9297 = vpop.f32.mrf.mxu0
        %v9298 = vadd.f32 %v9181, %v9297
        %v9299 = vpop.f32.mrf.mxu0
        %9300 = vmatprep.mubr.f32.mxu0 0.0
        %9301 = vmatmul.mubr.f32.gmra.mxu0 %v9187
        %v9302 = vpop.f32.mrf.mxu0
        %v9303 = vadd.f32 %v9181, %v9302
        %v9304 = vpop.f32.mrf.mxu0
        %9305 = vmatprep.mubr.f32.mxu0 0.0
        %9306 = vmatmul.mubr.f32.gmra.mxu0 %v9190
        %v9307 = vpop.f32.mrf.mxu0
        %v9308 = vadd.f32 %v9181, %v9307
        %v9309 = vpop.f32.mrf.mxu0
        %9310 = vmatprep.mubr.f32.mxu0 0.0
        %9311 = vmatmul.mubr.f32.gmra.mxu0 %v9193
        %v9312 = vpop.f32.mrf.mxu0
        %v9313 = vadd.f32 %v9181, %v9312
        %v9314 = vpop.f32.mrf.mxu0
        %9315 = vmatprep.mubr.f32.mxu0 0.0
        %9316 = vmatmul.mubr.f32.gmra.mxu0 %v9196
        %v9317 = vpop.f32.mrf.mxu0
        %v9318 = vadd.f32 %v9181, %v9317
        %v9319 = vpop.f32.mrf.mxu0
        %9320 = vmatprep.mubr.f32.mxu0 0.0
        %9321 = vmatmul.mubr.f32.gmra.mxu0 %v9199
        %v9322 = vpop.f32.mrf.mxu0
        %v9323 = vadd.f32 %v9181, %v9322
        %v9324 = vpop.f32.mrf.mxu0
        %9325 = vmatprep.mubr.f32.mxu0 0.0
        %9326 = vmatmul.mubr.f32.gmra.mxu0 %v9202
        %v9327 = vpop.f32.mrf.mxu0
        %v9328 = vadd.f32 %v9181, %v9327
        %v9329 = vpop.f32.mrf.mxu0
        %9330 = vmatprep.mubr.f32.mxu0 0.0
        %9331 = vmatmul.mubr.f32.gmra.mxu0 %v9205
        %v9332 = vpop.f32.mrf.mxu0
        %v9333 = vadd.f32 %v9181, %v9332
        %v9334 = vpop.f32.mrf.mxu0
        %9335 = vmatprep.mubr.f32.mxu0 0.0
        %9336 = vmatmul.mubr.f32.gmra.mxu0 %v9208
        %v9337 = vpop.f32.mrf.mxu0
        %v9338 = vadd.f32 %v9181, %v9337
        %v9339 = vpop.f32.mrf.mxu0
        %9340 = vmatprep.mubr.f32.mxu0 0.0
        %9341 = vmatmul.mubr.f32.gmra.mxu0 %v9211
        %v9342 = vpop.f32.mrf.mxu0
        %v9343 = vadd.f32 %v9181, %v9342
        %v9344 = vpop.f32.mrf.mxu0
        %9345 = vmatprep.mubr.f32.mxu0 0.0
        %9346 = vmatmul.mubr.f32.gmra.mxu0 %v9214
        %v9347 = vpop.f32.mrf.mxu0
        %v9348 = vadd.f32 %v9181, %v9347
        %v9349 = vpop.f32.mrf.mxu0
        %9350 = vmatprep.mubr.f32.mxu0 0.0
        %9351 = vmatmul.mubr.f32.gmra.mxu0 %v9217
        %v9352 = vpop.f32.mrf.mxu0
        %v9353 = vadd.f32 %v9181, %v9352
        %v9354 = vpop.f32.mrf.mxu0
        %9355 = vmatprep.mubr.f32.mxu0 0.0
        %9356 = vmatmul.mubr.f32.gmra.mxu0 %v9220
        %v9357 = vpop.f32.mrf.mxu0
        %v9358 = vadd.f32 %v9181, %v9357
        %v9359 = vpop.f32.mrf.mxu0
        %9360 = vmatprep.mubr.f32.mxu0 0.0
        %9361 = vmatmul.mubr.f32.gmra.mxu0 %v9223
        %v9362 = vpop.f32.mrf.mxu0
        %v9363 = vadd.f32 %v9181, %v9362
        %v9364 = vpop.f32.mrf.mxu0
        %9365 = vmatprep.mubr.f32.mxu0 0.0
        %9366 = vmatmul.mubr.f32.gmra.mxu0 %v9226
        %v9367 = vpop.f32.mrf.mxu0
        %v9368 = vadd.f32 %v9181, %v9367
        %v9369 = vpop.f32.mrf.mxu0
        %9370 = vmatprep.mubr.f32.mxu0 0.0
        %9371 = vmatmul.mubr.f32.gmra.mxu0 %v9229
        %v9372 = vpop.f32.mrf.mxu0
        %v9373 = vadd.f32 %v9181, %v9372
        %v9374 = vpop.f32.mrf.mxu0
        %9375 = vdwg.mxu0
        %v9376 = vmax.f32 %v9298, 0.0
        %v9377 = vmax.f32 %v9303, 0.0
        %v9378 = vmax.f32 %v9308, 0.0
        %v9379 = vmax.f32 %v9313, 0.0
        %v9380 = vmax.f32 %v9318, 0.0
        %v9381 = vmax.f32 %v9323, 0.0
        %v9382 = vmax.f32 %v9328, 0.0
        %v9383 = vmax.f32 %v9333, 0.0
        %v9384 = vmax.f32 %v9338, 0.0
        %v9385 = vmax.f32 %v9343, 0.0
        %v9386 = vmax.f32 %v9348, 0.0
        %v9387 = vmax.f32 %v9353, 0.0
        %v9388 = vmax.f32 %v9358, 0.0
        %v9389 = vmax.f32 %v9363, 0.0
        %v9390 = vmax.f32 %v9368, 0.0
        %v9391 = vmax.f32 %v9373, 0.0
        %v9392 = vld [vmem:[%s20] sm:$0xff]
        %v9393 = vld [vmem:[%s20 + $0x8] sm:$0xff]
        %v9394 = vld [vmem:[%s20 + $0x10] sm:$0xff]
        %v9395 = vld [vmem:[%s20 + $0x18] sm:$0xff]
        %v9396 = vld [vmem:[%s20 + $0x20] sm:$0xff]
        %v9397 = vld [vmem:[%s20 + $0x28] sm:$0xff]
        %v9398 = vld [vmem:[%s20 + $0x30] sm:$0xff]
        %v9399 = vld [vmem:[%s20 + $0x38] sm:$0xff]
        %v9400 = vld [vmem:[%s20 + $0x40] sm:$0xff]
        %v9401 = vld [vmem:[%s20 + $0x48] sm:$0xff]
        %v9402 = vld [vmem:[%s20 + $0x50] sm:$0xff]
        %v9403 = vld [vmem:[%s20 + $0x58] sm:$0xff]
        %v9404 = vld [vmem:[%s20 + $0x60] sm:$0xff]
        %v9405 = vld [vmem:[%s20 + $0x68] sm:$0xff]
        %v9406 = vld [vmem:[%s20 + $0x70] sm:$0xff]
        %v9407 = vld [vmem:[%s20 + $0x78] sm:$0xff]
        %v9408 = vld [vmem:[#allocation28] sm:$0x1]
        %v9410 = vlaneseq
        %v9411 = vshrl.u32 %v9410, 7
        %v9412 = vsub.s32 0, %v9411
        %v9413 = vrot.slane %v9408, %v9412
        %9415 = vmatprep.subr.mxu0 0.0
        %9416 = vmatpush1.msra.mxu0 %v9407
        %9417 = vmatprep.subr.mxu0 0.0
        %9418 = vmatpush1.msra.mxu0 %v9406
        %9419 = vmatprep.subr.mxu0 0.0
        %9420 = vmatpush1.msra.mxu0 %v9405
        %9421 = vmatprep.subr.mxu0 0.0
        %9422 = vmatpush1.msra.mxu0 %v9404
        %9423 = vmatprep.subr.mxu0 0.0
        %9424 = vmatpush1.msra.mxu0 %v9403
        %9425 = vmatprep.subr.mxu0 0.0
        %9426 = vmatpush1.msra.mxu0 %v9402
        %9427 = vmatprep.subr.mxu0 0.0
        %9428 = vmatpush1.msra.mxu0 %v9401
        %9429 = vmatprep.subr.mxu0 0.0
        %9430 = vmatpush1.msra.mxu0 %v9400
        %9431 = vmatprep.subr.mxu0 0.0
        %9432 = vmatpush1.msra.mxu0 %v9399
        %9433 = vmatprep.subr.mxu0 0.0
        %9434 = vmatpush1.msra.mxu0 %v9398
        %9435 = vmatprep.subr.mxu0 0.0
        %9436 = vmatpush1.msra.mxu0 %v9397
        %9437 = vmatprep.subr.mxu0 0.0
        %9438 = vmatpush1.msra.mxu0 %v9396
        %9439 = vmatprep.subr.mxu0 0.0
        %9440 = vmatpush1.msra.mxu0 %v9395
        %9441 = vmatprep.subr.mxu0 0.0
        %9442 = vmatpush1.msra.mxu0 %v9394
        %9443 = vmatprep.subr.mxu0 0.0
        %9444 = vmatpush1.msra.mxu0 %v9393
        %9445 = vmatprep.subr.mxu0 0.0
        %9446 = vmatpush1.msra.mxu0 %v9392
        %9447 = vmatprep.subr.mxu0 0.0
        %9448 = vmatpush2.msra.mxu0 0.0
        %9449 = vmatprep.subr.mxu0 0.0
        %9450 = vmatpush2.msra.mxu0 0.0
        %9451 = vmatprep.subr.mxu0 0.0
        %9452 = vmatpush2.msra.mxu0 0.0
        %9453 = vmatprep.subr.mxu0 0.0
        %9454 = vmatpush2.msra.mxu0 0.0
        %9455 = vmatprep.subr.mxu0 0.0
        %9456 = vmatpush2.msra.mxu0 0.0
        %9457 = vmatprep.subr.mxu0 0.0
        %9458 = vmatpush2.msra.mxu0 0.0
        %9459 = vmatprep.subr.mxu0 0.0
        %9460 = vmatpush2.msra.mxu0 0.0
        %9461 = vmatprep.subr.mxu0 0.0
        %9462 = vmatpush2.msra.mxu0 0.0
        %9463 = vmatprep.subr.mxu0 0.0
        %9464 = vmatpush2.msra.mxu0 0.0
        %9465 = vmatprep.subr.mxu0 0.0
        %9466 = vmatpush2.msra.mxu0 0.0
        %9467 = vmatprep.subr.mxu0 0.0
        %9468 = vmatpush2.msra.mxu0 0.0
        %9469 = vmatprep.subr.mxu0 0.0
        %9470 = vmatpush2.msra.mxu0 0.0
        %9471 = vmatprep.subr.mxu0 0.0
        %9472 = vmatpush2.msra.mxu0 0.0
        %9473 = vmatprep.subr.mxu0 0.0
        %9474 = vmatpush2.msra.mxu0 0.0
        %9475 = vmatprep.subr.mxu0 0.0
        %9476 = vmatpush2.msra.mxu0 0.0
        %9477 = vmatprep.subr.mxu0 0.0
        %9478 = vmatpush2.msra.mxu0 0.0
        %9479 = vmatprep.mubr.f32.mxu0 0.0
        %9480 = vmatmul.mubr.f32.gmra.mxu0 %v9376
        %v9481 = vpop.f32.mrf.mxu0
        %v9482 = vadd.f32 %v9413, %v9481
        %v9483 = vpop.f32.mrf.mxu0
        %9484 = vmatprep.mubr.f32.mxu0 0.0
        %9485 = vmatmul.mubr.f32.gmra.mxu0 %v9377
        %v9486 = vpop.f32.mrf.mxu0
        %v9487 = vadd.f32 %v9413, %v9486
        %v9488 = vpop.f32.mrf.mxu0
        %9489 = vmatprep.mubr.f32.mxu0 0.0
        %9490 = vmatmul.mubr.f32.gmra.mxu0 %v9378
        %v9491 = vpop.f32.mrf.mxu0
        %v9492 = vadd.f32 %v9413, %v9491
        %v9493 = vpop.f32.mrf.mxu0
        %9494 = vmatprep.mubr.f32.mxu0 0.0
        %9495 = vmatmul.mubr.f32.gmra.mxu0 %v9379
        %v9496 = vpop.f32.mrf.mxu0
        %v9497 = vadd.f32 %v9413, %v9496
        %v9498 = vpop.f32.mrf.mxu0
        %9499 = vmatprep.mubr.f32.mxu0 0.0
        %9500 = vmatmul.mubr.f32.gmra.mxu0 %v9380
        %v9501 = vpop.f32.mrf.mxu0
        %v9502 = vadd.f32 %v9413, %v9501
        %v9503 = vpop.f32.mrf.mxu0
        %9504 = vmatprep.mubr.f32.mxu0 0.0
        %9505 = vmatmul.mubr.f32.gmra.mxu0 %v9381
        %v9506 = vpop.f32.mrf.mxu0
        %v9507 = vadd.f32 %v9413, %v9506
        %v9508 = vpop.f32.mrf.mxu0
        %9509 = vmatprep.mubr.f32.mxu0 0.0
        %9510 = vmatmul.mubr.f32.gmra.mxu0 %v9382
        %v9511 = vpop.f32.mrf.mxu0
        %v9512 = vadd.f32 %v9413, %v9511
        %v9513 = vpop.f32.mrf.mxu0
        %9514 = vmatprep.mubr.f32.mxu0 0.0
        %9515 = vmatmul.mubr.f32.gmra.mxu0 %v9383
        %v9516 = vpop.f32.mrf.mxu0
        %v9517 = vadd.f32 %v9413, %v9516
        %v9518 = vpop.f32.mrf.mxu0
        %9519 = vmatprep.mubr.f32.mxu0 0.0
        %9520 = vmatmul.mubr.f32.gmra.mxu0 %v9384
        %v9521 = vpop.f32.mrf.mxu0
        %v9522 = vadd.f32 %v9413, %v9521
        %v9523 = vpop.f32.mrf.mxu0
        %9524 = vmatprep.mubr.f32.mxu0 0.0
        %9525 = vmatmul.mubr.f32.gmra.mxu0 %v9385
        %v9526 = vpop.f32.mrf.mxu0
        %v9527 = vadd.f32 %v9413, %v9526
        %v9528 = vpop.f32.mrf.mxu0
        %9529 = vmatprep.mubr.f32.mxu0 0.0
        %9530 = vmatmul.mubr.f32.gmra.mxu0 %v9386
        %v9531 = vpop.f32.mrf.mxu0
        %v9532 = vadd.f32 %v9413, %v9531
        %v9533 = vpop.f32.mrf.mxu0
        %9534 = vmatprep.mubr.f32.mxu0 0.0
        %9535 = vmatmul.mubr.f32.gmra.mxu0 %v9387
        %v9536 = vpop.f32.mrf.mxu0
        %v9537 = vadd.f32 %v9413, %v9536
        %v9538 = vpop.f32.mrf.mxu0
        %9539 = vmatprep.mubr.f32.mxu0 0.0
        %9540 = vmatmul.mubr.f32.gmra.mxu0 %v9388
        %v9541 = vpop.f32.mrf.mxu0
        %v9542 = vadd.f32 %v9413, %v9541
        %v9543 = vpop.f32.mrf.mxu0
        %9544 = vmatprep.mubr.f32.mxu0 0.0
        %9545 = vmatmul.mubr.f32.gmra.mxu0 %v9389
        %v9546 = vpop.f32.mrf.mxu0
        %v9547 = vadd.f32 %v9413, %v9546
        %v9548 = vpop.f32.mrf.mxu0
        %9549 = vmatprep.mubr.f32.mxu0 0.0
        %9550 = vmatmul.mubr.f32.gmra.mxu0 %v9390
        %v9551 = vpop.f32.mrf.mxu0
        %v9552 = vadd.f32 %v9413, %v9551
        %v9553 = vpop.f32.mrf.mxu0
        %9554 = vmatprep.mubr.f32.mxu0 0.0
        %9555 = vmatmul.mubr.f32.gmra.mxu0 %v9391
        %v9556 = vpop.f32.mrf.mxu0
        %v9557 = vadd.f32 %v9413, %v9556
        %v9558 = vpop.f32.mrf.mxu0
        %9559 = vdwg.mxu0
        %v9560 = vadd.f32 %v9482, %v9152
        %v9561 = vadd.f32 %v9487, %v9153
        %v9562 = vadd.f32 %v9492, %v9154
        %v9563 = vadd.f32 %v9497, %v9155
        %v9564 = vadd.f32 %v9502, %v9156
        %v9565 = vadd.f32 %v9507, %v9157
        %v9566 = vadd.f32 %v9512, %v9158
        %v9567 = vadd.f32 %v9517, %v9159
        %v9568 = vadd.f32 %v9522, %v9160
        %v9569 = vadd.f32 %v9527, %v9161
        %v9570 = vadd.f32 %v9532, %v9162
        %v9571 = vadd.f32 %v9537, %v9163
        %v9572 = vadd.f32 %v9542, %v9164
        %v9573 = vadd.f32 %v9547, %v9165
        %v9574 = vadd.f32 %v9552, %v9166
        %v9575 = vadd.f32 %v9557, %v9167
        %v9576 = vsel %vm1533, %v9560, 0.0
        %9577 = vadd.xlane.f32.xlu0 %v9576
        %v9578 = vpop.xlane.xlu0 %9577
        %v9579 = vsel %vm1533, %v9561, 0.0
        %9580 = vadd.xlane.f32.xlu0 %v9579
        %v9581 = vpop.xlane.xlu0 %9580
        %v9582 = vsel %vm1533, %v9562, 0.0
        %9583 = vadd.xlane.f32.xlu0 %v9582
        %v9584 = vpop.xlane.xlu0 %9583
        %v9585 = vsel %vm1533, %v9563, 0.0
        %9586 = vadd.xlane.f32.xlu0 %v9585
        %v9587 = vpop.xlane.xlu0 %9586
        %v9588 = vsel %vm1533, %v9564, 0.0
        %9589 = vadd.xlane.f32.xlu0 %v9588
        %v9590 = vpop.xlane.xlu0 %9589
        %v9591 = vsel %vm1533, %v9565, 0.0
        %9592 = vadd.xlane.f32.xlu0 %v9591
        %v9593 = vpop.xlane.xlu0 %9592
        %v9594 = vsel %vm1533, %v9566, 0.0
        %9595 = vadd.xlane.f32.xlu0 %v9594
        %v9596 = vpop.xlane.xlu0 %9595
        %v9597 = vsel %vm1533, %v9567, 0.0
        %9598 = vadd.xlane.f32.xlu0 %v9597
        %v9599 = vpop.xlane.xlu0 %9598
        %v9600 = vsel %vm1533, %v9568, 0.0
        %9601 = vadd.xlane.f32.xlu0 %v9600
        %v9602 = vpop.xlane.xlu0 %9601
        %v9603 = vsel %vm1533, %v9569, 0.0
        %9604 = vadd.xlane.f32.xlu0 %v9603
        %v9605 = vpop.xlane.xlu0 %9604
        %v9606 = vsel %vm1533, %v9570, 0.0
        %9607 = vadd.xlane.f32.xlu0 %v9606
        %v9608 = vpop.xlane.xlu0 %9607
        %v9609 = vsel %vm1533, %v9571, 0.0
        %9610 = vadd.xlane.f32.xlu0 %v9609
        %v9611 = vpop.xlane.xlu0 %9610
        %v9612 = vsel %vm1533, %v9572, 0.0
        %9613 = vadd.xlane.f32.xlu0 %v9612
        %v9614 = vpop.xlane.xlu0 %9613
        %v9615 = vsel %vm1533, %v9573, 0.0
        %9616 = vadd.xlane.f32.xlu0 %v9615
        %v9617 = vpop.xlane.xlu0 %9616
        %v9618 = vsel %vm1533, %v9574, 0.0
        %9619 = vadd.xlane.f32.xlu0 %v9618
        %v9620 = vpop.xlane.xlu0 %9619
        %v9621 = vsel %vm1533, %v9575, 0.0
        %9622 = vadd.xlane.f32.xlu0 %v9621
        %v9623 = vpop.xlane.xlu0 %9622
        %v9624 = vmul.f32 %v9578, %v8961
        %v9625 = vmul.f32 %v9581, %v8961
        %v9626 = vmul.f32 %v9584, %v8961
        %v9627 = vmul.f32 %v9587, %v8961
        %v9628 = vmul.f32 %v9590, %v8961
        %v9629 = vmul.f32 %v9593, %v8961
        %v9630 = vmul.f32 %v9596, %v8961
        %v9631 = vmul.f32 %v9599, %v8961
        %v9632 = vmul.f32 %v9602, %v8961
        %v9633 = vmul.f32 %v9605, %v8961
        %v9634 = vmul.f32 %v9608, %v8961
        %v9635 = vmul.f32 %v9611, %v8961
        %v9636 = vmul.f32 %v9614, %v8961
        %v9637 = vmul.f32 %v9617, %v8961
        %v9638 = vmul.f32 %v9620, %v8961
        %v9639 = vmul.f32 %v9623, %v8961
        %v9640 = vsub.f32 %v9560, %v9624
        %v9641 = vsub.f32 %v9561, %v9625
        %v9642 = vsub.f32 %v9562, %v9626
        %v9643 = vsub.f32 %v9563, %v9627
        %v9644 = vsub.f32 %v9564, %v9628
        %v9645 = vsub.f32 %v9565, %v9629
        %v9646 = vsub.f32 %v9566, %v9630
        %v9647 = vsub.f32 %v9567, %v9631
        %v9648 = vsub.f32 %v9568, %v9632
        %v9649 = vsub.f32 %v9569, %v9633
        %v9650 = vsub.f32 %v9570, %v9634
        %v9651 = vsub.f32 %v9571, %v9635
        %v9652 = vsub.f32 %v9572, %v9636
        %v9653 = vsub.f32 %v9573, %v9637
        %v9654 = vsub.f32 %v9574, %v9638
        %v9655 = vsub.f32 %v9575, %v9639
        %v9656 = vmul.f32 %v9640, %v9640
        %v9657 = vmul.f32 %v9641, %v9641
        %v9658 = vmul.f32 %v9642, %v9642
        %v9659 = vmul.f32 %v9643, %v9643
        %v9660 = vmul.f32 %v9644, %v9644
        %v9661 = vmul.f32 %v9645, %v9645
        %v9662 = vmul.f32 %v9646, %v9646
        %v9663 = vmul.f32 %v9647, %v9647
        %v9664 = vmul.f32 %v9648, %v9648
        %v9665 = vmul.f32 %v9649, %v9649
        %v9666 = vmul.f32 %v9650, %v9650
        %v9667 = vmul.f32 %v9651, %v9651
        %v9668 = vmul.f32 %v9652, %v9652
        %v9669 = vmul.f32 %v9653, %v9653
        %v9670 = vmul.f32 %v9654, %v9654
        %v9671 = vmul.f32 %v9655, %v9655
        %v9672 = vsel %vm1533, %v9656, 0.0
        %9673 = vadd.xlane.f32.xlu0 %v9672
        %v9674 = vpop.xlane.xlu0 %9673
        %v9675 = vsel %vm1533, %v9657, 0.0
        %9676 = vadd.xlane.f32.xlu0 %v9675
        %v9677 = vpop.xlane.xlu0 %9676
        %v9678 = vsel %vm1533, %v9658, 0.0
        %9679 = vadd.xlane.f32.xlu0 %v9678
        %v9680 = vpop.xlane.xlu0 %9679
        %v9681 = vsel %vm1533, %v9659, 0.0
        %9682 = vadd.xlane.f32.xlu0 %v9681
        %v9683 = vpop.xlane.xlu0 %9682
        %v9684 = vsel %vm1533, %v9660, 0.0
        %9685 = vadd.xlane.f32.xlu0 %v9684
        %v9686 = vpop.xlane.xlu0 %9685
        %v9687 = vsel %vm1533, %v9661, 0.0
        %9688 = vadd.xlane.f32.xlu0 %v9687
        %v9689 = vpop.xlane.xlu0 %9688
        %v9690 = vsel %vm1533, %v9662, 0.0
        %9691 = vadd.xlane.f32.xlu0 %v9690
        %v9692 = vpop.xlane.xlu0 %9691
        %v9693 = vsel %vm1533, %v9663, 0.0
        %9694 = vadd.xlane.f32.xlu0 %v9693
        %v9695 = vpop.xlane.xlu0 %9694
        %v9696 = vsel %vm1533, %v9664, 0.0
        %9697 = vadd.xlane.f32.xlu0 %v9696
        %v9698 = vpop.xlane.xlu0 %9697
        %v9699 = vsel %vm1533, %v9665, 0.0
        %9700 = vadd.xlane.f32.xlu0 %v9699
        %v9701 = vpop.xlane.xlu0 %9700
        %v9702 = vsel %vm1533, %v9666, 0.0
        %9703 = vadd.xlane.f32.xlu0 %v9702
        %v9704 = vpop.xlane.xlu0 %9703
        %v9705 = vsel %vm1533, %v9667, 0.0
        %9706 = vadd.xlane.f32.xlu0 %v9705
        %v9707 = vpop.xlane.xlu0 %9706
        %v9708 = vsel %vm1533, %v9668, 0.0
        %9709 = vadd.xlane.f32.xlu0 %v9708
        %v9710 = vpop.xlane.xlu0 %9709
        %v9711 = vsel %vm1533, %v9669, 0.0
        %9712 = vadd.xlane.f32.xlu0 %v9711
        %v9713 = vpop.xlane.xlu0 %9712
        %v9714 = vsel %vm1533, %v9670, 0.0
        %9715 = vadd.xlane.f32.xlu0 %v9714
        %v9716 = vpop.xlane.xlu0 %9715
        %v9717 = vsel %vm1533, %v9671, 0.0
        %9718 = vadd.xlane.f32.xlu0 %v9717
        %v9719 = vpop.xlane.xlu0 %9718
        %v9720 = vmul.f32 %v9674, %v8961
        %v9721 = vmul.f32 %v9677, %v8961
        %v9722 = vmul.f32 %v9680, %v8961
        %v9723 = vmul.f32 %v9683, %v8961
        %v9724 = vmul.f32 %v9686, %v8961
        %v9725 = vmul.f32 %v9689, %v8961
        %v9726 = vmul.f32 %v9692, %v8961
        %v9727 = vmul.f32 %v9695, %v8961
        %v9728 = vmul.f32 %v9698, %v8961
        %v9729 = vmul.f32 %v9701, %v8961
        %v9730 = vmul.f32 %v9704, %v8961
        %v9731 = vmul.f32 %v9707, %v8961
        %v9732 = vmul.f32 %v9710, %v8961
        %v9733 = vmul.f32 %v9713, %v8961
        %v9734 = vmul.f32 %v9716, %v8961
        %v9735 = vmul.f32 %v9719, %v8961
        %v9736 = vadd.f32 %v9720, 1e-05
        %v9737 = vadd.f32 %v9721, 1e-05
        %v9738 = vadd.f32 %v9722, 1e-05
        %v9739 = vadd.f32 %v9723, 1e-05
        %v9740 = vadd.f32 %v9724, 1e-05
        %v9741 = vadd.f32 %v9725, 1e-05
        %v9742 = vadd.f32 %v9726, 1e-05
        %v9743 = vadd.f32 %v9727, 1e-05
        %v9744 = vadd.f32 %v9728, 1e-05
        %v9745 = vadd.f32 %v9729, 1e-05
        %v9746 = vadd.f32 %v9730, 1e-05
        %v9747 = vadd.f32 %v9731, 1e-05
        %v9748 = vadd.f32 %v9732, 1e-05
        %v9749 = vadd.f32 %v9733, 1e-05
        %v9750 = vadd.f32 %v9734, 1e-05
        %v9751 = vadd.f32 %v9735, 1e-05
        %v9752 = vrsqrt.pop %v9736
        %v9753 = vrsqrt.pop %v9737
        %v9754 = vrsqrt.pop %v9738
        %v9755 = vrsqrt.pop %v9739
        %v9756 = vrsqrt.pop %v9740
        %v9757 = vrsqrt.pop %v9741
        %v9758 = vrsqrt.pop %v9742
        %v9759 = vrsqrt.pop %v9743
        %v9760 = vrsqrt.pop %v9744
        %v9761 = vrsqrt.pop %v9745
        %v9762 = vrsqrt.pop %v9746
        %v9763 = vrsqrt.pop %v9747
        %v9764 = vrsqrt.pop %v9748
        %v9765 = vrsqrt.pop %v9749
        %v9766 = vrsqrt.pop %v9750
        %v9767 = vrsqrt.pop %v9751
        %v9768 = vmul.f32 %v9640, %v9752
        %v9769 = vmul.f32 %v9641, %v9753
        %v9770 = vmul.f32 %v9642, %v9754
        %v9771 = vmul.f32 %v9643, %v9755
        %v9772 = vmul.f32 %v9644, %v9756
        %v9773 = vmul.f32 %v9645, %v9757
        %v9774 = vmul.f32 %v9646, %v9758
        %v9775 = vmul.f32 %v9647, %v9759
        %v9776 = vmul.f32 %v9648, %v9760
        %v9777 = vmul.f32 %v9649, %v9761
        %v9778 = vmul.f32 %v9650, %v9762
        %v9779 = vmul.f32 %v9651, %v9763
        %v9780 = vmul.f32 %v9652, %v9764
        %v9781 = vmul.f32 %v9653, %v9765
        %v9782 = vmul.f32 %v9654, %v9766
        %v9783 = vmul.f32 %v9655, %v9767
        %v9784 = vld [vmem:[#allocation22] sm:$0x1]
        %v9786 = vlaneseq
        %v9787 = vshrl.u32 %v9786, 7
        %v9788 = vsub.s32 0, %v9787
        %v9789 = vrot.slane %v9784, %v9788
        %v9791 = vmul.f32 %v9768, %v9789
        %v9792 = vmul.f32 %v9769, %v9789
        %v9793 = vmul.f32 %v9770, %v9789
        %v9794 = vmul.f32 %v9771, %v9789
        %v9795 = vmul.f32 %v9772, %v9789
        %v9796 = vmul.f32 %v9773, %v9789
        %v9797 = vmul.f32 %v9774, %v9789
        %v9798 = vmul.f32 %v9775, %v9789
        %v9799 = vmul.f32 %v9776, %v9789
        %v9800 = vmul.f32 %v9777, %v9789
        %v9801 = vmul.f32 %v9778, %v9789
        %v9802 = vmul.f32 %v9779, %v9789
        %v9803 = vmul.f32 %v9780, %v9789
        %v9804 = vmul.f32 %v9781, %v9789
        %v9805 = vmul.f32 %v9782, %v9789
        %v9806 = vmul.f32 %v9783, %v9789
        %v9807 = vld [vmem:[#allocation23] sm:$0x1]
        %v9809 = vlaneseq
        %v9810 = vshrl.u32 %v9809, 7
        %v9811 = vsub.s32 0, %v9810
        %v9812 = vrot.slane %v9807, %v9811
        %v9814 = vadd.f32 %v9791, %v9812
        %v9815 = vadd.f32 %v9792, %v9812
        %v9816 = vadd.f32 %v9793, %v9812
        %v9817 = vadd.f32 %v9794, %v9812
        %v9818 = vadd.f32 %v9795, %v9812
        %v9819 = vadd.f32 %v9796, %v9812
        %v9820 = vadd.f32 %v9797, %v9812
        %v9821 = vadd.f32 %v9798, %v9812
        %v9822 = vadd.f32 %v9799, %v9812
        %v9823 = vadd.f32 %v9800, %v9812
        %v9824 = vadd.f32 %v9801, %v9812
        %v9825 = vadd.f32 %v9802, %v9812
        %v9826 = vadd.f32 %v9803, %v9812
        %v9827 = vadd.f32 %v9804, %v9812
        %v9828 = vadd.f32 %v9805, %v9812
        %v9829 = vadd.f32 %v9806, %v9812
        %v9830 = vsel %vm1533, %v9814, -inf
        %v9831 = vsel %vm1533, %v9815, -inf
        %v9832 = vmax.f32 %v9830, %v9831
        %v9833 = vrot.slane %v9832, 4
        %v9834 = vmax.f32 %v9832, %v9833
        %v9835 = vrot.slane %v9834, 2
        %v9836 = vmax.f32 %v9834, %v9835
        %v9837 = vrot.slane %v9836, 1
        %v9838 = vmax.f32 %v9836, %v9837
        %v9839 = vsel %vm1533, %v9816, -inf
        %v9840 = vsel %vm1533, %v9817, -inf
        %v9841 = vmax.f32 %v9839, %v9840
        %v9842 = vrot.slane %v9841, 4
        %v9843 = vmax.f32 %v9841, %v9842
        %v9844 = vrot.slane %v9843, 2
        %v9845 = vmax.f32 %v9843, %v9844
        %v9846 = vrot.slane %v9845, 1
        %v9847 = vmax.f32 %v9845, %v9846
        %v9848 = vsel %vm1533, %v9818, -inf
        %v9849 = vsel %vm1533, %v9819, -inf
        %v9850 = vmax.f32 %v9848, %v9849
        %v9851 = vrot.slane %v9850, 4
        %v9852 = vmax.f32 %v9850, %v9851
        %v9853 = vrot.slane %v9852, 2
        %v9854 = vmax.f32 %v9852, %v9853
        %v9855 = vrot.slane %v9854, 1
        %v9856 = vmax.f32 %v9854, %v9855
        %v9857 = vsel %vm1533, %v9820, -inf
        %v9858 = vsel %vm1533, %v9821, -inf
        %v9859 = vmax.f32 %v9857, %v9858
        %v9860 = vrot.slane %v9859, 4
        %v9861 = vmax.f32 %v9859, %v9860
        %v9862 = vrot.slane %v9861, 2
        %v9863 = vmax.f32 %v9861, %v9862
        %v9864 = vrot.slane %v9863, 1
        %v9865 = vmax.f32 %v9863, %v9864
        %v9866 = vsel %vm1533, %v9822, -inf
        %v9867 = vsel %vm1533, %v9823, -inf
        %v9868 = vmax.f32 %v9866, %v9867
        %v9869 = vrot.slane %v9868, 4
        %v9870 = vmax.f32 %v9868, %v9869
        %v9871 = vrot.slane %v9870, 2
        %v9872 = vmax.f32 %v9870, %v9871
        %v9873 = vrot.slane %v9872, 1
        %v9874 = vmax.f32 %v9872, %v9873
        %v9875 = vsel %vm1533, %v9824, -inf
        %v9876 = vsel %vm1533, %v9825, -inf
        %v9877 = vmax.f32 %v9875, %v9876
        %v9878 = vrot.slane %v9877, 4
        %v9879 = vmax.f32 %v9877, %v9878
        %v9880 = vrot.slane %v9879, 2
        %v9881 = vmax.f32 %v9879, %v9880
        %v9882 = vrot.slane %v9881, 1
        %v9883 = vmax.f32 %v9881, %v9882
        %v9884 = vsel %vm1533, %v9826, -inf
        %v9885 = vsel %vm1533, %v9827, -inf
        %v9886 = vmax.f32 %v9884, %v9885
        %v9887 = vrot.slane %v9886, 4
        %v9888 = vmax.f32 %v9886, %v9887
        %v9889 = vrot.slane %v9888, 2
        %v9890 = vmax.f32 %v9888, %v9889
        %v9891 = vrot.slane %v9890, 1
        %v9892 = vmax.f32 %v9890, %v9891
        %v9893 = vsel %vm1533, %v9828, -inf
        %v9894 = vsel %vm1533, %v9829, -inf
        %v9895 = vmax.f32 %v9893, %v9894
        %v9896 = vrot.slane %v9895, 4
        %v9897 = vmax.f32 %v9895, %v9896
        %v9898 = vrot.slane %v9897, 2
        %v9899 = vmax.f32 %v9897, %v9898
        %v9900 = vrot.slane %v9899, 1
        %v9901 = vmax.f32 %v9899, %v9900
        %v9902 = vld [vmem:[%s22] sm:$0xff]
        %v9903 = vld [vmem:[%s22 + $0x8] sm:$0xff]
        %v9904 = vld [vmem:[%s22 + $0x10] sm:$0xff]
        %v9905 = vld [vmem:[%s22 + $0x18] sm:$0xff]
        %v9906 = vld [vmem:[%s22 + $0x20] sm:$0xff]
        %v9907 = vld [vmem:[%s22 + $0x28] sm:$0xff]
        %v9908 = vld [vmem:[%s22 + $0x30] sm:$0xff]
        %v9909 = vld [vmem:[%s22 + $0x38] sm:$0xff]
        %v9910 = vld [vmem:[%s22 + $0x40] sm:$0xff]
        %v9911 = vld [vmem:[%s22 + $0x48] sm:$0xff]
        %v9912 = vld [vmem:[%s22 + $0x50] sm:$0xff]
        %v9913 = vld [vmem:[%s22 + $0x58] sm:$0xff]
        %v9914 = vld [vmem:[%s22 + $0x60] sm:$0xff]
        %v9915 = vld [vmem:[%s22 + $0x68] sm:$0xff]
        %v9916 = vld [vmem:[%s22 + $0x70] sm:$0xff]
        %v9917 = vld [vmem:[%s22 + $0x78] sm:$0xff]
        %v9918 = vld [vmem:[%s22 + $0x80] sm:$0xff]
        %v9919 = vld [vmem:[%s22 + $0x88] sm:$0xff]
        %v9920 = vld [vmem:[%s22 + $0x90] sm:$0xff]
        %v9921 = vld [vmem:[%s22 + $0x98] sm:$0xff]
        %v9922 = vld [vmem:[%s22 + $0xa0] sm:$0xff]
        %v9923 = vld [vmem:[%s22 + $0xa8] sm:$0xff]
        %v9924 = vld [vmem:[%s22 + $0xb0] sm:$0xff]
        %v9925 = vld [vmem:[%s22 + $0xb8] sm:$0xff]
        %v9926 = vld [vmem:[%s22 + $0xc0] sm:$0xff]
        %v9927 = vld [vmem:[%s22 + $0xc8] sm:$0xff]
        %v9928 = vld [vmem:[%s22 + $0xd0] sm:$0xff]
        %v9929 = vld [vmem:[%s22 + $0xd8] sm:$0xff]
        %v9930 = vld [vmem:[%s22 + $0xe0] sm:$0xff]
        %v9931 = vld [vmem:[%s22 + $0xe8] sm:$0xff]
        %v9932 = vld [vmem:[%s22 + $0xf0] sm:$0xff]
        %v9933 = vld [vmem:[%s22 + $0xf8] sm:$0xff]
        %v9934 = vld [vmem:[%s22 + $0x100] sm:$0xff]
        %v9935 = vld [vmem:[%s22 + $0x108] sm:$0xff]
        %v9936 = vld [vmem:[%s22 + $0x110] sm:$0xff]
        %v9937 = vld [vmem:[%s22 + $0x118] sm:$0xff]
        %v9938 = vld [vmem:[%s22 + $0x120] sm:$0xff]
        %v9939 = vld [vmem:[%s22 + $0x128] sm:$0xff]
        %v9940 = vld [vmem:[%s22 + $0x130] sm:$0xff]
        %v9941 = vld [vmem:[%s22 + $0x138] sm:$0xff]
        %v9942 = vld [vmem:[%s22 + $0x140] sm:$0xff]
        %v9943 = vld [vmem:[%s22 + $0x148] sm:$0xff]
        %v9944 = vld [vmem:[%s22 + $0x150] sm:$0xff]
        %v9945 = vld [vmem:[%s22 + $0x158] sm:$0xff]
        %v9946 = vld [vmem:[%s22 + $0x160] sm:$0xff]
        %v9947 = vld [vmem:[%s22 + $0x168] sm:$0xff]
        %v9948 = vld [vmem:[%s22 + $0x170] sm:$0xff]
        %v9949 = vld [vmem:[%s22 + $0x178] sm:$0xff]
        %v9950 = vld [vmem:[%s22 + $0x180] sm:$0xff]
        %v9951 = vld [vmem:[%s22 + $0x188] sm:$0xff]
        %v9952 = vld [vmem:[%s22 + $0x190] sm:$0xff]
        %v9953 = vld [vmem:[%s22 + $0x198] sm:$0xff]
        %v9954 = vld [vmem:[%s22 + $0x1a0] sm:$0xff]
        %v9955 = vld [vmem:[%s22 + $0x1a8] sm:$0xff]
        %v9956 = vld [vmem:[%s22 + $0x1b0] sm:$0xff]
        %v9957 = vld [vmem:[%s22 + $0x1b8] sm:$0xff]
        %v9958 = vld [vmem:[%s22 + $0x1c0] sm:$0xff]
        %v9959 = vld [vmem:[%s22 + $0x1c8] sm:$0xff]
        %v9960 = vld [vmem:[%s22 + $0x1d0] sm:$0xff]
        %v9961 = vld [vmem:[%s22 + $0x1d8] sm:$0xff]
        %v9962 = vld [vmem:[%s22 + $0x1e0] sm:$0xff]
        %v9963 = vld [vmem:[%s22 + $0x1e8] sm:$0xff]
        %v9964 = vld [vmem:[%s22 + $0x1f0] sm:$0xff]
        %v9965 = vld [vmem:[%s22 + $0x1f8] sm:$0xff]
        %v9966 = vld [vmem:[#allocation29] sm:$0xff]
        %v9968 = vlaneseq
        %v9969 = vshrl.u32 %v9968, 7
        %v9970 = vsub.s32 0, %v9969
        %v9971 = vrot.slane %v9966, %v9970
        %v9972 = vlaneseq
        %v9973 = vshrl.u32 %v9972, 7
        %v9974 = vsub.s32 1, %v9973
        %v9975 = vrot.slane %v9966, %v9974
        %v9976 = vlaneseq
        %v9977 = vshrl.u32 %v9976, 7
        %v9978 = vsub.s32 2, %v9977
        %v9979 = vrot.slane %v9966, %v9978
        %v9980 = vlaneseq
        %v9981 = vshrl.u32 %v9980, 7
        %v9982 = vsub.s32 3, %v9981
        %v9983 = vrot.slane %v9966, %v9982
        %v9984 = vlaneseq
        %v9985 = vshrl.u32 %v9984, 7
        %v9986 = vsub.s32 4, %v9985
        %v9987 = vrot.slane %v9966, %v9986
        %v9988 = vlaneseq
        %v9989 = vshrl.u32 %v9988, 7
        %v9990 = vsub.s32 5, %v9989
        %v9991 = vrot.slane %v9966, %v9990
        %v9992 = vlaneseq
        %v9993 = vshrl.u32 %v9992, 7
        %v9994 = vsub.s32 6, %v9993
        %v9995 = vrot.slane %v9966, %v9994
        %v9996 = vlaneseq
        %v9997 = vshrl.u32 %v9996, 7
        %v9998 = vsub.s32 7, %v9997
        %v9999 = vrot.slane %v9966, %v9998
        %vm10016 = vcmask 1041409
        %v10017 = vsel %vm10016, %v9847, %v9838
        %vm10018 = vcmask 1042434
        %v10019 = vsel %vm10018, %v9856, %v10017
        %vm10020 = vcmask 1043459
        %v10021 = vsel %vm10020, %v9865, %v10019
        %vm10022 = vcmask 1044484
        %v10023 = vsel %vm10022, %v9874, %v10021
        %vm10024 = vcmask 1045509
        %v10025 = vsel %vm10024, %v9883, %v10023
        %vm10026 = vcmask 1046534
        %v10027 = vsel %vm10026, %v9892, %v10025
        %vm10028 = vcmask 1047559
        %v10029 = vsel %vm10028, %v9901, %v10027
        %v10030 = vsel %vm1533, %v10029, 0
        %10032 = vmatprep.subr.mxu0 0.0
        %10033 = vmatpush1.msra.mxu0 0.0
        %10034 = vmatprep.subr.mxu0 0.0
        %10035 = vmatpush1.msra.mxu0 0.0
        %10036 = vmatprep.subr.mxu0 0.0
        %10037 = vmatpush1.msra.mxu0 0.0
        %10038 = vmatprep.subr.mxu0 0.0
        %10039 = vmatpush1.msra.mxu0 0.0
        %10040 = vmatprep.subr.mxu0 0.0
        %10041 = vmatpush1.msra.mxu0 0.0
        %10042 = vmatprep.subr.mxu0 0.0
        %10043 = vmatpush1.msra.mxu0 0.0
        %10044 = vmatprep.subr.mxu0 0.0
        %10045 = vmatpush1.msra.mxu0 0.0
        %10046 = vmatprep.subr.mxu0 0.0
        %10047 = vmatpush1.msra.mxu0 0.0
        %10048 = vmatprep.subr.mxu0 %v9959
        %10049 = vmatpush1.msra.mxu0 %v9958
        %10050 = vmatprep.subr.mxu0 %v9951
        %10051 = vmatpush1.msra.mxu0 %v9950
        %10052 = vmatprep.subr.mxu0 %v9943
        %10053 = vmatpush1.msra.mxu0 %v9942
        %10054 = vmatprep.subr.mxu0 %v9935
        %10055 = vmatpush1.msra.mxu0 %v9934
        %10056 = vmatprep.subr.mxu0 %v9927
        %10057 = vmatpush1.msra.mxu0 %v9926
        %10058 = vmatprep.subr.mxu0 %v9919
        %10059 = vmatpush1.msra.mxu0 %v9918
        %10060 = vmatprep.subr.mxu0 %v9911
        %10061 = vmatpush1.msra.mxu0 %v9910
        %10062 = vmatprep.subr.mxu0 %v9903
        %10063 = vmatpush1.msra.mxu0 %v9902
        %10064 = vmatprep.subr.mxu0 0.0
        %10065 = vmatpush2.msra.mxu0 0.0
        %10066 = vmatprep.subr.mxu0 0.0
        %10067 = vmatpush2.msra.mxu0 0.0
        %10068 = vmatprep.subr.mxu0 0.0
        %10069 = vmatpush2.msra.mxu0 0.0
        %10070 = vmatprep.subr.mxu0 0.0
        %10071 = vmatpush2.msra.mxu0 0.0
        %10072 = vmatprep.subr.mxu0 0.0
        %10073 = vmatpush2.msra.mxu0 0.0
        %10074 = vmatprep.subr.mxu0 0.0
        %10075 = vmatpush2.msra.mxu0 0.0
        %10076 = vmatprep.subr.mxu0 0.0
        %10077 = vmatpush2.msra.mxu0 0.0
        %10078 = vmatprep.subr.mxu0 0.0
        %10079 = vmatpush2.msra.mxu0 0.0
        %10080 = vmatprep.subr.mxu0 0.0
        %10081 = vmatpush2.msra.mxu0 0.0
        %10082 = vmatprep.subr.mxu0 0.0
        %10083 = vmatpush2.msra.mxu0 0.0
        %10084 = vmatprep.subr.mxu0 0.0
        %10085 = vmatpush2.msra.mxu0 0.0
        %10086 = vmatprep.subr.mxu0 0.0
        %10087 = vmatpush2.msra.mxu0 0.0
        %10088 = vmatprep.subr.mxu0 0.0
        %10089 = vmatpush2.msra.mxu0 0.0
        %10090 = vmatprep.subr.mxu0 0.0
        %10091 = vmatpush2.msra.mxu0 0.0
        %10092 = vmatprep.subr.mxu0 0.0
        %10093 = vmatpush2.msra.mxu0 0.0
        %10094 = vmatprep.subr.mxu0 0.0
        %10095 = vmatpush2.msra.mxu0 0.0
        %10096 = vmatprep.mubr.f32.mxu0 0.0
        %10097 = vmatmul.mubr.f32.gmra.mxu0 %v10030
        %v10098 = vpop.f32.mrf.mxu0
        %v10099 = vadd.f32 %v9971, %v10098
        %v10100 = vpop.f32.mrf.mxu0
        %v10101 = vadd.f32 %v9975, %v10100
        %10102 = vdwg.mxu0
        %10103 = vmatprep.subr.mxu0 0.0
        %10104 = vmatpush1.msra.mxu0 0.0
        %10105 = vmatprep.subr.mxu0 0.0
        %10106 = vmatpush1.msra.mxu0 0.0
        %10107 = vmatprep.subr.mxu0 0.0
        %10108 = vmatpush1.msra.mxu0 0.0
        %10109 = vmatprep.subr.mxu0 0.0
        %10110 = vmatpush1.msra.mxu0 0.0
        %10111 = vmatprep.subr.mxu0 0.0
        %10112 = vmatpush1.msra.mxu0 0.0
        %10113 = vmatprep.subr.mxu0 0.0
        %10114 = vmatpush1.msra.mxu0 0.0
        %10115 = vmatprep.subr.mxu0 0.0
        %10116 = vmatpush1.msra.mxu0 0.0
        %10117 = vmatprep.subr.mxu0 0.0
        %10118 = vmatpush1.msra.mxu0 0.0
        %10119 = vmatprep.subr.mxu0 %v9961
        %10120 = vmatpush1.msra.mxu0 %v9960
        %10121 = vmatprep.subr.mxu0 %v9953
        %10122 = vmatpush1.msra.mxu0 %v9952
        %10123 = vmatprep.subr.mxu0 %v9945
        %10124 = vmatpush1.msra.mxu0 %v9944
        %10125 = vmatprep.subr.mxu0 %v9937
        %10126 = vmatpush1.msra.mxu0 %v9936
        %10127 = vmatprep.subr.mxu0 %v9929
        %10128 = vmatpush1.msra.mxu0 %v9928
        %10129 = vmatprep.subr.mxu0 %v9921
        %10130 = vmatpush1.msra.mxu0 %v9920
        %10131 = vmatprep.subr.mxu0 %v9913
        %10132 = vmatpush1.msra.mxu0 %v9912
        %10133 = vmatprep.subr.mxu0 %v9905
        %10134 = vmatpush1.msra.mxu0 %v9904
        %10135 = vmatprep.subr.mxu0 0.0
        %10136 = vmatpush2.msra.mxu0 0.0
        %10137 = vmatprep.subr.mxu0 0.0
        %10138 = vmatpush2.msra.mxu0 0.0
        %10139 = vmatprep.subr.mxu0 0.0
        %10140 = vmatpush2.msra.mxu0 0.0
        %10141 = vmatprep.subr.mxu0 0.0
        %10142 = vmatpush2.msra.mxu0 0.0
        %10143 = vmatprep.subr.mxu0 0.0
        %10144 = vmatpush2.msra.mxu0 0.0
        %10145 = vmatprep.subr.mxu0 0.0
        %10146 = vmatpush2.msra.mxu0 0.0
        %10147 = vmatprep.subr.mxu0 0.0
        %10148 = vmatpush2.msra.mxu0 0.0
        %10149 = vmatprep.subr.mxu0 0.0
        %10150 = vmatpush2.msra.mxu0 0.0
        %10151 = vmatprep.subr.mxu0 0.0
        %10152 = vmatpush2.msra.mxu0 0.0
        %10153 = vmatprep.subr.mxu0 0.0
        %10154 = vmatpush2.msra.mxu0 0.0
        %10155 = vmatprep.subr.mxu0 0.0
        %10156 = vmatpush2.msra.mxu0 0.0
        %10157 = vmatprep.subr.mxu0 0.0
        %10158 = vmatpush2.msra.mxu0 0.0
        %10159 = vmatprep.subr.mxu0 0.0
        %10160 = vmatpush2.msra.mxu0 0.0
        %10161 = vmatprep.subr.mxu0 0.0
        %10162 = vmatpush2.msra.mxu0 0.0
        %10163 = vmatprep.subr.mxu0 0.0
        %10164 = vmatpush2.msra.mxu0 0.0
        %10165 = vmatprep.subr.mxu0 0.0
        %10166 = vmatpush2.msra.mxu0 0.0
        %10167 = vmatprep.mubr.f32.mxu0 0.0
        %10168 = vmatmul.mubr.f32.gmra.mxu0 %v10030
        %v10169 = vpop.f32.mrf.mxu0
        %v10170 = vadd.f32 %v9979, %v10169
        %v10171 = vpop.f32.mrf.mxu0
        %v10172 = vadd.f32 %v9983, %v10171
        %10173 = vdwg.mxu0
        %10174 = vmatprep.subr.mxu0 0.0
        %10175 = vmatpush1.msra.mxu0 0.0
        %10176 = vmatprep.subr.mxu0 0.0
        %10177 = vmatpush1.msra.mxu0 0.0
        %10178 = vmatprep.subr.mxu0 0.0
        %10179 = vmatpush1.msra.mxu0 0.0
        %10180 = vmatprep.subr.mxu0 0.0
        %10181 = vmatpush1.msra.mxu0 0.0
        %10182 = vmatprep.subr.mxu0 0.0
        %10183 = vmatpush1.msra.mxu0 0.0
        %10184 = vmatprep.subr.mxu0 0.0
        %10185 = vmatpush1.msra.mxu0 0.0
        %10186 = vmatprep.subr.mxu0 0.0
        %10187 = vmatpush1.msra.mxu0 0.0
        %10188 = vmatprep.subr.mxu0 0.0
        %10189 = vmatpush1.msra.mxu0 0.0
        %10190 = vmatprep.subr.mxu0 %v9963
        %10191 = vmatpush1.msra.mxu0 %v9962
        %10192 = vmatprep.subr.mxu0 %v9955
        %10193 = vmatpush1.msra.mxu0 %v9954
        %10194 = vmatprep.subr.mxu0 %v9947
        %10195 = vmatpush1.msra.mxu0 %v9946
        %10196 = vmatprep.subr.mxu0 %v9939
        %10197 = vmatpush1.msra.mxu0 %v9938
        %10198 = vmatprep.subr.mxu0 %v9931
        %10199 = vmatpush1.msra.mxu0 %v9930
        %10200 = vmatprep.subr.mxu0 %v9923
        %10201 = vmatpush1.msra.mxu0 %v9922
        %10202 = vmatprep.subr.mxu0 %v9915
        %10203 = vmatpush1.msra.mxu0 %v9914
        %10204 = vmatprep.subr.mxu0 %v9907
        %10205 = vmatpush1.msra.mxu0 %v9906
        %10206 = vmatprep.subr.mxu0 0.0
        %10207 = vmatpush2.msra.mxu0 0.0
        %10208 = vmatprep.subr.mxu0 0.0
        %10209 = vmatpush2.msra.mxu0 0.0
        %10210 = vmatprep.subr.mxu0 0.0
        %10211 = vmatpush2.msra.mxu0 0.0
        %10212 = vmatprep.subr.mxu0 0.0
        %10213 = vmatpush2.msra.mxu0 0.0
        %10214 = vmatprep.subr.mxu0 0.0
        %10215 = vmatpush2.msra.mxu0 0.0
        %10216 = vmatprep.subr.mxu0 0.0
        %10217 = vmatpush2.msra.mxu0 0.0
        %10218 = vmatprep.subr.mxu0 0.0
        %10219 = vmatpush2.msra.mxu0 0.0
        %10220 = vmatprep.subr.mxu0 0.0
        %10221 = vmatpush2.msra.mxu0 0.0
        %10222 = vmatprep.subr.mxu0 0.0
        %10223 = vmatpush2.msra.mxu0 0.0
        %10224 = vmatprep.subr.mxu0 0.0
        %10225 = vmatpush2.msra.mxu0 0.0
        %10226 = vmatprep.subr.mxu0 0.0
        %10227 = vmatpush2.msra.mxu0 0.0
        %10228 = vmatprep.subr.mxu0 0.0
        %10229 = vmatpush2.msra.mxu0 0.0
        %10230 = vmatprep.subr.mxu0 0.0
        %10231 = vmatpush2.msra.mxu0 0.0
        %10232 = vmatprep.subr.mxu0 0.0
        %10233 = vmatpush2.msra.mxu0 0.0
        %10234 = vmatprep.subr.mxu0 0.0
        %10235 = vmatpush2.msra.mxu0 0.0
        %10236 = vmatprep.subr.mxu0 0.0
        %10237 = vmatpush2.msra.mxu0 0.0
        %10238 = vmatprep.mubr.f32.mxu0 0.0
        %10239 = vmatmul.mubr.f32.gmra.mxu0 %v10030
        %v10240 = vpop.f32.mrf.mxu0
        %v10241 = vadd.f32 %v9987, %v10240
        %v10242 = vpop.f32.mrf.mxu0
        %v10243 = vadd.f32 %v9991, %v10242
        %10244 = vdwg.mxu0
        %10245 = vmatprep.subr.mxu0 0.0
        %10246 = vmatpush1.msra.mxu0 0.0
        %10247 = vmatprep.subr.mxu0 0.0
        %10248 = vmatpush1.msra.mxu0 0.0
        %10249 = vmatprep.subr.mxu0 0.0
        %10250 = vmatpush1.msra.mxu0 0.0
        %10251 = vmatprep.subr.mxu0 0.0
        %10252 = vmatpush1.msra.mxu0 0.0
        %10253 = vmatprep.subr.mxu0 0.0
        %10254 = vmatpush1.msra.mxu0 0.0
        %10255 = vmatprep.subr.mxu0 0.0
        %10256 = vmatpush1.msra.mxu0 0.0
        %10257 = vmatprep.subr.mxu0 0.0
        %10258 = vmatpush1.msra.mxu0 0.0
        %10259 = vmatprep.subr.mxu0 0.0
        %10260 = vmatpush1.msra.mxu0 0.0
        %10261 = vmatprep.subr.mxu0 %v9965
        %10262 = vmatpush1.msra.mxu0 %v9964
        %10263 = vmatprep.subr.mxu0 %v9957
        %10264 = vmatpush1.msra.mxu0 %v9956
        %10265 = vmatprep.subr.mxu0 %v9949
        %10266 = vmatpush1.msra.mxu0 %v9948
        %10267 = vmatprep.subr.mxu0 %v9941
        %10268 = vmatpush1.msra.mxu0 %v9940
        %10269 = vmatprep.subr.mxu0 %v9933
        %10270 = vmatpush1.msra.mxu0 %v9932
        %10271 = vmatprep.subr.mxu0 %v9925
        %10272 = vmatpush1.msra.mxu0 %v9924
        %10273 = vmatprep.subr.mxu0 %v9917
        %10274 = vmatpush1.msra.mxu0 %v9916
        %10275 = vmatprep.subr.mxu0 %v9909
        %10276 = vmatpush1.msra.mxu0 %v9908
        %10277 = vmatprep.subr.mxu0 0.0
        %10278 = vmatpush2.msra.mxu0 0.0
        %10279 = vmatprep.subr.mxu0 0.0
        %10280 = vmatpush2.msra.mxu0 0.0
        %10281 = vmatprep.subr.mxu0 0.0
        %10282 = vmatpush2.msra.mxu0 0.0
        %10283 = vmatprep.subr.mxu0 0.0
        %10284 = vmatpush2.msra.mxu0 0.0
        %10285 = vmatprep.subr.mxu0 0.0
        %10286 = vmatpush2.msra.mxu0 0.0
        %10287 = vmatprep.subr.mxu0 0.0
        %10288 = vmatpush2.msra.mxu0 0.0
        %10289 = vmatprep.subr.mxu0 0.0
        %10290 = vmatpush2.msra.mxu0 0.0
        %10291 = vmatprep.subr.mxu0 0.0
        %10292 = vmatpush2.msra.mxu0 0.0
        %10293 = vmatprep.subr.mxu0 0.0
        %10294 = vmatpush2.msra.mxu0 0.0
        %10295 = vmatprep.subr.mxu0 0.0
        %10296 = vmatpush2.msra.mxu0 0.0
        %10297 = vmatprep.subr.mxu0 0.0
        %10298 = vmatpush2.msra.mxu0 0.0
        %10299 = vmatprep.subr.mxu0 0.0
        %10300 = vmatpush2.msra.mxu0 0.0
        %10301 = vmatprep.subr.mxu0 0.0
        %10302 = vmatpush2.msra.mxu0 0.0
        %10303 = vmatprep.subr.mxu0 0.0
        %10304 = vmatpush2.msra.mxu0 0.0
        %10305 = vmatprep.subr.mxu0 0.0
        %10306 = vmatpush2.msra.mxu0 0.0
        %10307 = vmatprep.subr.mxu0 0.0
        %10308 = vmatpush2.msra.mxu0 0.0
        %10309 = vmatprep.mubr.f32.mxu0 0.0
        %10310 = vmatmul.mubr.f32.gmra.mxu0 %v10030
        %v10311 = vpop.f32.mrf.mxu0
        %v10312 = vadd.f32 %v9995, %v10311
        %v10313 = vpop.f32.mrf.mxu0
        %v10314 = vadd.f32 %v9999, %v10313
        %10315 = vdwg.mxu0
        %v10316 = vmax.f32 %v10099, 0.0
        %v10317 = vmax.f32 %v10101, 0.0
        %v10318 = vmax.f32 %v10170, 0.0
        %v10319 = vmax.f32 %v10172, 0.0
        %v10320 = vmax.f32 %v10241, 0.0
        %v10321 = vmax.f32 %v10243, 0.0
        %v10322 = vmax.f32 %v10312, 0.0
        %v10323 = vmax.f32 %v10314, 0.0
        %v10324 = vld [vmem:[#allocation31] sm:$0xff]
        %v10325 = vld [vmem:[#allocation31 + $0x8] sm:$0xff]
        %v10326 = vld [vmem:[#allocation31 + $0x10] sm:$0xff]
        %v10327 = vld [vmem:[#allocation31 + $0x18] sm:$0xff]
        %v10328 = vld [vmem:[#allocation31 + $0x20] sm:$0xff]
        %v10329 = vld [vmem:[#allocation31 + $0x28] sm:$0xff]
        %v10330 = vld [vmem:[#allocation31 + $0x30] sm:$0xff]
        %v10331 = vld [vmem:[#allocation31 + $0x38] sm:$0xff]
        %v10332 = vld [vmem:[#allocation31 + $0x40] sm:$0xff]
        %v10333 = vld [vmem:[#allocation31 + $0x48] sm:$0xff]
        %v10334 = vld [vmem:[#allocation31 + $0x50] sm:$0xff]
        %v10335 = vld [vmem:[#allocation31 + $0x58] sm:$0xff]
        %v10336 = vld [vmem:[#allocation31 + $0x60] sm:$0xff]
        %v10337 = vld [vmem:[#allocation31 + $0x68] sm:$0xff]
        %v10338 = vld [vmem:[#allocation31 + $0x70] sm:$0xff]
        %v10339 = vld [vmem:[#allocation31 + $0x78] sm:$0xff]
        %v10340 = vld [vmem:[#allocation31 + $0x80] sm:$0xff]
        %v10341 = vld [vmem:[#allocation31 + $0x88] sm:$0xff]
        %v10342 = vld [vmem:[#allocation31 + $0x90] sm:$0xff]
        %v10343 = vld [vmem:[#allocation31 + $0x98] sm:$0xff]
        %v10344 = vld [vmem:[#allocation31 + $0xa0] sm:$0xff]
        %v10345 = vld [vmem:[#allocation31 + $0xa8] sm:$0xff]
        %v10346 = vld [vmem:[#allocation31 + $0xb0] sm:$0xff]
        %v10347 = vld [vmem:[#allocation31 + $0xb8] sm:$0xff]
        %v10348 = vld [vmem:[#allocation31 + $0xc0] sm:$0xff]
        %v10349 = vld [vmem:[#allocation31 + $0xc8] sm:$0xff]
        %v10350 = vld [vmem:[#allocation31 + $0xd0] sm:$0xff]
        %v10351 = vld [vmem:[#allocation31 + $0xd8] sm:$0xff]
        %v10352 = vld [vmem:[#allocation31 + $0xe0] sm:$0xff]
        %v10353 = vld [vmem:[#allocation31 + $0xe8] sm:$0xff]
        %v10354 = vld [vmem:[#allocation31 + $0xf0] sm:$0xff]
        %v10355 = vld [vmem:[#allocation31 + $0xf8] sm:$0xff]
        %v10356 = vld [vmem:[#allocation31 + $0x100] sm:$0xff]
        %v10357 = vld [vmem:[#allocation31 + $0x108] sm:$0xff]
        %v10358 = vld [vmem:[#allocation31 + $0x110] sm:$0xff]
        %v10359 = vld [vmem:[#allocation31 + $0x118] sm:$0xff]
        %v10360 = vld [vmem:[#allocation31 + $0x120] sm:$0xff]
        %v10361 = vld [vmem:[#allocation31 + $0x128] sm:$0xff]
        %v10362 = vld [vmem:[#allocation31 + $0x130] sm:$0xff]
        %v10363 = vld [vmem:[#allocation31 + $0x138] sm:$0xff]
        %v10364 = vld [vmem:[#allocation31 + $0x140] sm:$0xff]
        %v10365 = vld [vmem:[#allocation31 + $0x148] sm:$0xff]
        %v10366 = vld [vmem:[#allocation31 + $0x150] sm:$0xff]
        %v10367 = vld [vmem:[#allocation31 + $0x158] sm:$0xff]
        %v10368 = vld [vmem:[#allocation31 + $0x160] sm:$0xff]
        %v10369 = vld [vmem:[#allocation31 + $0x168] sm:$0xff]
        %v10370 = vld [vmem:[#allocation31 + $0x170] sm:$0xff]
        %v10371 = vld [vmem:[#allocation31 + $0x178] sm:$0xff]
        %v10372 = vld [vmem:[#allocation31 + $0x180] sm:$0xff]
        %v10373 = vld [vmem:[#allocation31 + $0x188] sm:$0xff]
        %v10374 = vld [vmem:[#allocation31 + $0x190] sm:$0xff]
        %v10375 = vld [vmem:[#allocation31 + $0x198] sm:$0xff]
        %v10376 = vld [vmem:[#allocation31 + $0x1a0] sm:$0xff]
        %v10377 = vld [vmem:[#allocation31 + $0x1a8] sm:$0xff]
        %v10378 = vld [vmem:[#allocation31 + $0x1b0] sm:$0xff]
        %v10379 = vld [vmem:[#allocation31 + $0x1b8] sm:$0xff]
        %v10380 = vld [vmem:[#allocation31 + $0x1c0] sm:$0xff]
        %v10381 = vld [vmem:[#allocation31 + $0x1c8] sm:$0xff]
        %v10382 = vld [vmem:[#allocation31 + $0x1d0] sm:$0xff]
        %v10383 = vld [vmem:[#allocation31 + $0x1d8] sm:$0xff]
        %v10384 = vld [vmem:[#allocation31 + $0x1e0] sm:$0xff]
        %v10385 = vld [vmem:[#allocation31 + $0x1e8] sm:$0xff]
        %v10386 = vld [vmem:[#allocation31 + $0x1f0] sm:$0xff]
        %v10387 = vld [vmem:[#allocation31 + $0x1f8] sm:$0xff]
        %v10388 = vld [vmem:[#allocation31 + $0x200] sm:$0xff]
        %v10389 = vld [vmem:[#allocation31 + $0x208] sm:$0xff]
        %v10390 = vld [vmem:[#allocation31 + $0x210] sm:$0xff]
        %v10391 = vld [vmem:[#allocation31 + $0x218] sm:$0xff]
        %v10392 = vld [vmem:[#allocation31 + $0x220] sm:$0xff]
        %v10393 = vld [vmem:[#allocation31 + $0x228] sm:$0xff]
        %v10394 = vld [vmem:[#allocation31 + $0x230] sm:$0xff]
        %v10395 = vld [vmem:[#allocation31 + $0x238] sm:$0xff]
        %v10396 = vld [vmem:[#allocation31 + $0x240] sm:$0xff]
        %v10397 = vld [vmem:[#allocation31 + $0x248] sm:$0xff]
        %v10398 = vld [vmem:[#allocation31 + $0x250] sm:$0xff]
        %v10399 = vld [vmem:[#allocation31 + $0x258] sm:$0xff]
        %v10400 = vld [vmem:[#allocation31 + $0x260] sm:$0xff]
        %v10401 = vld [vmem:[#allocation31 + $0x268] sm:$0xff]
        %v10402 = vld [vmem:[#allocation31 + $0x270] sm:$0xff]
        %v10403 = vld [vmem:[#allocation31 + $0x278] sm:$0xff]
        %v10404 = vld [vmem:[#allocation31 + $0x280] sm:$0xff]
        %v10405 = vld [vmem:[#allocation31 + $0x288] sm:$0xff]
        %v10406 = vld [vmem:[#allocation31 + $0x290] sm:$0xff]
        %v10407 = vld [vmem:[#allocation31 + $0x298] sm:$0xff]
        %v10408 = vld [vmem:[#allocation31 + $0x2a0] sm:$0xff]
        %v10409 = vld [vmem:[#allocation31 + $0x2a8] sm:$0xff]
        %v10410 = vld [vmem:[#allocation31 + $0x2b0] sm:$0xff]
        %v10411 = vld [vmem:[#allocation31 + $0x2b8] sm:$0xff]
        %v10412 = vld [vmem:[#allocation31 + $0x2c0] sm:$0xff]
        %v10413 = vld [vmem:[#allocation31 + $0x2c8] sm:$0xff]
        %v10414 = vld [vmem:[#allocation31 + $0x2d0] sm:$0xff]
        %v10415 = vld [vmem:[#allocation31 + $0x2d8] sm:$0xff]
        %v10416 = vld [vmem:[#allocation31 + $0x2e0] sm:$0xff]
        %v10417 = vld [vmem:[#allocation31 + $0x2e8] sm:$0xff]
        %v10418 = vld [vmem:[#allocation31 + $0x2f0] sm:$0xff]
        %v10419 = vld [vmem:[#allocation31 + $0x2f8] sm:$0xff]
        %v10420 = vld [vmem:[#allocation31 + $0x300] sm:$0xff]
        %v10421 = vld [vmem:[#allocation31 + $0x308] sm:$0xff]
        %v10422 = vld [vmem:[#allocation31 + $0x310] sm:$0xff]
        %v10423 = vld [vmem:[#allocation31 + $0x318] sm:$0xff]
        %v10424 = vld [vmem:[#allocation31 + $0x320] sm:$0xff]
        %v10425 = vld [vmem:[#allocation31 + $0x328] sm:$0xff]
        %v10426 = vld [vmem:[#allocation31 + $0x330] sm:$0xff]
        %v10427 = vld [vmem:[#allocation31 + $0x338] sm:$0xff]
        %v10428 = vld [vmem:[#allocation31 + $0x340] sm:$0xff]
        %v10429 = vld [vmem:[#allocation31 + $0x348] sm:$0xff]
        %v10430 = vld [vmem:[#allocation31 + $0x350] sm:$0xff]
        %v10431 = vld [vmem:[#allocation31 + $0x358] sm:$0xff]
        %v10432 = vld [vmem:[#allocation31 + $0x360] sm:$0xff]
        %v10433 = vld [vmem:[#allocation31 + $0x368] sm:$0xff]
        %v10434 = vld [vmem:[#allocation31 + $0x370] sm:$0xff]
        %v10435 = vld [vmem:[#allocation31 + $0x378] sm:$0xff]
        %v10436 = vld [vmem:[#allocation31 + $0x380] sm:$0xff]
        %v10437 = vld [vmem:[#allocation31 + $0x388] sm:$0xff]
        %v10438 = vld [vmem:[#allocation31 + $0x390] sm:$0xff]
        %v10439 = vld [vmem:[#allocation31 + $0x398] sm:$0xff]
        %v10440 = vld [vmem:[#allocation31 + $0x3a0] sm:$0xff]
        %v10441 = vld [vmem:[#allocation31 + $0x3a8] sm:$0xff]
        %v10442 = vld [vmem:[#allocation31 + $0x3b0] sm:$0xff]
        %v10443 = vld [vmem:[#allocation31 + $0x3b8] sm:$0xff]
        %v10444 = vld [vmem:[#allocation31 + $0x3c0] sm:$0xff]
        %v10445 = vld [vmem:[#allocation31 + $0x3c8] sm:$0xff]
        %v10446 = vld [vmem:[#allocation31 + $0x3d0] sm:$0xff]
        %v10447 = vld [vmem:[#allocation31 + $0x3d8] sm:$0xff]
        %v10448 = vld [vmem:[#allocation31 + $0x3e0] sm:$0xff]
        %v10449 = vld [vmem:[#allocation31 + $0x3e8] sm:$0xff]
        %v10450 = vld [vmem:[#allocation31 + $0x3f0] sm:$0xff]
        %v10451 = vld [vmem:[#allocation31 + $0x3f8] sm:$0xff]
        %v10452 = vld [vmem:[%s25] sm:$0x1]
        %v10454 = vlaneseq
        %v10455 = vshrl.u32 %v10454, 7
        %v10456 = vsub.s32 0, %v10455
        %v10457 = vrot.slane %v10452, %v10456
        %10459 = vmatprep.subr.mxu0 0.0
        %10460 = vmatpush1.msra.mxu0 %v10339
        %10461 = vmatprep.subr.mxu0 0.0
        %10462 = vmatpush1.msra.mxu0 %v10338
        %10463 = vmatprep.subr.mxu0 0.0
        %10464 = vmatpush1.msra.mxu0 %v10337
        %10465 = vmatprep.subr.mxu0 0.0
        %10466 = vmatpush1.msra.mxu0 %v10336
        %10467 = vmatprep.subr.mxu0 0.0
        %10468 = vmatpush1.msra.mxu0 %v10335
        %10469 = vmatprep.subr.mxu0 0.0
        %10470 = vmatpush1.msra.mxu0 %v10334
        %10471 = vmatprep.subr.mxu0 0.0
        %10472 = vmatpush1.msra.mxu0 %v10333
        %10473 = vmatprep.subr.mxu0 0.0
        %10474 = vmatpush1.msra.mxu0 %v10332
        %10475 = vmatprep.subr.mxu0 0.0
        %10476 = vmatpush1.msra.mxu0 %v10331
        %10477 = vmatprep.subr.mxu0 0.0
        %10478 = vmatpush1.msra.mxu0 %v10330
        %10479 = vmatprep.subr.mxu0 0.0
        %10480 = vmatpush1.msra.mxu0 %v10329
        %10481 = vmatprep.subr.mxu0 0.0
        %10482 = vmatpush1.msra.mxu0 %v10328
        %10483 = vmatprep.subr.mxu0 0.0
        %10484 = vmatpush1.msra.mxu0 %v10327
        %10485 = vmatprep.subr.mxu0 0.0
        %10486 = vmatpush1.msra.mxu0 %v10326
        %10487 = vmatprep.subr.mxu0 0.0
        %10488 = vmatpush1.msra.mxu0 %v10325
        %10489 = vmatprep.subr.mxu0 0.0
        %10490 = vmatpush1.msra.mxu0 %v10324
        %10491 = vmatprep.subr.mxu0 0.0
        %10492 = vmatpush2.msra.mxu0 %v10355
        %10493 = vmatprep.subr.mxu0 0.0
        %10494 = vmatpush2.msra.mxu0 %v10354
        %10495 = vmatprep.subr.mxu0 0.0
        %10496 = vmatpush2.msra.mxu0 %v10353
        %10497 = vmatprep.subr.mxu0 0.0
        %10498 = vmatpush2.msra.mxu0 %v10352
        %10499 = vmatprep.subr.mxu0 0.0
        %10500 = vmatpush2.msra.mxu0 %v10351
        %10501 = vmatprep.subr.mxu0 0.0
        %10502 = vmatpush2.msra.mxu0 %v10350
        %10503 = vmatprep.subr.mxu0 0.0
        %10504 = vmatpush2.msra.mxu0 %v10349
        %10505 = vmatprep.subr.mxu0 0.0
        %10506 = vmatpush2.msra.mxu0 %v10348
        %10507 = vmatprep.subr.mxu0 0.0
        %10508 = vmatpush2.msra.mxu0 %v10347
        %10509 = vmatprep.subr.mxu0 0.0
        %10510 = vmatpush2.msra.mxu0 %v10346
        %10511 = vmatprep.subr.mxu0 0.0
        %10512 = vmatpush2.msra.mxu0 %v10345
        %10513 = vmatprep.subr.mxu0 0.0
        %10514 = vmatpush2.msra.mxu0 %v10344
        %10515 = vmatprep.subr.mxu0 0.0
        %10516 = vmatpush2.msra.mxu0 %v10343
        %10517 = vmatprep.subr.mxu0 0.0
        %10518 = vmatpush2.msra.mxu0 %v10342
        %10519 = vmatprep.subr.mxu0 0.0
        %10520 = vmatpush2.msra.mxu0 %v10341
        %10521 = vmatprep.subr.mxu0 0.0
        %10522 = vmatpush2.msra.mxu0 %v10340
        %10523 = vmatprep.mubr.f32.mxu0 %v10317
        %10524 = vmatmul.mubr.f32.gmra.mxu0 %v10316
        %v10525 = vpop.f32.mrf.mxu0
        %v10526 = vadd.f32 %v10457, %v10525
        %v10527 = vpop.f32.mrf.mxu0
        %10528 = vdwg.mxu0
        %10529 = vmatprep.subr.mxu0 0.0
        %10530 = vmatpush1.msra.mxu0 %v10371
        %10531 = vmatprep.subr.mxu0 0.0
        %10532 = vmatpush1.msra.mxu0 %v10370
        %10533 = vmatprep.subr.mxu0 0.0
        %10534 = vmatpush1.msra.mxu0 %v10369
        %10535 = vmatprep.subr.mxu0 0.0
        %10536 = vmatpush1.msra.mxu0 %v10368
        %10537 = vmatprep.subr.mxu0 0.0
        %10538 = vmatpush1.msra.mxu0 %v10367
        %10539 = vmatprep.subr.mxu0 0.0
        %10540 = vmatpush1.msra.mxu0 %v10366
        %10541 = vmatprep.subr.mxu0 0.0
        %10542 = vmatpush1.msra.mxu0 %v10365
        %10543 = vmatprep.subr.mxu0 0.0
        %10544 = vmatpush1.msra.mxu0 %v10364
        %10545 = vmatprep.subr.mxu0 0.0
        %10546 = vmatpush1.msra.mxu0 %v10363
        %10547 = vmatprep.subr.mxu0 0.0
        %10548 = vmatpush1.msra.mxu0 %v10362
        %10549 = vmatprep.subr.mxu0 0.0
        %10550 = vmatpush1.msra.mxu0 %v10361
        %10551 = vmatprep.subr.mxu0 0.0
        %10552 = vmatpush1.msra.mxu0 %v10360
        %10553 = vmatprep.subr.mxu0 0.0
        %10554 = vmatpush1.msra.mxu0 %v10359
        %10555 = vmatprep.subr.mxu0 0.0
        %10556 = vmatpush1.msra.mxu0 %v10358
        %10557 = vmatprep.subr.mxu0 0.0
        %10558 = vmatpush1.msra.mxu0 %v10357
        %10559 = vmatprep.subr.mxu0 0.0
        %10560 = vmatpush1.msra.mxu0 %v10356
        %10561 = vmatprep.subr.mxu0 0.0
        %10562 = vmatpush2.msra.mxu0 %v10387
        %10563 = vmatprep.subr.mxu0 0.0
        %10564 = vmatpush2.msra.mxu0 %v10386
        %10565 = vmatprep.subr.mxu0 0.0
        %10566 = vmatpush2.msra.mxu0 %v10385
        %10567 = vmatprep.subr.mxu0 0.0
        %10568 = vmatpush2.msra.mxu0 %v10384
        %10569 = vmatprep.subr.mxu0 0.0
        %10570 = vmatpush2.msra.mxu0 %v10383
        %10571 = vmatprep.subr.mxu0 0.0
        %10572 = vmatpush2.msra.mxu0 %v10382
        %10573 = vmatprep.subr.mxu0 0.0
        %10574 = vmatpush2.msra.mxu0 %v10381
        %10575 = vmatprep.subr.mxu0 0.0
        %10576 = vmatpush2.msra.mxu0 %v10380
        %10577 = vmatprep.subr.mxu0 0.0
        %10578 = vmatpush2.msra.mxu0 %v10379
        %10579 = vmatprep.subr.mxu0 0.0
        %10580 = vmatpush2.msra.mxu0 %v10378
        %10581 = vmatprep.subr.mxu0 0.0
        %10582 = vmatpush2.msra.mxu0 %v10377
        %10583 = vmatprep.subr.mxu0 0.0
        %10584 = vmatpush2.msra.mxu0 %v10376
        %10585 = vmatprep.subr.mxu0 0.0
        %10586 = vmatpush2.msra.mxu0 %v10375
        %10587 = vmatprep.subr.mxu0 0.0
        %10588 = vmatpush2.msra.mxu0 %v10374
        %10589 = vmatprep.subr.mxu0 0.0
        %10590 = vmatpush2.msra.mxu0 %v10373
        %10591 = vmatprep.subr.mxu0 0.0
        %10592 = vmatpush2.msra.mxu0 %v10372
        %10593 = vmatprep.mubr.f32.mxu0 %v10319
        %10594 = vmatmul.mubr.f32.gmra.mxu0 %v10318
        %v10595 = vpop.f32.mrf.mxu0
        %v10596 = vadd.f32 %v10526, %v10595
        %v10597 = vpop.f32.mrf.mxu0
        %10598 = vdwg.mxu0
        %10599 = vmatprep.subr.mxu0 0.0
        %10600 = vmatpush1.msra.mxu0 %v10403
        %10601 = vmatprep.subr.mxu0 0.0
        %10602 = vmatpush1.msra.mxu0 %v10402
        %10603 = vmatprep.subr.mxu0 0.0
        %10604 = vmatpush1.msra.mxu0 %v10401
        %10605 = vmatprep.subr.mxu0 0.0
        %10606 = vmatpush1.msra.mxu0 %v10400
        %10607 = vmatprep.subr.mxu0 0.0
        %10608 = vmatpush1.msra.mxu0 %v10399
        %10609 = vmatprep.subr.mxu0 0.0
        %10610 = vmatpush1.msra.mxu0 %v10398
        %10611 = vmatprep.subr.mxu0 0.0
        %10612 = vmatpush1.msra.mxu0 %v10397
        %10613 = vmatprep.subr.mxu0 0.0
        %10614 = vmatpush1.msra.mxu0 %v10396
        %10615 = vmatprep.subr.mxu0 0.0
        %10616 = vmatpush1.msra.mxu0 %v10395
        %10617 = vmatprep.subr.mxu0 0.0
        %10618 = vmatpush1.msra.mxu0 %v10394
        %10619 = vmatprep.subr.mxu0 0.0
        %10620 = vmatpush1.msra.mxu0 %v10393
        %10621 = vmatprep.subr.mxu0 0.0
        %10622 = vmatpush1.msra.mxu0 %v10392
        %10623 = vmatprep.subr.mxu0 0.0
        %10624 = vmatpush1.msra.mxu0 %v10391
        %10625 = vmatprep.subr.mxu0 0.0
        %10626 = vmatpush1.msra.mxu0 %v10390
        %10627 = vmatprep.subr.mxu0 0.0
        %10628 = vmatpush1.msra.mxu0 %v10389
        %10629 = vmatprep.subr.mxu0 0.0
        %10630 = vmatpush1.msra.mxu0 %v10388
        %10631 = vmatprep.subr.mxu0 0.0
        %10632 = vmatpush2.msra.mxu0 %v10419
        %10633 = vmatprep.subr.mxu0 0.0
        %10634 = vmatpush2.msra.mxu0 %v10418
        %10635 = vmatprep.subr.mxu0 0.0
        %10636 = vmatpush2.msra.mxu0 %v10417
        %10637 = vmatprep.subr.mxu0 0.0
        %10638 = vmatpush2.msra.mxu0 %v10416
        %10639 = vmatprep.subr.mxu0 0.0
        %10640 = vmatpush2.msra.mxu0 %v10415
        %10641 = vmatprep.subr.mxu0 0.0
        %10642 = vmatpush2.msra.mxu0 %v10414
        %10643 = vmatprep.subr.mxu0 0.0
        %10644 = vmatpush2.msra.mxu0 %v10413
        %10645 = vmatprep.subr.mxu0 0.0
        %10646 = vmatpush2.msra.mxu0 %v10412
        %10647 = vmatprep.subr.mxu0 0.0
        %10648 = vmatpush2.msra.mxu0 %v10411
        %10649 = vmatprep.subr.mxu0 0.0
        %10650 = vmatpush2.msra.mxu0 %v10410
        %10651 = vmatprep.subr.mxu0 0.0
        %10652 = vmatpush2.msra.mxu0 %v10409
        %10653 = vmatprep.subr.mxu0 0.0
        %10654 = vmatpush2.msra.mxu0 %v10408
        %10655 = vmatprep.subr.mxu0 0.0
        %10656 = vmatpush2.msra.mxu0 %v10407
        %10657 = vmatprep.subr.mxu0 0.0
        %10658 = vmatpush2.msra.mxu0 %v10406
        %10659 = vmatprep.subr.mxu0 0.0
        %10660 = vmatpush2.msra.mxu0 %v10405
        %10661 = vmatprep.subr.mxu0 0.0
        %10662 = vmatpush2.msra.mxu0 %v10404
        %10663 = vmatprep.mubr.f32.mxu0 %v10321
        %10664 = vmatmul.mubr.f32.gmra.mxu0 %v10320
        %v10665 = vpop.f32.mrf.mxu0
        %v10666 = vadd.f32 %v10596, %v10665
        %v10667 = vpop.f32.mrf.mxu0
        %10668 = vdwg.mxu0
        %10669 = vmatprep.subr.mxu0 0.0
        %10670 = vmatpush1.msra.mxu0 %v10435
        %10671 = vmatprep.subr.mxu0 0.0
        %10672 = vmatpush1.msra.mxu0 %v10434
        %10673 = vmatprep.subr.mxu0 0.0
        %10674 = vmatpush1.msra.mxu0 %v10433
        %10675 = vmatprep.subr.mxu0 0.0
        %10676 = vmatpush1.msra.mxu0 %v10432
        %10677 = vmatprep.subr.mxu0 0.0
        %10678 = vmatpush1.msra.mxu0 %v10431
        %10679 = vmatprep.subr.mxu0 0.0
        %10680 = vmatpush1.msra.mxu0 %v10430
        %10681 = vmatprep.subr.mxu0 0.0
        %10682 = vmatpush1.msra.mxu0 %v10429
        %10683 = vmatprep.subr.mxu0 0.0
        %10684 = vmatpush1.msra.mxu0 %v10428
        %10685 = vmatprep.subr.mxu0 0.0
        %10686 = vmatpush1.msra.mxu0 %v10427
        %10687 = vmatprep.subr.mxu0 0.0
        %10688 = vmatpush1.msra.mxu0 %v10426
        %10689 = vmatprep.subr.mxu0 0.0
        %10690 = vmatpush1.msra.mxu0 %v10425
        %10691 = vmatprep.subr.mxu0 0.0
        %10692 = vmatpush1.msra.mxu0 %v10424
        %10693 = vmatprep.subr.mxu0 0.0
        %10694 = vmatpush1.msra.mxu0 %v10423
        %10695 = vmatprep.subr.mxu0 0.0
        %10696 = vmatpush1.msra.mxu0 %v10422
        %10697 = vmatprep.subr.mxu0 0.0
        %10698 = vmatpush1.msra.mxu0 %v10421
        %10699 = vmatprep.subr.mxu0 0.0
        %10700 = vmatpush1.msra.mxu0 %v10420
        %10701 = vmatprep.subr.mxu0 0.0
        %10702 = vmatpush2.msra.mxu0 %v10451
        %10703 = vmatprep.subr.mxu0 0.0
        %10704 = vmatpush2.msra.mxu0 %v10450
        %10705 = vmatprep.subr.mxu0 0.0
        %10706 = vmatpush2.msra.mxu0 %v10449
        %10707 = vmatprep.subr.mxu0 0.0
        %10708 = vmatpush2.msra.mxu0 %v10448
        %10709 = vmatprep.subr.mxu0 0.0
        %10710 = vmatpush2.msra.mxu0 %v10447
        %10711 = vmatprep.subr.mxu0 0.0
        %10712 = vmatpush2.msra.mxu0 %v10446
        %10713 = vmatprep.subr.mxu0 0.0
        %10714 = vmatpush2.msra.mxu0 %v10445
        %10715 = vmatprep.subr.mxu0 0.0
        %10716 = vmatpush2.msra.mxu0 %v10444
        %10717 = vmatprep.subr.mxu0 0.0
        %10718 = vmatpush2.msra.mxu0 %v10443
        %10719 = vmatprep.subr.mxu0 0.0
        %10720 = vmatpush2.msra.mxu0 %v10442
        %10721 = vmatprep.subr.mxu0 0.0
        %10722 = vmatpush2.msra.mxu0 %v10441
        %10723 = vmatprep.subr.mxu0 0.0
        %10724 = vmatpush2.msra.mxu0 %v10440
        %10725 = vmatprep.subr.mxu0 0.0
        %10726 = vmatpush2.msra.mxu0 %v10439
        %10727 = vmatprep.subr.mxu0 0.0
        %10728 = vmatpush2.msra.mxu0 %v10438
        %10729 = vmatprep.subr.mxu0 0.0
        %10730 = vmatpush2.msra.mxu0 %v10437
        %10731 = vmatprep.subr.mxu0 0.0
        %10732 = vmatpush2.msra.mxu0 %v10436
        %10733 = vmatprep.mubr.f32.mxu0 %v10323
        %10734 = vmatmul.mubr.f32.gmra.mxu0 %v10322
        %v10735 = vpop.f32.mrf.mxu0
        %v10736 = vadd.f32 %v10666, %v10735
        %v10737 = vpop.f32.mrf.mxu0
        %10738 = vdwg.mxu0
        %10739 = vmax.xlane.f32.xlu0 %v10736
        %v10740 = vpop.xlane.xlu0 %10739
        %v10741 = vsub.f32 %v10736, %v10740
        %v10742 = vmul.f32 %v10741, 1.442695
        %v10743 = vpow.pop %v10742
        %10744 = vadd.xlane.f32.xlu0 %v10743
        %v10745 = vpop.xlane.xlu0 %10744
        %v10746 = vrcp.pop %v10745
        %v10747 = vmul.f32 %v10743, %v10746
        %10748 = vst [vmem:[%s1037] sm:$0xff] %v10747
        %s10749 = sand.u32 %s609, 1
        %s10750 = scalar_lea.sflag [#allocation4], %s10749
        %s10751 = sand.u32 %s609, 1
        %s10752 = smul.addr %s10751, 8
        %s10753 = scalar_lea.vmem [#allocation32], %s10752
        // Predicated region
        $region201: #{tpu_custom_call.1} parent=123 // pred_check
          %p10754 = pneg %p619
        $region202: #{tpu_custom_call.1} parent=123 // pred_check_branch
          %10756 = sbr.rel (%p10754) target = $region204
        $region203: #{tpu_custom_call.1} parent=123 // pred_region
          %s10758 = ssub.s32 128, 128
          %10759 = vsyncadd %s10750, %s10758
          %s10760 = smul.addr %s50, 128
          %s10761 = scalar_lea.hbm %s26, %s10760
          %s10763 = sshll.u32 %s10753, 4
          %s10764 = int_to_ptr.vmem [resolvable:$true] %s10763
          %10766 = dma.vmem_to_hbm [thread:$0]  %s10764, 128, %s10761, %s10750
        $region204: #{tpu_custom_call.1} parent=123 // pred_fallthru
          _
      $region124: #{tpu_custom_call.1} parent=5 // pred_fallthru
        _
      %p10767 = scmp.le.s32.totalorder 2, %s45
      // Predicated region
      $region205: #{tpu_custom_call.1} parent=5 // pred_check
        %p10768 = pneg %p10767
      $region206: #{tpu_custom_call.1} parent=5 // pred_check_branch
        %10770 = sbr.rel (%p10768) target = $region208
      $region207: #{tpu_custom_call.1} parent=5 // pred_region
        %s10771 = ssub.s32 %s45, 2
        // Predicated region
        $region209: #{tpu_custom_call.1} parent=207 // pred_check
          %p10772 = pneg %p625
        $region210: #{tpu_custom_call.1} parent=207 // pred_check_branch
          %10774 = sbr.rel (%p10772) target = $region212
        $region211: #{tpu_custom_call.1} parent=207 // pred_region
          %s10775 = sand.u32 %s610, 1
          %s10776 = scalar_lea.sflag [#allocation4], %s10775
          %s10777 = sand.u32 %s610, 1
          %s10778 = smul.addr %s10777, 8
          %s10779 = scalar_lea.vmem [#allocation32], %s10778
          %10780 = dma.done %s10776, 128
        $region212: #{tpu_custom_call.1} parent=207 // pred_fallthru
          _
      $region208: #{tpu_custom_call.1} parent=5 // pred_fallthru
        _
    $region6: #{tpu_custom_call.1} parent=1 // loop_footer
      %s49 = sadd.s32 1, %s45
    $region7: #{tpu_custom_call.1} parent=1 // loop_footer_branch
      %44 = sbr.rel target = $region3
    $region8: #{tpu_custom_call.1} parent=1 // loop_exit
      _
    %10781 = vsyncpa [#allocation3], 1
    %s10782 = scalar_lea.sflag [#allocation3], 1
    %10783 = vsyncpa %s10782, 1
    %10784 = vsyncpa [#allocation6], 1
    %10785 = vsyncpa [#allocation9], 1
    %10786 = vsyncpa [#allocation12], 1
    %10787 = vsyncpa [#allocation15], 1
    %10788 = vsyncpa [#allocation18], 1
    %10789 = vsyncpa [#allocation21], 1
    %10790 = vsyncpa [#allocation24], 1
    %10791 = vsyncpa [#allocation27], 1
    %10792 = vsyncpa [#allocation30], 1
    %10793 = vsyncpa [#allocation4], 1
    %s10794 = scalar_lea.sflag [#allocation4], 1
    %10795 = vsyncpa %s10794, 1

</llo_original>
